<compile_context>
chip_gen: v7x
topology: tpu7x:2x2x1
jax: 0.10.0
libtpu: 0.0.40
codegen_flags: <defaults>
</compile_context>

<pallas_src>
import functools

import jax
import jax.numpy as jnp
from jax.experimental import pallas as pl
from jax.experimental.pallas import tpu as pltpu


def _round_up(v, m):
    return (v + m - 1) // m * m


def _vmem_need(th, wp8, wo, cin_p, cout_p, K, dil):
    """Rough VMEM working-set estimate (bytes) for a given band height."""
    dma_rows = (th + dil * (K - 1) + 1) * wp8
    return (2 * K * K * cin_p * cout_p * 2     # bf16 weights (double-buffered by Pallas)
            + 2 * dma_rows * cin_p * 2         # bf16 band double buffer
            + th * wp8 * cout_p * 4            # f32 accumulator scratch
            + 2 * th * wo * cout_p * 4         # f32 output block (double-buffered)
            + 2 * cout_p * 4)                  # bias


def _aspp_kernel(x_hbm, w_ref, bias_ref, o_ref, band_buf, band_sem, acc_ref, *,
                 th, wo, wp8, K, dil, cout_p):
    # x_hbm:    (N, Hflat, Cin_p)      flattened padded input, bf16, resident in HBM
    # w_ref:    (K, K, Cin_p, Cout_p)  BN-scale-folded weights, bf16, resident in VMEM
    # bias_ref: (1, Cout_p)            folded BN bias, f32
    # o_ref:    (1, th, Wo, Cout_p)    output row-band (lane-dense Cout), f32
    # band_buf: (2, dma_rows, Cin_p)   double-buffered flattened input band, bf16
    # acc_ref:  (th*Wp8, Cout_p)       f32 accumulator scratch
    n = pl.program_id(0)
    h = pl.program_id(1)
    nh = pl.num_programs(1)
    slot = jax.lax.rem(h, 2)

    m_rows = th * wp8                            # matmul M dimension (static)
    dma_rows = (th + dil * (K - 1) + 1) * wp8    # rows DMA'd per band (static; +1 row halo
                                                 # so tap windows never read past the buffer)

    def band_copy(band_idx, s):
        return pltpu.make_async_copy(
            x_hbm.at[n, pl.ds(band_idx * th * wp8, dma_rows)],
            band_buf.at[s],
            band_sem.at[s])

    # Prime the pipeline on the first band of every image.
    # TODO(synk): cross-image prefetch at h == nh-1 would hide this per-image prime, but is
    # only safe if the batch axis stops being megacore-parallel.
    @pl.when(h == 0)
    def _():
        band_copy(0, 0).start()

    # Wait for the current band (same descriptor as the matching .start()).
    band_copy(h, slot).wait()

    # Prefetch the next band into the other slot while computing this one.
    @pl.when(h + 1 < nh)
    def _():
        band_copy(h + 1, 1 - slot).start()

    # Leading ReLU, once per band (commutes with the replication pad done in the wrapper).
    # Static slot index in each branch keeps the in-place store statically addressed.
    @pl.when(slot == 0)
    def _():
        band_buf[0] = jnp.maximum(band_buf[0], 0.0)

    @pl.when(slot == 1)
    def _():
        band_buf[1] = jnp.maximum(band_buf[1], 0.0)

    # Accumulator starts at the folded-BN bias (saves a separate bias/scale pass).
    acc_ref[...] = jnp.broadcast_to(bias_ref[...], (m_rows, cout_p))

    # K*K dilated taps; each tap is a contiguous th*Wp8-row window of the flattened band
    # (no strided slice / reshape relayout), contracted bf16 x bf16 -> f32 on the MXU.
    for kh in range(K):
        for kw in range(K):
            off = (kh * wp8 + kw) * dil
            acc_ref[...] += jnp.dot(band_buf[slot, off:off + m_rows, :],
                                    w_ref[kh, kw],
                                    preferred_element_type=jnp.float32)

    # Trailing ReLU; store only the Wo valid columns of each output row.
    y = jnp.maximum(acc_ref[...], 0.0).reshape(th, wp8, cout_p)
    o_ref[0] = y[:, :wo, :].astype(o_ref.dtype)


def aspp_module_forward(x_nchw, w_oihw, padding, dilation, eps=1e-5):
    """x_nchw: (N, Cin, H, W) f32; w_oihw: (Cout, Cin, K, K) f32 -> (N, Cout, Ho, Wo) f32."""
    N, cin, H, W = x_nchw.shape
    cout, _, K, _ = w_oihw.shape

    # --- eval-mode BN with the module's deterministic init, folded into the conv ---
    # TODO(synk): plumb real running stats / affine params for a trained BatchNorm.
    gamma = jnp.ones((cout,), jnp.float32)
    beta = jnp.zeros((cout,), jnp.float32)
    run_mean = jnp.zeros((cout,), jnp.float32)
    run_var = jnp.ones((cout,), jnp.float32)
    scale = gamma / jnp.sqrt(run_var + eps)
    bias = beta - run_mean * scale
    w_folded = w_oihw * scale[:, None, None, None]

    # --- channel padding to full 128-lane vregs (lane-dense loads/stores, deep MXU) ---
    cin_p = _round_up(cin, 128)
    cout_p = _round_up(cout, 128)

    Hp, Wp = H + 2 * padding, W + 2 * padding
    Ho = Hp - dilation * (K - 1)
    Wo = Wp - dilation * (K - 1)
    Wp8 = _round_up(Wp, 8)            # keep the flattened band reshape layout-free

    # --- band height: largest multiple of 8 that fits a conservative VMEM budget ---
    # (v7x has only 64 MiB physical VMEM; could be derived from pltpu.get_tpu_info()).
    budget = 40 << 20
    th = 8
    for cand in (64, 56, 48, 40, 32, 24, 16, 8):
        if cand > _round_up(Ho, 8):
            continue
        if _vmem_need(cand, Wp8, Wo, cin_p, cout_p, K, dilation) <= budget:
            th = cand
            break
    Ho_pad = _round_up(Ho, th)
    nh = Ho_pad // th
    Hp_need = Ho_pad + dilation * (K - 1) + 1     # +1 row: tap windows over-read by < 1 row

    vmem_limit = int(min(112 << 20,
                         max(32 << 20,
                             _vmem_need(th, Wp8, Wo, cin_p, cout_p, K, dilation) + (8 << 20))))

    # --- glue: NCHW->NHWC, replication pad, zero pads, flatten, bf16 cast (plain JAX) ---
    # TODO(synk): at real DeepLab scale keep the model NHWC end-to-end to avoid the
    # transpose round-trips through HBM.
    x_nhwc = jnp.transpose(x_nchw, (0, 2, 3, 1))
    x_pad = jnp.pad(x_nhwc, ((0, 0), (padding, padding), (padding, padding), (0, 0)),
                    mode="edge")                                   # ReplicationPad2d
    x_pad = jnp.pad(x_pad, ((0, 0), (0, Hp_need - Hp), (0, Wp8 - Wp), (0, cin_p - cin)))
    x_flat = x_pad.reshape(N, Hp_need * Wp8, cin_p).astype(jnp.bfloat16)

    w_kkio = jnp.transpose(w_folded, (2, 3, 1, 0))                 # OIHW -> KKIO
    w_kkio = jnp.pad(w_kkio, ((0, 0), (0, 0), (0, cin_p - cin), (0, cout_p - cout)))
    w_kkio = w_kkio.astype(jnp.bfloat16)
    bias_p = jnp.pad(bias, (0, cout_p - cout)).reshape(1, cout_p).astype(jnp.float32)

    dma_rows = (th + dilation * (K - 1) + 1) * Wp8

    kernel = functools.partial(_aspp_kernel, th=th, wo=Wo, wp8=Wp8, K=K,
                               dil=dilation, cout_p=cout_p)

    out_nhwc = pl.pallas_call(
        kernel,
        out_shape=jax.ShapeDtypeStruct((N, Ho_pad, Wo, cout_p), jnp.float32),
        grid_spec=pltpu.PrefetchScalarGridSpec(
            num_scalar_prefetch=0,
            grid=(N, nh),
            in_specs=[
                pl.BlockSpec(memory_space=pl.ANY),                          # input in HBM
                # TODO(synk): single-buffer this grid-invariant block (pl.Buffered(1)) for v7x.
                pl.BlockSpec((K, K, cin_p, cout_p), lambda n, h: (0, 0, 0, 0)),
                pl.BlockSpec((1, cout_p), lambda n, h: (0, 0)),
            ],
            out_specs=pl.BlockSpec((1, th, Wo, cout_p), lambda n, h: (n, h, 0, 0)),
            scratch_shapes=[
                pltpu.VMEM((2, dma_rows, cin_p), jnp.bfloat16),   # band double buffer
                pltpu.SemaphoreType.DMA((2,)),
                pltpu.VMEM((th * Wp8, cout_p), jnp.float32),      # f32 accumulator
            ],
        ),
        compiler_params=pltpu.CompilerParams(
            dimension_semantics=("parallel", "arbitrary"),
            vmem_limit_bytes=vmem_limit),
    )(x_flat, w_kkio, bias_p)

    out = out_nhwc[:, :Ho, :, :cout]              # drop Ho / Cout padding
    return jnp.transpose(out, (0, 3, 1, 2))       # NHWC -> NCHW


def _reference(x_nchw, w_oihw, padding, dilation, eps=1e-5):
    """Pure-JAX f32 reference mirroring the PyTorch forward (eval-mode BN, default stats)."""
    x = jnp.maximum(x_nchw, 0.0)
    x = jnp.pad(x, ((0, 0), (0, 0), (padding, padding), (padding, padding)), mode="edge")
    y = jax.lax.conv_general_dilated(
        x, w_oihw, window_strides=(1, 1), padding="VALID",
        rhs_dilation=(dilation, dilation),
        dimension_numbers=("NCHW", "OIHW", "NCHW"))
    y = y / jnp.sqrt(1.0 + eps)
    return jnp.maximum(y, 0.0)


if __name__ == "__main__":
    key = jax.random.PRNGKey(0)
    kx, kw = jax.random.split(key)

    N, inplanes, H, W = 2, 4, 16, 16
    planes, kernel_size, dilation = 8, 3, 2
    padding = dilation  # keeps spatial size (typical ASPP branch)

    x = jax.random.normal(kx, (N, inplanes, H, W), dtype=jnp.float32)

    # kaiming_normal_ (fan_in, relu gain): std = sqrt(2 / (Cin * K * K))
    fan_in = inplanes * kernel_size * kernel_size
    std = (2.0 / fan_in) ** 0.5
    w = jax.random.normal(kw, (planes, inplanes, kernel_size, kernel_size),
                          dtype=jnp.float32) * std

    out = aspp_module_forward(x, w, padding, dilation)
    out = jax.block_until_ready(out)

    ref = _reference(x, w, padding, dilation)
    assert out.shape == ref.shape == (N, planes, H, W)
    # Loose tolerance: kernel contracts in bf16 (f32 accumulation), reference is pure f32.
    assert jnp.allclose(out, ref, atol=5e-2, rtol=5e-2), "mismatch vs reference"

    print("KERNEL_OK")
</pallas_src>

<mosaic_0001>
module attributes {stable_mosaic.version = 11 : i64} {
  func.func @_aspp_kernel(%arg0: i32, %arg1: i32, %arg2: memref<2x504x128xbf16, #tpu.memory_space<any>>, %arg3: memref<3x3x128x128xbf16, #tpu.memory_space<vmem>>, %arg4: memref<1x128xf32, #tpu.memory_space<vmem>>, %arg5: memref<1x16x16x128xf32, #tpu.memory_space<vmem>>, %arg6: memref<2x504x128xbf16, #tpu.memory_space<vmem>>, %arg7: memref<2x!tpu.dma_semaphore, #tpu.memory_space<semaphore_mem>>, %arg8: memref<384x128xf32, #tpu.memory_space<vmem>>) attributes {dimension_semantics = [#tpu.dimension_semantics<parallel>, #tpu.dimension_semantics<arbitrary>], iteration_bounds = array<i64: 2, 1>, scalar_prefetch = 0 : i64, scratch_operands = 3 : i64, tpu.core_type = #tpu.core_type<tc>, window_params = [{}, {pipeline_mode = #tpu.pipeline_mode<synchronous>, transform_indices = @transform_1, window_bounds = array<i64: 3, 3, 128, 128>}, {pipeline_mode = #tpu.pipeline_mode<synchronous>, transform_indices = @transform_2, window_bounds = array<i64: 1, 128>}, {transform_indices = @transform_3, window_bounds = array<i64: 1, 16, 16, 128>}]} {
    %c2_i32 = arith.constant 2 : i32
    %0 = arith.remsi %arg1, %c2_i32 : i32
    %c0_i32 = arith.constant 0 : i32
    %1 = arith.cmpi eq, %arg1, %c0_i32 : i32
    %2 = arith.extui %1 : i1 to i32
    %c0_i32_0 = arith.constant 0 : i32
    %3 = arith.cmpi ne, %2, %c0_i32_0 : i32
    scf.if %3 {
      %c0_i32_109 = arith.constant 0 : i32
      %c0_i32_110 = arith.constant 0 : i32
      %c0_i32_111 = arith.constant 0 : i32
      %c0_i32_112 = arith.constant 0 : i32
      %115 = tpu.memref_slice %arg2[%arg0, %c0_i32_111, %c0_i32_112] : memref<2x504x128xbf16, #tpu.memory_space<any>> -> memref<1x504x128xbf16, #tpu.memory_space<any>>
      %116 = tpu.memref_squeeze %115 : memref<1x504x128xbf16, #tpu.memory_space<any>> -> memref<504x128xbf16, #tpu.memory_space<any>>
      %c0_i32_113 = arith.constant 0 : i32
      %c0_i32_114 = arith.constant 0 : i32
      %117 = tpu.memref_slice %arg6[%c0_i32_109, %c0_i32_113, %c0_i32_114] : memref<2x504x128xbf16, #tpu.memory_space<vmem>> -> memref<1x504x128xbf16, #tpu.memory_space<vmem>>
      %118 = tpu.memref_squeeze %117 : memref<1x504x128xbf16, #tpu.memory_space<vmem>> -> memref<504x128xbf16, #tpu.memory_space<vmem>>
      %119 = tpu.memref_slice %arg7[%c0_i32_110] : memref<2x!tpu.dma_semaphore, #tpu.memory_space<semaphore_mem>> -> memref<1x!tpu.dma_semaphore, #tpu.memory_space<semaphore_mem>>
      %120 = tpu.memref_squeeze %119 : memref<1x!tpu.dma_semaphore, #tpu.memory_space<semaphore_mem>> -> memref<!tpu.dma_semaphore, #tpu.memory_space<semaphore_mem>>
      tpu.enqueue_dma source(%116 : memref<504x128xbf16, #tpu.memory_space<any>>) target(%118 : memref<504x128xbf16, #tpu.memory_space<vmem>>) target_semaphore(%120 : memref<!tpu.dma_semaphore, #tpu.memory_space<semaphore_mem>>)
    } else {
    }
    %c16_i32 = arith.constant 16 : i32
    %4 = arith.muli %arg1, %c16_i32 : i32
    %c24_i32 = arith.constant 24 : i32
    %5 = arith.muli %4, %c24_i32 : i32
    %c0_i32_1 = arith.constant 0 : i32
    %6 = tpu.memref_slice %arg2[%arg0, %5, %c0_i32_1] : memref<2x504x128xbf16, #tpu.memory_space<any>> -> memref<1x504x128xbf16, #tpu.memory_space<any>>
    %7 = tpu.memref_squeeze %6 : memref<1x504x128xbf16, #tpu.memory_space<any>> -> memref<504x128xbf16, #tpu.memory_space<any>>
    %c0_i32_2 = arith.constant 0 : i32
    %c0_i32_3 = arith.constant 0 : i32
    %8 = tpu.memref_slice %arg6[%0, %c0_i32_2, %c0_i32_3] : memref<2x504x128xbf16, #tpu.memory_space<vmem>> -> memref<1x504x128xbf16, #tpu.memory_space<vmem>>
    %9 = tpu.memref_squeeze %8 : memref<1x504x128xbf16, #tpu.memory_space<vmem>> -> memref<504x128xbf16, #tpu.memory_space<vmem>>
    %10 = tpu.memref_slice %arg7[%0] : memref<2x!tpu.dma_semaphore, #tpu.memory_space<semaphore_mem>> -> memref<1x!tpu.dma_semaphore, #tpu.memory_space<semaphore_mem>>
    %11 = tpu.memref_squeeze %10 : memref<1x!tpu.dma_semaphore, #tpu.memory_space<semaphore_mem>> -> memref<!tpu.dma_semaphore, #tpu.memory_space<semaphore_mem>>
    tpu.wait_dma2 semaphore(%11 : memref<!tpu.dma_semaphore, #tpu.memory_space<semaphore_mem>>) src(%7 : memref<504x128xbf16, #tpu.memory_space<any>>) dst(%9 : memref<504x128xbf16, #tpu.memory_space<vmem>>)
    %c1_i32 = arith.constant 1 : i32
    %12 = arith.addi %arg1, %c1_i32 : i32
    %c1_i32_4 = arith.constant 1 : i32
    %13 = arith.cmpi slt, %12, %c1_i32_4 : i32
    %14 = arith.extui %13 : i1 to i32
    %c0_i32_5 = arith.constant 0 : i32
    %15 = arith.cmpi ne, %14, %c0_i32_5 : i32
    scf.if %15 {
      %c1_i32_109 = arith.constant 1 : i32
      %115 = arith.addi %arg1, %c1_i32_109 : i32
      %c1_i32_110 = arith.constant 1 : i32
      %116 = arith.subi %c1_i32_110, %0 : i32
      %c16_i32_111 = arith.constant 16 : i32
      %117 = arith.muli %115, %c16_i32_111 : i32
      %c24_i32_112 = arith.constant 24 : i32
      %118 = arith.muli %117, %c24_i32_112 : i32
      %c0_i32_113 = arith.constant 0 : i32
      %119 = tpu.memref_slice %arg2[%arg0, %118, %c0_i32_113] : memref<2x504x128xbf16, #tpu.memory_space<any>> -> memref<1x504x128xbf16, #tpu.memory_space<any>>
      %120 = tpu.memref_squeeze %119 : memref<1x504x128xbf16, #tpu.memory_space<any>> -> memref<504x128xbf16, #tpu.memory_space<any>>
      %c0_i32_114 = arith.constant 0 : i32
      %c0_i32_115 = arith.constant 0 : i32
      %121 = tpu.memref_slice %arg6[%116, %c0_i32_114, %c0_i32_115] : memref<2x504x128xbf16, #tpu.memory_space<vmem>> -> memref<1x504x128xbf16, #tpu.memory_space<vmem>>
      %122 = tpu.memref_squeeze %121 : memref<1x504x128xbf16, #tpu.memory_space<vmem>> -> memref<504x128xbf16, #tpu.memory_space<vmem>>
      %123 = tpu.memref_slice %arg7[%116] : memref<2x!tpu.dma_semaphore, #tpu.memory_space<semaphore_mem>> -> memref<1x!tpu.dma_semaphore, #tpu.memory_space<semaphore_mem>>
      %124 = tpu.memref_squeeze %123 : memref<1x!tpu.dma_semaphore, #tpu.memory_space<semaphore_mem>> -> memref<!tpu.dma_semaphore, #tpu.memory_space<semaphore_mem>>
      tpu.enqueue_dma source(%120 : memref<504x128xbf16, #tpu.memory_space<any>>) target(%122 : memref<504x128xbf16, #tpu.memory_space<vmem>>) target_semaphore(%124 : memref<!tpu.dma_semaphore, #tpu.memory_space<semaphore_mem>>)
    } else {
    }
    %c0_i32_6 = arith.constant 0 : i32
    %16 = arith.cmpi eq, %0, %c0_i32_6 : i32
    %17 = arith.extui %16 : i1 to i32
    %c0_i32_7 = arith.constant 0 : i32
    %18 = arith.cmpi ne, %17, %c0_i32_7 : i32
    scf.if %18 {
      %c0_109 = arith.constant 0 : index
      %c0_110 = arith.constant 0 : index
      %c0_111 = arith.constant 0 : index
      %115 = vector.load %arg6[%c0_109, %c0_110, %c0_111] : memref<2x504x128xbf16, #tpu.memory_space<vmem>>, vector<1x504x128xbf16>
      %116 = vector.shape_cast %115 : vector<1x504x128xbf16> to vector<504x128xbf16>
      %cst_112 = arith.constant 0.000000e+00 : bf16
      %117 = vector.broadcast %cst_112 : bf16 to vector<504x128xbf16>
      %118 = arith.maximumf %116, %117 : vector<504x128xbf16>
      %c0_113 = arith.constant 0 : index
      %c0_114 = arith.constant 0 : index
      %c0_115 = arith.constant 0 : index
      %119 = vector.load %arg6[%c0_113, %c0_114, %c0_115] : memref<2x504x128xbf16, #tpu.memory_space<vmem>>, vector<1x504x128xbf16>
      %120 = vector.shape_cast %119 : vector<1x504x128xbf16> to vector<504x128xbf16>
      %121 = vector.shape_cast %118 : vector<504x128xbf16> to vector<1x504x128xbf16>
      tpu.vector_store %arg6[%c0_113, %c0_114, %c0_115], %121 {strides = array<i32>} : memref<2x504x128xbf16, #tpu.memory_space<vmem>>, vector<1x504x128xbf16>,
    } else {
    }
    %c1_i32_8 = arith.constant 1 : i32
    %19 = arith.cmpi eq, %0, %c1_i32_8 : i32
    %20 = arith.extui %19 : i1 to i32
    %c0_i32_9 = arith.constant 0 : i32
    %21 = arith.cmpi ne, %20, %c0_i32_9 : i32
    scf.if %21 {
      %c1_109 = arith.constant 1 : index
      %c0_110 = arith.constant 0 : index
      %c0_111 = arith.constant 0 : index
      %115 = vector.load %arg6[%c1_109, %c0_110, %c0_111] : memref<2x504x128xbf16, #tpu.memory_space<vmem>>, vector<1x504x128xbf16>
      %116 = vector.shape_cast %115 : vector<1x504x128xbf16> to vector<504x128xbf16>
      %cst_112 = arith.constant 0.000000e+00 : bf16
      %117 = vector.broadcast %cst_112 : bf16 to vector<504x128xbf16>
      %118 = arith.maximumf %116, %117 : vector<504x128xbf16>
      %c1_113 = arith.constant 1 : index
      %c0_114 = arith.constant 0 : index
      %c0_115 = arith.constant 0 : index
      %119 = vector.load %arg6[%c1_113, %c0_114, %c0_115] : memref<2x504x128xbf16, #tpu.memory_space<vmem>>, vector<1x504x128xbf16>
      %120 = vector.shape_cast %119 : vector<1x504x128xbf16> to vector<504x128xbf16>
      %121 = vector.shape_cast %118 : vector<504x128xbf16> to vector<1x504x128xbf16>
      tpu.vector_store %arg6[%c1_113, %c0_114, %c0_115], %121 {strides = array<i32>} : memref<2x504x128xbf16, #tpu.memory_space<vmem>>, vector<1x504x128xbf16>,
    } else {
    }
    %c0 = arith.constant 0 : index
    %c0_10 = arith.constant 0 : index
    %22 = vector.load %arg4[%c0, %c0_10] : memref<1x128xf32, #tpu.memory_space<vmem>>, vector<1x128xf32>
    %23 = vector.shape_cast %22 : vector<1x128xf32> to vector<1x128xf32>
    %24 = vector.broadcast %23 : vector<1x128xf32> to vector<384x128xf32>
    %c0_11 = arith.constant 0 : index
    %c0_12 = arith.constant 0 : index
    %25 = vector.load %arg8[%c0_11, %c0_12] : memref<384x128xf32, #tpu.memory_space<vmem>>, vector<384x128xf32>
    tpu.vector_store %arg8[%c0_11, %c0_12], %24 {strides = array<i32>} : memref<384x128xf32, #tpu.memory_space<vmem>>, vector<384x128xf32>,
    %c0_13 = arith.constant 0 : index
    %c0_14 = arith.constant 0 : index
    %26 = vector.load %arg8[%c0_13, %c0_14] : memref<384x128xf32, #tpu.memory_space<vmem>>, vector<384x128xf32>
    %27 = arith.index_cast %0 : i32 to index
    %c0_15 = arith.constant 0 : index
    %c0_16 = arith.constant 0 : index
    %28 = vector.load %arg6[%27, %c0_15, %c0_16] : memref<2x504x128xbf16, #tpu.memory_space<vmem>>, vector<1x384x128xbf16>
    %29 = vector.shape_cast %28 : vector<1x384x128xbf16> to vector<384x128xbf16>
    %c0_17 = arith.constant 0 : index
    %c0_18 = arith.constant 0 : index
    %c0_19 = arith.constant 0 : index
    %c0_20 = arith.constant 0 : index
    %30 = vector.load %arg3[%c0_17, %c0_18, %c0_19, %c0_20] : memref<3x3x128x128xbf16, #tpu.memory_space<vmem>>, vector<1x1x128x128xbf16>
    %31 = vector.shape_cast %30 : vector<1x1x128x128xbf16> to vector<128x128xbf16>
    %cst = arith.constant dense<0.000000e+00> : vector<384x128xf32>
    %32 = tpu.matmul %29, %31, %cst {dimension_numbers = #tpu.dot_dimension_numbers<[1], [0], [0], [1], [0, 0, 1, 1], [], []>} : vector<384x128xbf16>, vector<128x128xbf16>, vector<384x128xf32> -> vector<384x128xf32>
    %33 = arith.addf %26, %32 : vector<384x128xf32>
    %c0_21 = arith.constant 0 : index
    %c0_22 = arith.constant 0 : index
    %34 = vector.load %arg8[%c0_21, %c0_22] : memref<384x128xf32, #tpu.memory_space<vmem>>, vector<384x128xf32>
    tpu.vector_store %arg8[%c0_21, %c0_22], %33 {strides = array<i32>} : memref<384x128xf32, #tpu.memory_space<vmem>>, vector<384x128xf32>,
    %c0_23 = arith.constant 0 : index
    %c0_24 = arith.constant 0 : index
    %35 = vector.load %arg8[%c0_23, %c0_24] : memref<384x128xf32, #tpu.memory_space<vmem>>, vector<384x128xf32>
    %36 = arith.index_cast %0 : i32 to index
    %c2 = arith.constant 2 : index
    %c0_25 = arith.constant 0 : index
    %37 = vector.load %arg6[%36, %c2, %c0_25] : memref<2x504x128xbf16, #tpu.memory_space<vmem>>, vector<1x384x128xbf16>
    %38 = vector.shape_cast %37 : vector<1x384x128xbf16> to vector<384x128xbf16>
    %c0_26 = arith.constant 0 : index
    %c1 = arith.constant 1 : index
    %c0_27 = arith.constant 0 : index
    %c0_28 = arith.constant 0 : index
    %39 = vector.load %arg3[%c0_26, %c1, %c0_27, %c0_28] : memref<3x3x128x128xbf16, #tpu.memory_space<vmem>>, vector<1x1x128x128xbf16>
    %40 = vector.shape_cast %39 : vector<1x1x128x128xbf16> to vector<128x128xbf16>
    %cst_29 = arith.constant dense<0.000000e+00> : vector<384x128xf32>
    %41 = tpu.matmul %38, %40, %cst_29 {dimension_numbers = #tpu.dot_dimension_numbers<[1], [0], [0], [1], [0, 0, 1, 1], [], []>} : vector<384x128xbf16>, vector<128x128xbf16>, vector<384x128xf32> -> vector<384x128xf32>
    %42 = arith.addf %35, %41 : vector<384x128xf32>
    %c0_30 = arith.constant 0 : index
    %c0_31 = arith.constant 0 : index
    %43 = vector.load %arg8[%c0_30, %c0_31] : memref<384x128xf32, #tpu.memory_space<vmem>>, vector<384x128xf32>
    tpu.vector_store %arg8[%c0_30, %c0_31], %42 {strides = array<i32>} : memref<384x128xf32, #tpu.memory_space<vmem>>, vector<384x128xf32>,
    %c0_32 = arith.constant 0 : index
    %c0_33 = arith.constant 0 : index
    %44 = vector.load %arg8[%c0_32, %c0_33] : memref<384x128xf32, #tpu.memory_space<vmem>>, vector<384x128xf32>
    %45 = arith.index_cast %0 : i32 to index
    %c4 = arith.constant 4 : index
    %c0_34 = arith.constant 0 : index
    %46 = vector.load %arg6[%45, %c4, %c0_34] : memref<2x504x128xbf16, #tpu.memory_space<vmem>>, vector<1x384x128xbf16>
    %47 = vector.shape_cast %46 : vector<1x384x128xbf16> to vector<384x128xbf16>
    %c0_35 = arith.constant 0 : index
    %c2_36 = arith.constant 2 : index
    %c0_37 = arith.constant 0 : index
    %c0_38 = arith.constant 0 : index
    %48 = vector.load %arg3[%c0_35, %c2_36, %c0_37, %c0_38] : memref<3x3x128x128xbf16, #tpu.memory_space<vmem>>, vector<1x1x128x128xbf16>
    %49 = vector.shape_cast %48 : vector<1x1x128x128xbf16> to vector<128x128xbf16>
    %cst_39 = arith.constant dense<0.000000e+00> : vector<384x128xf32>
    %50 = tpu.matmul %47, %49, %cst_39 {dimension_numbers = #tpu.dot_dimension_numbers<[1], [0], [0], [1], [0, 0, 1, 1], [], []>} : vector<384x128xbf16>, vector<128x128xbf16>, vector<384x128xf32> -> vector<384x128xf32>
    %51 = arith.addf %44, %50 : vector<384x128xf32>
    %c0_40 = arith.constant 0 : index
    %c0_41 = arith.constant 0 : index
    %52 = vector.load %arg8[%c0_40, %c0_41] : memref<384x128xf32, #tpu.memory_space<vmem>>, vector<384x128xf32>
    tpu.vector_store %arg8[%c0_40, %c0_41], %51 {strides = array<i32>} : memref<384x128xf32, #tpu.memory_space<vmem>>, vector<384x128xf32>,
    %c0_42 = arith.constant 0 : index
    %c0_43 = arith.constant 0 : index
    %53 = vector.load %arg8[%c0_42, %c0_43] : memref<384x128xf32, #tpu.memory_space<vmem>>, vector<384x128xf32>
    %54 = arith.index_cast %0 : i32 to index
    %c48 = arith.constant 48 : index
    %c0_44 = arith.constant 0 : index
    %55 = vector.load %arg6[%54, %c48, %c0_44] : memref<2x504x128xbf16, #tpu.memory_space<vmem>>, vector<1x384x128xbf16>
    %56 = vector.shape_cast %55 : vector<1x384x128xbf16> to vector<384x128xbf16>
    %c1_45 = arith.constant 1 : index
    %c0_46 = arith.constant 0 : index
    %c0_47 = arith.constant 0 : index
    %c0_48 = arith.constant 0 : index
    %57 = vector.load %arg3[%c1_45, %c0_46, %c0_47, %c0_48] : memref<3x3x128x128xbf16, #tpu.memory_space<vmem>>, vector<1x1x128x128xbf16>
    %58 = vector.shape_cast %57 : vector<1x1x128x128xbf16> to vector<128x128xbf16>
    %cst_49 = arith.constant dense<0.000000e+00> : vector<384x128xf32>
    %59 = tpu.matmul %56, %58, %cst_49 {dimension_numbers = #tpu.dot_dimension_numbers<[1], [0], [0], [1], [0, 0, 1, 1], [], []>} : vector<384x128xbf16>, vector<128x128xbf16>, vector<384x128xf32> -> vector<384x128xf32>
    %60 = arith.addf %53, %59 : vector<384x128xf32>
    %c0_50 = arith.constant 0 : index
    %c0_51 = arith.constant 0 : index
    %61 = vector.load %arg8[%c0_50, %c0_51] : memref<384x128xf32, #tpu.memory_space<vmem>>, vector<384x128xf32>
    tpu.vector_store %arg8[%c0_50, %c0_51], %60 {strides = array<i32>} : memref<384x128xf32, #tpu.memory_space<vmem>>, vector<384x128xf32>,
    %c0_52 = arith.constant 0 : index
    %c0_53 = arith.constant 0 : index
    %62 = vector.load %arg8[%c0_52, %c0_53] : memref<384x128xf32, #tpu.memory_space<vmem>>, vector<384x128xf32>
    %63 = arith.index_cast %0 : i32 to index
    %c50 = arith.constant 50 : index
    %c0_54 = arith.constant 0 : index
    %64 = vector.load %arg6[%63, %c50, %c0_54] : memref<2x504x128xbf16, #tpu.memory_space<vmem>>, vector<1x384x128xbf16>
    %65 = vector.shape_cast %64 : vector<1x384x128xbf16> to vector<384x128xbf16>
    %c1_55 = arith.constant 1 : index
    %c1_56 = arith.constant 1 : index
    %c0_57 = arith.constant 0 : index
    %c0_58 = arith.constant 0 : index
    %66 = vector.load %arg3[%c1_55, %c1_56, %c0_57, %c0_58] : memref<3x3x128x128xbf16, #tpu.memory_space<vmem>>, vector<1x1x128x128xbf16>
    %67 = vector.shape_cast %66 : vector<1x1x128x128xbf16> to vector<128x128xbf16>
    %cst_59 = arith.constant dense<0.000000e+00> : vector<384x128xf32>
    %68 = tpu.matmul %65, %67, %cst_59 {dimension_numbers = #tpu.dot_dimension_numbers<[1], [0], [0], [1], [0, 0, 1, 1], [], []>} : vector<384x128xbf16>, vector<128x128xbf16>, vector<384x128xf32> -> vector<384x128xf32>
    %69 = arith.addf %62, %68 : vector<384x128xf32>
    %c0_60 = arith.constant 0 : index
    %c0_61 = arith.constant 0 : index
    %70 = vector.load %arg8[%c0_60, %c0_61] : memref<384x128xf32, #tpu.memory_space<vmem>>, vector<384x128xf32>
    tpu.vector_store %arg8[%c0_60, %c0_61], %69 {strides = array<i32>} : memref<384x128xf32, #tpu.memory_space<vmem>>, vector<384x128xf32>,
    %c0_62 = arith.constant 0 : index
    %c0_63 = arith.constant 0 : index
    %71 = vector.load %arg8[%c0_62, %c0_63] : memref<384x128xf32, #tpu.memory_space<vmem>>, vector<384x128xf32>
    %72 = arith.index_cast %0 : i32 to index
    %c52 = arith.constant 52 : index
    %c0_64 = arith.constant 0 : index
    %73 = vector.load %arg6[%72, %c52, %c0_64] : memref<2x504x128xbf16, #tpu.memory_space<vmem>>, vector<1x384x128xbf16>
    %74 = vector.shape_cast %73 : vector<1x384x128xbf16> to vector<384x128xbf16>
    %c1_65 = arith.constant 1 : index
    %c2_66 = arith.constant 2 : index
    %c0_67 = arith.constant 0 : index
    %c0_68 = arith.constant 0 : index
    %75 = vector.load %arg3[%c1_65, %c2_66, %c0_67, %c0_68] : memref<3x3x128x128xbf16, #tpu.memory_space<vmem>>, vector<1x1x128x128xbf16>
    %76 = vector.shape_cast %75 : vector<1x1x128x128xbf16> to vector<128x128xbf16>
    %cst_69 = arith.constant dense<0.000000e+00> : vector<384x128xf32>
    %77 = tpu.matmul %74, %76, %cst_69 {dimension_numbers = #tpu.dot_dimension_numbers<[1], [0], [0], [1], [0, 0, 1, 1], [], []>} : vector<384x128xbf16>, vector<128x128xbf16>, vector<384x128xf32> -> vector<384x128xf32>
    %78 = arith.addf %71, %77 : vector<384x128xf32>
    %c0_70 = arith.constant 0 : index
    %c0_71 = arith.constant 0 : index
    %79 = vector.load %arg8[%c0_70, %c0_71] : memref<384x128xf32, #tpu.memory_space<vmem>>, vector<384x128xf32>
    tpu.vector_store %arg8[%c0_70, %c0_71], %78 {strides = array<i32>} : memref<384x128xf32, #tpu.memory_space<vmem>>, vector<384x128xf32>,
    %c0_72 = arith.constant 0 : index
    %c0_73 = arith.constant 0 : index
    %80 = vector.load %arg8[%c0_72, %c0_73] : memref<384x128xf32, #tpu.memory_space<vmem>>, vector<384x128xf32>
    %81 = arith.index_cast %0 : i32 to index
    %c96 = arith.constant 96 : index
    %c0_74 = arith.constant 0 : index
    %82 = vector.load %arg6[%81, %c96, %c0_74] : memref<2x504x128xbf16, #tpu.memory_space<vmem>>, vector<1x384x128xbf16>
    %83 = vector.shape_cast %82 : vector<1x384x128xbf16> to vector<384x128xbf16>
    %c2_75 = arith.constant 2 : index
    %c0_76 = arith.constant 0 : index
    %c0_77 = arith.constant 0 : index
    %c0_78 = arith.constant 0 : index
    %84 = vector.load %arg3[%c2_75, %c0_76, %c0_77, %c0_78] : memref<3x3x128x128xbf16, #tpu.memory_space<vmem>>, vector<1x1x128x128xbf16>
    %85 = vector.shape_cast %84 : vector<1x1x128x128xbf16> to vector<128x128xbf16>
    %cst_79 = arith.constant dense<0.000000e+00> : vector<384x128xf32>
    %86 = tpu.matmul %83, %85, %cst_79 {dimension_numbers = #tpu.dot_dimension_numbers<[1], [0], [0], [1], [0, 0, 1, 1], [], []>} : vector<384x128xbf16>, vector<128x128xbf16>, vector<384x128xf32> -> vector<384x128xf32>
    %87 = arith.addf %80, %86 : vector<384x128xf32>
    %c0_80 = arith.constant 0 : index
    %c0_81 = arith.constant 0 : index
    %88 = vector.load %arg8[%c0_80, %c0_81] : memref<384x128xf32, #tpu.memory_space<vmem>>, vector<384x128xf32>
    tpu.vector_store %arg8[%c0_80, %c0_81], %87 {strides = array<i32>} : memref<384x128xf32, #tpu.memory_space<vmem>>, vector<384x128xf32>,
    %c0_82 = arith.constant 0 : index
    %c0_83 = arith.constant 0 : index
    %89 = vector.load %arg8[%c0_82, %c0_83] : memref<384x128xf32, #tpu.memory_space<vmem>>, vector<384x128xf32>
    %90 = arith.index_cast %0 : i32 to index
    %c98 = arith.constant 98 : index
    %c0_84 = arith.constant 0 : index
    %91 = vector.load %arg6[%90, %c98, %c0_84] : memref<2x504x128xbf16, #tpu.memory_space<vmem>>, vector<1x384x128xbf16>
    %92 = vector.shape_cast %91 : vector<1x384x128xbf16> to vector<384x128xbf16>
    %c2_85 = arith.constant 2 : index
    %c1_86 = arith.constant 1 : index
    %c0_87 = arith.constant 0 : index
    %c0_88 = arith.constant 0 : index
    %93 = vector.load %arg3[%c2_85, %c1_86, %c0_87, %c0_88] : memref<3x3x128x128xbf16, #tpu.memory_space<vmem>>, vector<1x1x128x128xbf16>
    %94 = vector.shape_cast %93 : vector<1x1x128x128xbf16> to vector<128x128xbf16>
    %cst_89 = arith.constant dense<0.000000e+00> : vector<384x128xf32>
    %95 = tpu.matmul %92, %94, %cst_89 {dimension_numbers = #tpu.dot_dimension_numbers<[1], [0], [0], [1], [0, 0, 1, 1], [], []>} : vector<384x128xbf16>, vector<128x128xbf16>, vector<384x128xf32> -> vector<384x128xf32>
    %96 = arith.addf %89, %95 : vector<384x128xf32>
    %c0_90 = arith.constant 0 : index
    %c0_91 = arith.constant 0 : index
    %97 = vector.load %arg8[%c0_90, %c0_91] : memref<384x128xf32, #tpu.memory_space<vmem>>, vector<384x128xf32>
    tpu.vector_store %arg8[%c0_90, %c0_91], %96 {strides = array<i32>} : memref<384x128xf32, #tpu.memory_space<vmem>>, vector<384x128xf32>,
    %c0_92 = arith.constant 0 : index
    %c0_93 = arith.constant 0 : index
    %98 = vector.load %arg8[%c0_92, %c0_93] : memref<384x128xf32, #tpu.memory_space<vmem>>, vector<384x128xf32>
    %99 = arith.index_cast %0 : i32 to index
    %c100 = arith.constant 100 : index
    %c0_94 = arith.constant 0 : index
    %100 = vector.load %arg6[%99, %c100, %c0_94] : memref<2x504x128xbf16, #tpu.memory_space<vmem>>, vector<1x384x128xbf16>
    %101 = vector.shape_cast %100 : vector<1x384x128xbf16> to vector<384x128xbf16>
    %c2_95 = arith.constant 2 : index
    %c2_96 = arith.constant 2 : index
    %c0_97 = arith.constant 0 : index
    %c0_98 = arith.constant 0 : index
    %102 = vector.load %arg3[%c2_95, %c2_96, %c0_97, %c0_98] : memref<3x3x128x128xbf16, #tpu.memory_space<vmem>>, vector<1x1x128x128xbf16>
    %103 = vector.shape_cast %102 : vector<1x1x128x128xbf16> to vector<128x128xbf16>
    %cst_99 = arith.constant dense<0.000000e+00> : vector<384x128xf32>
    %104 = tpu.matmul %101, %103, %cst_99 {dimension_numbers = #tpu.dot_dimension_numbers<[1], [0], [0], [1], [0, 0, 1, 1], [], []>} : vector<384x128xbf16>, vector<128x128xbf16>, vector<384x128xf32> -> vector<384x128xf32>
    %105 = arith.addf %98, %104 : vector<384x128xf32>
    %c0_100 = arith.constant 0 : index
    %c0_101 = arith.constant 0 : index
    %106 = vector.load %arg8[%c0_100, %c0_101] : memref<384x128xf32, #tpu.memory_space<vmem>>, vector<384x128xf32>
    tpu.vector_store %arg8[%c0_100, %c0_101], %105 {strides = array<i32>} : memref<384x128xf32, #tpu.memory_space<vmem>>, vector<384x128xf32>,
    %c0_102 = arith.constant 0 : index
    %c0_103 = arith.constant 0 : index
    %107 = vector.load %arg8[%c0_102, %c0_103] : memref<384x128xf32, #tpu.memory_space<vmem>>, vector<384x128xf32>
    %cst_104 = arith.constant 0.000000e+00 : f32
    %108 = vector.broadcast %cst_104 : f32 to vector<384x128xf32>
    %109 = arith.maximumf %107, %108 : vector<384x128xf32>
    %110 = vector.shape_cast %109 : vector<384x128xf32> to vector<16x24x128xf32>
    %111 = vector.extract_strided_slice %110 {offsets = [0, 0, 0], sizes = [16, 16, 128], strides = [1, 1, 1]} : vector<16x24x128xf32> to vector<16x16x128xf32>
    %c0_105 = arith.constant 0 : index
    %c0_106 = arith.constant 0 : index
    %c0_107 = arith.constant 0 : index
    %c0_108 = arith.constant 0 : index
    %112 = vector.load %arg5[%c0_105, %c0_106, %c0_107, %c0_108] : memref<1x16x16x128xf32, #tpu.memory_space<vmem>>, vector<1x16x16x128xf32>
    %113 = vector.shape_cast %112 : vector<1x16x16x128xf32> to vector<16x16x128xf32>
    %114 = vector.shape_cast %111 : vector<16x16x128xf32> to vector<1x16x16x128xf32>
    tpu.vector_store %arg5[%c0_105, %c0_106, %c0_107, %c0_108], %114 {strides = array<i32>} : memref<1x16x16x128xf32, #tpu.memory_space<vmem>>, vector<1x16x16x128xf32>,
    return
  }
  func.func @transform_1(%arg0: i32, %arg1: i32) -> (i32, i32, i32, i32) {
    %c0_i32 = arith.constant 0 : i32
    %c0_i32_0 = arith.constant 0 : i32
    %c0_i32_1 = arith.constant 0 : i32
    %c0_i32_2 = arith.constant 0 : i32
    %c0_i32_3 = arith.constant 0 : i32
    return %c0_i32, %c0_i32_0, %c0_i32_1, %c0_i32_2 : i32, i32, i32, i32
  }
  func.func @transform_2(%arg0: i32, %arg1: i32) -> (i32, i32) {
    %c0_i32 = arith.constant 0 : i32
    %c0_i32_0 = arith.constant 0 : i32
    %c0_i32_1 = arith.constant 0 : i32
    return %c0_i32, %c0_i32_0 : i32, i32
  }
  func.func @transform_3(%arg0: i32, %arg1: i32) -> (i32, i32, i32, i32) {
    %c0_i32 = arith.constant 0 : i32
    %c0_i32_0 = arith.constant 0 : i32
    %c0_i32_1 = arith.constant 0 : i32
    return %arg0, %arg1, %c0_i32, %c0_i32_0 : i32, i32, i32, i32
  }
}

</mosaic_0001>

<llo_original>
// kernel: tpu_custom_call.1
$region0: #{tpu_custom_call.1}
  #allocation0 [shape = 'u32[]', space=smem, size = 0x4, offset = 0x4, fixed_abs, tag = 'smem constant byte address 0x4 - core index']
  #allocation1 [shape = 'u32[144,128]{1,0:T(1,128)}', space=vmem, size = 0x12000, scoped, tag = 'internal scratch']
  #allocation2 [shape = 'bf16[2,504,128]{2,1,0:T(8,128)(2,1)}', space=vmem, size = 0x3f000, scoped, tag = 'scratch operand']
  #allocation3 [shape = 's32[2]{0}', space=sflag, size = 0x8, scoped, tag = 'scratch operand']
  #allocation4 [shape = 'f32[384,128]{1,0:T(8,128)}', space=vmem, size = 0x30000, scoped, tag = 'scratch operand']
  #allocation9 [shape = 's32[]', space=sflag, size = 0x4, offset = 0, fixed_abs, tag = 'sflag constant byte address 0x0 - dummy sync flag']
  #allocation10 [shape = 's32[]', space=sflag, size = 0x4, offset = 0, fixed_abs, tag = 'sflag constant byte address 0x0 - dummy sync flag']
  #allocation11 [shape = 'u32[]', space=smem, size = 0x4, offset = 0x44, fixed_abs, tag = 'smem constant byte address 0x44 - assertion arg 0']
  #allocation12 [shape = 'u32[]', space=smem, size = 0x4, offset = 0x48, fixed_abs, tag = 'smem constant byte address 0x48 - assertion arg 1']
  #allocation13 [shape = 's32[]', space=sflag, size = 0x4, offset = 0, fixed_abs, tag = 'sflag constant byte address 0x0 - dummy sync flag']
  #allocation14 [shape = 's32[]', space=sflag, size = 0x4, offset = 0, fixed_abs, tag = 'sflag constant byte address 0x0 - dummy sync flag']
  %s0 = inlined_call_operand.hbm [shape: bf16[2,504,128], index: 0, kind: input, shape index: {}]
  %s1 = inlined_call_operand.hbm [shape: bf16[3,3,128,128], index: 1, kind: input, shape index: {}]
  %s2 = inlined_call_operand.vmem [shape: f32[1,128], index: 2, kind: input, shape index: {}]
  %s3 = inlined_call_operand.hbm [shape: f32[2,16,16,128], index: 3, kind: output, shape index: {}]
  %s4 = sld [smem:[#allocation0]]
  $region69: #{tpu_custom_call.1} parent=0
    _
  %s6 = ssub.s32 1, %s4
  %s7 = scalar_select 0, %s6, %s4
  $region1: #{tpu_custom_call.1} parent=0
    #allocation5 [shape = 'u8[294912]{0}', space=vmem, size = 0x48000, scoped, tag = 'input window, operand 1, single buffered']
    #allocation6 [shape = 's32[2]{0}', space=sflag, size = 0x8, scoped, tag = 'scoped memory for tpu_custom_call.1']
    #allocation7 [shape = 's32[2]{0}', space=sflag, size = 0x8, scoped, tag = 'scoped memory for tpu_custom_call.1']
    #allocation8 [shape = 'u8[262144]{0}', space=vmem, size = 0x40000, scoped, tag = 'output window, operand 0']
    %8 = vsyncpa [#allocation6], 0
    %9 = vsyncpa [#allocation7], 0
    %s10 = scalar_lea.sflag [#allocation7], 1
    %11 = vsyncpa %s10, 0
    loop: start=0, step=1, limit=4
    $region2: #{tpu_custom_call.1} parent=1 // loop_pre_header
      _
    $region3: #{tpu_custom_call.1} parent=1 // loop_header
      %s13 = sphi 0, %s17
      %p14 = scmp.ge.s32.totalorder %s13, 4
      %s20 = sphi 0, %s32
      %s21 = sphi 0, %s28
      %s22 = sphi 0, %s20
      %s23 = sphi 0, %s21
      %s24 = sphi 0, %s22
      %s25 = sphi 0, %s23
      %s33 = sphi 0, %s33
      %s35 = sphi 0, %s33
      %s36 = sphi 0, %s35
      %s50 = sphi 0, %s36
      %s54 = sphi 0, %s54
      %s56 = sphi 0, %s54
      %s57 = sphi 0, %s56
      %s71 = sphi 0, %s57
      %s79 = sphi 0, %s81
      %s82 = sphi 0, %s79
      %s83 = sphi 0, %s82
      %s99 = sphi 0, %s83
    $region4: #{tpu_custom_call.1} parent=1 // loop_header_branch
      %16 = sbr.rel (%p14) target = $region8
    $region5: #{tpu_custom_call.1} parent=1 // loop_body
      %s18 = ssub.s32 %s13, 1
      %s19 = ssub.s32 %s13, 2
      %s26 = sadd.s32 1, %s21
      %p27 = scmp.ge.s32.totalorder %s26, 1
      %s28 = scalar_select %p27, 0, %s26
      %s29 = sadd.s32 1, %s20
      %s30 = scalar_select %p27, %s29, %s20
      %p31 = scmp.ge.s32.totalorder %s30, 2
      %s32 = scalar_select %p31, 0, %s30
      %s34 = sadd.s32 %s33, 1
      %p37 = scmp.eq.s32.totalorder %s13, 1
      %p38 = scmp.ne.s32.totalorder %s33, %s35
      %p39 = scmp.eq.s32.totalorder %s13, 0
      %p40 = por %p38, %p39
      %p41 = scmp.ne.s32.totalorder %s33, %s35
      %p42 = scmp.eq.s32.totalorder %s18, 1
      %p43 = por %p41, %p42
      %p44 = scmp.ne.s32.totalorder %s35, %s36
      %p45 = scmp.eq.s32.totalorder %s18, 0
      %p46 = por %p44, %p45
      %p47 = scmp.ne.s32.totalorder %s35, %s36
      %p48 = scmp.eq.s32.totalorder %s19, 1
      %p49 = por %p47, %p48
      %p51 = scmp.ne.s32.totalorder %s36, %s50
      %p52 = scmp.eq.s32.totalorder %s19, 0
      %p53 = por %p51, %p52
      %s55 = sadd.s32 %s54, 1
      %p58 = scmp.eq.s32.totalorder %s13, 1
      %p59 = scmp.ne.s32.totalorder %s54, %s56
      %p60 = scmp.eq.s32.totalorder %s13, 0
      %p61 = por %p59, %p60
      %p62 = scmp.ne.s32.totalorder %s54, %s56
      %p63 = scmp.eq.s32.totalorder %s18, 1
      %p64 = por %p62, %p63
      %p65 = scmp.ne.s32.totalorder %s56, %s57
      %p66 = scmp.eq.s32.totalorder %s18, 0
      %p67 = por %p65, %p66
      %p68 = scmp.ne.s32.totalorder %s56, %s57
      %p69 = scmp.eq.s32.totalorder %s19, 1
      %p70 = por %p68, %p69
      %p72 = scmp.ne.s32.totalorder %s57, %s71
      %p73 = scmp.eq.s32.totalorder %s19, 0
      %p74 = por %p72, %p73
      %s75 = ssub.s32 %s20, %s32
      %s76 = ssub.s32 %s21, %s28
      %s77 = sor.u32 %s75, %s76
      %p78 = scmp.eq.s32.totalorder %s77, 0
      %s80 = sadd.s32 %s79, 1
      %s81 = scalar_select %p78, %s79, %s80
      %p84 = pneg %p78
      %p85 = scmp.eq.s32.totalorder %s13, 1
      %p86 = por %p84, %p85
      %p87 = scmp.ne.s32.totalorder %s79, %s82
      %p88 = scmp.eq.s32.totalorder %s13, 0
      %p89 = por %p87, %p88
      %p90 = scmp.ne.s32.totalorder %s79, %s82
      %p91 = scmp.eq.s32.totalorder %s18, 1
      %p92 = por %p90, %p91
      %p93 = scmp.ne.s32.totalorder %s82, %s83
      %p94 = scmp.eq.s32.totalorder %s18, 0
      %p95 = por %p93, %p94
      %p96 = scmp.ne.s32.totalorder %s82, %s83
      %p97 = scmp.eq.s32.totalorder %s19, 1
      %p98 = por %p96, %p97
      %p100 = scmp.ne.s32.totalorder %s83, %s99
      %p101 = scmp.eq.s32.totalorder %s19, 0
      %p102 = por %p100, %p101
      %p103 = scmp.le.s32.totalorder 1, %s13
      %p104 = scmp.lt.s32.totalorder %s13, 3
      %p105 = pnand %p103, %p104
      %p106 = pneg %p105
      // Predicated region
      $region9: #{tpu_custom_call.1} parent=5 // pred_check
        _
      $region10: #{tpu_custom_call.1} parent=5 // pred_check_branch
        %108 = sbr.rel (%p105) target = $region12
      $region11: #{tpu_custom_call.1} parent=5 // pred_region
        %s109 = ssub.s32 %s13, 1
        // Predicated region
        $region13: #{tpu_custom_call.1} parent=11 // pred_check
          %p110 = pneg %p46
        $region14: #{tpu_custom_call.1} parent=11 // pred_check_branch
          %112 = sbr.rel (%p110) target = $region16
        $region15: #{tpu_custom_call.1} parent=11 // pred_region
          %s114 = ssub.s32 9216, 9216
          %115 = vsyncadd [#allocation6], %s114
          %s116 = sshll.u32 [#allocation5], 4
          %s117 = int_to_ptr.vmem [resolvable:$true] %s116
          %122 = dma.hbm_to_vmem [thread:$0]  %s1, 9216, %s117, [#allocation6], 64, 64, 4
        $region16: #{tpu_custom_call.1} parent=11 // pred_fallthru
          _
        // Predicated region
        $region17: #{tpu_custom_call.1} parent=11 // pred_check
          %p123 = pneg %p67
        $region18: #{tpu_custom_call.1} parent=11 // pred_check_branch
          %125 = sbr.rel (%p123) target = $region20
        $region19: #{tpu_custom_call.1} parent=11 // pred_region
          _
        $region20: #{tpu_custom_call.1} parent=11 // pred_fallthru
          _
      $region12: #{tpu_custom_call.1} parent=5 // pred_fallthru
        _
      %p126 = scmp.lt.s32.totalorder %s13, 2
      // Predicated region
      $region21: #{tpu_custom_call.1} parent=5 // pred_check
        %p127 = pneg %p126
      $region22: #{tpu_custom_call.1} parent=5 // pred_check_branch
        %129 = sbr.rel (%p127) target = $region24
      $region23: #{tpu_custom_call.1} parent=5 // pred_region
        _
      $region24: #{tpu_custom_call.1} parent=5 // pred_fallthru
        _
      %p130 = scmp.le.s32.totalorder 1, %s13
      %p131 = scmp.lt.s32.totalorder %s13, 3
      %p132 = pnand %p130, %p131
      %p133 = pneg %p132
      // Predicated region
      $region25: #{tpu_custom_call.1} parent=5 // pred_check
        _
      $region26: #{tpu_custom_call.1} parent=5 // pred_check_branch
        %135 = sbr.rel (%p132) target = $region28
      $region27: #{tpu_custom_call.1} parent=5 // pred_region
        %s136 = ssub.s32 %s13, 1
        // Predicated region
        $region29: #{tpu_custom_call.1} parent=27 // pred_check
          %p137 = pneg %p46
        $region30: #{tpu_custom_call.1} parent=27 // pred_check_branch
          %139 = sbr.rel (%p137) target = $region32
        $region31: #{tpu_custom_call.1} parent=27 // pred_region
          %140 = dma.done [#allocation6], 9216
        $region32: #{tpu_custom_call.1} parent=27 // pred_fallthru
          _
        %p141 = pneg %p46
        %p142 = pneg %p43
        %p143 = pneg %p67
        %p144 = pneg %p64
        %p145 = pneg %p95
        %p146 = pneg %p92
        %s147 = sand.u32 %s82, 1
        %s148 = scalar_lea.sflag [#allocation7], %s147
        %s149 = sand.u32 %s82, 1
        %s150 = smul.addr %s149, 256
        %s151 = scalar_lea.vmem [#allocation8], %s150
        %s152 = smul.u32 16, %s23
        %p154 = scmp.lt.s32.totalorder %s23, 0
        %s155 = ssub.s32 0, %s23
        %s156 = scalar_select %p154, %s155, %s23
        %s157 = sand.u32 %s156, 1
        %s158 = ssub.s32 0, %s157
        %s159 = scalar_select %p154, %s158, %s157
        %p160 = scmp.eq.s32.totalorder %s23, 0
        // Predicated region
        $region33: #{tpu_custom_call.1} parent=27 // pred_check
          %p161 = pneg %p160
        $region34: #{tpu_custom_call.1} parent=27 // pred_check_branch
          %163 = sbr.rel (%p161) target = $region36
        $region35: #{tpu_custom_call.1} parent=27 // pred_region
          %s164 = smul.u32 %s22, 63
          %s165 = smul.addr %s164, 64
          %s166 = scalar_lea.hbm %s0, %s165
          // Predicated region
          $region37: #{tpu_custom_call.1} parent=35 // pred_check
            _
          $region38: #{tpu_custom_call.1} parent=35 // pred_check_branch
            %168 = sbr.rel target = $region40
          $region39: #{tpu_custom_call.1} parent=35 // pred_region
            %169 = sst [smem:[#allocation11]] [#allocation10]
            %170 = sst [smem:[#allocation12]] [#allocation9]
          $region40: #{tpu_custom_call.1} parent=35 // pred_fallthru
            _
          %172 = shalt.err (0)
          %s174 = sshll.u32 [#allocation2], 4
          %s175 = int_to_ptr.vmem [resolvable:$true] %s174
          %177 = dma.hbm_to_vmem [thread:$0]  %s166, 4032, %s175, [#allocation3]
        $region36: #{tpu_custom_call.1} parent=27 // pred_fallthru
          _
        %s178 = scalar_lea.sflag [#allocation3], %s159
        %s179 = smul.u32 4, 63
        %s180 = smul.u32 %s179, 1
        %s181 = sshll.u32 %s180, 4
        %182 = dma.done %s178, %s181
        %s183 = sadd.s32 %s23, 1
        %p184 = scmp.lt.s32.totalorder %s183, 1
        // Predicated region
        $region41: #{tpu_custom_call.1} parent=27 // pred_check
          %p185 = pneg %p184
        $region42: #{tpu_custom_call.1} parent=27 // pred_check_branch
          %187 = sbr.rel (%p185) target = $region44
        $region43: #{tpu_custom_call.1} parent=27 // pred_region
          %s188 = ssub.s32 1, %s159
          %s189 = smul.u32 %s183, 384
          %s190 = sshra.s32 %s189, 3
          %s191 = sand.u32 %s189, 7
          %s192 = smul.u32 %s22, 63
          %s193 = sadd.s32 %s190, %s192
          %s194 = smul.addr %s193, 64
          %s195 = scalar_lea.hbm %s0, %s194
          %s196 = smul.u32 %s188, 63
          %s197 = smul.addr %s196, 4
          %s198 = scalar_lea.vmem [#allocation2], %s197
          %s199 = scalar_lea.sflag [#allocation3], %s188
          // Predicated region
          $region45: #{tpu_custom_call.1} parent=43 // pred_check
            _
          $region46: #{tpu_custom_call.1} parent=43 // pred_check_branch
            %201 = sbr.rel target = $region48
          $region47: #{tpu_custom_call.1} parent=43 // pred_region
            %202 = sst [smem:[#allocation11]] [#allocation14]
            %203 = sst [smem:[#allocation12]] [#allocation13]
          $region48: #{tpu_custom_call.1} parent=43 // pred_fallthru
            _
          %205 = shalt.err (0)
          %s207 = sshll.u32 %s198, 4
          %s208 = int_to_ptr.vmem [resolvable:$true] %s207
          %210 = dma.hbm_to_vmem [thread:$0]  %s195, 4032, %s208, %s199
        $region44: #{tpu_custom_call.1} parent=27 // pred_fallthru
          _
        %p211 = scmp.eq.s32.totalorder %s159, 0
        // Predicated region
        $region49: #{tpu_custom_call.1} parent=27 // pred_check
          %p212 = pneg %p211
        $region50: #{tpu_custom_call.1} parent=27 // pred_check_branch
          %214 = sbr.rel (%p212) target = $region52
        $region51: #{tpu_custom_call.1} parent=27 // pred_region
          %v215 = vld [vmem:[#allocation2] sm:$0xf]
          %v216 = vld [vmem:[#allocation2 + $0x4] sm:$0xf]
          %v217 = vld [vmem:[#allocation2 + $0x8] sm:$0xf]
          %v218 = vld [vmem:[#allocation2 + $0xc] sm:$0xf]
          %v219 = vld [vmem:[#allocation2 + $0x10] sm:$0xf]
          %v220 = vld [vmem:[#allocation2 + $0x14] sm:$0xf]
          %v221 = vld [vmem:[#allocation2 + $0x18] sm:$0xf]
          %v222 = vld [vmem:[#allocation2 + $0x1c] sm:$0xf]
          %v223 = vld [vmem:[#allocation2 + $0x20] sm:$0xf]
          %v224 = vld [vmem:[#allocation2 + $0x24] sm:$0xf]
          %v225 = vld [vmem:[#allocation2 + $0x28] sm:$0xf]
          %v226 = vld [vmem:[#allocation2 + $0x2c] sm:$0xf]
          %v227 = vld [vmem:[#allocation2 + $0x30] sm:$0xf]
          %v228 = vld [vmem:[#allocation2 + $0x34] sm:$0xf]
          %v229 = vld [vmem:[#allocation2 + $0x38] sm:$0xf]
          %v230 = vld [vmem:[#allocation2 + $0x3c] sm:$0xf]
          %v231 = vld [vmem:[#allocation2 + $0x40] sm:$0xf]
          %v232 = vld [vmem:[#allocation2 + $0x44] sm:$0xf]
          %v233 = vld [vmem:[#allocation2 + $0x48] sm:$0xf]
          %v234 = vld [vmem:[#allocation2 + $0x4c] sm:$0xf]
          %v235 = vld [vmem:[#allocation2 + $0x50] sm:$0xf]
          %v236 = vld [vmem:[#allocation2 + $0x54] sm:$0xf]
          %v237 = vld [vmem:[#allocation2 + $0x58] sm:$0xf]
          %v238 = vld [vmem:[#allocation2 + $0x5c] sm:$0xf]
          %v239 = vld [vmem:[#allocation2 + $0x60] sm:$0xf]
          %v240 = vld [vmem:[#allocation2 + $0x64] sm:$0xf]
          %v241 = vld [vmem:[#allocation2 + $0x68] sm:$0xf]
          %v242 = vld [vmem:[#allocation2 + $0x6c] sm:$0xf]
          %v243 = vld [vmem:[#allocation2 + $0x70] sm:$0xf]
          %v244 = vld [vmem:[#allocation2 + $0x74] sm:$0xf]
          %v245 = vld [vmem:[#allocation2 + $0x78] sm:$0xf]
          %v246 = vld [vmem:[#allocation2 + $0x7c] sm:$0xf]
          %v247 = vld [vmem:[#allocation2 + $0x80] sm:$0xf]
          %v248 = vld [vmem:[#allocation2 + $0x84] sm:$0xf]
          %v249 = vld [vmem:[#allocation2 + $0x88] sm:$0xf]
          %v250 = vld [vmem:[#allocation2 + $0x8c] sm:$0xf]
          %v251 = vld [vmem:[#allocation2 + $0x90] sm:$0xf]
          %v252 = vld [vmem:[#allocation2 + $0x94] sm:$0xf]
          %v253 = vld [vmem:[#allocation2 + $0x98] sm:$0xf]
          %v254 = vld [vmem:[#allocation2 + $0x9c] sm:$0xf]
          %v255 = vld [vmem:[#allocation2 + $0xa0] sm:$0xf]
          %v256 = vld [vmem:[#allocation2 + $0xa4] sm:$0xf]
          %v257 = vld [vmem:[#allocation2 + $0xa8] sm:$0xf]
          %v258 = vld [vmem:[#allocation2 + $0xac] sm:$0xf]
          %v259 = vld [vmem:[#allocation2 + $0xb0] sm:$0xf]
          %v260 = vld [vmem:[#allocation2 + $0xb4] sm:$0xf]
          %v261 = vld [vmem:[#allocation2 + $0xb8] sm:$0xf]
          %v262 = vld [vmem:[#allocation2 + $0xbc] sm:$0xf]
          %v263 = vld [vmem:[#allocation2 + $0xc0] sm:$0xf]
          %v264 = vld [vmem:[#allocation2 + $0xc4] sm:$0xf]
          %v265 = vld [vmem:[#allocation2 + $0xc8] sm:$0xf]
          %v266 = vld [vmem:[#allocation2 + $0xcc] sm:$0xf]
          %v267 = vld [vmem:[#allocation2 + $0xd0] sm:$0xf]
          %v268 = vld [vmem:[#allocation2 + $0xd4] sm:$0xf]
          %v269 = vld [vmem:[#allocation2 + $0xd8] sm:$0xf]
          %v270 = vld [vmem:[#allocation2 + $0xdc] sm:$0xf]
          %v271 = vld [vmem:[#allocation2 + $0xe0] sm:$0xf]
          %v272 = vld [vmem:[#allocation2 + $0xe4] sm:$0xf]
          %v273 = vld [vmem:[#allocation2 + $0xe8] sm:$0xf]
          %v274 = vld [vmem:[#allocation2 + $0xec] sm:$0xf]
          %v275 = vld [vmem:[#allocation2 + $0xf0] sm:$0xf]
          %v276 = vld [vmem:[#allocation2 + $0xf4] sm:$0xf]
          %v277 = vld [vmem:[#allocation2 + $0xf8] sm:$0xf]
          %v278 = vmax.bf16 %v215, 0
          %v279 = vmax.bf16 %v216, 0
          %v280 = vmax.bf16 %v217, 0
          %v281 = vmax.bf16 %v218, 0
          %v282 = vmax.bf16 %v219, 0
          %v283 = vmax.bf16 %v220, 0
          %v284 = vmax.bf16 %v221, 0
          %v285 = vmax.bf16 %v222, 0
          %v286 = vmax.bf16 %v223, 0
          %v287 = vmax.bf16 %v224, 0
          %v288 = vmax.bf16 %v225, 0
          %v289 = vmax.bf16 %v226, 0
          %v290 = vmax.bf16 %v227, 0
          %v291 = vmax.bf16 %v228, 0
          %v292 = vmax.bf16 %v229, 0
          %v293 = vmax.bf16 %v230, 0
          %v294 = vmax.bf16 %v231, 0
          %v295 = vmax.bf16 %v232, 0
          %v296 = vmax.bf16 %v233, 0
          %v297 = vmax.bf16 %v234, 0
          %v298 = vmax.bf16 %v235, 0
          %v299 = vmax.bf16 %v236, 0
          %v300 = vmax.bf16 %v237, 0
          %v301 = vmax.bf16 %v238, 0
          %v302 = vmax.bf16 %v239, 0
          %v303 = vmax.bf16 %v240, 0
          %v304 = vmax.bf16 %v241, 0
          %v305 = vmax.bf16 %v242, 0
          %v306 = vmax.bf16 %v243, 0
          %v307 = vmax.bf16 %v244, 0
          %v308 = vmax.bf16 %v245, 0
          %v309 = vmax.bf16 %v246, 0
          %v310 = vmax.bf16 %v247, 0
          %v311 = vmax.bf16 %v248, 0
          %v312 = vmax.bf16 %v249, 0
          %v313 = vmax.bf16 %v250, 0
          %v314 = vmax.bf16 %v251, 0
          %v315 = vmax.bf16 %v252, 0
          %v316 = vmax.bf16 %v253, 0
          %v317 = vmax.bf16 %v254, 0
          %v318 = vmax.bf16 %v255, 0
          %v319 = vmax.bf16 %v256, 0
          %v320 = vmax.bf16 %v257, 0
          %v321 = vmax.bf16 %v258, 0
          %v322 = vmax.bf16 %v259, 0
          %v323 = vmax.bf16 %v260, 0
          %v324 = vmax.bf16 %v261, 0
          %v325 = vmax.bf16 %v262, 0
          %v326 = vmax.bf16 %v263, 0
          %v327 = vmax.bf16 %v264, 0
          %v328 = vmax.bf16 %v265, 0
          %v329 = vmax.bf16 %v266, 0
          %v330 = vmax.bf16 %v267, 0
          %v331 = vmax.bf16 %v268, 0
          %v332 = vmax.bf16 %v269, 0
          %v333 = vmax.bf16 %v270, 0
          %v334 = vmax.bf16 %v271, 0
          %v335 = vmax.bf16 %v272, 0
          %v336 = vmax.bf16 %v273, 0
          %v337 = vmax.bf16 %v274, 0
          %v338 = vmax.bf16 %v275, 0
          %v339 = vmax.bf16 %v276, 0
          %v340 = vmax.bf16 %v277, 0
          %341 = vst [vmem:[#allocation2] sm:$0xf] %v278
          %342 = vst [vmem:[#allocation2 + $0x4] sm:$0xf] %v279
          %343 = vst [vmem:[#allocation2 + $0x8] sm:$0xf] %v280
          %344 = vst [vmem:[#allocation2 + $0xc] sm:$0xf] %v281
          %345 = vst [vmem:[#allocation2 + $0x10] sm:$0xf] %v282
          %346 = vst [vmem:[#allocation2 + $0x14] sm:$0xf] %v283
          %347 = vst [vmem:[#allocation2 + $0x18] sm:$0xf] %v284
          %348 = vst [vmem:[#allocation2 + $0x1c] sm:$0xf] %v285
          %349 = vst [vmem:[#allocation2 + $0x20] sm:$0xf] %v286
          %350 = vst [vmem:[#allocation2 + $0x24] sm:$0xf] %v287
          %351 = vst [vmem:[#allocation2 + $0x28] sm:$0xf] %v288
          %352 = vst [vmem:[#allocation2 + $0x2c] sm:$0xf] %v289
          %353 = vst [vmem:[#allocation2 + $0x30] sm:$0xf] %v290
          %354 = vst [vmem:[#allocation2 + $0x34] sm:$0xf] %v291
          %355 = vst [vmem:[#allocation2 + $0x38] sm:$0xf] %v292
          %356 = vst [vmem:[#allocation2 + $0x3c] sm:$0xf] %v293
          %357 = vst [vmem:[#allocation2 + $0x40] sm:$0xf] %v294
          %358 = vst [vmem:[#allocation2 + $0x44] sm:$0xf] %v295
          %359 = vst [vmem:[#allocation2 + $0x48] sm:$0xf] %v296
          %360 = vst [vmem:[#allocation2 + $0x4c] sm:$0xf] %v297
          %361 = vst [vmem:[#allocation2 + $0x50] sm:$0xf] %v298
          %362 = vst [vmem:[#allocation2 + $0x54] sm:$0xf] %v299
          %363 = vst [vmem:[#allocation2 + $0x58] sm:$0xf] %v300
          %364 = vst [vmem:[#allocation2 + $0x5c] sm:$0xf] %v301
          %365 = vst [vmem:[#allocation2 + $0x60] sm:$0xf] %v302
          %366 = vst [vmem:[#allocation2 + $0x64] sm:$0xf] %v303
          %367 = vst [vmem:[#allocation2 + $0x68] sm:$0xf] %v304
          %368 = vst [vmem:[#allocation2 + $0x6c] sm:$0xf] %v305
          %369 = vst [vmem:[#allocation2 + $0x70] sm:$0xf] %v306
          %370 = vst [vmem:[#allocation2 + $0x74] sm:$0xf] %v307
          %371 = vst [vmem:[#allocation2 + $0x78] sm:$0xf] %v308
          %372 = vst [vmem:[#allocation2 + $0x7c] sm:$0xf] %v309
          %373 = vst [vmem:[#allocation2 + $0x80] sm:$0xf] %v310
          %374 = vst [vmem:[#allocation2 + $0x84] sm:$0xf] %v311
          %375 = vst [vmem:[#allocation2 + $0x88] sm:$0xf] %v312
          %376 = vst [vmem:[#allocation2 + $0x8c] sm:$0xf] %v313
          %377 = vst [vmem:[#allocation2 + $0x90] sm:$0xf] %v314
          %378 = vst [vmem:[#allocation2 + $0x94] sm:$0xf] %v315
          %379 = vst [vmem:[#allocation2 + $0x98] sm:$0xf] %v316
          %380 = vst [vmem:[#allocation2 + $0x9c] sm:$0xf] %v317
          %381 = vst [vmem:[#allocation2 + $0xa0] sm:$0xf] %v318
          %382 = vst [vmem:[#allocation2 + $0xa4] sm:$0xf] %v319
          %383 = vst [vmem:[#allocation2 + $0xa8] sm:$0xf] %v320
          %384 = vst [vmem:[#allocation2 + $0xac] sm:$0xf] %v321
          %385 = vst [vmem:[#allocation2 + $0xb0] sm:$0xf] %v322
          %386 = vst [vmem:[#allocation2 + $0xb4] sm:$0xf] %v323
          %387 = vst [vmem:[#allocation2 + $0xb8] sm:$0xf] %v324
          %388 = vst [vmem:[#allocation2 + $0xbc] sm:$0xf] %v325
          %389 = vst [vmem:[#allocation2 + $0xc0] sm:$0xf] %v326
          %390 = vst [vmem:[#allocation2 + $0xc4] sm:$0xf] %v327
          %391 = vst [vmem:[#allocation2 + $0xc8] sm:$0xf] %v328
          %392 = vst [vmem:[#allocation2 + $0xcc] sm:$0xf] %v329
          %393 = vst [vmem:[#allocation2 + $0xd0] sm:$0xf] %v330
          %394 = vst [vmem:[#allocation2 + $0xd4] sm:$0xf] %v331
          %395 = vst [vmem:[#allocation2 + $0xd8] sm:$0xf] %v332
          %396 = vst [vmem:[#allocation2 + $0xdc] sm:$0xf] %v333
          %397 = vst [vmem:[#allocation2 + $0xe0] sm:$0xf] %v334
          %398 = vst [vmem:[#allocation2 + $0xe4] sm:$0xf] %v335
          %399 = vst [vmem:[#allocation2 + $0xe8] sm:$0xf] %v336
          %400 = vst [vmem:[#allocation2 + $0xec] sm:$0xf] %v337
          %401 = vst [vmem:[#allocation2 + $0xf0] sm:$0xf] %v338
          %402 = vst [vmem:[#allocation2 + $0xf4] sm:$0xf] %v339
          %403 = vst [vmem:[#allocation2 + $0xf8] sm:$0xf] %v340
        $region52: #{tpu_custom_call.1} parent=27 // pred_fallthru
          _
        %p404 = scmp.eq.s32.totalorder %s159, 1
        // Predicated region
        $region53: #{tpu_custom_call.1} parent=27 // pred_check
          %p405 = pneg %p404
        $region54: #{tpu_custom_call.1} parent=27 // pred_check_branch
          %407 = sbr.rel (%p405) target = $region56
        $region55: #{tpu_custom_call.1} parent=27 // pred_region
          %s408 = scalar_lea.vmem [#allocation2], 252
          %v409 = vld [vmem:[%s408] sm:$0xf]
          %v410 = vld [vmem:[%s408 + $0x4] sm:$0xf]
          %v411 = vld [vmem:[%s408 + $0x8] sm:$0xf]
          %v412 = vld [vmem:[%s408 + $0xc] sm:$0xf]
          %v413 = vld [vmem:[%s408 + $0x10] sm:$0xf]
          %v414 = vld [vmem:[%s408 + $0x14] sm:$0xf]
          %v415 = vld [vmem:[%s408 + $0x18] sm:$0xf]
          %v416 = vld [vmem:[%s408 + $0x1c] sm:$0xf]
          %v417 = vld [vmem:[%s408 + $0x20] sm:$0xf]
          %v418 = vld [vmem:[%s408 + $0x24] sm:$0xf]
          %v419 = vld [vmem:[%s408 + $0x28] sm:$0xf]
          %v420 = vld [vmem:[%s408 + $0x2c] sm:$0xf]
          %v421 = vld [vmem:[%s408 + $0x30] sm:$0xf]
          %v422 = vld [vmem:[%s408 + $0x34] sm:$0xf]
          %v423 = vld [vmem:[%s408 + $0x38] sm:$0xf]
          %v424 = vld [vmem:[%s408 + $0x3c] sm:$0xf]
          %v425 = vld [vmem:[%s408 + $0x40] sm:$0xf]
          %v426 = vld [vmem:[%s408 + $0x44] sm:$0xf]
          %v427 = vld [vmem:[%s408 + $0x48] sm:$0xf]
          %v428 = vld [vmem:[%s408 + $0x4c] sm:$0xf]
          %v429 = vld [vmem:[%s408 + $0x50] sm:$0xf]
          %v430 = vld [vmem:[%s408 + $0x54] sm:$0xf]
          %v431 = vld [vmem:[%s408 + $0x58] sm:$0xf]
          %v432 = vld [vmem:[%s408 + $0x5c] sm:$0xf]
          %v433 = vld [vmem:[%s408 + $0x60] sm:$0xf]
          %v434 = vld [vmem:[%s408 + $0x64] sm:$0xf]
          %v435 = vld [vmem:[%s408 + $0x68] sm:$0xf]
          %v436 = vld [vmem:[%s408 + $0x6c] sm:$0xf]
          %v437 = vld [vmem:[%s408 + $0x70] sm:$0xf]
          %v438 = vld [vmem:[%s408 + $0x74] sm:$0xf]
          %v439 = vld [vmem:[%s408 + $0x78] sm:$0xf]
          %v440 = vld [vmem:[%s408 + $0x7c] sm:$0xf]
          %v441 = vld [vmem:[%s408 + $0x80] sm:$0xf]
          %v442 = vld [vmem:[%s408 + $0x84] sm:$0xf]
          %v443 = vld [vmem:[%s408 + $0x88] sm:$0xf]
          %v444 = vld [vmem:[%s408 + $0x8c] sm:$0xf]
          %v445 = vld [vmem:[%s408 + $0x90] sm:$0xf]
          %v446 = vld [vmem:[%s408 + $0x94] sm:$0xf]
          %v447 = vld [vmem:[%s408 + $0x98] sm:$0xf]
          %v448 = vld [vmem:[%s408 + $0x9c] sm:$0xf]
          %v449 = vld [vmem:[%s408 + $0xa0] sm:$0xf]
          %v450 = vld [vmem:[%s408 + $0xa4] sm:$0xf]
          %v451 = vld [vmem:[%s408 + $0xa8] sm:$0xf]
          %v452 = vld [vmem:[%s408 + $0xac] sm:$0xf]
          %v453 = vld [vmem:[%s408 + $0xb0] sm:$0xf]
          %v454 = vld [vmem:[%s408 + $0xb4] sm:$0xf]
          %v455 = vld [vmem:[%s408 + $0xb8] sm:$0xf]
          %v456 = vld [vmem:[%s408 + $0xbc] sm:$0xf]
          %v457 = vld [vmem:[%s408 + $0xc0] sm:$0xf]
          %v458 = vld [vmem:[%s408 + $0xc4] sm:$0xf]
          %v459 = vld [vmem:[%s408 + $0xc8] sm:$0xf]
          %v460 = vld [vmem:[%s408 + $0xcc] sm:$0xf]
          %v461 = vld [vmem:[%s408 + $0xd0] sm:$0xf]
          %v462 = vld [vmem:[%s408 + $0xd4] sm:$0xf]
          %v463 = vld [vmem:[%s408 + $0xd8] sm:$0xf]
          %v464 = vld [vmem:[%s408 + $0xdc] sm:$0xf]
          %v465 = vld [vmem:[%s408 + $0xe0] sm:$0xf]
          %v466 = vld [vmem:[%s408 + $0xe4] sm:$0xf]
          %v467 = vld [vmem:[%s408 + $0xe8] sm:$0xf]
          %v468 = vld [vmem:[%s408 + $0xec] sm:$0xf]
          %v469 = vld [vmem:[%s408 + $0xf0] sm:$0xf]
          %v470 = vld [vmem:[%s408 + $0xf4] sm:$0xf]
          %v471 = vld [vmem:[%s408 + $0xf8] sm:$0xf]
          %v472 = vmax.bf16 %v409, 0
          %v473 = vmax.bf16 %v410, 0
          %v474 = vmax.bf16 %v411, 0
          %v475 = vmax.bf16 %v412, 0
          %v476 = vmax.bf16 %v413, 0
          %v477 = vmax.bf16 %v414, 0
          %v478 = vmax.bf16 %v415, 0
          %v479 = vmax.bf16 %v416, 0
          %v480 = vmax.bf16 %v417, 0
          %v481 = vmax.bf16 %v418, 0
          %v482 = vmax.bf16 %v419, 0
          %v483 = vmax.bf16 %v420, 0
          %v484 = vmax.bf16 %v421, 0
          %v485 = vmax.bf16 %v422, 0
          %v486 = vmax.bf16 %v423, 0
          %v487 = vmax.bf16 %v424, 0
          %v488 = vmax.bf16 %v425, 0
          %v489 = vmax.bf16 %v426, 0
          %v490 = vmax.bf16 %v427, 0
          %v491 = vmax.bf16 %v428, 0
          %v492 = vmax.bf16 %v429, 0
          %v493 = vmax.bf16 %v430, 0
          %v494 = vmax.bf16 %v431, 0
          %v495 = vmax.bf16 %v432, 0
          %v496 = vmax.bf16 %v433, 0
          %v497 = vmax.bf16 %v434, 0
          %v498 = vmax.bf16 %v435, 0
          %v499 = vmax.bf16 %v436, 0
          %v500 = vmax.bf16 %v437, 0
          %v501 = vmax.bf16 %v438, 0
          %v502 = vmax.bf16 %v439, 0
          %v503 = vmax.bf16 %v440, 0
          %v504 = vmax.bf16 %v441, 0
          %v505 = vmax.bf16 %v442, 0
          %v506 = vmax.bf16 %v443, 0
          %v507 = vmax.bf16 %v444, 0
          %v508 = vmax.bf16 %v445, 0
          %v509 = vmax.bf16 %v446, 0
          %v510 = vmax.bf16 %v447, 0
          %v511 = vmax.bf16 %v448, 0
          %v512 = vmax.bf16 %v449, 0
          %v513 = vmax.bf16 %v450, 0
          %v514 = vmax.bf16 %v451, 0
          %v515 = vmax.bf16 %v452, 0
          %v516 = vmax.bf16 %v453, 0
          %v517 = vmax.bf16 %v454, 0
          %v518 = vmax.bf16 %v455, 0
          %v519 = vmax.bf16 %v456, 0
          %v520 = vmax.bf16 %v457, 0
          %v521 = vmax.bf16 %v458, 0
          %v522 = vmax.bf16 %v459, 0
          %v523 = vmax.bf16 %v460, 0
          %v524 = vmax.bf16 %v461, 0
          %v525 = vmax.bf16 %v462, 0
          %v526 = vmax.bf16 %v463, 0
          %v527 = vmax.bf16 %v464, 0
          %v528 = vmax.bf16 %v465, 0
          %v529 = vmax.bf16 %v466, 0
          %v530 = vmax.bf16 %v467, 0
          %v531 = vmax.bf16 %v468, 0
          %v532 = vmax.bf16 %v469, 0
          %v533 = vmax.bf16 %v470, 0
          %v534 = vmax.bf16 %v471, 0
          %535 = vst [vmem:[%s408] sm:$0xf] %v472
          %536 = vst [vmem:[%s408 + $0x4] sm:$0xf] %v473
          %537 = vst [vmem:[%s408 + $0x8] sm:$0xf] %v474
          %538 = vst [vmem:[%s408 + $0xc] sm:$0xf] %v475
          %539 = vst [vmem:[%s408 + $0x10] sm:$0xf] %v476
          %540 = vst [vmem:[%s408 + $0x14] sm:$0xf] %v477
          %541 = vst [vmem:[%s408 + $0x18] sm:$0xf] %v478
          %542 = vst [vmem:[%s408 + $0x1c] sm:$0xf] %v479
          %543 = vst [vmem:[%s408 + $0x20] sm:$0xf] %v480
          %544 = vst [vmem:[%s408 + $0x24] sm:$0xf] %v481
          %545 = vst [vmem:[%s408 + $0x28] sm:$0xf] %v482
          %546 = vst [vmem:[%s408 + $0x2c] sm:$0xf] %v483
          %547 = vst [vmem:[%s408 + $0x30] sm:$0xf] %v484
          %548 = vst [vmem:[%s408 + $0x34] sm:$0xf] %v485
          %549 = vst [vmem:[%s408 + $0x38] sm:$0xf] %v486
          %550 = vst [vmem:[%s408 + $0x3c] sm:$0xf] %v487
          %551 = vst [vmem:[%s408 + $0x40] sm:$0xf] %v488
          %552 = vst [vmem:[%s408 + $0x44] sm:$0xf] %v489
          %553 = vst [vmem:[%s408 + $0x48] sm:$0xf] %v490
          %554 = vst [vmem:[%s408 + $0x4c] sm:$0xf] %v491
          %555 = vst [vmem:[%s408 + $0x50] sm:$0xf] %v492
          %556 = vst [vmem:[%s408 + $0x54] sm:$0xf] %v493
          %557 = vst [vmem:[%s408 + $0x58] sm:$0xf] %v494
          %558 = vst [vmem:[%s408 + $0x5c] sm:$0xf] %v495
          %559 = vst [vmem:[%s408 + $0x60] sm:$0xf] %v496
          %560 = vst [vmem:[%s408 + $0x64] sm:$0xf] %v497
          %561 = vst [vmem:[%s408 + $0x68] sm:$0xf] %v498
          %562 = vst [vmem:[%s408 + $0x6c] sm:$0xf] %v499
          %563 = vst [vmem:[%s408 + $0x70] sm:$0xf] %v500
          %564 = vst [vmem:[%s408 + $0x74] sm:$0xf] %v501
          %565 = vst [vmem:[%s408 + $0x78] sm:$0xf] %v502
          %566 = vst [vmem:[%s408 + $0x7c] sm:$0xf] %v503
          %567 = vst [vmem:[%s408 + $0x80] sm:$0xf] %v504
          %568 = vst [vmem:[%s408 + $0x84] sm:$0xf] %v505
          %569 = vst [vmem:[%s408 + $0x88] sm:$0xf] %v506
          %570 = vst [vmem:[%s408 + $0x8c] sm:$0xf] %v507
          %571 = vst [vmem:[%s408 + $0x90] sm:$0xf] %v508
          %572 = vst [vmem:[%s408 + $0x94] sm:$0xf] %v509
          %573 = vst [vmem:[%s408 + $0x98] sm:$0xf] %v510
          %574 = vst [vmem:[%s408 + $0x9c] sm:$0xf] %v511
          %575 = vst [vmem:[%s408 + $0xa0] sm:$0xf] %v512
          %576 = vst [vmem:[%s408 + $0xa4] sm:$0xf] %v513
          %577 = vst [vmem:[%s408 + $0xa8] sm:$0xf] %v514
          %578 = vst [vmem:[%s408 + $0xac] sm:$0xf] %v515
          %579 = vst [vmem:[%s408 + $0xb0] sm:$0xf] %v516
          %580 = vst [vmem:[%s408 + $0xb4] sm:$0xf] %v517
          %581 = vst [vmem:[%s408 + $0xb8] sm:$0xf] %v518
          %582 = vst [vmem:[%s408 + $0xbc] sm:$0xf] %v519
          %583 = vst [vmem:[%s408 + $0xc0] sm:$0xf] %v520
          %584 = vst [vmem:[%s408 + $0xc4] sm:$0xf] %v521
          %585 = vst [vmem:[%s408 + $0xc8] sm:$0xf] %v522
          %586 = vst [vmem:[%s408 + $0xcc] sm:$0xf] %v523
          %587 = vst [vmem:[%s408 + $0xd0] sm:$0xf] %v524
          %588 = vst [vmem:[%s408 + $0xd4] sm:$0xf] %v525
          %589 = vst [vmem:[%s408 + $0xd8] sm:$0xf] %v526
          %590 = vst [vmem:[%s408 + $0xdc] sm:$0xf] %v527
          %591 = vst [vmem:[%s408 + $0xe0] sm:$0xf] %v528
          %592 = vst [vmem:[%s408 + $0xe4] sm:$0xf] %v529
          %593 = vst [vmem:[%s408 + $0xe8] sm:$0xf] %v530
          %594 = vst [vmem:[%s408 + $0xec] sm:$0xf] %v531
          %595 = vst [vmem:[%s408 + $0xf0] sm:$0xf] %v532
          %596 = vst [vmem:[%s408 + $0xf4] sm:$0xf] %v533
          %597 = vst [vmem:[%s408 + $0xf8] sm:$0xf] %v534
        $region56: #{tpu_custom_call.1} parent=27 // pred_fallthru
          _
        %v598 = vld [vmem:[%s2] sm:$0x1]
        %v600 = vlaneseq
        %v601 = vshrl.u32 %v600, 7
        %v602 = vsub.s32 0, %v601
        %v603 = vrot.slane %v598, %v602
        %605 = vst [vmem:[#allocation4] sm:$0xff] %v603
        %606 = vst [vmem:[#allocation4 + $0x8] sm:$0xff] %v603
        %607 = vst [vmem:[#allocation4 + $0x10] sm:$0xff] %v603
        %608 = vst [vmem:[#allocation4 + $0x18] sm:$0xff] %v603
        %609 = vst [vmem:[#allocation4 + $0x20] sm:$0xff] %v603
        %610 = vst [vmem:[#allocation4 + $0x28] sm:$0xff] %v603
        %611 = vst [vmem:[#allocation4 + $0x30] sm:$0xff] %v603
        %612 = vst [vmem:[#allocation4 + $0x38] sm:$0xff] %v603
        %613 = vst [vmem:[#allocation4 + $0x40] sm:$0xff] %v603
        %614 = vst [vmem:[#allocation4 + $0x48] sm:$0xff] %v603
        %615 = vst [vmem:[#allocation4 + $0x50] sm:$0xff] %v603
        %616 = vst [vmem:[#allocation4 + $0x58] sm:$0xff] %v603
        %617 = vst [vmem:[#allocation4 + $0x60] sm:$0xff] %v603
        %618 = vst [vmem:[#allocation4 + $0x68] sm:$0xff] %v603
        %619 = vst [vmem:[#allocation4 + $0x70] sm:$0xff] %v603
        %620 = vst [vmem:[#allocation4 + $0x78] sm:$0xff] %v603
        %621 = vst [vmem:[#allocation4 + $0x80] sm:$0xff] %v603
        %622 = vst [vmem:[#allocation4 + $0x88] sm:$0xff] %v603
        %623 = vst [vmem:[#allocation4 + $0x90] sm:$0xff] %v603
        %624 = vst [vmem:[#allocation4 + $0x98] sm:$0xff] %v603
        %625 = vst [vmem:[#allocation4 + $0xa0] sm:$0xff] %v603
        %626 = vst [vmem:[#allocation4 + $0xa8] sm:$0xff] %v603
        %627 = vst [vmem:[#allocation4 + $0xb0] sm:$0xff] %v603
        %628 = vst [vmem:[#allocation4 + $0xb8] sm:$0xff] %v603
        %629 = vst [vmem:[#allocation4 + $0xc0] sm:$0xff] %v603
        %630 = vst [vmem:[#allocation4 + $0xc8] sm:$0xff] %v603
        %631 = vst [vmem:[#allocation4 + $0xd0] sm:$0xff] %v603
        %632 = vst [vmem:[#allocation4 + $0xd8] sm:$0xff] %v603
        %633 = vst [vmem:[#allocation4 + $0xe0] sm:$0xff] %v603
        %634 = vst [vmem:[#allocation4 + $0xe8] sm:$0xff] %v603
        %635 = vst [vmem:[#allocation4 + $0xf0] sm:$0xff] %v603
        %636 = vst [vmem:[#allocation4 + $0xf8] sm:$0xff] %v603
        %637 = vst [vmem:[#allocation4 + $0x100] sm:$0xff] %v603
        %638 = vst [vmem:[#allocation4 + $0x108] sm:$0xff] %v603
        %639 = vst [vmem:[#allocation4 + $0x110] sm:$0xff] %v603
        %640 = vst [vmem:[#allocation4 + $0x118] sm:$0xff] %v603
        %641 = vst [vmem:[#allocation4 + $0x120] sm:$0xff] %v603
        %642 = vst [vmem:[#allocation4 + $0x128] sm:$0xff] %v603
        %643 = vst [vmem:[#allocation4 + $0x130] sm:$0xff] %v603
        %644 = vst [vmem:[#allocation4 + $0x138] sm:$0xff] %v603
        %645 = vst [vmem:[#allocation4 + $0x140] sm:$0xff] %v603
        %646 = vst [vmem:[#allocation4 + $0x148] sm:$0xff] %v603
        %647 = vst [vmem:[#allocation4 + $0x150] sm:$0xff] %v603
        %648 = vst [vmem:[#allocation4 + $0x158] sm:$0xff] %v603
        %649 = vst [vmem:[#allocation4 + $0x160] sm:$0xff] %v603
        %650 = vst [vmem:[#allocation4 + $0x168] sm:$0xff] %v603
        %651 = vst [vmem:[#allocation4 + $0x170] sm:$0xff] %v603
        %652 = vst [vmem:[#allocation4 + $0x178] sm:$0xff] %v603
        %v653 = vld [vmem:[#allocation4] sm:$0xff]
        %v654 = vld [vmem:[#allocation4 + $0x8] sm:$0xff]
        %v655 = vld [vmem:[#allocation4 + $0x10] sm:$0xff]
        %v656 = vld [vmem:[#allocation4 + $0x18] sm:$0xff]
        %v657 = vld [vmem:[#allocation4 + $0x20] sm:$0xff]
        %v658 = vld [vmem:[#allocation4 + $0x28] sm:$0xff]
        %v659 = vld [vmem:[#allocation4 + $0x30] sm:$0xff]
        %v660 = vld [vmem:[#allocation4 + $0x38] sm:$0xff]
        %v661 = vld [vmem:[#allocation4 + $0x40] sm:$0xff]
        %v662 = vld [vmem:[#allocation4 + $0x48] sm:$0xff]
        %v663 = vld [vmem:[#allocation4 + $0x50] sm:$0xff]
        %v664 = vld [vmem:[#allocation4 + $0x58] sm:$0xff]
        %v665 = vld [vmem:[#allocation4 + $0x60] sm:$0xff]
        %v666 = vld [vmem:[#allocation4 + $0x68] sm:$0xff]
        %v667 = vld [vmem:[#allocation4 + $0x70] sm:$0xff]
        %v668 = vld [vmem:[#allocation4 + $0x78] sm:$0xff]
        %v669 = vld [vmem:[#allocation4 + $0x80] sm:$0xff]
        %v670 = vld [vmem:[#allocation4 + $0x88] sm:$0xff]
        %v671 = vld [vmem:[#allocation4 + $0x90] sm:$0xff]
        %v672 = vld [vmem:[#allocation4 + $0x98] sm:$0xff]
        %v673 = vld [vmem:[#allocation4 + $0xa0] sm:$0xff]
        %v674 = vld [vmem:[#allocation4 + $0xa8] sm:$0xff]
        %v675 = vld [vmem:[#allocation4 + $0xb0] sm:$0xff]
        %v676 = vld [vmem:[#allocation4 + $0xb8] sm:$0xff]
        %v677 = vld [vmem:[#allocation4 + $0xc0] sm:$0xff]
        %v678 = vld [vmem:[#allocation4 + $0xc8] sm:$0xff]
        %v679 = vld [vmem:[#allocation4 + $0xd0] sm:$0xff]
        %v680 = vld [vmem:[#allocation4 + $0xd8] sm:$0xff]
        %v681 = vld [vmem:[#allocation4 + $0xe0] sm:$0xff]
        %v682 = vld [vmem:[#allocation4 + $0xe8] sm:$0xff]
        %v683 = vld [vmem:[#allocation4 + $0xf0] sm:$0xff]
        %v684 = vld [vmem:[#allocation4 + $0xf8] sm:$0xff]
        %v685 = vld [vmem:[#allocation4 + $0x100] sm:$0xff]
        %v686 = vld [vmem:[#allocation4 + $0x108] sm:$0xff]
        %v687 = vld [vmem:[#allocation4 + $0x110] sm:$0xff]
        %v688 = vld [vmem:[#allocation4 + $0x118] sm:$0xff]
        %v689 = vld [vmem:[#allocation4 + $0x120] sm:$0xff]
        %v690 = vld [vmem:[#allocation4 + $0x128] sm:$0xff]
        %v691 = vld [vmem:[#allocation4 + $0x130] sm:$0xff]
        %v692 = vld [vmem:[#allocation4 + $0x138] sm:$0xff]
        %v693 = vld [vmem:[#allocation4 + $0x140] sm:$0xff]
        %v694 = vld [vmem:[#allocation4 + $0x148] sm:$0xff]
        %v695 = vld [vmem:[#allocation4 + $0x150] sm:$0xff]
        %v696 = vld [vmem:[#allocation4 + $0x158] sm:$0xff]
        %v697 = vld [vmem:[#allocation4 + $0x160] sm:$0xff]
        %v698 = vld [vmem:[#allocation4 + $0x168] sm:$0xff]
        %v699 = vld [vmem:[#allocation4 + $0x170] sm:$0xff]
        %v700 = vld [vmem:[#allocation4 + $0x178] sm:$0xff]
        %s701 = smul.u32 %s159, 63
        %s702 = smul.addr %s701, 4
        %s703 = scalar_lea.vmem [#allocation2], %s702
        %v704 = vld [vmem:[%s703] sm:$0xf]
        %v705 = vld [vmem:[%s703 + $0x4] sm:$0xf]
        %v706 = vld [vmem:[%s703 + $0x8] sm:$0xf]
        %v707 = vld [vmem:[%s703 + $0xc] sm:$0xf]
        %v708 = vld [vmem:[%s703 + $0x10] sm:$0xf]
        %v709 = vld [vmem:[%s703 + $0x14] sm:$0xf]
        %v710 = vld [vmem:[%s703 + $0x18] sm:$0xf]
        %v711 = vld [vmem:[%s703 + $0x1c] sm:$0xf]
        %v712 = vld [vmem:[%s703 + $0x20] sm:$0xf]
        %v713 = vld [vmem:[%s703 + $0x24] sm:$0xf]
        %v714 = vld [vmem:[%s703 + $0x28] sm:$0xf]
        %v715 = vld [vmem:[%s703 + $0x2c] sm:$0xf]
        %v716 = vld [vmem:[%s703 + $0x30] sm:$0xf]
        %v717 = vld [vmem:[%s703 + $0x34] sm:$0xf]
        %v718 = vld [vmem:[%s703 + $0x38] sm:$0xf]
        %v719 = vld [vmem:[%s703 + $0x3c] sm:$0xf]
        %v720 = vld [vmem:[%s703 + $0x40] sm:$0xf]
        %v721 = vld [vmem:[%s703 + $0x44] sm:$0xf]
        %v722 = vld [vmem:[%s703 + $0x48] sm:$0xf]
        %v723 = vld [vmem:[%s703 + $0x4c] sm:$0xf]
        %v724 = vld [vmem:[%s703 + $0x50] sm:$0xf]
        %v725 = vld [vmem:[%s703 + $0x54] sm:$0xf]
        %v726 = vld [vmem:[%s703 + $0x58] sm:$0xf]
        %v727 = vld [vmem:[%s703 + $0x5c] sm:$0xf]
        %v728 = vld [vmem:[%s703 + $0x60] sm:$0xf]
        %v729 = vld [vmem:[%s703 + $0x64] sm:$0xf]
        %v730 = vld [vmem:[%s703 + $0x68] sm:$0xf]
        %v731 = vld [vmem:[%s703 + $0x6c] sm:$0xf]
        %v732 = vld [vmem:[%s703 + $0x70] sm:$0xf]
        %v733 = vld [vmem:[%s703 + $0x74] sm:$0xf]
        %v734 = vld [vmem:[%s703 + $0x78] sm:$0xf]
        %v735 = vld [vmem:[%s703 + $0x7c] sm:$0xf]
        %v736 = vld [vmem:[%s703 + $0x80] sm:$0xf]
        %v737 = vld [vmem:[%s703 + $0x84] sm:$0xf]
        %v738 = vld [vmem:[%s703 + $0x88] sm:$0xf]
        %v739 = vld [vmem:[%s703 + $0x8c] sm:$0xf]
        %v740 = vld [vmem:[%s703 + $0x90] sm:$0xf]
        %v741 = vld [vmem:[%s703 + $0x94] sm:$0xf]
        %v742 = vld [vmem:[%s703 + $0x98] sm:$0xf]
        %v743 = vld [vmem:[%s703 + $0x9c] sm:$0xf]
        %v744 = vld [vmem:[%s703 + $0xa0] sm:$0xf]
        %v745 = vld [vmem:[%s703 + $0xa4] sm:$0xf]
        %v746 = vld [vmem:[%s703 + $0xa8] sm:$0xf]
        %v747 = vld [vmem:[%s703 + $0xac] sm:$0xf]
        %v748 = vld [vmem:[%s703 + $0xb0] sm:$0xf]
        %v749 = vld [vmem:[%s703 + $0xb4] sm:$0xf]
        %v750 = vld [vmem:[%s703 + $0xb8] sm:$0xf]
        %v751 = vld [vmem:[%s703 + $0xbc] sm:$0xf]
        %v752 = vld [vmem:[#allocation5] sm:$0xf]
        %v753 = vld [vmem:[#allocation5 + $0x4] sm:$0xf]
        %v754 = vld [vmem:[#allocation5 + $0x8] sm:$0xf]
        %v755 = vld [vmem:[#allocation5 + $0xc] sm:$0xf]
        %v756 = vld [vmem:[#allocation5 + $0x10] sm:$0xf]
        %v757 = vld [vmem:[#allocation5 + $0x14] sm:$0xf]
        %v758 = vld [vmem:[#allocation5 + $0x18] sm:$0xf]
        %v759 = vld [vmem:[#allocation5 + $0x1c] sm:$0xf]
        %v760 = vld [vmem:[#allocation5 + $0x20] sm:$0xf]
        %v761 = vld [vmem:[#allocation5 + $0x24] sm:$0xf]
        %v762 = vld [vmem:[#allocation5 + $0x28] sm:$0xf]
        %v763 = vld [vmem:[#allocation5 + $0x2c] sm:$0xf]
        %v764 = vld [vmem:[#allocation5 + $0x30] sm:$0xf]
        %v765 = vld [vmem:[#allocation5 + $0x34] sm:$0xf]
        %v766 = vld [vmem:[#allocation5 + $0x38] sm:$0xf]
        %v767 = vld [vmem:[#allocation5 + $0x3c] sm:$0xf]
        %v816 = vunpack.c.l.b16 %v704
        %v817 = vunpack.c.l.b16 %v705
        %v818 = vunpack.c.l.b16 %v706
        %v819 = vunpack.c.l.b16 %v707
        %v820 = vunpack.c.l.b16 %v708
        %v821 = vunpack.c.l.b16 %v709
        %v822 = vunpack.c.l.b16 %v710
        %v823 = vunpack.c.l.b16 %v711
        %v824 = vunpack.c.l.b16 %v712
        %v825 = vunpack.c.l.b16 %v713
        %v826 = vunpack.c.l.b16 %v714
        %v827 = vunpack.c.l.b16 %v715
        %v828 = vunpack.c.l.b16 %v716
        %v829 = vunpack.c.l.b16 %v717
        %v830 = vunpack.c.l.b16 %v718
        %v831 = vunpack.c.l.b16 %v719
        %v832 = vunpack.c.l.b16 %v720
        %v833 = vunpack.c.l.b16 %v721
        %v834 = vunpack.c.l.b16 %v722
        %v835 = vunpack.c.l.b16 %v723
        %v836 = vunpack.c.l.b16 %v724
        %v837 = vunpack.c.l.b16 %v725
        %v838 = vunpack.c.l.b16 %v726
        %v839 = vunpack.c.l.b16 %v727
        %v840 = vunpack.c.l.b16 %v728
        %v841 = vunpack.c.l.b16 %v729
        %v842 = vunpack.c.l.b16 %v730
        %v843 = vunpack.c.l.b16 %v731
        %v844 = vunpack.c.l.b16 %v732
        %v845 = vunpack.c.l.b16 %v733
        %v846 = vunpack.c.l.b16 %v734
        %v847 = vunpack.c.l.b16 %v735
        %v848 = vunpack.c.l.b16 %v736
        %v849 = vunpack.c.l.b16 %v737
        %v850 = vunpack.c.l.b16 %v738
        %v851 = vunpack.c.l.b16 %v739
        %v852 = vunpack.c.l.b16 %v740
        %v853 = vunpack.c.l.b16 %v741
        %v854 = vunpack.c.l.b16 %v742
        %v855 = vunpack.c.l.b16 %v743
        %v856 = vunpack.c.l.b16 %v744
        %v857 = vunpack.c.l.b16 %v745
        %v858 = vunpack.c.l.b16 %v746
        %v859 = vunpack.c.l.b16 %v747
        %v860 = vunpack.c.l.b16 %v748
        %v861 = vunpack.c.l.b16 %v749
        %v862 = vunpack.c.l.b16 %v750
        %v863 = vunpack.c.l.b16 %v751
        %v864 = vpack.c.b16 %v817, %v816
        %v865 = vpack.c.b16 %v819, %v818
        %v866 = vpack.c.b16 %v821, %v820
        %v867 = vpack.c.b16 %v823, %v822
        %v868 = vpack.c.b16 %v825, %v824
        %v869 = vpack.c.b16 %v827, %v826
        %v870 = vpack.c.b16 %v829, %v828
        %v871 = vpack.c.b16 %v831, %v830
        %v872 = vpack.c.b16 %v833, %v832
        %v873 = vpack.c.b16 %v835, %v834
        %v874 = vpack.c.b16 %v837, %v836
        %v875 = vpack.c.b16 %v839, %v838
        %v876 = vpack.c.b16 %v841, %v840
        %v877 = vpack.c.b16 %v843, %v842
        %v878 = vpack.c.b16 %v845, %v844
        %v879 = vpack.c.b16 %v847, %v846
        %v880 = vpack.c.b16 %v849, %v848
        %v881 = vpack.c.b16 %v851, %v850
        %v882 = vpack.c.b16 %v853, %v852
        %v883 = vpack.c.b16 %v855, %v854
        %v884 = vpack.c.b16 %v857, %v856
        %v885 = vpack.c.b16 %v859, %v858
        %v886 = vpack.c.b16 %v861, %v860
        %v887 = vpack.c.b16 %v863, %v862
        %v928 = vunpack.c.l.b16 %v752
        %v929 = vunpack.c.l.b16 %v753
        %v930 = vunpack.c.l.b16 %v754
        %v931 = vunpack.c.l.b16 %v755
        %v932 = vunpack.c.l.b16 %v756
        %v933 = vunpack.c.l.b16 %v757
        %v934 = vunpack.c.l.b16 %v758
        %v935 = vunpack.c.l.b16 %v759
        %v936 = vunpack.c.l.b16 %v760
        %v937 = vunpack.c.l.b16 %v761
        %v938 = vunpack.c.l.b16 %v762
        %v939 = vunpack.c.l.b16 %v763
        %v940 = vunpack.c.l.b16 %v764
        %v941 = vunpack.c.l.b16 %v765
        %v942 = vunpack.c.l.b16 %v766
        %v943 = vunpack.c.l.b16 %v767
        %v944 = vpack.c.b16 %v929, %v928
        %v945 = vpack.c.b16 %v931, %v930
        %v946 = vpack.c.b16 %v933, %v932
        %v947 = vpack.c.b16 %v935, %v934
        %v948 = vpack.c.b16 %v937, %v936
        %v949 = vpack.c.b16 %v939, %v938
        %v950 = vpack.c.b16 %v941, %v940
        %v951 = vpack.c.b16 %v943, %v942
        %960 = vmatprep.subr.bf16.mxu0 0
        %961 = vmatpush1.bf16.msra.mxu0 %v944
        %962 = vmatprep.subr.bf16.mxu0 0
        %963 = vmatpush1.bf16.msra.mxu0 %v945
        %964 = vmatprep.subr.bf16.mxu0 0
        %965 = vmatpush1.bf16.msra.mxu0 %v946
        %966 = vmatprep.subr.bf16.mxu0 0
        %967 = vmatpush1.bf16.msra.mxu0 %v947
        %968 = vmatprep.subr.bf16.mxu0 0
        %969 = vmatpush1.bf16.msra.mxu0 %v948
        %970 = vmatprep.subr.bf16.mxu0 0
        %971 = vmatpush1.bf16.msra.mxu0 %v949
        %972 = vmatprep.subr.bf16.mxu0 0
        %973 = vmatpush1.bf16.msra.mxu0 %v950
        %974 = vmatprep.subr.bf16.mxu0 0
        %975 = vmatpush1.bf16.msra.mxu0 %v951
        %976 = vmatprep.subr.bf16.mxu0 0
        %977 = vmatpush1.bf16.msra.mxu0 0
        %978 = vmatprep.subr.bf16.mxu0 0
        %979 = vmatpush1.bf16.msra.mxu0 0
        %980 = vmatprep.subr.bf16.mxu0 0
        %981 = vmatpush1.bf16.msra.mxu0 0
        %982 = vmatprep.subr.bf16.mxu0 0
        %983 = vmatpush1.bf16.msra.mxu0 0
        %984 = vmatprep.subr.bf16.mxu0 0
        %985 = vmatpush1.bf16.msra.mxu0 0
        %986 = vmatprep.subr.bf16.mxu0 0
        %987 = vmatpush1.bf16.msra.mxu0 0
        %988 = vmatprep.subr.bf16.mxu0 0
        %989 = vmatpush1.bf16.msra.mxu0 0
        %990 = vmatprep.subr.bf16.mxu0 0
        %991 = vmatpush1.bf16.msra.mxu0 0
        %992 = vmatprep.mubr.bf16.mxu0 0
        %993 = vmatmul.mubr.bf16.gmra.mrb[0].mxu0 %v864
        %v994 = vpop.f32.mrb[0].mxu0
        %v995 = vadd.f32 0.0, %v994
        %v996 = vpop.f32.mrb[0].mxu0
        %v997 = vpop.f32.mrb[0].mxu0
        %v998 = vadd.f32 0.0, %v997
        %v999 = vpop.f32.mrb[0].mxu0
        %1000 = vmatprep.mubr.bf16.mxu0 0
        %1001 = vmatmul.mubr.bf16.gmra.mrb[0].mxu0 %v865
        %v1002 = vpop.f32.mrb[0].mxu0
        %v1003 = vadd.f32 0.0, %v1002
        %v1004 = vpop.f32.mrb[0].mxu0
        %v1005 = vpop.f32.mrb[0].mxu0
        %v1006 = vadd.f32 0.0, %v1005
        %v1007 = vpop.f32.mrb[0].mxu0
        %1008 = vmatprep.mubr.bf16.mxu0 0
        %1009 = vmatmul.mubr.bf16.gmra.mrb[0].mxu0 %v866
        %v1010 = vpop.f32.mrb[0].mxu0
        %v1011 = vadd.f32 0.0, %v1010
        %v1012 = vpop.f32.mrb[0].mxu0
        %v1013 = vpop.f32.mrb[0].mxu0
        %v1014 = vadd.f32 0.0, %v1013
        %v1015 = vpop.f32.mrb[0].mxu0
        %1016 = vmatprep.mubr.bf16.mxu0 0
        %1017 = vmatmul.mubr.bf16.gmra.mrb[0].mxu0 %v867
        %v1018 = vpop.f32.mrb[0].mxu0
        %v1019 = vadd.f32 0.0, %v1018
        %v1020 = vpop.f32.mrb[0].mxu0
        %v1021 = vpop.f32.mrb[0].mxu0
        %v1022 = vadd.f32 0.0, %v1021
        %v1023 = vpop.f32.mrb[0].mxu0
        %1024 = vmatprep.mubr.bf16.mxu0 0
        %1025 = vmatmul.mubr.bf16.gmra.mrb[0].mxu0 %v868
        %v1026 = vpop.f32.mrb[0].mxu0
        %v1027 = vadd.f32 0.0, %v1026
        %v1028 = vpop.f32.mrb[0].mxu0
        %v1029 = vpop.f32.mrb[0].mxu0
        %v1030 = vadd.f32 0.0, %v1029
        %v1031 = vpop.f32.mrb[0].mxu0
        %1032 = vmatprep.mubr.bf16.mxu0 0
        %1033 = vmatmul.mubr.bf16.gmra.mrb[0].mxu0 %v869
        %v1034 = vpop.f32.mrb[0].mxu0
        %v1035 = vadd.f32 0.0, %v1034
        %v1036 = vpop.f32.mrb[0].mxu0
        %v1037 = vpop.f32.mrb[0].mxu0
        %v1038 = vadd.f32 0.0, %v1037
        %v1039 = vpop.f32.mrb[0].mxu0
        %1040 = vmatprep.mubr.bf16.mxu0 0
        %1041 = vmatmul.mubr.bf16.gmra.mrb[0].mxu0 %v870
        %v1042 = vpop.f32.mrb[0].mxu0
        %v1043 = vadd.f32 0.0, %v1042
        %v1044 = vpop.f32.mrb[0].mxu0
        %v1045 = vpop.f32.mrb[0].mxu0
        %v1046 = vadd.f32 0.0, %v1045
        %v1047 = vpop.f32.mrb[0].mxu0
        %1048 = vmatprep.mubr.bf16.mxu0 0
        %1049 = vmatmul.mubr.bf16.gmra.mrb[0].mxu0 %v871
        %v1050 = vpop.f32.mrb[0].mxu0
        %v1051 = vadd.f32 0.0, %v1050
        %v1052 = vpop.f32.mrb[0].mxu0
        %v1053 = vpop.f32.mrb[0].mxu0
        %v1054 = vadd.f32 0.0, %v1053
        %v1055 = vpop.f32.mrb[0].mxu0
        %1056 = vmatprep.mubr.bf16.mxu0 0
        %1057 = vmatmul.mubr.bf16.gmra.mrb[0].mxu0 %v872
        %v1058 = vpop.f32.mrb[0].mxu0
        %v1059 = vadd.f32 0.0, %v1058
        %v1060 = vpop.f32.mrb[0].mxu0
        %v1061 = vpop.f32.mrb[0].mxu0
        %v1062 = vadd.f32 0.0, %v1061
        %v1063 = vpop.f32.mrb[0].mxu0
        %1064 = vmatprep.mubr.bf16.mxu0 0
        %1065 = vmatmul.mubr.bf16.gmra.mrb[0].mxu0 %v873
        %v1066 = vpop.f32.mrb[0].mxu0
        %v1067 = vadd.f32 0.0, %v1066
        %v1068 = vpop.f32.mrb[0].mxu0
        %v1069 = vpop.f32.mrb[0].mxu0
        %v1070 = vadd.f32 0.0, %v1069
        %v1071 = vpop.f32.mrb[0].mxu0
        %1072 = vmatprep.mubr.bf16.mxu0 0
        %1073 = vmatmul.mubr.bf16.gmra.mrb[0].mxu0 %v874
        %v1074 = vpop.f32.mrb[0].mxu0
        %v1075 = vadd.f32 0.0, %v1074
        %v1076 = vpop.f32.mrb[0].mxu0
        %v1077 = vpop.f32.mrb[0].mxu0
        %v1078 = vadd.f32 0.0, %v1077
        %v1079 = vpop.f32.mrb[0].mxu0
        %1080 = vmatprep.mubr.bf16.mxu0 0
        %1081 = vmatmul.mubr.bf16.gmra.mrb[0].mxu0 %v875
        %v1082 = vpop.f32.mrb[0].mxu0
        %v1083 = vadd.f32 0.0, %v1082
        %v1084 = vpop.f32.mrb[0].mxu0
        %v1085 = vpop.f32.mrb[0].mxu0
        %v1086 = vadd.f32 0.0, %v1085
        %v1087 = vpop.f32.mrb[0].mxu0
        %1088 = vmatprep.mubr.bf16.mxu0 0
        %1089 = vmatmul.mubr.bf16.gmra.mrb[0].mxu0 %v876
        %v1090 = vpop.f32.mrb[0].mxu0
        %v1091 = vadd.f32 0.0, %v1090
        %v1092 = vpop.f32.mrb[0].mxu0
        %v1093 = vpop.f32.mrb[0].mxu0
        %v1094 = vadd.f32 0.0, %v1093
        %v1095 = vpop.f32.mrb[0].mxu0
        %1096 = vmatprep.mubr.bf16.mxu0 0
        %1097 = vmatmul.mubr.bf16.gmra.mrb[0].mxu0 %v877
        %v1098 = vpop.f32.mrb[0].mxu0
        %v1099 = vadd.f32 0.0, %v1098
        %v1100 = vpop.f32.mrb[0].mxu0
        %v1101 = vpop.f32.mrb[0].mxu0
        %v1102 = vadd.f32 0.0, %v1101
        %v1103 = vpop.f32.mrb[0].mxu0
        %1104 = vmatprep.mubr.bf16.mxu0 0
        %1105 = vmatmul.mubr.bf16.gmra.mrb[0].mxu0 %v878
        %v1106 = vpop.f32.mrb[0].mxu0
        %v1107 = vadd.f32 0.0, %v1106
        %v1108 = vpop.f32.mrb[0].mxu0
        %v1109 = vpop.f32.mrb[0].mxu0
        %v1110 = vadd.f32 0.0, %v1109
        %v1111 = vpop.f32.mrb[0].mxu0
        %1112 = vmatprep.mubr.bf16.mxu0 0
        %1113 = vmatmul.mubr.bf16.gmra.mrb[0].mxu0 %v879
        %v1114 = vpop.f32.mrb[0].mxu0
        %v1115 = vadd.f32 0.0, %v1114
        %v1116 = vpop.f32.mrb[0].mxu0
        %v1117 = vpop.f32.mrb[0].mxu0
        %v1118 = vadd.f32 0.0, %v1117
        %v1119 = vpop.f32.mrb[0].mxu0
        %1120 = vmatprep.mubr.bf16.mxu0 0
        %1121 = vmatmul.mubr.bf16.gmra.mrb[0].mxu0 %v880
        %v1122 = vpop.f32.mrb[0].mxu0
        %v1123 = vadd.f32 0.0, %v1122
        %v1124 = vpop.f32.mrb[0].mxu0
        %v1125 = vpop.f32.mrb[0].mxu0
        %v1126 = vadd.f32 0.0, %v1125
        %v1127 = vpop.f32.mrb[0].mxu0
        %1128 = vmatprep.mubr.bf16.mxu0 0
        %1129 = vmatmul.mubr.bf16.gmra.mrb[0].mxu0 %v881
        %v1130 = vpop.f32.mrb[0].mxu0
        %v1131 = vadd.f32 0.0, %v1130
        %v1132 = vpop.f32.mrb[0].mxu0
        %v1133 = vpop.f32.mrb[0].mxu0
        %v1134 = vadd.f32 0.0, %v1133
        %v1135 = vpop.f32.mrb[0].mxu0
        %1136 = vmatprep.mubr.bf16.mxu0 0
        %1137 = vmatmul.mubr.bf16.gmra.mrb[0].mxu0 %v882
        %v1138 = vpop.f32.mrb[0].mxu0
        %v1139 = vadd.f32 0.0, %v1138
        %v1140 = vpop.f32.mrb[0].mxu0
        %v1141 = vpop.f32.mrb[0].mxu0
        %v1142 = vadd.f32 0.0, %v1141
        %v1143 = vpop.f32.mrb[0].mxu0
        %1144 = vmatprep.mubr.bf16.mxu0 0
        %1145 = vmatmul.mubr.bf16.gmra.mrb[0].mxu0 %v883
        %v1146 = vpop.f32.mrb[0].mxu0
        %v1147 = vadd.f32 0.0, %v1146
        %v1148 = vpop.f32.mrb[0].mxu0
        %v1149 = vpop.f32.mrb[0].mxu0
        %v1150 = vadd.f32 0.0, %v1149
        %v1151 = vpop.f32.mrb[0].mxu0
        %1152 = vmatprep.mubr.bf16.mxu0 0
        %1153 = vmatmul.mubr.bf16.gmra.mrb[0].mxu0 %v884
        %v1154 = vpop.f32.mrb[0].mxu0
        %v1155 = vadd.f32 0.0, %v1154
        %v1156 = vpop.f32.mrb[0].mxu0
        %v1157 = vpop.f32.mrb[0].mxu0
        %v1158 = vadd.f32 0.0, %v1157
        %v1159 = vpop.f32.mrb[0].mxu0
        %1160 = vmatprep.mubr.bf16.mxu0 0
        %1161 = vmatmul.mubr.bf16.gmra.mrb[0].mxu0 %v885
        %v1162 = vpop.f32.mrb[0].mxu0
        %v1163 = vadd.f32 0.0, %v1162
        %v1164 = vpop.f32.mrb[0].mxu0
        %v1165 = vpop.f32.mrb[0].mxu0
        %v1166 = vadd.f32 0.0, %v1165
        %v1167 = vpop.f32.mrb[0].mxu0
        %1168 = vmatprep.mubr.bf16.mxu0 0
        %1169 = vmatmul.mubr.bf16.gmra.mrb[0].mxu0 %v886
        %v1170 = vpop.f32.mrb[0].mxu0
        %v1171 = vadd.f32 0.0, %v1170
        %v1172 = vpop.f32.mrb[0].mxu0
        %v1173 = vpop.f32.mrb[0].mxu0
        %v1174 = vadd.f32 0.0, %v1173
        %v1175 = vpop.f32.mrb[0].mxu0
        %1176 = vmatprep.mubr.bf16.mxu0 0
        %1177 = vmatmul.mubr.bf16.gmra.mrb[0].mxu0 %v887
        %v1178 = vpop.f32.mrb[0].mxu0
        %v1179 = vadd.f32 0.0, %v1178
        %v1180 = vpop.f32.mrb[0].mxu0
        %v1181 = vpop.f32.mrb[0].mxu0
        %v1182 = vadd.f32 0.0, %v1181
        %v1183 = vpop.f32.mrb[0].mxu0
        %1184 = vdwg.mxu0
        %v1185 = vadd.f32 %v653, %v995
        %v1186 = vadd.f32 %v654, %v998
        %v1187 = vadd.f32 %v655, %v1003
        %v1188 = vadd.f32 %v656, %v1006
        %v1189 = vadd.f32 %v657, %v1011
        %v1190 = vadd.f32 %v658, %v1014
        %v1191 = vadd.f32 %v659, %v1019
        %v1192 = vadd.f32 %v660, %v1022
        %v1193 = vadd.f32 %v661, %v1027
        %v1194 = vadd.f32 %v662, %v1030
        %v1195 = vadd.f32 %v663, %v1035
        %v1196 = vadd.f32 %v664, %v1038
        %v1197 = vadd.f32 %v665, %v1043
        %v1198 = vadd.f32 %v666, %v1046
        %v1199 = vadd.f32 %v667, %v1051
        %v1200 = vadd.f32 %v668, %v1054
        %v1201 = vadd.f32 %v669, %v1059
        %v1202 = vadd.f32 %v670, %v1062
        %v1203 = vadd.f32 %v671, %v1067
        %v1204 = vadd.f32 %v672, %v1070
        %v1205 = vadd.f32 %v673, %v1075
        %v1206 = vadd.f32 %v674, %v1078
        %v1207 = vadd.f32 %v675, %v1083
        %v1208 = vadd.f32 %v676, %v1086
        %v1209 = vadd.f32 %v677, %v1091
        %v1210 = vadd.f32 %v678, %v1094
        %v1211 = vadd.f32 %v679, %v1099
        %v1212 = vadd.f32 %v680, %v1102
        %v1213 = vadd.f32 %v681, %v1107
        %v1214 = vadd.f32 %v682, %v1110
        %v1215 = vadd.f32 %v683, %v1115
        %v1216 = vadd.f32 %v684, %v1118
        %v1217 = vadd.f32 %v685, %v1123
        %v1218 = vadd.f32 %v686, %v1126
        %v1219 = vadd.f32 %v687, %v1131
        %v1220 = vadd.f32 %v688, %v1134
        %v1221 = vadd.f32 %v689, %v1139
        %v1222 = vadd.f32 %v690, %v1142
        %v1223 = vadd.f32 %v691, %v1147
        %v1224 = vadd.f32 %v692, %v1150
        %v1225 = vadd.f32 %v693, %v1155
        %v1226 = vadd.f32 %v694, %v1158
        %v1227 = vadd.f32 %v695, %v1163
        %v1228 = vadd.f32 %v696, %v1166
        %v1229 = vadd.f32 %v697, %v1171
        %v1230 = vadd.f32 %v698, %v1174
        %v1231 = vadd.f32 %v699, %v1179
        %v1232 = vadd.f32 %v700, %v1182
        %1233 = vst [vmem:[#allocation4] sm:$0xff] %v1185
        %1234 = vst [vmem:[#allocation4 + $0x8] sm:$0xff] %v1186
        %1235 = vst [vmem:[#allocation4 + $0x10] sm:$0xff] %v1187
        %1236 = vst [vmem:[#allocation4 + $0x18] sm:$0xff] %v1188
        %1237 = vst [vmem:[#allocation4 + $0x20] sm:$0xff] %v1189
        %1238 = vst [vmem:[#allocation4 + $0x28] sm:$0xff] %v1190
        %1239 = vst [vmem:[#allocation4 + $0x30] sm:$0xff] %v1191
        %1240 = vst [vmem:[#allocation4 + $0x38] sm:$0xff] %v1192
        %1241 = vst [vmem:[#allocation4 + $0x40] sm:$0xff] %v1193
        %1242 = vst [vmem:[#allocation4 + $0x48] sm:$0xff] %v1194
        %1243 = vst [vmem:[#allocation4 + $0x50] sm:$0xff] %v1195
        %1244 = vst [vmem:[#allocation4 + $0x58] sm:$0xff] %v1196
        %1245 = vst [vmem:[#allocation4 + $0x60] sm:$0xff] %v1197
        %1246 = vst [vmem:[#allocation4 + $0x68] sm:$0xff] %v1198
        %1247 = vst [vmem:[#allocation4 + $0x70] sm:$0xff] %v1199
        %1248 = vst [vmem:[#allocation4 + $0x78] sm:$0xff] %v1200
        %1249 = vst [vmem:[#allocation4 + $0x80] sm:$0xff] %v1201
        %1250 = vst [vmem:[#allocation4 + $0x88] sm:$0xff] %v1202
        %1251 = vst [vmem:[#allocation4 + $0x90] sm:$0xff] %v1203
        %1252 = vst [vmem:[#allocation4 + $0x98] sm:$0xff] %v1204
        %1253 = vst [vmem:[#allocation4 + $0xa0] sm:$0xff] %v1205
        %1254 = vst [vmem:[#allocation4 + $0xa8] sm:$0xff] %v1206
        %1255 = vst [vmem:[#allocation4 + $0xb0] sm:$0xff] %v1207
        %1256 = vst [vmem:[#allocation4 + $0xb8] sm:$0xff] %v1208
        %1257 = vst [vmem:[#allocation4 + $0xc0] sm:$0xff] %v1209
        %1258 = vst [vmem:[#allocation4 + $0xc8] sm:$0xff] %v1210
        %1259 = vst [vmem:[#allocation4 + $0xd0] sm:$0xff] %v1211
        %1260 = vst [vmem:[#allocation4 + $0xd8] sm:$0xff] %v1212
        %1261 = vst [vmem:[#allocation4 + $0xe0] sm:$0xff] %v1213
        %1262 = vst [vmem:[#allocation4 + $0xe8] sm:$0xff] %v1214
        %1263 = vst [vmem:[#allocation4 + $0xf0] sm:$0xff] %v1215
        %1264 = vst [vmem:[#allocation4 + $0xf8] sm:$0xff] %v1216
        %1265 = vst [vmem:[#allocation4 + $0x100] sm:$0xff] %v1217
        %1266 = vst [vmem:[#allocation4 + $0x108] sm:$0xff] %v1218
        %1267 = vst [vmem:[#allocation4 + $0x110] sm:$0xff] %v1219
        %1268 = vst [vmem:[#allocation4 + $0x118] sm:$0xff] %v1220
        %1269 = vst [vmem:[#allocation4 + $0x120] sm:$0xff] %v1221
        %1270 = vst [vmem:[#allocation4 + $0x128] sm:$0xff] %v1222
        %1271 = vst [vmem:[#allocation4 + $0x130] sm:$0xff] %v1223
        %1272 = vst [vmem:[#allocation4 + $0x138] sm:$0xff] %v1224
        %1273 = vst [vmem:[#allocation4 + $0x140] sm:$0xff] %v1225
        %1274 = vst [vmem:[#allocation4 + $0x148] sm:$0xff] %v1226
        %1275 = vst [vmem:[#allocation4 + $0x150] sm:$0xff] %v1227
        %1276 = vst [vmem:[#allocation4 + $0x158] sm:$0xff] %v1228
        %1277 = vst [vmem:[#allocation4 + $0x160] sm:$0xff] %v1229
        %1278 = vst [vmem:[#allocation4 + $0x168] sm:$0xff] %v1230
        %1279 = vst [vmem:[#allocation4 + $0x170] sm:$0xff] %v1231
        %1280 = vst [vmem:[#allocation4 + $0x178] sm:$0xff] %v1232
        %v1281 = vld [vmem:[#allocation4] sm:$0xff]
        %v1282 = vld [vmem:[#allocation4 + $0x8] sm:$0xff]
        %v1283 = vld [vmem:[#allocation4 + $0x10] sm:$0xff]
        %v1284 = vld [vmem:[#allocation4 + $0x18] sm:$0xff]
        %v1285 = vld [vmem:[#allocation4 + $0x20] sm:$0xff]
        %v1286 = vld [vmem:[#allocation4 + $0x28] sm:$0xff]
        %v1287 = vld [vmem:[#allocation4 + $0x30] sm:$0xff]
        %v1288 = vld [vmem:[#allocation4 + $0x38] sm:$0xff]
        %v1289 = vld [vmem:[#allocation4 + $0x40] sm:$0xff]
        %v1290 = vld [vmem:[#allocation4 + $0x48] sm:$0xff]
        %v1291 = vld [vmem:[#allocation4 + $0x50] sm:$0xff]
        %v1292 = vld [vmem:[#allocation4 + $0x58] sm:$0xff]
        %v1293 = vld [vmem:[#allocation4 + $0x60] sm:$0xff]
        %v1294 = vld [vmem:[#allocation4 + $0x68] sm:$0xff]
        %v1295 = vld [vmem:[#allocation4 + $0x70] sm:$0xff]
        %v1296 = vld [vmem:[#allocation4 + $0x78] sm:$0xff]
        %v1297 = vld [vmem:[#allocation4 + $0x80] sm:$0xff]
        %v1298 = vld [vmem:[#allocation4 + $0x88] sm:$0xff]
        %v1299 = vld [vmem:[#allocation4 + $0x90] sm:$0xff]
        %v1300 = vld [vmem:[#allocation4 + $0x98] sm:$0xff]
        %v1301 = vld [vmem:[#allocation4 + $0xa0] sm:$0xff]
        %v1302 = vld [vmem:[#allocation4 + $0xa8] sm:$0xff]
        %v1303 = vld [vmem:[#allocation4 + $0xb0] sm:$0xff]
        %v1304 = vld [vmem:[#allocation4 + $0xb8] sm:$0xff]
        %v1305 = vld [vmem:[#allocation4 + $0xc0] sm:$0xff]
        %v1306 = vld [vmem:[#allocation4 + $0xc8] sm:$0xff]
        %v1307 = vld [vmem:[#allocation4 + $0xd0] sm:$0xff]
        %v1308 = vld [vmem:[#allocation4 + $0xd8] sm:$0xff]
        %v1309 = vld [vmem:[#allocation4 + $0xe0] sm:$0xff]
        %v1310 = vld [vmem:[#allocation4 + $0xe8] sm:$0xff]
        %v1311 = vld [vmem:[#allocation4 + $0xf0] sm:$0xff]
        %v1312 = vld [vmem:[#allocation4 + $0xf8] sm:$0xff]
        %v1313 = vld [vmem:[#allocation4 + $0x100] sm:$0xff]
        %v1314 = vld [vmem:[#allocation4 + $0x108] sm:$0xff]
        %v1315 = vld [vmem:[#allocation4 + $0x110] sm:$0xff]
        %v1316 = vld [vmem:[#allocation4 + $0x118] sm:$0xff]
        %v1317 = vld [vmem:[#allocation4 + $0x120] sm:$0xff]
        %v1318 = vld [vmem:[#allocation4 + $0x128] sm:$0xff]
        %v1319 = vld [vmem:[#allocation4 + $0x130] sm:$0xff]
        %v1320 = vld [vmem:[#allocation4 + $0x138] sm:$0xff]
        %v1321 = vld [vmem:[#allocation4 + $0x140] sm:$0xff]
        %v1322 = vld [vmem:[#allocation4 + $0x148] sm:$0xff]
        %v1323 = vld [vmem:[#allocation4 + $0x150] sm:$0xff]
        %v1324 = vld [vmem:[#allocation4 + $0x158] sm:$0xff]
        %v1325 = vld [vmem:[#allocation4 + $0x160] sm:$0xff]
        %v1326 = vld [vmem:[#allocation4 + $0x168] sm:$0xff]
        %v1327 = vld [vmem:[#allocation4 + $0x170] sm:$0xff]
        %v1328 = vld [vmem:[#allocation4 + $0x178] sm:$0xff]
        %v1329 = vld [vmem:[%s703] sm:$0xe]
        %v1330 = vld [vmem:[%s703 + $0x4] sm:$0xf]
        %v1331 = vld [vmem:[%s703 + $0x8] sm:$0xf]
        %v1332 = vld [vmem:[%s703 + $0xc] sm:$0xf]
        %v1333 = vld [vmem:[%s703 + $0x10] sm:$0xf]
        %v1334 = vld [vmem:[%s703 + $0x14] sm:$0xf]
        %v1335 = vld [vmem:[%s703 + $0x18] sm:$0xf]
        %v1336 = vld [vmem:[%s703 + $0x1c] sm:$0xf]
        %v1337 = vld [vmem:[%s703 + $0x20] sm:$0xf]
        %v1338 = vld [vmem:[%s703 + $0x24] sm:$0xf]
        %v1339 = vld [vmem:[%s703 + $0x28] sm:$0xf]
        %v1340 = vld [vmem:[%s703 + $0x2c] sm:$0xf]
        %v1341 = vld [vmem:[%s703 + $0x30] sm:$0xf]
        %v1342 = vld [vmem:[%s703 + $0x34] sm:$0xf]
        %v1343 = vld [vmem:[%s703 + $0x38] sm:$0xf]
        %v1344 = vld [vmem:[%s703 + $0x3c] sm:$0xf]
        %v1345 = vld [vmem:[%s703 + $0x40] sm:$0xf]
        %v1346 = vld [vmem:[%s703 + $0x44] sm:$0xf]
        %v1347 = vld [vmem:[%s703 + $0x48] sm:$0xf]
        %v1348 = vld [vmem:[%s703 + $0x4c] sm:$0xf]
        %v1349 = vld [vmem:[%s703 + $0x50] sm:$0xf]
        %v1350 = vld [vmem:[%s703 + $0x54] sm:$0xf]
        %v1351 = vld [vmem:[%s703 + $0x58] sm:$0xf]
        %v1352 = vld [vmem:[%s703 + $0x5c] sm:$0xf]
        %v1353 = vld [vmem:[%s703 + $0x60] sm:$0xf]
        %v1354 = vld [vmem:[%s703 + $0x64] sm:$0xf]
        %v1355 = vld [vmem:[%s703 + $0x68] sm:$0xf]
        %v1356 = vld [vmem:[%s703 + $0x6c] sm:$0xf]
        %v1357 = vld [vmem:[%s703 + $0x70] sm:$0xf]
        %v1358 = vld [vmem:[%s703 + $0x74] sm:$0xf]
        %v1359 = vld [vmem:[%s703 + $0x78] sm:$0xf]
        %v1360 = vld [vmem:[%s703 + $0x7c] sm:$0xf]
        %v1361 = vld [vmem:[%s703 + $0x80] sm:$0xf]
        %v1362 = vld [vmem:[%s703 + $0x84] sm:$0xf]
        %v1363 = vld [vmem:[%s703 + $0x88] sm:$0xf]
        %v1364 = vld [vmem:[%s703 + $0x8c] sm:$0xf]
        %v1365 = vld [vmem:[%s703 + $0x90] sm:$0xf]
        %v1366 = vld [vmem:[%s703 + $0x94] sm:$0xf]
        %v1367 = vld [vmem:[%s703 + $0x98] sm:$0xf]
        %v1368 = vld [vmem:[%s703 + $0x9c] sm:$0xf]
        %v1369 = vld [vmem:[%s703 + $0xa0] sm:$0xf]
        %v1370 = vld [vmem:[%s703 + $0xa4] sm:$0xf]
        %v1371 = vld [vmem:[%s703 + $0xa8] sm:$0xf]
        %v1372 = vld [vmem:[%s703 + $0xac] sm:$0xf]
        %v1373 = vld [vmem:[%s703 + $0xb0] sm:$0xf]
        %v1374 = vld [vmem:[%s703 + $0xb4] sm:$0xf]
        %v1375 = vld [vmem:[%s703 + $0xb8] sm:$0xf]
        %v1376 = vld [vmem:[%s703 + $0xbc] sm:$0xf]
        %v1377 = vld [vmem:[%s703 + $0xc0] sm:$0x1]
        %s1378 = scalar_lea.vmem [#allocation5], 64
        %v1379 = vld [vmem:[%s1378] sm:$0xf]
        %v1380 = vld [vmem:[%s1378 + $0x4] sm:$0xf]
        %v1381 = vld [vmem:[%s1378 + $0x8] sm:$0xf]
        %v1382 = vld [vmem:[%s1378 + $0xc] sm:$0xf]
        %v1383 = vld [vmem:[%s1378 + $0x10] sm:$0xf]
        %v1384 = vld [vmem:[%s1378 + $0x14] sm:$0xf]
        %v1385 = vld [vmem:[%s1378 + $0x18] sm:$0xf]
        %v1386 = vld [vmem:[%s1378 + $0x1c] sm:$0xf]
        %v1387 = vld [vmem:[%s1378 + $0x20] sm:$0xf]
        %v1388 = vld [vmem:[%s1378 + $0x24] sm:$0xf]
        %v1389 = vld [vmem:[%s1378 + $0x28] sm:$0xf]
        %v1390 = vld [vmem:[%s1378 + $0x2c] sm:$0xf]
        %v1391 = vld [vmem:[%s1378 + $0x30] sm:$0xf]
        %v1392 = vld [vmem:[%s1378 + $0x34] sm:$0xf]
        %v1393 = vld [vmem:[%s1378 + $0x38] sm:$0xf]
        %v1394 = vld [vmem:[%s1378 + $0x3c] sm:$0xf]
        %v1444 = vunpack.c.l.b16 %v1329
        %v1445 = vunpack.c.l.b16 %v1330
        %v1446 = vunpack.c.l.b16 %v1331
        %v1447 = vunpack.c.l.b16 %v1332
        %v1448 = vunpack.c.l.b16 %v1333
        %v1449 = vunpack.c.l.b16 %v1334
        %v1450 = vunpack.c.l.b16 %v1335
        %v1451 = vunpack.c.l.b16 %v1336
        %v1452 = vunpack.c.l.b16 %v1337
        %v1453 = vunpack.c.l.b16 %v1338
        %v1454 = vunpack.c.l.b16 %v1339
        %v1455 = vunpack.c.l.b16 %v1340
        %v1456 = vunpack.c.l.b16 %v1341
        %v1457 = vunpack.c.l.b16 %v1342
        %v1458 = vunpack.c.l.b16 %v1343
        %v1459 = vunpack.c.l.b16 %v1344
        %v1460 = vunpack.c.l.b16 %v1345
        %v1461 = vunpack.c.l.b16 %v1346
        %v1462 = vunpack.c.l.b16 %v1347
        %v1463 = vunpack.c.l.b16 %v1348
        %v1464 = vunpack.c.l.b16 %v1349
        %v1465 = vunpack.c.l.b16 %v1350
        %v1466 = vunpack.c.l.b16 %v1351
        %v1467 = vunpack.c.l.b16 %v1352
        %v1468 = vunpack.c.l.b16 %v1353
        %v1469 = vunpack.c.l.b16 %v1354
        %v1470 = vunpack.c.l.b16 %v1355
        %v1471 = vunpack.c.l.b16 %v1356
        %v1472 = vunpack.c.l.b16 %v1357
        %v1473 = vunpack.c.l.b16 %v1358
        %v1474 = vunpack.c.l.b16 %v1359
        %v1475 = vunpack.c.l.b16 %v1360
        %v1476 = vunpack.c.l.b16 %v1361
        %v1477 = vunpack.c.l.b16 %v1362
        %v1478 = vunpack.c.l.b16 %v1363
        %v1479 = vunpack.c.l.b16 %v1364
        %v1480 = vunpack.c.l.b16 %v1365
        %v1481 = vunpack.c.l.b16 %v1366
        %v1482 = vunpack.c.l.b16 %v1367
        %v1483 = vunpack.c.l.b16 %v1368
        %v1484 = vunpack.c.l.b16 %v1369
        %v1485 = vunpack.c.l.b16 %v1370
        %v1486 = vunpack.c.l.b16 %v1371
        %v1487 = vunpack.c.l.b16 %v1372
        %v1488 = vunpack.c.l.b16 %v1373
        %v1489 = vunpack.c.l.b16 %v1374
        %v1490 = vunpack.c.l.b16 %v1375
        %v1491 = vunpack.c.l.b16 %v1376
        %v1492 = vunpack.c.l.b16 %v1377
        %v1493 = vpack.c.b16 %v1445, %v1444
        %v1494 = vpack.c.b16 %v1447, %v1446
        %v1495 = vpack.c.b16 %v1449, %v1448
        %v1496 = vpack.c.b16 %v1451, %v1450
        %v1497 = vpack.c.b16 %v1453, %v1452
        %v1498 = vpack.c.b16 %v1455, %v1454
        %v1499 = vpack.c.b16 %v1457, %v1456
        %v1500 = vpack.c.b16 %v1459, %v1458
        %v1501 = vpack.c.b16 %v1461, %v1460
        %v1502 = vpack.c.b16 %v1463, %v1462
        %v1503 = vpack.c.b16 %v1465, %v1464
        %v1504 = vpack.c.b16 %v1467, %v1466
        %v1505 = vpack.c.b16 %v1469, %v1468
        %v1506 = vpack.c.b16 %v1471, %v1470
        %v1507 = vpack.c.b16 %v1473, %v1472
        %v1508 = vpack.c.b16 %v1475, %v1474
        %v1509 = vpack.c.b16 %v1477, %v1476
        %v1510 = vpack.c.b16 %v1479, %v1478
        %v1511 = vpack.c.b16 %v1481, %v1480
        %v1512 = vpack.c.b16 %v1483, %v1482
        %v1513 = vpack.c.b16 %v1485, %v1484
        %v1514 = vpack.c.b16 %v1487, %v1486
        %v1515 = vpack.c.b16 %v1489, %v1488
        %v1516 = vpack.c.b16 %v1491, %v1490
        %v1517 = vpack.c.b16 %v1492, %v1492
        %vm1518 = vcmask 1046528
        %v1519 = vrot.slane %v1493, 1
        %v1520 = vrot.slane %v1494, 1
        %v1521 = vsel %vm1518, %v1519, %v1520
        %v1522 = vrot.slane %v1495, 1
        %v1523 = vsel %vm1518, %v1520, %v1522
        %v1524 = vrot.slane %v1496, 1
        %v1525 = vsel %vm1518, %v1522, %v1524
        %v1526 = vrot.slane %v1497, 1
        %v1527 = vsel %vm1518, %v1524, %v1526
        %v1528 = vrot.slane %v1498, 1
        %v1529 = vsel %vm1518, %v1526, %v1528
        %v1530 = vrot.slane %v1499, 1
        %v1531 = vsel %vm1518, %v1528, %v1530
        %v1532 = vrot.slane %v1500, 1
        %v1533 = vsel %vm1518, %v1530, %v1532
        %v1534 = vrot.slane %v1501, 1
        %v1535 = vsel %vm1518, %v1532, %v1534
        %v1536 = vrot.slane %v1502, 1
        %v1537 = vsel %vm1518, %v1534, %v1536
        %v1538 = vrot.slane %v1503, 1
        %v1539 = vsel %vm1518, %v1536, %v1538
        %v1540 = vrot.slane %v1504, 1
        %v1541 = vsel %vm1518, %v1538, %v1540
        %v1542 = vrot.slane %v1505, 1
        %v1543 = vsel %vm1518, %v1540, %v1542
        %v1544 = vrot.slane %v1506, 1
        %v1545 = vsel %vm1518, %v1542, %v1544
        %v1546 = vrot.slane %v1507, 1
        %v1547 = vsel %vm1518, %v1544, %v1546
        %v1548 = vrot.slane %v1508, 1
        %v1549 = vsel %vm1518, %v1546, %v1548
        %v1550 = vrot.slane %v1509, 1
        %v1551 = vsel %vm1518, %v1548, %v1550
        %v1552 = vrot.slane %v1510, 1
        %v1553 = vsel %vm1518, %v1550, %v1552
        %v1554 = vrot.slane %v1511, 1
        %v1555 = vsel %vm1518, %v1552, %v1554
        %v1556 = vrot.slane %v1512, 1
        %v1557 = vsel %vm1518, %v1554, %v1556
        %v1558 = vrot.slane %v1513, 1
        %v1559 = vsel %vm1518, %v1556, %v1558
        %v1560 = vrot.slane %v1514, 1
        %v1561 = vsel %vm1518, %v1558, %v1560
        %v1562 = vrot.slane %v1515, 1
        %v1563 = vsel %vm1518, %v1560, %v1562
        %v1564 = vrot.slane %v1516, 1
        %v1565 = vsel %vm1518, %v1562, %v1564
        %v1566 = vrot.slane %v1517, 1
        %v1567 = vsel %vm1518, %v1564, %v1566
        %v1608 = vunpack.c.l.b16 %v1379
        %v1609 = vunpack.c.l.b16 %v1380
        %v1610 = vunpack.c.l.b16 %v1381
        %v1611 = vunpack.c.l.b16 %v1382
        %v1612 = vunpack.c.l.b16 %v1383
        %v1613 = vunpack.c.l.b16 %v1384
        %v1614 = vunpack.c.l.b16 %v1385
        %v1615 = vunpack.c.l.b16 %v1386
        %v1616 = vunpack.c.l.b16 %v1387
        %v1617 = vunpack.c.l.b16 %v1388
        %v1618 = vunpack.c.l.b16 %v1389
        %v1619 = vunpack.c.l.b16 %v1390
        %v1620 = vunpack.c.l.b16 %v1391
        %v1621 = vunpack.c.l.b16 %v1392
        %v1622 = vunpack.c.l.b16 %v1393
        %v1623 = vunpack.c.l.b16 %v1394
        %v1624 = vpack.c.b16 %v1609, %v1608
        %v1625 = vpack.c.b16 %v1611, %v1610
        %v1626 = vpack.c.b16 %v1613, %v1612
        %v1627 = vpack.c.b16 %v1615, %v1614
        %v1628 = vpack.c.b16 %v1617, %v1616
        %v1629 = vpack.c.b16 %v1619, %v1618
        %v1630 = vpack.c.b16 %v1621, %v1620
        %v1631 = vpack.c.b16 %v1623, %v1622
        %1640 = vmatprep.subr.bf16.mxu0 0
        %1641 = vmatpush1.bf16.msra.mxu0 %v1624
        %1642 = vmatprep.subr.bf16.mxu0 0
        %1643 = vmatpush1.bf16.msra.mxu0 %v1625
        %1644 = vmatprep.subr.bf16.mxu0 0
        %1645 = vmatpush1.bf16.msra.mxu0 %v1626
        %1646 = vmatprep.subr.bf16.mxu0 0
        %1647 = vmatpush1.bf16.msra.mxu0 %v1627
        %1648 = vmatprep.subr.bf16.mxu0 0
        %1649 = vmatpush1.bf16.msra.mxu0 %v1628
        %1650 = vmatprep.subr.bf16.mxu0 0
        %1651 = vmatpush1.bf16.msra.mxu0 %v1629
        %1652 = vmatprep.subr.bf16.mxu0 0
        %1653 = vmatpush1.bf16.msra.mxu0 %v1630
        %1654 = vmatprep.subr.bf16.mxu0 0
        %1655 = vmatpush1.bf16.msra.mxu0 %v1631
        %1656 = vmatprep.subr.bf16.mxu0 0
        %1657 = vmatpush1.bf16.msra.mxu0 0
        %1658 = vmatprep.subr.bf16.mxu0 0
        %1659 = vmatpush1.bf16.msra.mxu0 0
        %1660 = vmatprep.subr.bf16.mxu0 0
        %1661 = vmatpush1.bf16.msra.mxu0 0
        %1662 = vmatprep.subr.bf16.mxu0 0
        %1663 = vmatpush1.bf16.msra.mxu0 0
        %1664 = vmatprep.subr.bf16.mxu0 0
        %1665 = vmatpush1.bf16.msra.mxu0 0
        %1666 = vmatprep.subr.bf16.mxu0 0
        %1667 = vmatpush1.bf16.msra.mxu0 0
        %1668 = vmatprep.subr.bf16.mxu0 0
        %1669 = vmatpush1.bf16.msra.mxu0 0
        %1670 = vmatprep.subr.bf16.mxu0 0
        %1671 = vmatpush1.bf16.msra.mxu0 0
        %1672 = vmatprep.mubr.bf16.mxu0 0
        %1673 = vmatmul.mubr.bf16.gmra.mrb[0].mxu0 %v1521
        %v1674 = vpop.f32.mrb[0].mxu0
        %v1675 = vadd.f32 0.0, %v1674
        %v1676 = vpop.f32.mrb[0].mxu0
        %v1677 = vpop.f32.mrb[0].mxu0
        %v1678 = vadd.f32 0.0, %v1677
        %v1679 = vpop.f32.mrb[0].mxu0
        %1680 = vmatprep.mubr.bf16.mxu0 0
        %1681 = vmatmul.mubr.bf16.gmra.mrb[0].mxu0 %v1523
        %v1682 = vpop.f32.mrb[0].mxu0
        %v1683 = vadd.f32 0.0, %v1682
        %v1684 = vpop.f32.mrb[0].mxu0
        %v1685 = vpop.f32.mrb[0].mxu0
        %v1686 = vadd.f32 0.0, %v1685
        %v1687 = vpop.f32.mrb[0].mxu0
        %1688 = vmatprep.mubr.bf16.mxu0 0
        %1689 = vmatmul.mubr.bf16.gmra.mrb[0].mxu0 %v1525
        %v1690 = vpop.f32.mrb[0].mxu0
        %v1691 = vadd.f32 0.0, %v1690
        %v1692 = vpop.f32.mrb[0].mxu0
        %v1693 = vpop.f32.mrb[0].mxu0
        %v1694 = vadd.f32 0.0, %v1693
        %v1695 = vpop.f32.mrb[0].mxu0
        %1696 = vmatprep.mubr.bf16.mxu0 0
        %1697 = vmatmul.mubr.bf16.gmra.mrb[0].mxu0 %v1527
        %v1698 = vpop.f32.mrb[0].mxu0
        %v1699 = vadd.f32 0.0, %v1698
        %v1700 = vpop.f32.mrb[0].mxu0
        %v1701 = vpop.f32.mrb[0].mxu0
        %v1702 = vadd.f32 0.0, %v1701
        %v1703 = vpop.f32.mrb[0].mxu0
        %1704 = vmatprep.mubr.bf16.mxu0 0
        %1705 = vmatmul.mubr.bf16.gmra.mrb[0].mxu0 %v1529
        %v1706 = vpop.f32.mrb[0].mxu0
        %v1707 = vadd.f32 0.0, %v1706
        %v1708 = vpop.f32.mrb[0].mxu0
        %v1709 = vpop.f32.mrb[0].mxu0
        %v1710 = vadd.f32 0.0, %v1709
        %v1711 = vpop.f32.mrb[0].mxu0
        %1712 = vmatprep.mubr.bf16.mxu0 0
        %1713 = vmatmul.mubr.bf16.gmra.mrb[0].mxu0 %v1531
        %v1714 = vpop.f32.mrb[0].mxu0
        %v1715 = vadd.f32 0.0, %v1714
        %v1716 = vpop.f32.mrb[0].mxu0
        %v1717 = vpop.f32.mrb[0].mxu0
        %v1718 = vadd.f32 0.0, %v1717
        %v1719 = vpop.f32.mrb[0].mxu0
        %1720 = vmatprep.mubr.bf16.mxu0 0
        %1721 = vmatmul.mubr.bf16.gmra.mrb[0].mxu0 %v1533
        %v1722 = vpop.f32.mrb[0].mxu0
        %v1723 = vadd.f32 0.0, %v1722
        %v1724 = vpop.f32.mrb[0].mxu0
        %v1725 = vpop.f32.mrb[0].mxu0
        %v1726 = vadd.f32 0.0, %v1725
        %v1727 = vpop.f32.mrb[0].mxu0
        %1728 = vmatprep.mubr.bf16.mxu0 0
        %1729 = vmatmul.mubr.bf16.gmra.mrb[0].mxu0 %v1535
        %v1730 = vpop.f32.mrb[0].mxu0
        %v1731 = vadd.f32 0.0, %v1730
        %v1732 = vpop.f32.mrb[0].mxu0
        %v1733 = vpop.f32.mrb[0].mxu0
        %v1734 = vadd.f32 0.0, %v1733
        %v1735 = vpop.f32.mrb[0].mxu0
        %1736 = vmatprep.mubr.bf16.mxu0 0
        %1737 = vmatmul.mubr.bf16.gmra.mrb[0].mxu0 %v1537
        %v1738 = vpop.f32.mrb[0].mxu0
        %v1739 = vadd.f32 0.0, %v1738
        %v1740 = vpop.f32.mrb[0].mxu0
        %v1741 = vpop.f32.mrb[0].mxu0
        %v1742 = vadd.f32 0.0, %v1741
        %v1743 = vpop.f32.mrb[0].mxu0
        %1744 = vmatprep.mubr.bf16.mxu0 0
        %1745 = vmatmul.mubr.bf16.gmra.mrb[0].mxu0 %v1539
        %v1746 = vpop.f32.mrb[0].mxu0
        %v1747 = vadd.f32 0.0, %v1746
        %v1748 = vpop.f32.mrb[0].mxu0
        %v1749 = vpop.f32.mrb[0].mxu0
        %v1750 = vadd.f32 0.0, %v1749
        %v1751 = vpop.f32.mrb[0].mxu0
        %1752 = vmatprep.mubr.bf16.mxu0 0
        %1753 = vmatmul.mubr.bf16.gmra.mrb[0].mxu0 %v1541
        %v1754 = vpop.f32.mrb[0].mxu0
        %v1755 = vadd.f32 0.0, %v1754
        %v1756 = vpop.f32.mrb[0].mxu0
        %v1757 = vpop.f32.mrb[0].mxu0
        %v1758 = vadd.f32 0.0, %v1757
        %v1759 = vpop.f32.mrb[0].mxu0
        %1760 = vmatprep.mubr.bf16.mxu0 0
        %1761 = vmatmul.mubr.bf16.gmra.mrb[0].mxu0 %v1543
        %v1762 = vpop.f32.mrb[0].mxu0
        %v1763 = vadd.f32 0.0, %v1762
        %v1764 = vpop.f32.mrb[0].mxu0
        %v1765 = vpop.f32.mrb[0].mxu0
        %v1766 = vadd.f32 0.0, %v1765
        %v1767 = vpop.f32.mrb[0].mxu0
        %1768 = vmatprep.mubr.bf16.mxu0 0
        %1769 = vmatmul.mubr.bf16.gmra.mrb[0].mxu0 %v1545
        %v1770 = vpop.f32.mrb[0].mxu0
        %v1771 = vadd.f32 0.0, %v1770
        %v1772 = vpop.f32.mrb[0].mxu0
        %v1773 = vpop.f32.mrb[0].mxu0
        %v1774 = vadd.f32 0.0, %v1773
        %v1775 = vpop.f32.mrb[0].mxu0
        %1776 = vmatprep.mubr.bf16.mxu0 0
        %1777 = vmatmul.mubr.bf16.gmra.mrb[0].mxu0 %v1547
        %v1778 = vpop.f32.mrb[0].mxu0
        %v1779 = vadd.f32 0.0, %v1778
        %v1780 = vpop.f32.mrb[0].mxu0
        %v1781 = vpop.f32.mrb[0].mxu0
        %v1782 = vadd.f32 0.0, %v1781
        %v1783 = vpop.f32.mrb[0].mxu0
        %1784 = vmatprep.mubr.bf16.mxu0 0
        %1785 = vmatmul.mubr.bf16.gmra.mrb[0].mxu0 %v1549
        %v1786 = vpop.f32.mrb[0].mxu0
        %v1787 = vadd.f32 0.0, %v1786
        %v1788 = vpop.f32.mrb[0].mxu0
        %v1789 = vpop.f32.mrb[0].mxu0
        %v1790 = vadd.f32 0.0, %v1789
        %v1791 = vpop.f32.mrb[0].mxu0
        %1792 = vmatprep.mubr.bf16.mxu0 0
        %1793 = vmatmul.mubr.bf16.gmra.mrb[0].mxu0 %v1551
        %v1794 = vpop.f32.mrb[0].mxu0
        %v1795 = vadd.f32 0.0, %v1794
        %v1796 = vpop.f32.mrb[0].mxu0
        %v1797 = vpop.f32.mrb[0].mxu0
        %v1798 = vadd.f32 0.0, %v1797
        %v1799 = vpop.f32.mrb[0].mxu0
        %1800 = vmatprep.mubr.bf16.mxu0 0
        %1801 = vmatmul.mubr.bf16.gmra.mrb[0].mxu0 %v1553
        %v1802 = vpop.f32.mrb[0].mxu0
        %v1803 = vadd.f32 0.0, %v1802
        %v1804 = vpop.f32.mrb[0].mxu0
        %v1805 = vpop.f32.mrb[0].mxu0
        %v1806 = vadd.f32 0.0, %v1805
        %v1807 = vpop.f32.mrb[0].mxu0
        %1808 = vmatprep.mubr.bf16.mxu0 0
        %1809 = vmatmul.mubr.bf16.gmra.mrb[0].mxu0 %v1555
        %v1810 = vpop.f32.mrb[0].mxu0
        %v1811 = vadd.f32 0.0, %v1810
        %v1812 = vpop.f32.mrb[0].mxu0
        %v1813 = vpop.f32.mrb[0].mxu0
        %v1814 = vadd.f32 0.0, %v1813
        %v1815 = vpop.f32.mrb[0].mxu0
        %1816 = vmatprep.mubr.bf16.mxu0 0
        %1817 = vmatmul.mubr.bf16.gmra.mrb[0].mxu0 %v1557
        %v1818 = vpop.f32.mrb[0].mxu0
        %v1819 = vadd.f32 0.0, %v1818
        %v1820 = vpop.f32.mrb[0].mxu0
        %v1821 = vpop.f32.mrb[0].mxu0
        %v1822 = vadd.f32 0.0, %v1821
        %v1823 = vpop.f32.mrb[0].mxu0
        %1824 = vmatprep.mubr.bf16.mxu0 0
        %1825 = vmatmul.mubr.bf16.gmra.mrb[0].mxu0 %v1559
        %v1826 = vpop.f32.mrb[0].mxu0
        %v1827 = vadd.f32 0.0, %v1826
        %v1828 = vpop.f32.mrb[0].mxu0
        %v1829 = vpop.f32.mrb[0].mxu0
        %v1830 = vadd.f32 0.0, %v1829
        %v1831 = vpop.f32.mrb[0].mxu0
        %1832 = vmatprep.mubr.bf16.mxu0 0
        %1833 = vmatmul.mubr.bf16.gmra.mrb[0].mxu0 %v1561
        %v1834 = vpop.f32.mrb[0].mxu0
        %v1835 = vadd.f32 0.0, %v1834
        %v1836 = vpop.f32.mrb[0].mxu0
        %v1837 = vpop.f32.mrb[0].mxu0
        %v1838 = vadd.f32 0.0, %v1837
        %v1839 = vpop.f32.mrb[0].mxu0
        %1840 = vmatprep.mubr.bf16.mxu0 0
        %1841 = vmatmul.mubr.bf16.gmra.mrb[0].mxu0 %v1563
        %v1842 = vpop.f32.mrb[0].mxu0
        %v1843 = vadd.f32 0.0, %v1842
        %v1844 = vpop.f32.mrb[0].mxu0
        %v1845 = vpop.f32.mrb[0].mxu0
        %v1846 = vadd.f32 0.0, %v1845
        %v1847 = vpop.f32.mrb[0].mxu0
        %1848 = vmatprep.mubr.bf16.mxu0 0
        %1849 = vmatmul.mubr.bf16.gmra.mrb[0].mxu0 %v1565
        %v1850 = vpop.f32.mrb[0].mxu0
        %v1851 = vadd.f32 0.0, %v1850
        %v1852 = vpop.f32.mrb[0].mxu0
        %v1853 = vpop.f32.mrb[0].mxu0
        %v1854 = vadd.f32 0.0, %v1853
        %v1855 = vpop.f32.mrb[0].mxu0
        %1856 = vmatprep.mubr.bf16.mxu0 0
        %1857 = vmatmul.mubr.bf16.gmra.mrb[0].mxu0 %v1567
        %v1858 = vpop.f32.mrb[0].mxu0
        %v1859 = vadd.f32 0.0, %v1858
        %v1860 = vpop.f32.mrb[0].mxu0
        %v1861 = vpop.f32.mrb[0].mxu0
        %v1862 = vadd.f32 0.0, %v1861
        %v1863 = vpop.f32.mrb[0].mxu0
        %1864 = vdwg.mxu0
        %v1865 = vadd.f32 %v1281, %v1675
        %v1866 = vadd.f32 %v1282, %v1678
        %v1867 = vadd.f32 %v1283, %v1683
        %v1868 = vadd.f32 %v1284, %v1686
        %v1869 = vadd.f32 %v1285, %v1691
        %v1870 = vadd.f32 %v1286, %v1694
        %v1871 = vadd.f32 %v1287, %v1699
        %v1872 = vadd.f32 %v1288, %v1702
        %v1873 = vadd.f32 %v1289, %v1707
        %v1874 = vadd.f32 %v1290, %v1710
        %v1875 = vadd.f32 %v1291, %v1715
        %v1876 = vadd.f32 %v1292, %v1718
        %v1877 = vadd.f32 %v1293, %v1723
        %v1878 = vadd.f32 %v1294, %v1726
        %v1879 = vadd.f32 %v1295, %v1731
        %v1880 = vadd.f32 %v1296, %v1734
        %v1881 = vadd.f32 %v1297, %v1739
        %v1882 = vadd.f32 %v1298, %v1742
        %v1883 = vadd.f32 %v1299, %v1747
        %v1884 = vadd.f32 %v1300, %v1750
        %v1885 = vadd.f32 %v1301, %v1755
        %v1886 = vadd.f32 %v1302, %v1758
        %v1887 = vadd.f32 %v1303, %v1763
        %v1888 = vadd.f32 %v1304, %v1766
        %v1889 = vadd.f32 %v1305, %v1771
        %v1890 = vadd.f32 %v1306, %v1774
        %v1891 = vadd.f32 %v1307, %v1779
        %v1892 = vadd.f32 %v1308, %v1782
        %v1893 = vadd.f32 %v1309, %v1787
        %v1894 = vadd.f32 %v1310, %v1790
        %v1895 = vadd.f32 %v1311, %v1795
        %v1896 = vadd.f32 %v1312, %v1798
        %v1897 = vadd.f32 %v1313, %v1803
        %v1898 = vadd.f32 %v1314, %v1806
        %v1899 = vadd.f32 %v1315, %v1811
        %v1900 = vadd.f32 %v1316, %v1814
        %v1901 = vadd.f32 %v1317, %v1819
        %v1902 = vadd.f32 %v1318, %v1822
        %v1903 = vadd.f32 %v1319, %v1827
        %v1904 = vadd.f32 %v1320, %v1830
        %v1905 = vadd.f32 %v1321, %v1835
        %v1906 = vadd.f32 %v1322, %v1838
        %v1907 = vadd.f32 %v1323, %v1843
        %v1908 = vadd.f32 %v1324, %v1846
        %v1909 = vadd.f32 %v1325, %v1851
        %v1910 = vadd.f32 %v1326, %v1854
        %v1911 = vadd.f32 %v1327, %v1859
        %v1912 = vadd.f32 %v1328, %v1862
        %1913 = vst [vmem:[#allocation4] sm:$0xff] %v1865
        %1914 = vst [vmem:[#allocation4 + $0x8] sm:$0xff] %v1866
        %1915 = vst [vmem:[#allocation4 + $0x10] sm:$0xff] %v1867
        %1916 = vst [vmem:[#allocation4 + $0x18] sm:$0xff] %v1868
        %1917 = vst [vmem:[#allocation4 + $0x20] sm:$0xff] %v1869
        %1918 = vst [vmem:[#allocation4 + $0x28] sm:$0xff] %v1870
        %1919 = vst [vmem:[#allocation4 + $0x30] sm:$0xff] %v1871
        %1920 = vst [vmem:[#allocation4 + $0x38] sm:$0xff] %v1872
        %1921 = vst [vmem:[#allocation4 + $0x40] sm:$0xff] %v1873
        %1922 = vst [vmem:[#allocation4 + $0x48] sm:$0xff] %v1874
        %1923 = vst [vmem:[#allocation4 + $0x50] sm:$0xff] %v1875
        %1924 = vst [vmem:[#allocation4 + $0x58] sm:$0xff] %v1876
        %1925 = vst [vmem:[#allocation4 + $0x60] sm:$0xff] %v1877
        %1926 = vst [vmem:[#allocation4 + $0x68] sm:$0xff] %v1878
        %1927 = vst [vmem:[#allocation4 + $0x70] sm:$0xff] %v1879
        %1928 = vst [vmem:[#allocation4 + $0x78] sm:$0xff] %v1880
        %1929 = vst [vmem:[#allocation4 + $0x80] sm:$0xff] %v1881
        %1930 = vst [vmem:[#allocation4 + $0x88] sm:$0xff] %v1882
        %1931 = vst [vmem:[#allocation4 + $0x90] sm:$0xff] %v1883
        %1932 = vst [vmem:[#allocation4 + $0x98] sm:$0xff] %v1884
        %1933 = vst [vmem:[#allocation4 + $0xa0] sm:$0xff] %v1885
        %1934 = vst [vmem:[#allocation4 + $0xa8] sm:$0xff] %v1886
        %1935 = vst [vmem:[#allocation4 + $0xb0] sm:$0xff] %v1887
        %1936 = vst [vmem:[#allocation4 + $0xb8] sm:$0xff] %v1888
        %1937 = vst [vmem:[#allocation4 + $0xc0] sm:$0xff] %v1889
        %1938 = vst [vmem:[#allocation4 + $0xc8] sm:$0xff] %v1890
        %1939 = vst [vmem:[#allocation4 + $0xd0] sm:$0xff] %v1891
        %1940 = vst [vmem:[#allocation4 + $0xd8] sm:$0xff] %v1892
        %1941 = vst [vmem:[#allocation4 + $0xe0] sm:$0xff] %v1893
        %1942 = vst [vmem:[#allocation4 + $0xe8] sm:$0xff] %v1894
        %1943 = vst [vmem:[#allocation4 + $0xf0] sm:$0xff] %v1895
        %1944 = vst [vmem:[#allocation4 + $0xf8] sm:$0xff] %v1896
        %1945 = vst [vmem:[#allocation4 + $0x100] sm:$0xff] %v1897
        %1946 = vst [vmem:[#allocation4 + $0x108] sm:$0xff] %v1898
        %1947 = vst [vmem:[#allocation4 + $0x110] sm:$0xff] %v1899
        %1948 = vst [vmem:[#allocation4 + $0x118] sm:$0xff] %v1900
        %1949 = vst [vmem:[#allocation4 + $0x120] sm:$0xff] %v1901
        %1950 = vst [vmem:[#allocation4 + $0x128] sm:$0xff] %v1902
        %1951 = vst [vmem:[#allocation4 + $0x130] sm:$0xff] %v1903
        %1952 = vst [vmem:[#allocation4 + $0x138] sm:$0xff] %v1904
        %1953 = vst [vmem:[#allocation4 + $0x140] sm:$0xff] %v1905
        %1954 = vst [vmem:[#allocation4 + $0x148] sm:$0xff] %v1906
        %1955 = vst [vmem:[#allocation4 + $0x150] sm:$0xff] %v1907
        %1956 = vst [vmem:[#allocation4 + $0x158] sm:$0xff] %v1908
        %1957 = vst [vmem:[#allocation4 + $0x160] sm:$0xff] %v1909
        %1958 = vst [vmem:[#allocation4 + $0x168] sm:$0xff] %v1910
        %1959 = vst [vmem:[#allocation4 + $0x170] sm:$0xff] %v1911
        %1960 = vst [vmem:[#allocation4 + $0x178] sm:$0xff] %v1912
        %v1961 = vld [vmem:[#allocation4] sm:$0xff]
        %v1962 = vld [vmem:[#allocation4 + $0x8] sm:$0xff]
        %v1963 = vld [vmem:[#allocation4 + $0x10] sm:$0xff]
        %v1964 = vld [vmem:[#allocation4 + $0x18] sm:$0xff]
        %v1965 = vld [vmem:[#allocation4 + $0x20] sm:$0xff]
        %v1966 = vld [vmem:[#allocation4 + $0x28] sm:$0xff]
        %v1967 = vld [vmem:[#allocation4 + $0x30] sm:$0xff]
        %v1968 = vld [vmem:[#allocation4 + $0x38] sm:$0xff]
        %v1969 = vld [vmem:[#allocation4 + $0x40] sm:$0xff]
        %v1970 = vld [vmem:[#allocation4 + $0x48] sm:$0xff]
        %v1971 = vld [vmem:[#allocation4 + $0x50] sm:$0xff]
        %v1972 = vld [vmem:[#allocation4 + $0x58] sm:$0xff]
        %v1973 = vld [vmem:[#allocation4 + $0x60] sm:$0xff]
        %v1974 = vld [vmem:[#allocation4 + $0x68] sm:$0xff]
        %v1975 = vld [vmem:[#allocation4 + $0x70] sm:$0xff]
        %v1976 = vld [vmem:[#allocation4 + $0x78] sm:$0xff]
        %v1977 = vld [vmem:[#allocation4 + $0x80] sm:$0xff]
        %v1978 = vld [vmem:[#allocation4 + $0x88] sm:$0xff]
        %v1979 = vld [vmem:[#allocation4 + $0x90] sm:$0xff]
        %v1980 = vld [vmem:[#allocation4 + $0x98] sm:$0xff]
        %v1981 = vld [vmem:[#allocation4 + $0xa0] sm:$0xff]
        %v1982 = vld [vmem:[#allocation4 + $0xa8] sm:$0xff]
        %v1983 = vld [vmem:[#allocation4 + $0xb0] sm:$0xff]
        %v1984 = vld [vmem:[#allocation4 + $0xb8] sm:$0xff]
        %v1985 = vld [vmem:[#allocation4 + $0xc0] sm:$0xff]
        %v1986 = vld [vmem:[#allocation4 + $0xc8] sm:$0xff]
        %v1987 = vld [vmem:[#allocation4 + $0xd0] sm:$0xff]
        %v1988 = vld [vmem:[#allocation4 + $0xd8] sm:$0xff]
        %v1989 = vld [vmem:[#allocation4 + $0xe0] sm:$0xff]
        %v1990 = vld [vmem:[#allocation4 + $0xe8] sm:$0xff]
        %v1991 = vld [vmem:[#allocation4 + $0xf0] sm:$0xff]
        %v1992 = vld [vmem:[#allocation4 + $0xf8] sm:$0xff]
        %v1993 = vld [vmem:[#allocation4 + $0x100] sm:$0xff]
        %v1994 = vld [vmem:[#allocation4 + $0x108] sm:$0xff]
        %v1995 = vld [vmem:[#allocation4 + $0x110] sm:$0xff]
        %v1996 = vld [vmem:[#allocation4 + $0x118] sm:$0xff]
        %v1997 = vld [vmem:[#allocation4 + $0x120] sm:$0xff]
        %v1998 = vld [vmem:[#allocation4 + $0x128] sm:$0xff]
        %v1999 = vld [vmem:[#allocation4 + $0x130] sm:$0xff]
        %v2000 = vld [vmem:[#allocation4 + $0x138] sm:$0xff]
        %v2001 = vld [vmem:[#allocation4 + $0x140] sm:$0xff]
        %v2002 = vld [vmem:[#allocation4 + $0x148] sm:$0xff]
        %v2003 = vld [vmem:[#allocation4 + $0x150] sm:$0xff]
        %v2004 = vld [vmem:[#allocation4 + $0x158] sm:$0xff]
        %v2005 = vld [vmem:[#allocation4 + $0x160] sm:$0xff]
        %v2006 = vld [vmem:[#allocation4 + $0x168] sm:$0xff]
        %v2007 = vld [vmem:[#allocation4 + $0x170] sm:$0xff]
        %v2008 = vld [vmem:[#allocation4 + $0x178] sm:$0xff]
        %v2009 = vld [vmem:[%s703] sm:$0xc]
        %v2010 = vld [vmem:[%s703 + $0x4] sm:$0xf]
        %v2011 = vld [vmem:[%s703 + $0x8] sm:$0xf]
        %v2012 = vld [vmem:[%s703 + $0xc] sm:$0xf]
        %v2013 = vld [vmem:[%s703 + $0x10] sm:$0xf]
        %v2014 = vld [vmem:[%s703 + $0x14] sm:$0xf]
        %v2015 = vld [vmem:[%s703 + $0x18] sm:$0xf]
        %v2016 = vld [vmem:[%s703 + $0x1c] sm:$0xf]
        %v2017 = vld [vmem:[%s703 + $0x20] sm:$0xf]
        %v2018 = vld [vmem:[%s703 + $0x24] sm:$0xf]
        %v2019 = vld [vmem:[%s703 + $0x28] sm:$0xf]
        %v2020 = vld [vmem:[%s703 + $0x2c] sm:$0xf]
        %v2021 = vld [vmem:[%s703 + $0x30] sm:$0xf]
        %v2022 = vld [vmem:[%s703 + $0x34] sm:$0xf]
        %v2023 = vld [vmem:[%s703 + $0x38] sm:$0xf]
        %v2024 = vld [vmem:[%s703 + $0x3c] sm:$0xf]
        %v2025 = vld [vmem:[%s703 + $0x40] sm:$0xf]
        %v2026 = vld [vmem:[%s703 + $0x44] sm:$0xf]
        %v2027 = vld [vmem:[%s703 + $0x48] sm:$0xf]
        %v2028 = vld [vmem:[%s703 + $0x4c] sm:$0xf]
        %v2029 = vld [vmem:[%s703 + $0x50] sm:$0xf]
        %v2030 = vld [vmem:[%s703 + $0x54] sm:$0xf]
        %v2031 = vld [vmem:[%s703 + $0x58] sm:$0xf]
        %v2032 = vld [vmem:[%s703 + $0x5c] sm:$0xf]
        %v2033 = vld [vmem:[%s703 + $0x60] sm:$0xf]
        %v2034 = vld [vmem:[%s703 + $0x64] sm:$0xf]
        %v2035 = vld [vmem:[%s703 + $0x68] sm:$0xf]
        %v2036 = vld [vmem:[%s703 + $0x6c] sm:$0xf]
        %v2037 = vld [vmem:[%s703 + $0x70] sm:$0xf]
        %v2038 = vld [vmem:[%s703 + $0x74] sm:$0xf]
        %v2039 = vld [vmem:[%s703 + $0x78] sm:$0xf]
        %v2040 = vld [vmem:[%s703 + $0x7c] sm:$0xf]
        %v2041 = vld [vmem:[%s703 + $0x80] sm:$0xf]
        %v2042 = vld [vmem:[%s703 + $0x84] sm:$0xf]
        %v2043 = vld [vmem:[%s703 + $0x88] sm:$0xf]
        %v2044 = vld [vmem:[%s703 + $0x8c] sm:$0xf]
        %v2045 = vld [vmem:[%s703 + $0x90] sm:$0xf]
        %v2046 = vld [vmem:[%s703 + $0x94] sm:$0xf]
        %v2047 = vld [vmem:[%s703 + $0x98] sm:$0xf]
        %v2048 = vld [vmem:[%s703 + $0x9c] sm:$0xf]
        %v2049 = vld [vmem:[%s703 + $0xa0] sm:$0xf]
        %v2050 = vld [vmem:[%s703 + $0xa4] sm:$0xf]
        %v2051 = vld [vmem:[%s703 + $0xa8] sm:$0xf]
        %v2052 = vld [vmem:[%s703 + $0xac] sm:$0xf]
        %v2053 = vld [vmem:[%s703 + $0xb0] sm:$0xf]
        %v2054 = vld [vmem:[%s703 + $0xb4] sm:$0xf]
        %v2055 = vld [vmem:[%s703 + $0xb8] sm:$0xf]
        %v2056 = vld [vmem:[%s703 + $0xbc] sm:$0xf]
        %v2057 = vld [vmem:[%s703 + $0xc0] sm:$0x3]
        %s2058 = scalar_lea.vmem [#allocation5], 128
        %v2059 = vld [vmem:[%s2058] sm:$0xf]
        %v2060 = vld [vmem:[%s2058 + $0x4] sm:$0xf]
        %v2061 = vld [vmem:[%s2058 + $0x8] sm:$0xf]
        %v2062 = vld [vmem:[%s2058 + $0xc] sm:$0xf]
        %v2063 = vld [vmem:[%s2058 + $0x10] sm:$0xf]
        %v2064 = vld [vmem:[%s2058 + $0x14] sm:$0xf]
        %v2065 = vld [vmem:[%s2058 + $0x18] sm:$0xf]
        %v2066 = vld [vmem:[%s2058 + $0x1c] sm:$0xf]
        %v2067 = vld [vmem:[%s2058 + $0x20] sm:$0xf]
        %v2068 = vld [vmem:[%s2058 + $0x24] sm:$0xf]
        %v2069 = vld [vmem:[%s2058 + $0x28] sm:$0xf]
        %v2070 = vld [vmem:[%s2058 + $0x2c] sm:$0xf]
        %v2071 = vld [vmem:[%s2058 + $0x30] sm:$0xf]
        %v2072 = vld [vmem:[%s2058 + $0x34] sm:$0xf]
        %v2073 = vld [vmem:[%s2058 + $0x38] sm:$0xf]
        %v2074 = vld [vmem:[%s2058 + $0x3c] sm:$0xf]
        %v2124 = vunpack.c.l.b16 %v2009
        %v2125 = vunpack.c.l.b16 %v2010
        %v2126 = vunpack.c.l.b16 %v2011
        %v2127 = vunpack.c.l.b16 %v2012
        %v2128 = vunpack.c.l.b16 %v2013
        %v2129 = vunpack.c.l.b16 %v2014
        %v2130 = vunpack.c.l.b16 %v2015
        %v2131 = vunpack.c.l.b16 %v2016
        %v2132 = vunpack.c.l.b16 %v2017
        %v2133 = vunpack.c.l.b16 %v2018
        %v2134 = vunpack.c.l.b16 %v2019
        %v2135 = vunpack.c.l.b16 %v2020
        %v2136 = vunpack.c.l.b16 %v2021
        %v2137 = vunpack.c.l.b16 %v2022
        %v2138 = vunpack.c.l.b16 %v2023
        %v2139 = vunpack.c.l.b16 %v2024
        %v2140 = vunpack.c.l.b16 %v2025
        %v2141 = vunpack.c.l.b16 %v2026
        %v2142 = vunpack.c.l.b16 %v2027
        %v2143 = vunpack.c.l.b16 %v2028
        %v2144 = vunpack.c.l.b16 %v2029
        %v2145 = vunpack.c.l.b16 %v2030
        %v2146 = vunpack.c.l.b16 %v2031
        %v2147 = vunpack.c.l.b16 %v2032
        %v2148 = vunpack.c.l.b16 %v2033
        %v2149 = vunpack.c.l.b16 %v2034
        %v2150 = vunpack.c.l.b16 %v2035
        %v2151 = vunpack.c.l.b16 %v2036
        %v2152 = vunpack.c.l.b16 %v2037
        %v2153 = vunpack.c.l.b16 %v2038
        %v2154 = vunpack.c.l.b16 %v2039
        %v2155 = vunpack.c.l.b16 %v2040
        %v2156 = vunpack.c.l.b16 %v2041
        %v2157 = vunpack.c.l.b16 %v2042
        %v2158 = vunpack.c.l.b16 %v2043
        %v2159 = vunpack.c.l.b16 %v2044
        %v2160 = vunpack.c.l.b16 %v2045
        %v2161 = vunpack.c.l.b16 %v2046
        %v2162 = vunpack.c.l.b16 %v2047
        %v2163 = vunpack.c.l.b16 %v2048
        %v2164 = vunpack.c.l.b16 %v2049
        %v2165 = vunpack.c.l.b16 %v2050
        %v2166 = vunpack.c.l.b16 %v2051
        %v2167 = vunpack.c.l.b16 %v2052
        %v2168 = vunpack.c.l.b16 %v2053
        %v2169 = vunpack.c.l.b16 %v2054
        %v2170 = vunpack.c.l.b16 %v2055
        %v2171 = vunpack.c.l.b16 %v2056
        %v2172 = vunpack.c.l.b16 %v2057
        %v2173 = vpack.c.b16 %v2125, %v2124
        %v2174 = vpack.c.b16 %v2127, %v2126
        %v2175 = vpack.c.b16 %v2129, %v2128
        %v2176 = vpack.c.b16 %v2131, %v2130
        %v2177 = vpack.c.b16 %v2133, %v2132
        %v2178 = vpack.c.b16 %v2135, %v2134
        %v2179 = vpack.c.b16 %v2137, %v2136
        %v2180 = vpack.c.b16 %v2139, %v2138
        %v2181 = vpack.c.b16 %v2141, %v2140
        %v2182 = vpack.c.b16 %v2143, %v2142
        %v2183 = vpack.c.b16 %v2145, %v2144
        %v2184 = vpack.c.b16 %v2147, %v2146
        %v2185 = vpack.c.b16 %v2149, %v2148
        %v2186 = vpack.c.b16 %v2151, %v2150
        %v2187 = vpack.c.b16 %v2153, %v2152
        %v2188 = vpack.c.b16 %v2155, %v2154
        %v2189 = vpack.c.b16 %v2157, %v2156
        %v2190 = vpack.c.b16 %v2159, %v2158
        %v2191 = vpack.c.b16 %v2161, %v2160
        %v2192 = vpack.c.b16 %v2163, %v2162
        %v2193 = vpack.c.b16 %v2165, %v2164
        %v2194 = vpack.c.b16 %v2167, %v2166
        %v2195 = vpack.c.b16 %v2169, %v2168
        %v2196 = vpack.c.b16 %v2171, %v2170
        %v2197 = vpack.c.b16 %v2172, %v2172
        %vm2198 = vcmask 1045504
        %v2199 = vrot.slane %v2173, 2
        %v2200 = vrot.slane %v2174, 2
        %v2201 = vsel %vm2198, %v2199, %v2200
        %v2202 = vrot.slane %v2175, 2
        %v2203 = vsel %vm2198, %v2200, %v2202
        %v2204 = vrot.slane %v2176, 2
        %v2205 = vsel %vm2198, %v2202, %v2204
        %v2206 = vrot.slane %v2177, 2
        %v2207 = vsel %vm2198, %v2204, %v2206
        %v2208 = vrot.slane %v2178, 2
        %v2209 = vsel %vm2198, %v2206, %v2208
        %v2210 = vrot.slane %v2179, 2
        %v2211 = vsel %vm2198, %v2208, %v2210
        %v2212 = vrot.slane %v2180, 2
        %v2213 = vsel %vm2198, %v2210, %v2212
        %v2214 = vrot.slane %v2181, 2
        %v2215 = vsel %vm2198, %v2212, %v2214
        %v2216 = vrot.slane %v2182, 2
        %v2217 = vsel %vm2198, %v2214, %v2216
        %v2218 = vrot.slane %v2183, 2
        %v2219 = vsel %vm2198, %v2216, %v2218
        %v2220 = vrot.slane %v2184, 2
        %v2221 = vsel %vm2198, %v2218, %v2220
        %v2222 = vrot.slane %v2185, 2
        %v2223 = vsel %vm2198, %v2220, %v2222
        %v2224 = vrot.slane %v2186, 2
        %v2225 = vsel %vm2198, %v2222, %v2224
        %v2226 = vrot.slane %v2187, 2
        %v2227 = vsel %vm2198, %v2224, %v2226
        %v2228 = vrot.slane %v2188, 2
        %v2229 = vsel %vm2198, %v2226, %v2228
        %v2230 = vrot.slane %v2189, 2
        %v2231 = vsel %vm2198, %v2228, %v2230
        %v2232 = vrot.slane %v2190, 2
        %v2233 = vsel %vm2198, %v2230, %v2232
        %v2234 = vrot.slane %v2191, 2
        %v2235 = vsel %vm2198, %v2232, %v2234
        %v2236 = vrot.slane %v2192, 2
        %v2237 = vsel %vm2198, %v2234, %v2236
        %v2238 = vrot.slane %v2193, 2
        %v2239 = vsel %vm2198, %v2236, %v2238
        %v2240 = vrot.slane %v2194, 2
        %v2241 = vsel %vm2198, %v2238, %v2240
        %v2242 = vrot.slane %v2195, 2
        %v2243 = vsel %vm2198, %v2240, %v2242
        %v2244 = vrot.slane %v2196, 2
        %v2245 = vsel %vm2198, %v2242, %v2244
        %v2246 = vrot.slane %v2197, 2
        %v2247 = vsel %vm2198, %v2244, %v2246
        %v2288 = vunpack.c.l.b16 %v2059
        %v2289 = vunpack.c.l.b16 %v2060
        %v2290 = vunpack.c.l.b16 %v2061
        %v2291 = vunpack.c.l.b16 %v2062
        %v2292 = vunpack.c.l.b16 %v2063
        %v2293 = vunpack.c.l.b16 %v2064
        %v2294 = vunpack.c.l.b16 %v2065
        %v2295 = vunpack.c.l.b16 %v2066
        %v2296 = vunpack.c.l.b16 %v2067
        %v2297 = vunpack.c.l.b16 %v2068
        %v2298 = vunpack.c.l.b16 %v2069
        %v2299 = vunpack.c.l.b16 %v2070
        %v2300 = vunpack.c.l.b16 %v2071
        %v2301 = vunpack.c.l.b16 %v2072
        %v2302 = vunpack.c.l.b16 %v2073
        %v2303 = vunpack.c.l.b16 %v2074
        %v2304 = vpack.c.b16 %v2289, %v2288
        %v2305 = vpack.c.b16 %v2291, %v2290
        %v2306 = vpack.c.b16 %v2293, %v2292
        %v2307 = vpack.c.b16 %v2295, %v2294
        %v2308 = vpack.c.b16 %v2297, %v2296
        %v2309 = vpack.c.b16 %v2299, %v2298
        %v2310 = vpack.c.b16 %v2301, %v2300
        %v2311 = vpack.c.b16 %v2303, %v2302
        %2320 = vmatprep.subr.bf16.mxu0 0
        %2321 = vmatpush1.bf16.msra.mxu0 %v2304
        %2322 = vmatprep.subr.bf16.mxu0 0
        %2323 = vmatpush1.bf16.msra.mxu0 %v2305
        %2324 = vmatprep.subr.bf16.mxu0 0
        %2325 = vmatpush1.bf16.msra.mxu0 %v2306
        %2326 = vmatprep.subr.bf16.mxu0 0
        %2327 = vmatpush1.bf16.msra.mxu0 %v2307
        %2328 = vmatprep.subr.bf16.mxu0 0
        %2329 = vmatpush1.bf16.msra.mxu0 %v2308
        %2330 = vmatprep.subr.bf16.mxu0 0
        %2331 = vmatpush1.bf16.msra.mxu0 %v2309
        %2332 = vmatprep.subr.bf16.mxu0 0
        %2333 = vmatpush1.bf16.msra.mxu0 %v2310
        %2334 = vmatprep.subr.bf16.mxu0 0
        %2335 = vmatpush1.bf16.msra.mxu0 %v2311
        %2336 = vmatprep.subr.bf16.mxu0 0
        %2337 = vmatpush1.bf16.msra.mxu0 0
        %2338 = vmatprep.subr.bf16.mxu0 0
        %2339 = vmatpush1.bf16.msra.mxu0 0
        %2340 = vmatprep.subr.bf16.mxu0 0
        %2341 = vmatpush1.bf16.msra.mxu0 0
        %2342 = vmatprep.subr.bf16.mxu0 0
        %2343 = vmatpush1.bf16.msra.mxu0 0
        %2344 = vmatprep.subr.bf16.mxu0 0
        %2345 = vmatpush1.bf16.msra.mxu0 0
        %2346 = vmatprep.subr.bf16.mxu0 0
        %2347 = vmatpush1.bf16.msra.mxu0 0
        %2348 = vmatprep.subr.bf16.mxu0 0
        %2349 = vmatpush1.bf16.msra.mxu0 0
        %2350 = vmatprep.subr.bf16.mxu0 0
        %2351 = vmatpush1.bf16.msra.mxu0 0
        %2352 = vmatprep.mubr.bf16.mxu0 0
        %2353 = vmatmul.mubr.bf16.gmra.mrb[0].mxu0 %v2201
        %v2354 = vpop.f32.mrb[0].mxu0
        %v2355 = vadd.f32 0.0, %v2354
        %v2356 = vpop.f32.mrb[0].mxu0
        %v2357 = vpop.f32.mrb[0].mxu0
        %v2358 = vadd.f32 0.0, %v2357
        %v2359 = vpop.f32.mrb[0].mxu0
        %2360 = vmatprep.mubr.bf16.mxu0 0
        %2361 = vmatmul.mubr.bf16.gmra.mrb[0].mxu0 %v2203
        %v2362 = vpop.f32.mrb[0].mxu0
        %v2363 = vadd.f32 0.0, %v2362
        %v2364 = vpop.f32.mrb[0].mxu0
        %v2365 = vpop.f32.mrb[0].mxu0
        %v2366 = vadd.f32 0.0, %v2365
        %v2367 = vpop.f32.mrb[0].mxu0
        %2368 = vmatprep.mubr.bf16.mxu0 0
        %2369 = vmatmul.mubr.bf16.gmra.mrb[0].mxu0 %v2205
        %v2370 = vpop.f32.mrb[0].mxu0
        %v2371 = vadd.f32 0.0, %v2370
        %v2372 = vpop.f32.mrb[0].mxu0
        %v2373 = vpop.f32.mrb[0].mxu0
        %v2374 = vadd.f32 0.0, %v2373
        %v2375 = vpop.f32.mrb[0].mxu0
        %2376 = vmatprep.mubr.bf16.mxu0 0
        %2377 = vmatmul.mubr.bf16.gmra.mrb[0].mxu0 %v2207
        %v2378 = vpop.f32.mrb[0].mxu0
        %v2379 = vadd.f32 0.0, %v2378
        %v2380 = vpop.f32.mrb[0].mxu0
        %v2381 = vpop.f32.mrb[0].mxu0
        %v2382 = vadd.f32 0.0, %v2381
        %v2383 = vpop.f32.mrb[0].mxu0
        %2384 = vmatprep.mubr.bf16.mxu0 0
        %2385 = vmatmul.mubr.bf16.gmra.mrb[0].mxu0 %v2209
        %v2386 = vpop.f32.mrb[0].mxu0
        %v2387 = vadd.f32 0.0, %v2386
        %v2388 = vpop.f32.mrb[0].mxu0
        %v2389 = vpop.f32.mrb[0].mxu0
        %v2390 = vadd.f32 0.0, %v2389
        %v2391 = vpop.f32.mrb[0].mxu0
        %2392 = vmatprep.mubr.bf16.mxu0 0
        %2393 = vmatmul.mubr.bf16.gmra.mrb[0].mxu0 %v2211
        %v2394 = vpop.f32.mrb[0].mxu0
        %v2395 = vadd.f32 0.0, %v2394
        %v2396 = vpop.f32.mrb[0].mxu0
        %v2397 = vpop.f32.mrb[0].mxu0
        %v2398 = vadd.f32 0.0, %v2397
        %v2399 = vpop.f32.mrb[0].mxu0
        %2400 = vmatprep.mubr.bf16.mxu0 0
        %2401 = vmatmul.mubr.bf16.gmra.mrb[0].mxu0 %v2213
        %v2402 = vpop.f32.mrb[0].mxu0
        %v2403 = vadd.f32 0.0, %v2402
        %v2404 = vpop.f32.mrb[0].mxu0
        %v2405 = vpop.f32.mrb[0].mxu0
        %v2406 = vadd.f32 0.0, %v2405
        %v2407 = vpop.f32.mrb[0].mxu0
        %2408 = vmatprep.mubr.bf16.mxu0 0
        %2409 = vmatmul.mubr.bf16.gmra.mrb[0].mxu0 %v2215
        %v2410 = vpop.f32.mrb[0].mxu0
        %v2411 = vadd.f32 0.0, %v2410
        %v2412 = vpop.f32.mrb[0].mxu0
        %v2413 = vpop.f32.mrb[0].mxu0
        %v2414 = vadd.f32 0.0, %v2413
        %v2415 = vpop.f32.mrb[0].mxu0
        %2416 = vmatprep.mubr.bf16.mxu0 0
        %2417 = vmatmul.mubr.bf16.gmra.mrb[0].mxu0 %v2217
        %v2418 = vpop.f32.mrb[0].mxu0
        %v2419 = vadd.f32 0.0, %v2418
        %v2420 = vpop.f32.mrb[0].mxu0
        %v2421 = vpop.f32.mrb[0].mxu0
        %v2422 = vadd.f32 0.0, %v2421
        %v2423 = vpop.f32.mrb[0].mxu0
        %2424 = vmatprep.mubr.bf16.mxu0 0
        %2425 = vmatmul.mubr.bf16.gmra.mrb[0].mxu0 %v2219
        %v2426 = vpop.f32.mrb[0].mxu0
        %v2427 = vadd.f32 0.0, %v2426
        %v2428 = vpop.f32.mrb[0].mxu0
        %v2429 = vpop.f32.mrb[0].mxu0
        %v2430 = vadd.f32 0.0, %v2429
        %v2431 = vpop.f32.mrb[0].mxu0
        %2432 = vmatprep.mubr.bf16.mxu0 0
        %2433 = vmatmul.mubr.bf16.gmra.mrb[0].mxu0 %v2221
        %v2434 = vpop.f32.mrb[0].mxu0
        %v2435 = vadd.f32 0.0, %v2434
        %v2436 = vpop.f32.mrb[0].mxu0
        %v2437 = vpop.f32.mrb[0].mxu0
        %v2438 = vadd.f32 0.0, %v2437
        %v2439 = vpop.f32.mrb[0].mxu0
        %2440 = vmatprep.mubr.bf16.mxu0 0
        %2441 = vmatmul.mubr.bf16.gmra.mrb[0].mxu0 %v2223
        %v2442 = vpop.f32.mrb[0].mxu0
        %v2443 = vadd.f32 0.0, %v2442
        %v2444 = vpop.f32.mrb[0].mxu0
        %v2445 = vpop.f32.mrb[0].mxu0
        %v2446 = vadd.f32 0.0, %v2445
        %v2447 = vpop.f32.mrb[0].mxu0
        %2448 = vmatprep.mubr.bf16.mxu0 0
        %2449 = vmatmul.mubr.bf16.gmra.mrb[0].mxu0 %v2225
        %v2450 = vpop.f32.mrb[0].mxu0
        %v2451 = vadd.f32 0.0, %v2450
        %v2452 = vpop.f32.mrb[0].mxu0
        %v2453 = vpop.f32.mrb[0].mxu0
        %v2454 = vadd.f32 0.0, %v2453
        %v2455 = vpop.f32.mrb[0].mxu0
        %2456 = vmatprep.mubr.bf16.mxu0 0
        %2457 = vmatmul.mubr.bf16.gmra.mrb[0].mxu0 %v2227
        %v2458 = vpop.f32.mrb[0].mxu0
        %v2459 = vadd.f32 0.0, %v2458
        %v2460 = vpop.f32.mrb[0].mxu0
        %v2461 = vpop.f32.mrb[0].mxu0
        %v2462 = vadd.f32 0.0, %v2461
        %v2463 = vpop.f32.mrb[0].mxu0
        %2464 = vmatprep.mubr.bf16.mxu0 0
        %2465 = vmatmul.mubr.bf16.gmra.mrb[0].mxu0 %v2229
        %v2466 = vpop.f32.mrb[0].mxu0
        %v2467 = vadd.f32 0.0, %v2466
        %v2468 = vpop.f32.mrb[0].mxu0
        %v2469 = vpop.f32.mrb[0].mxu0
        %v2470 = vadd.f32 0.0, %v2469
        %v2471 = vpop.f32.mrb[0].mxu0
        %2472 = vmatprep.mubr.bf16.mxu0 0
        %2473 = vmatmul.mubr.bf16.gmra.mrb[0].mxu0 %v2231
        %v2474 = vpop.f32.mrb[0].mxu0
        %v2475 = vadd.f32 0.0, %v2474
        %v2476 = vpop.f32.mrb[0].mxu0
        %v2477 = vpop.f32.mrb[0].mxu0
        %v2478 = vadd.f32 0.0, %v2477
        %v2479 = vpop.f32.mrb[0].mxu0
        %2480 = vmatprep.mubr.bf16.mxu0 0
        %2481 = vmatmul.mubr.bf16.gmra.mrb[0].mxu0 %v2233
        %v2482 = vpop.f32.mrb[0].mxu0
        %v2483 = vadd.f32 0.0, %v2482
        %v2484 = vpop.f32.mrb[0].mxu0
        %v2485 = vpop.f32.mrb[0].mxu0
        %v2486 = vadd.f32 0.0, %v2485
        %v2487 = vpop.f32.mrb[0].mxu0
        %2488 = vmatprep.mubr.bf16.mxu0 0
        %2489 = vmatmul.mubr.bf16.gmra.mrb[0].mxu0 %v2235
        %v2490 = vpop.f32.mrb[0].mxu0
        %v2491 = vadd.f32 0.0, %v2490
        %v2492 = vpop.f32.mrb[0].mxu0
        %v2493 = vpop.f32.mrb[0].mxu0
        %v2494 = vadd.f32 0.0, %v2493
        %v2495 = vpop.f32.mrb[0].mxu0
        %2496 = vmatprep.mubr.bf16.mxu0 0
        %2497 = vmatmul.mubr.bf16.gmra.mrb[0].mxu0 %v2237
        %v2498 = vpop.f32.mrb[0].mxu0
        %v2499 = vadd.f32 0.0, %v2498
        %v2500 = vpop.f32.mrb[0].mxu0
        %v2501 = vpop.f32.mrb[0].mxu0
        %v2502 = vadd.f32 0.0, %v2501
        %v2503 = vpop.f32.mrb[0].mxu0
        %2504 = vmatprep.mubr.bf16.mxu0 0
        %2505 = vmatmul.mubr.bf16.gmra.mrb[0].mxu0 %v2239
        %v2506 = vpop.f32.mrb[0].mxu0
        %v2507 = vadd.f32 0.0, %v2506
        %v2508 = vpop.f32.mrb[0].mxu0
        %v2509 = vpop.f32.mrb[0].mxu0
        %v2510 = vadd.f32 0.0, %v2509
        %v2511 = vpop.f32.mrb[0].mxu0
        %2512 = vmatprep.mubr.bf16.mxu0 0
        %2513 = vmatmul.mubr.bf16.gmra.mrb[0].mxu0 %v2241
        %v2514 = vpop.f32.mrb[0].mxu0
        %v2515 = vadd.f32 0.0, %v2514
        %v2516 = vpop.f32.mrb[0].mxu0
        %v2517 = vpop.f32.mrb[0].mxu0
        %v2518 = vadd.f32 0.0, %v2517
        %v2519 = vpop.f32.mrb[0].mxu0
        %2520 = vmatprep.mubr.bf16.mxu0 0
        %2521 = vmatmul.mubr.bf16.gmra.mrb[0].mxu0 %v2243
        %v2522 = vpop.f32.mrb[0].mxu0
        %v2523 = vadd.f32 0.0, %v2522
        %v2524 = vpop.f32.mrb[0].mxu0
        %v2525 = vpop.f32.mrb[0].mxu0
        %v2526 = vadd.f32 0.0, %v2525
        %v2527 = vpop.f32.mrb[0].mxu0
        %2528 = vmatprep.mubr.bf16.mxu0 0
        %2529 = vmatmul.mubr.bf16.gmra.mrb[0].mxu0 %v2245
        %v2530 = vpop.f32.mrb[0].mxu0
        %v2531 = vadd.f32 0.0, %v2530
        %v2532 = vpop.f32.mrb[0].mxu0
        %v2533 = vpop.f32.mrb[0].mxu0
        %v2534 = vadd.f32 0.0, %v2533
        %v2535 = vpop.f32.mrb[0].mxu0
        %2536 = vmatprep.mubr.bf16.mxu0 0
        %2537 = vmatmul.mubr.bf16.gmra.mrb[0].mxu0 %v2247
        %v2538 = vpop.f32.mrb[0].mxu0
        %v2539 = vadd.f32 0.0, %v2538
        %v2540 = vpop.f32.mrb[0].mxu0
        %v2541 = vpop.f32.mrb[0].mxu0
        %v2542 = vadd.f32 0.0, %v2541
        %v2543 = vpop.f32.mrb[0].mxu0
        %2544 = vdwg.mxu0
        %v2545 = vadd.f32 %v1961, %v2355
        %v2546 = vadd.f32 %v1962, %v2358
        %v2547 = vadd.f32 %v1963, %v2363
        %v2548 = vadd.f32 %v1964, %v2366
        %v2549 = vadd.f32 %v1965, %v2371
        %v2550 = vadd.f32 %v1966, %v2374
        %v2551 = vadd.f32 %v1967, %v2379
        %v2552 = vadd.f32 %v1968, %v2382
        %v2553 = vadd.f32 %v1969, %v2387
        %v2554 = vadd.f32 %v1970, %v2390
        %v2555 = vadd.f32 %v1971, %v2395
        %v2556 = vadd.f32 %v1972, %v2398
        %v2557 = vadd.f32 %v1973, %v2403
        %v2558 = vadd.f32 %v1974, %v2406
        %v2559 = vadd.f32 %v1975, %v2411
        %v2560 = vadd.f32 %v1976, %v2414
        %v2561 = vadd.f32 %v1977, %v2419
        %v2562 = vadd.f32 %v1978, %v2422
        %v2563 = vadd.f32 %v1979, %v2427
        %v2564 = vadd.f32 %v1980, %v2430
        %v2565 = vadd.f32 %v1981, %v2435
        %v2566 = vadd.f32 %v1982, %v2438
        %v2567 = vadd.f32 %v1983, %v2443
        %v2568 = vadd.f32 %v1984, %v2446
        %v2569 = vadd.f32 %v1985, %v2451
        %v2570 = vadd.f32 %v1986, %v2454
        %v2571 = vadd.f32 %v1987, %v2459
        %v2572 = vadd.f32 %v1988, %v2462
        %v2573 = vadd.f32 %v1989, %v2467
        %v2574 = vadd.f32 %v1990, %v2470
        %v2575 = vadd.f32 %v1991, %v2475
        %v2576 = vadd.f32 %v1992, %v2478
        %v2577 = vadd.f32 %v1993, %v2483
        %v2578 = vadd.f32 %v1994, %v2486
        %v2579 = vadd.f32 %v1995, %v2491
        %v2580 = vadd.f32 %v1996, %v2494
        %v2581 = vadd.f32 %v1997, %v2499
        %v2582 = vadd.f32 %v1998, %v2502
        %v2583 = vadd.f32 %v1999, %v2507
        %v2584 = vadd.f32 %v2000, %v2510
        %v2585 = vadd.f32 %v2001, %v2515
        %v2586 = vadd.f32 %v2002, %v2518
        %v2587 = vadd.f32 %v2003, %v2523
        %v2588 = vadd.f32 %v2004, %v2526
        %v2589 = vadd.f32 %v2005, %v2531
        %v2590 = vadd.f32 %v2006, %v2534
        %v2591 = vadd.f32 %v2007, %v2539
        %v2592 = vadd.f32 %v2008, %v2542
        %2593 = vst [vmem:[#allocation4] sm:$0xff] %v2545
        %2594 = vst [vmem:[#allocation4 + $0x8] sm:$0xff] %v2546
        %2595 = vst [vmem:[#allocation4 + $0x10] sm:$0xff] %v2547
        %2596 = vst [vmem:[#allocation4 + $0x18] sm:$0xff] %v2548
        %2597 = vst [vmem:[#allocation4 + $0x20] sm:$0xff] %v2549
        %2598 = vst [vmem:[#allocation4 + $0x28] sm:$0xff] %v2550
        %2599 = vst [vmem:[#allocation4 + $0x30] sm:$0xff] %v2551
        %2600 = vst [vmem:[#allocation4 + $0x38] sm:$0xff] %v2552
        %2601 = vst [vmem:[#allocation4 + $0x40] sm:$0xff] %v2553
        %2602 = vst [vmem:[#allocation4 + $0x48] sm:$0xff] %v2554
        %2603 = vst [vmem:[#allocation4 + $0x50] sm:$0xff] %v2555
        %2604 = vst [vmem:[#allocation4 + $0x58] sm:$0xff] %v2556
        %2605 = vst [vmem:[#allocation4 + $0x60] sm:$0xff] %v2557
        %2606 = vst [vmem:[#allocation4 + $0x68] sm:$0xff] %v2558
        %2607 = vst [vmem:[#allocation4 + $0x70] sm:$0xff] %v2559
        %2608 = vst [vmem:[#allocation4 + $0x78] sm:$0xff] %v2560
        %2609 = vst [vmem:[#allocation4 + $0x80] sm:$0xff] %v2561
        %2610 = vst [vmem:[#allocation4 + $0x88] sm:$0xff] %v2562
        %2611 = vst [vmem:[#allocation4 + $0x90] sm:$0xff] %v2563
        %2612 = vst [vmem:[#allocation4 + $0x98] sm:$0xff] %v2564
        %2613 = vst [vmem:[#allocation4 + $0xa0] sm:$0xff] %v2565
        %2614 = vst [vmem:[#allocation4 + $0xa8] sm:$0xff] %v2566
        %2615 = vst [vmem:[#allocation4 + $0xb0] sm:$0xff] %v2567
        %2616 = vst [vmem:[#allocation4 + $0xb8] sm:$0xff] %v2568
        %2617 = vst [vmem:[#allocation4 + $0xc0] sm:$0xff] %v2569
        %2618 = vst [vmem:[#allocation4 + $0xc8] sm:$0xff] %v2570
        %2619 = vst [vmem:[#allocation4 + $0xd0] sm:$0xff] %v2571
        %2620 = vst [vmem:[#allocation4 + $0xd8] sm:$0xff] %v2572
        %2621 = vst [vmem:[#allocation4 + $0xe0] sm:$0xff] %v2573
        %2622 = vst [vmem:[#allocation4 + $0xe8] sm:$0xff] %v2574
        %2623 = vst [vmem:[#allocation4 + $0xf0] sm:$0xff] %v2575
        %2624 = vst [vmem:[#allocation4 + $0xf8] sm:$0xff] %v2576
        %2625 = vst [vmem:[#allocation4 + $0x100] sm:$0xff] %v2577
        %2626 = vst [vmem:[#allocation4 + $0x108] sm:$0xff] %v2578
        %2627 = vst [vmem:[#allocation4 + $0x110] sm:$0xff] %v2579
        %2628 = vst [vmem:[#allocation4 + $0x118] sm:$0xff] %v2580
        %2629 = vst [vmem:[#allocation4 + $0x120] sm:$0xff] %v2581
        %2630 = vst [vmem:[#allocation4 + $0x128] sm:$0xff] %v2582
        %2631 = vst [vmem:[#allocation4 + $0x130] sm:$0xff] %v2583
        %2632 = vst [vmem:[#allocation4 + $0x138] sm:$0xff] %v2584
        %2633 = vst [vmem:[#allocation4 + $0x140] sm:$0xff] %v2585
        %2634 = vst [vmem:[#allocation4 + $0x148] sm:$0xff] %v2586
        %2635 = vst [vmem:[#allocation4 + $0x150] sm:$0xff] %v2587
        %2636 = vst [vmem:[#allocation4 + $0x158] sm:$0xff] %v2588
        %2637 = vst [vmem:[#allocation4 + $0x160] sm:$0xff] %v2589
        %2638 = vst [vmem:[#allocation4 + $0x168] sm:$0xff] %v2590
        %2639 = vst [vmem:[#allocation4 + $0x170] sm:$0xff] %v2591
        %2640 = vst [vmem:[#allocation4 + $0x178] sm:$0xff] %v2592
        %v2641 = vld [vmem:[#allocation4] sm:$0xff]
        %v2642 = vld [vmem:[#allocation4 + $0x8] sm:$0xff]
        %v2643 = vld [vmem:[#allocation4 + $0x10] sm:$0xff]
        %v2644 = vld [vmem:[#allocation4 + $0x18] sm:$0xff]
        %v2645 = vld [vmem:[#allocation4 + $0x20] sm:$0xff]
        %v2646 = vld [vmem:[#allocation4 + $0x28] sm:$0xff]
        %v2647 = vld [vmem:[#allocation4 + $0x30] sm:$0xff]
        %v2648 = vld [vmem:[#allocation4 + $0x38] sm:$0xff]
        %v2649 = vld [vmem:[#allocation4 + $0x40] sm:$0xff]
        %v2650 = vld [vmem:[#allocation4 + $0x48] sm:$0xff]
        %v2651 = vld [vmem:[#allocation4 + $0x50] sm:$0xff]
        %v2652 = vld [vmem:[#allocation4 + $0x58] sm:$0xff]
        %v2653 = vld [vmem:[#allocation4 + $0x60] sm:$0xff]
        %v2654 = vld [vmem:[#allocation4 + $0x68] sm:$0xff]
        %v2655 = vld [vmem:[#allocation4 + $0x70] sm:$0xff]
        %v2656 = vld [vmem:[#allocation4 + $0x78] sm:$0xff]
        %v2657 = vld [vmem:[#allocation4 + $0x80] sm:$0xff]
        %v2658 = vld [vmem:[#allocation4 + $0x88] sm:$0xff]
        %v2659 = vld [vmem:[#allocation4 + $0x90] sm:$0xff]
        %v2660 = vld [vmem:[#allocation4 + $0x98] sm:$0xff]
        %v2661 = vld [vmem:[#allocation4 + $0xa0] sm:$0xff]
        %v2662 = vld [vmem:[#allocation4 + $0xa8] sm:$0xff]
        %v2663 = vld [vmem:[#allocation4 + $0xb0] sm:$0xff]
        %v2664 = vld [vmem:[#allocation4 + $0xb8] sm:$0xff]
        %v2665 = vld [vmem:[#allocation4 + $0xc0] sm:$0xff]
        %v2666 = vld [vmem:[#allocation4 + $0xc8] sm:$0xff]
        %v2667 = vld [vmem:[#allocation4 + $0xd0] sm:$0xff]
        %v2668 = vld [vmem:[#allocation4 + $0xd8] sm:$0xff]
        %v2669 = vld [vmem:[#allocation4 + $0xe0] sm:$0xff]
        %v2670 = vld [vmem:[#allocation4 + $0xe8] sm:$0xff]
        %v2671 = vld [vmem:[#allocation4 + $0xf0] sm:$0xff]
        %v2672 = vld [vmem:[#allocation4 + $0xf8] sm:$0xff]
        %v2673 = vld [vmem:[#allocation4 + $0x100] sm:$0xff]
        %v2674 = vld [vmem:[#allocation4 + $0x108] sm:$0xff]
        %v2675 = vld [vmem:[#allocation4 + $0x110] sm:$0xff]
        %v2676 = vld [vmem:[#allocation4 + $0x118] sm:$0xff]
        %v2677 = vld [vmem:[#allocation4 + $0x120] sm:$0xff]
        %v2678 = vld [vmem:[#allocation4 + $0x128] sm:$0xff]
        %v2679 = vld [vmem:[#allocation4 + $0x130] sm:$0xff]
        %v2680 = vld [vmem:[#allocation4 + $0x138] sm:$0xff]
        %v2681 = vld [vmem:[#allocation4 + $0x140] sm:$0xff]
        %v2682 = vld [vmem:[#allocation4 + $0x148] sm:$0xff]
        %v2683 = vld [vmem:[#allocation4 + $0x150] sm:$0xff]
        %v2684 = vld [vmem:[#allocation4 + $0x158] sm:$0xff]
        %v2685 = vld [vmem:[#allocation4 + $0x160] sm:$0xff]
        %v2686 = vld [vmem:[#allocation4 + $0x168] sm:$0xff]
        %v2687 = vld [vmem:[#allocation4 + $0x170] sm:$0xff]
        %v2688 = vld [vmem:[#allocation4 + $0x178] sm:$0xff]
        %v2689 = vld [vmem:[%s703 + $0x18] sm:$0xf]
        %v2690 = vld [vmem:[%s703 + $0x1c] sm:$0xf]
        %v2691 = vld [vmem:[%s703 + $0x20] sm:$0xf]
        %v2692 = vld [vmem:[%s703 + $0x24] sm:$0xf]
        %v2693 = vld [vmem:[%s703 + $0x28] sm:$0xf]
        %v2694 = vld [vmem:[%s703 + $0x2c] sm:$0xf]
        %v2695 = vld [vmem:[%s703 + $0x30] sm:$0xf]
        %v2696 = vld [vmem:[%s703 + $0x34] sm:$0xf]
        %v2697 = vld [vmem:[%s703 + $0x38] sm:$0xf]
        %v2698 = vld [vmem:[%s703 + $0x3c] sm:$0xf]
        %v2699 = vld [vmem:[%s703 + $0x40] sm:$0xf]
        %v2700 = vld [vmem:[%s703 + $0x44] sm:$0xf]
        %v2701 = vld [vmem:[%s703 + $0x48] sm:$0xf]
        %v2702 = vld [vmem:[%s703 + $0x4c] sm:$0xf]
        %v2703 = vld [vmem:[%s703 + $0x50] sm:$0xf]
        %v2704 = vld [vmem:[%s703 + $0x54] sm:$0xf]
        %v2705 = vld [vmem:[%s703 + $0x58] sm:$0xf]
        %v2706 = vld [vmem:[%s703 + $0x5c] sm:$0xf]
        %v2707 = vld [vmem:[%s703 + $0x60] sm:$0xf]
        %v2708 = vld [vmem:[%s703 + $0x64] sm:$0xf]
        %v2709 = vld [vmem:[%s703 + $0x68] sm:$0xf]
        %v2710 = vld [vmem:[%s703 + $0x6c] sm:$0xf]
        %v2711 = vld [vmem:[%s703 + $0x70] sm:$0xf]
        %v2712 = vld [vmem:[%s703 + $0x74] sm:$0xf]
        %v2713 = vld [vmem:[%s703 + $0x78] sm:$0xf]
        %v2714 = vld [vmem:[%s703 + $0x7c] sm:$0xf]
        %v2715 = vld [vmem:[%s703 + $0x80] sm:$0xf]
        %v2716 = vld [vmem:[%s703 + $0x84] sm:$0xf]
        %v2717 = vld [vmem:[%s703 + $0x88] sm:$0xf]
        %v2718 = vld [vmem:[%s703 + $0x8c] sm:$0xf]
        %v2719 = vld [vmem:[%s703 + $0x90] sm:$0xf]
        %v2720 = vld [vmem:[%s703 + $0x94] sm:$0xf]
        %v2721 = vld [vmem:[%s703 + $0x98] sm:$0xf]
        %v2722 = vld [vmem:[%s703 + $0x9c] sm:$0xf]
        %v2723 = vld [vmem:[%s703 + $0xa0] sm:$0xf]
        %v2724 = vld [vmem:[%s703 + $0xa4] sm:$0xf]
        %v2725 = vld [vmem:[%s703 + $0xa8] sm:$0xf]
        %v2726 = vld [vmem:[%s703 + $0xac] sm:$0xf]
        %v2727 = vld [vmem:[%s703 + $0xb0] sm:$0xf]
        %v2728 = vld [vmem:[%s703 + $0xb4] sm:$0xf]
        %v2729 = vld [vmem:[%s703 + $0xb8] sm:$0xf]
        %v2730 = vld [vmem:[%s703 + $0xbc] sm:$0xf]
        %v2731 = vld [vmem:[%s703 + $0xc0] sm:$0xf]
        %v2732 = vld [vmem:[%s703 + $0xc4] sm:$0xf]
        %v2733 = vld [vmem:[%s703 + $0xc8] sm:$0xf]
        %v2734 = vld [vmem:[%s703 + $0xcc] sm:$0xf]
        %v2735 = vld [vmem:[%s703 + $0xd0] sm:$0xf]
        %v2736 = vld [vmem:[%s703 + $0xd4] sm:$0xf]
        %s2737 = scalar_lea.vmem [#allocation5], 192
        %v2738 = vld [vmem:[%s2737] sm:$0xf]
        %v2739 = vld [vmem:[%s2737 + $0x4] sm:$0xf]
        %v2740 = vld [vmem:[%s2737 + $0x8] sm:$0xf]
        %v2741 = vld [vmem:[%s2737 + $0xc] sm:$0xf]
        %v2742 = vld [vmem:[%s2737 + $0x10] sm:$0xf]
        %v2743 = vld [vmem:[%s2737 + $0x14] sm:$0xf]
        %v2744 = vld [vmem:[%s2737 + $0x18] sm:$0xf]
        %v2745 = vld [vmem:[%s2737 + $0x1c] sm:$0xf]
        %v2746 = vld [vmem:[%s2737 + $0x20] sm:$0xf]
        %v2747 = vld [vmem:[%s2737 + $0x24] sm:$0xf]
        %v2748 = vld [vmem:[%s2737 + $0x28] sm:$0xf]
        %v2749 = vld [vmem:[%s2737 + $0x2c] sm:$0xf]
        %v2750 = vld [vmem:[%s2737 + $0x30] sm:$0xf]
        %v2751 = vld [vmem:[%s2737 + $0x34] sm:$0xf]
        %v2752 = vld [vmem:[%s2737 + $0x38] sm:$0xf]
        %v2753 = vld [vmem:[%s2737 + $0x3c] sm:$0xf]
        %v2802 = vunpack.c.l.b16 %v2689
        %v2803 = vunpack.c.l.b16 %v2690
        %v2804 = vunpack.c.l.b16 %v2691
        %v2805 = vunpack.c.l.b16 %v2692
        %v2806 = vunpack.c.l.b16 %v2693
        %v2807 = vunpack.c.l.b16 %v2694
        %v2808 = vunpack.c.l.b16 %v2695
        %v2809 = vunpack.c.l.b16 %v2696
        %v2810 = vunpack.c.l.b16 %v2697
        %v2811 = vunpack.c.l.b16 %v2698
        %v2812 = vunpack.c.l.b16 %v2699
        %v2813 = vunpack.c.l.b16 %v2700
        %v2814 = vunpack.c.l.b16 %v2701
        %v2815 = vunpack.c.l.b16 %v2702
        %v2816 = vunpack.c.l.b16 %v2703
        %v2817 = vunpack.c.l.b16 %v2704
        %v2818 = vunpack.c.l.b16 %v2705
        %v2819 = vunpack.c.l.b16 %v2706
        %v2820 = vunpack.c.l.b16 %v2707
        %v2821 = vunpack.c.l.b16 %v2708
        %v2822 = vunpack.c.l.b16 %v2709
        %v2823 = vunpack.c.l.b16 %v2710
        %v2824 = vunpack.c.l.b16 %v2711
        %v2825 = vunpack.c.l.b16 %v2712
        %v2826 = vunpack.c.l.b16 %v2713
        %v2827 = vunpack.c.l.b16 %v2714
        %v2828 = vunpack.c.l.b16 %v2715
        %v2829 = vunpack.c.l.b16 %v2716
        %v2830 = vunpack.c.l.b16 %v2717
        %v2831 = vunpack.c.l.b16 %v2718
        %v2832 = vunpack.c.l.b16 %v2719
        %v2833 = vunpack.c.l.b16 %v2720
        %v2834 = vunpack.c.l.b16 %v2721
        %v2835 = vunpack.c.l.b16 %v2722
        %v2836 = vunpack.c.l.b16 %v2723
        %v2837 = vunpack.c.l.b16 %v2724
        %v2838 = vunpack.c.l.b16 %v2725
        %v2839 = vunpack.c.l.b16 %v2726
        %v2840 = vunpack.c.l.b16 %v2727
        %v2841 = vunpack.c.l.b16 %v2728
        %v2842 = vunpack.c.l.b16 %v2729
        %v2843 = vunpack.c.l.b16 %v2730
        %v2844 = vunpack.c.l.b16 %v2731
        %v2845 = vunpack.c.l.b16 %v2732
        %v2846 = vunpack.c.l.b16 %v2733
        %v2847 = vunpack.c.l.b16 %v2734
        %v2848 = vunpack.c.l.b16 %v2735
        %v2849 = vunpack.c.l.b16 %v2736
        %v2850 = vpack.c.b16 %v2803, %v2802
        %v2851 = vpack.c.b16 %v2805, %v2804
        %v2852 = vpack.c.b16 %v2807, %v2806
        %v2853 = vpack.c.b16 %v2809, %v2808
        %v2854 = vpack.c.b16 %v2811, %v2810
        %v2855 = vpack.c.b16 %v2813, %v2812
        %v2856 = vpack.c.b16 %v2815, %v2814
        %v2857 = vpack.c.b16 %v2817, %v2816
        %v2858 = vpack.c.b16 %v2819, %v2818
        %v2859 = vpack.c.b16 %v2821, %v2820
        %v2860 = vpack.c.b16 %v2823, %v2822
        %v2861 = vpack.c.b16 %v2825, %v2824
        %v2862 = vpack.c.b16 %v2827, %v2826
        %v2863 = vpack.c.b16 %v2829, %v2828
        %v2864 = vpack.c.b16 %v2831, %v2830
        %v2865 = vpack.c.b16 %v2833, %v2832
        %v2866 = vpack.c.b16 %v2835, %v2834
        %v2867 = vpack.c.b16 %v2837, %v2836
        %v2868 = vpack.c.b16 %v2839, %v2838
        %v2869 = vpack.c.b16 %v2841, %v2840
        %v2870 = vpack.c.b16 %v2843, %v2842
        %v2871 = vpack.c.b16 %v2845, %v2844
        %v2872 = vpack.c.b16 %v2847, %v2846
        %v2873 = vpack.c.b16 %v2849, %v2848
        %v2914 = vunpack.c.l.b16 %v2738
        %v2915 = vunpack.c.l.b16 %v2739
        %v2916 = vunpack.c.l.b16 %v2740
        %v2917 = vunpack.c.l.b16 %v2741
        %v2918 = vunpack.c.l.b16 %v2742
        %v2919 = vunpack.c.l.b16 %v2743
        %v2920 = vunpack.c.l.b16 %v2744
        %v2921 = vunpack.c.l.b16 %v2745
        %v2922 = vunpack.c.l.b16 %v2746
        %v2923 = vunpack.c.l.b16 %v2747
        %v2924 = vunpack.c.l.b16 %v2748
        %v2925 = vunpack.c.l.b16 %v2749
        %v2926 = vunpack.c.l.b16 %v2750
        %v2927 = vunpack.c.l.b16 %v2751
        %v2928 = vunpack.c.l.b16 %v2752
        %v2929 = vunpack.c.l.b16 %v2753
        %v2930 = vpack.c.b16 %v2915, %v2914
        %v2931 = vpack.c.b16 %v2917, %v2916
        %v2932 = vpack.c.b16 %v2919, %v2918
        %v2933 = vpack.c.b16 %v2921, %v2920
        %v2934 = vpack.c.b16 %v2923, %v2922
        %v2935 = vpack.c.b16 %v2925, %v2924
        %v2936 = vpack.c.b16 %v2927, %v2926
        %v2937 = vpack.c.b16 %v2929, %v2928
        %2946 = vmatprep.subr.bf16.mxu0 0
        %2947 = vmatpush1.bf16.msra.mxu0 %v2930
        %2948 = vmatprep.subr.bf16.mxu0 0
        %2949 = vmatpush1.bf16.msra.mxu0 %v2931
        %2950 = vmatprep.subr.bf16.mxu0 0
        %2951 = vmatpush1.bf16.msra.mxu0 %v2932
        %2952 = vmatprep.subr.bf16.mxu0 0
        %2953 = vmatpush1.bf16.msra.mxu0 %v2933
        %2954 = vmatprep.subr.bf16.mxu0 0
        %2955 = vmatpush1.bf16.msra.mxu0 %v2934
        %2956 = vmatprep.subr.bf16.mxu0 0
        %2957 = vmatpush1.bf16.msra.mxu0 %v2935
        %2958 = vmatprep.subr.bf16.mxu0 0
        %2959 = vmatpush1.bf16.msra.mxu0 %v2936
        %2960 = vmatprep.subr.bf16.mxu0 0
        %2961 = vmatpush1.bf16.msra.mxu0 %v2937
        %2962 = vmatprep.subr.bf16.mxu0 0
        %2963 = vmatpush1.bf16.msra.mxu0 0
        %2964 = vmatprep.subr.bf16.mxu0 0
        %2965 = vmatpush1.bf16.msra.mxu0 0
        %2966 = vmatprep.subr.bf16.mxu0 0
        %2967 = vmatpush1.bf16.msra.mxu0 0
        %2968 = vmatprep.subr.bf16.mxu0 0
        %2969 = vmatpush1.bf16.msra.mxu0 0
        %2970 = vmatprep.subr.bf16.mxu0 0
        %2971 = vmatpush1.bf16.msra.mxu0 0
        %2972 = vmatprep.subr.bf16.mxu0 0
        %2973 = vmatpush1.bf16.msra.mxu0 0
        %2974 = vmatprep.subr.bf16.mxu0 0
        %2975 = vmatpush1.bf16.msra.mxu0 0
        %2976 = vmatprep.subr.bf16.mxu0 0
        %2977 = vmatpush1.bf16.msra.mxu0 0
        %2978 = vmatprep.mubr.bf16.mxu0 0
        %2979 = vmatmul.mubr.bf16.gmra.mrb[0].mxu0 %v2850
        %v2980 = vpop.f32.mrb[0].mxu0
        %v2981 = vadd.f32 0.0, %v2980
        %v2982 = vpop.f32.mrb[0].mxu0
        %v2983 = vpop.f32.mrb[0].mxu0
        %v2984 = vadd.f32 0.0, %v2983
        %v2985 = vpop.f32.mrb[0].mxu0
        %2986 = vmatprep.mubr.bf16.mxu0 0
        %2987 = vmatmul.mubr.bf16.gmra.mrb[0].mxu0 %v2851
        %v2988 = vpop.f32.mrb[0].mxu0
        %v2989 = vadd.f32 0.0, %v2988
        %v2990 = vpop.f32.mrb[0].mxu0
        %v2991 = vpop.f32.mrb[0].mxu0
        %v2992 = vadd.f32 0.0, %v2991
        %v2993 = vpop.f32.mrb[0].mxu0
        %2994 = vmatprep.mubr.bf16.mxu0 0
        %2995 = vmatmul.mubr.bf16.gmra.mrb[0].mxu0 %v2852
        %v2996 = vpop.f32.mrb[0].mxu0
        %v2997 = vadd.f32 0.0, %v2996
        %v2998 = vpop.f32.mrb[0].mxu0
        %v2999 = vpop.f32.mrb[0].mxu0
        %v3000 = vadd.f32 0.0, %v2999
        %v3001 = vpop.f32.mrb[0].mxu0
        %3002 = vmatprep.mubr.bf16.mxu0 0
        %3003 = vmatmul.mubr.bf16.gmra.mrb[0].mxu0 %v2853
        %v3004 = vpop.f32.mrb[0].mxu0
        %v3005 = vadd.f32 0.0, %v3004
        %v3006 = vpop.f32.mrb[0].mxu0
        %v3007 = vpop.f32.mrb[0].mxu0
        %v3008 = vadd.f32 0.0, %v3007
        %v3009 = vpop.f32.mrb[0].mxu0
        %3010 = vmatprep.mubr.bf16.mxu0 0
        %3011 = vmatmul.mubr.bf16.gmra.mrb[0].mxu0 %v2854
        %v3012 = vpop.f32.mrb[0].mxu0
        %v3013 = vadd.f32 0.0, %v3012
        %v3014 = vpop.f32.mrb[0].mxu0
        %v3015 = vpop.f32.mrb[0].mxu0
        %v3016 = vadd.f32 0.0, %v3015
        %v3017 = vpop.f32.mrb[0].mxu0
        %3018 = vmatprep.mubr.bf16.mxu0 0
        %3019 = vmatmul.mubr.bf16.gmra.mrb[0].mxu0 %v2855
        %v3020 = vpop.f32.mrb[0].mxu0
        %v3021 = vadd.f32 0.0, %v3020
        %v3022 = vpop.f32.mrb[0].mxu0
        %v3023 = vpop.f32.mrb[0].mxu0
        %v3024 = vadd.f32 0.0, %v3023
        %v3025 = vpop.f32.mrb[0].mxu0
        %3026 = vmatprep.mubr.bf16.mxu0 0
        %3027 = vmatmul.mubr.bf16.gmra.mrb[0].mxu0 %v2856
        %v3028 = vpop.f32.mrb[0].mxu0
        %v3029 = vadd.f32 0.0, %v3028
        %v3030 = vpop.f32.mrb[0].mxu0
        %v3031 = vpop.f32.mrb[0].mxu0
        %v3032 = vadd.f32 0.0, %v3031
        %v3033 = vpop.f32.mrb[0].mxu0
        %3034 = vmatprep.mubr.bf16.mxu0 0
        %3035 = vmatmul.mubr.bf16.gmra.mrb[0].mxu0 %v2857
        %v3036 = vpop.f32.mrb[0].mxu0
        %v3037 = vadd.f32 0.0, %v3036
        %v3038 = vpop.f32.mrb[0].mxu0
        %v3039 = vpop.f32.mrb[0].mxu0
        %v3040 = vadd.f32 0.0, %v3039
        %v3041 = vpop.f32.mrb[0].mxu0
        %3042 = vmatprep.mubr.bf16.mxu0 0
        %3043 = vmatmul.mubr.bf16.gmra.mrb[0].mxu0 %v2858
        %v3044 = vpop.f32.mrb[0].mxu0
        %v3045 = vadd.f32 0.0, %v3044
        %v3046 = vpop.f32.mrb[0].mxu0
        %v3047 = vpop.f32.mrb[0].mxu0
        %v3048 = vadd.f32 0.0, %v3047
        %v3049 = vpop.f32.mrb[0].mxu0
        %3050 = vmatprep.mubr.bf16.mxu0 0
        %3051 = vmatmul.mubr.bf16.gmra.mrb[0].mxu0 %v2859
        %v3052 = vpop.f32.mrb[0].mxu0
        %v3053 = vadd.f32 0.0, %v3052
        %v3054 = vpop.f32.mrb[0].mxu0
        %v3055 = vpop.f32.mrb[0].mxu0
        %v3056 = vadd.f32 0.0, %v3055
        %v3057 = vpop.f32.mrb[0].mxu0
        %3058 = vmatprep.mubr.bf16.mxu0 0
        %3059 = vmatmul.mubr.bf16.gmra.mrb[0].mxu0 %v2860
        %v3060 = vpop.f32.mrb[0].mxu0
        %v3061 = vadd.f32 0.0, %v3060
        %v3062 = vpop.f32.mrb[0].mxu0
        %v3063 = vpop.f32.mrb[0].mxu0
        %v3064 = vadd.f32 0.0, %v3063
        %v3065 = vpop.f32.mrb[0].mxu0
        %3066 = vmatprep.mubr.bf16.mxu0 0
        %3067 = vmatmul.mubr.bf16.gmra.mrb[0].mxu0 %v2861
        %v3068 = vpop.f32.mrb[0].mxu0
        %v3069 = vadd.f32 0.0, %v3068
        %v3070 = vpop.f32.mrb[0].mxu0
        %v3071 = vpop.f32.mrb[0].mxu0
        %v3072 = vadd.f32 0.0, %v3071
        %v3073 = vpop.f32.mrb[0].mxu0
        %3074 = vmatprep.mubr.bf16.mxu0 0
        %3075 = vmatmul.mubr.bf16.gmra.mrb[0].mxu0 %v2862
        %v3076 = vpop.f32.mrb[0].mxu0
        %v3077 = vadd.f32 0.0, %v3076
        %v3078 = vpop.f32.mrb[0].mxu0
        %v3079 = vpop.f32.mrb[0].mxu0
        %v3080 = vadd.f32 0.0, %v3079
        %v3081 = vpop.f32.mrb[0].mxu0
        %3082 = vmatprep.mubr.bf16.mxu0 0
        %3083 = vmatmul.mubr.bf16.gmra.mrb[0].mxu0 %v2863
        %v3084 = vpop.f32.mrb[0].mxu0
        %v3085 = vadd.f32 0.0, %v3084
        %v3086 = vpop.f32.mrb[0].mxu0
        %v3087 = vpop.f32.mrb[0].mxu0
        %v3088 = vadd.f32 0.0, %v3087
        %v3089 = vpop.f32.mrb[0].mxu0
        %3090 = vmatprep.mubr.bf16.mxu0 0
        %3091 = vmatmul.mubr.bf16.gmra.mrb[0].mxu0 %v2864
        %v3092 = vpop.f32.mrb[0].mxu0
        %v3093 = vadd.f32 0.0, %v3092
        %v3094 = vpop.f32.mrb[0].mxu0
        %v3095 = vpop.f32.mrb[0].mxu0
        %v3096 = vadd.f32 0.0, %v3095
        %v3097 = vpop.f32.mrb[0].mxu0
        %3098 = vmatprep.mubr.bf16.mxu0 0
        %3099 = vmatmul.mubr.bf16.gmra.mrb[0].mxu0 %v2865
        %v3100 = vpop.f32.mrb[0].mxu0
        %v3101 = vadd.f32 0.0, %v3100
        %v3102 = vpop.f32.mrb[0].mxu0
        %v3103 = vpop.f32.mrb[0].mxu0
        %v3104 = vadd.f32 0.0, %v3103
        %v3105 = vpop.f32.mrb[0].mxu0
        %3106 = vmatprep.mubr.bf16.mxu0 0
        %3107 = vmatmul.mubr.bf16.gmra.mrb[0].mxu0 %v2866
        %v3108 = vpop.f32.mrb[0].mxu0
        %v3109 = vadd.f32 0.0, %v3108
        %v3110 = vpop.f32.mrb[0].mxu0
        %v3111 = vpop.f32.mrb[0].mxu0
        %v3112 = vadd.f32 0.0, %v3111
        %v3113 = vpop.f32.mrb[0].mxu0
        %3114 = vmatprep.mubr.bf16.mxu0 0
        %3115 = vmatmul.mubr.bf16.gmra.mrb[0].mxu0 %v2867
        %v3116 = vpop.f32.mrb[0].mxu0
        %v3117 = vadd.f32 0.0, %v3116
        %v3118 = vpop.f32.mrb[0].mxu0
        %v3119 = vpop.f32.mrb[0].mxu0
        %v3120 = vadd.f32 0.0, %v3119
        %v3121 = vpop.f32.mrb[0].mxu0
        %3122 = vmatprep.mubr.bf16.mxu0 0
        %3123 = vmatmul.mubr.bf16.gmra.mrb[0].mxu0 %v2868
        %v3124 = vpop.f32.mrb[0].mxu0
        %v3125 = vadd.f32 0.0, %v3124
        %v3126 = vpop.f32.mrb[0].mxu0
        %v3127 = vpop.f32.mrb[0].mxu0
        %v3128 = vadd.f32 0.0, %v3127
        %v3129 = vpop.f32.mrb[0].mxu0
        %3130 = vmatprep.mubr.bf16.mxu0 0
        %3131 = vmatmul.mubr.bf16.gmra.mrb[0].mxu0 %v2869
        %v3132 = vpop.f32.mrb[0].mxu0
        %v3133 = vadd.f32 0.0, %v3132
        %v3134 = vpop.f32.mrb[0].mxu0
        %v3135 = vpop.f32.mrb[0].mxu0
        %v3136 = vadd.f32 0.0, %v3135
        %v3137 = vpop.f32.mrb[0].mxu0
        %3138 = vmatprep.mubr.bf16.mxu0 0
        %3139 = vmatmul.mubr.bf16.gmra.mrb[0].mxu0 %v2870
        %v3140 = vpop.f32.mrb[0].mxu0
        %v3141 = vadd.f32 0.0, %v3140
        %v3142 = vpop.f32.mrb[0].mxu0
        %v3143 = vpop.f32.mrb[0].mxu0
        %v3144 = vadd.f32 0.0, %v3143
        %v3145 = vpop.f32.mrb[0].mxu0
        %3146 = vmatprep.mubr.bf16.mxu0 0
        %3147 = vmatmul.mubr.bf16.gmra.mrb[0].mxu0 %v2871
        %v3148 = vpop.f32.mrb[0].mxu0
        %v3149 = vadd.f32 0.0, %v3148
        %v3150 = vpop.f32.mrb[0].mxu0
        %v3151 = vpop.f32.mrb[0].mxu0
        %v3152 = vadd.f32 0.0, %v3151
        %v3153 = vpop.f32.mrb[0].mxu0
        %3154 = vmatprep.mubr.bf16.mxu0 0
        %3155 = vmatmul.mubr.bf16.gmra.mrb[0].mxu0 %v2872
        %v3156 = vpop.f32.mrb[0].mxu0
        %v3157 = vadd.f32 0.0, %v3156
        %v3158 = vpop.f32.mrb[0].mxu0
        %v3159 = vpop.f32.mrb[0].mxu0
        %v3160 = vadd.f32 0.0, %v3159
        %v3161 = vpop.f32.mrb[0].mxu0
        %3162 = vmatprep.mubr.bf16.mxu0 0
        %3163 = vmatmul.mubr.bf16.gmra.mrb[0].mxu0 %v2873
        %v3164 = vpop.f32.mrb[0].mxu0
        %v3165 = vadd.f32 0.0, %v3164
        %v3166 = vpop.f32.mrb[0].mxu0
        %v3167 = vpop.f32.mrb[0].mxu0
        %v3168 = vadd.f32 0.0, %v3167
        %v3169 = vpop.f32.mrb[0].mxu0
        %3170 = vdwg.mxu0
        %v3171 = vadd.f32 %v2641, %v2981
        %v3172 = vadd.f32 %v2642, %v2984
        %v3173 = vadd.f32 %v2643, %v2989
        %v3174 = vadd.f32 %v2644, %v2992
        %v3175 = vadd.f32 %v2645, %v2997
        %v3176 = vadd.f32 %v2646, %v3000
        %v3177 = vadd.f32 %v2647, %v3005
        %v3178 = vadd.f32 %v2648, %v3008
        %v3179 = vadd.f32 %v2649, %v3013
        %v3180 = vadd.f32 %v2650, %v3016
        %v3181 = vadd.f32 %v2651, %v3021
        %v3182 = vadd.f32 %v2652, %v3024
        %v3183 = vadd.f32 %v2653, %v3029
        %v3184 = vadd.f32 %v2654, %v3032
        %v3185 = vadd.f32 %v2655, %v3037
        %v3186 = vadd.f32 %v2656, %v3040
        %v3187 = vadd.f32 %v2657, %v3045
        %v3188 = vadd.f32 %v2658, %v3048
        %v3189 = vadd.f32 %v2659, %v3053
        %v3190 = vadd.f32 %v2660, %v3056
        %v3191 = vadd.f32 %v2661, %v3061
        %v3192 = vadd.f32 %v2662, %v3064
        %v3193 = vadd.f32 %v2663, %v3069
        %v3194 = vadd.f32 %v2664, %v3072
        %v3195 = vadd.f32 %v2665, %v3077
        %v3196 = vadd.f32 %v2666, %v3080
        %v3197 = vadd.f32 %v2667, %v3085
        %v3198 = vadd.f32 %v2668, %v3088
        %v3199 = vadd.f32 %v2669, %v3093
        %v3200 = vadd.f32 %v2670, %v3096
        %v3201 = vadd.f32 %v2671, %v3101
        %v3202 = vadd.f32 %v2672, %v3104
        %v3203 = vadd.f32 %v2673, %v3109
        %v3204 = vadd.f32 %v2674, %v3112
        %v3205 = vadd.f32 %v2675, %v3117
        %v3206 = vadd.f32 %v2676, %v3120
        %v3207 = vadd.f32 %v2677, %v3125
        %v3208 = vadd.f32 %v2678, %v3128
        %v3209 = vadd.f32 %v2679, %v3133
        %v3210 = vadd.f32 %v2680, %v3136
        %v3211 = vadd.f32 %v2681, %v3141
        %v3212 = vadd.f32 %v2682, %v3144
        %v3213 = vadd.f32 %v2683, %v3149
        %v3214 = vadd.f32 %v2684, %v3152
        %v3215 = vadd.f32 %v2685, %v3157
        %v3216 = vadd.f32 %v2686, %v3160
        %v3217 = vadd.f32 %v2687, %v3165
        %v3218 = vadd.f32 %v2688, %v3168
        %3219 = vst [vmem:[#allocation4] sm:$0xff] %v3171
        %3220 = vst [vmem:[#allocation4 + $0x8] sm:$0xff] %v3172
        %3221 = vst [vmem:[#allocation4 + $0x10] sm:$0xff] %v3173
        %3222 = vst [vmem:[#allocation4 + $0x18] sm:$0xff] %v3174
        %3223 = vst [vmem:[#allocation4 + $0x20] sm:$0xff] %v3175
        %3224 = vst [vmem:[#allocation4 + $0x28] sm:$0xff] %v3176
        %3225 = vst [vmem:[#allocation4 + $0x30] sm:$0xff] %v3177
        %3226 = vst [vmem:[#allocation4 + $0x38] sm:$0xff] %v3178
        %3227 = vst [vmem:[#allocation4 + $0x40] sm:$0xff] %v3179
        %3228 = vst [vmem:[#allocation4 + $0x48] sm:$0xff] %v3180
        %3229 = vst [vmem:[#allocation4 + $0x50] sm:$0xff] %v3181
        %3230 = vst [vmem:[#allocation4 + $0x58] sm:$0xff] %v3182
        %3231 = vst [vmem:[#allocation4 + $0x60] sm:$0xff] %v3183
        %3232 = vst [vmem:[#allocation4 + $0x68] sm:$0xff] %v3184
        %3233 = vst [vmem:[#allocation4 + $0x70] sm:$0xff] %v3185
        %3234 = vst [vmem:[#allocation4 + $0x78] sm:$0xff] %v3186
        %3235 = vst [vmem:[#allocation4 + $0x80] sm:$0xff] %v3187
        %3236 = vst [vmem:[#allocation4 + $0x88] sm:$0xff] %v3188
        %3237 = vst [vmem:[#allocation4 + $0x90] sm:$0xff] %v3189
        %3238 = vst [vmem:[#allocation4 + $0x98] sm:$0xff] %v3190
        %3239 = vst [vmem:[#allocation4 + $0xa0] sm:$0xff] %v3191
        %3240 = vst [vmem:[#allocation4 + $0xa8] sm:$0xff] %v3192
        %3241 = vst [vmem:[#allocation4 + $0xb0] sm:$0xff] %v3193
        %3242 = vst [vmem:[#allocation4 + $0xb8] sm:$0xff] %v3194
        %3243 = vst [vmem:[#allocation4 + $0xc0] sm:$0xff] %v3195
        %3244 = vst [vmem:[#allocation4 + $0xc8] sm:$0xff] %v3196
        %3245 = vst [vmem:[#allocation4 + $0xd0] sm:$0xff] %v3197
        %3246 = vst [vmem:[#allocation4 + $0xd8] sm:$0xff] %v3198
        %3247 = vst [vmem:[#allocation4 + $0xe0] sm:$0xff] %v3199
        %3248 = vst [vmem:[#allocation4 + $0xe8] sm:$0xff] %v3200
        %3249 = vst [vmem:[#allocation4 + $0xf0] sm:$0xff] %v3201
        %3250 = vst [vmem:[#allocation4 + $0xf8] sm:$0xff] %v3202
        %3251 = vst [vmem:[#allocation4 + $0x100] sm:$0xff] %v3203
        %3252 = vst [vmem:[#allocation4 + $0x108] sm:$0xff] %v3204
        %3253 = vst [vmem:[#allocation4 + $0x110] sm:$0xff] %v3205
        %3254 = vst [vmem:[#allocation4 + $0x118] sm:$0xff] %v3206
        %3255 = vst [vmem:[#allocation4 + $0x120] sm:$0xff] %v3207
        %3256 = vst [vmem:[#allocation4 + $0x128] sm:$0xff] %v3208
        %3257 = vst [vmem:[#allocation4 + $0x130] sm:$0xff] %v3209
        %3258 = vst [vmem:[#allocation4 + $0x138] sm:$0xff] %v3210
        %3259 = vst [vmem:[#allocation4 + $0x140] sm:$0xff] %v3211
        %3260 = vst [vmem:[#allocation4 + $0x148] sm:$0xff] %v3212
        %3261 = vst [vmem:[#allocation4 + $0x150] sm:$0xff] %v3213
        %3262 = vst [vmem:[#allocation4 + $0x158] sm:$0xff] %v3214
        %3263 = vst [vmem:[#allocation4 + $0x160] sm:$0xff] %v3215
        %3264 = vst [vmem:[#allocation4 + $0x168] sm:$0xff] %v3216
        %3265 = vst [vmem:[#allocation4 + $0x170] sm:$0xff] %v3217
        %3266 = vst [vmem:[#allocation4 + $0x178] sm:$0xff] %v3218
        %v3267 = vld [vmem:[#allocation4] sm:$0xff]
        %v3268 = vld [vmem:[#allocation4 + $0x8] sm:$0xff]
        %v3269 = vld [vmem:[#allocation4 + $0x10] sm:$0xff]
        %v3270 = vld [vmem:[#allocation4 + $0x18] sm:$0xff]
        %v3271 = vld [vmem:[#allocation4 + $0x20] sm:$0xff]
        %v3272 = vld [vmem:[#allocation4 + $0x28] sm:$0xff]
        %v3273 = vld [vmem:[#allocation4 + $0x30] sm:$0xff]
        %v3274 = vld [vmem:[#allocation4 + $0x38] sm:$0xff]
        %v3275 = vld [vmem:[#allocation4 + $0x40] sm:$0xff]
        %v3276 = vld [vmem:[#allocation4 + $0x48] sm:$0xff]
        %v3277 = vld [vmem:[#allocation4 + $0x50] sm:$0xff]
        %v3278 = vld [vmem:[#allocation4 + $0x58] sm:$0xff]
        %v3279 = vld [vmem:[#allocation4 + $0x60] sm:$0xff]
        %v3280 = vld [vmem:[#allocation4 + $0x68] sm:$0xff]
        %v3281 = vld [vmem:[#allocation4 + $0x70] sm:$0xff]
        %v3282 = vld [vmem:[#allocation4 + $0x78] sm:$0xff]
        %v3283 = vld [vmem:[#allocation4 + $0x80] sm:$0xff]
        %v3284 = vld [vmem:[#allocation4 + $0x88] sm:$0xff]
        %v3285 = vld [vmem:[#allocation4 + $0x90] sm:$0xff]
        %v3286 = vld [vmem:[#allocation4 + $0x98] sm:$0xff]
        %v3287 = vld [vmem:[#allocation4 + $0xa0] sm:$0xff]
        %v3288 = vld [vmem:[#allocation4 + $0xa8] sm:$0xff]
        %v3289 = vld [vmem:[#allocation4 + $0xb0] sm:$0xff]
        %v3290 = vld [vmem:[#allocation4 + $0xb8] sm:$0xff]
        %v3291 = vld [vmem:[#allocation4 + $0xc0] sm:$0xff]
        %v3292 = vld [vmem:[#allocation4 + $0xc8] sm:$0xff]
        %v3293 = vld [vmem:[#allocation4 + $0xd0] sm:$0xff]
        %v3294 = vld [vmem:[#allocation4 + $0xd8] sm:$0xff]
        %v3295 = vld [vmem:[#allocation4 + $0xe0] sm:$0xff]
        %v3296 = vld [vmem:[#allocation4 + $0xe8] sm:$0xff]
        %v3297 = vld [vmem:[#allocation4 + $0xf0] sm:$0xff]
        %v3298 = vld [vmem:[#allocation4 + $0xf8] sm:$0xff]
        %v3299 = vld [vmem:[#allocation4 + $0x100] sm:$0xff]
        %v3300 = vld [vmem:[#allocation4 + $0x108] sm:$0xff]
        %v3301 = vld [vmem:[#allocation4 + $0x110] sm:$0xff]
        %v3302 = vld [vmem:[#allocation4 + $0x118] sm:$0xff]
        %v3303 = vld [vmem:[#allocation4 + $0x120] sm:$0xff]
        %v3304 = vld [vmem:[#allocation4 + $0x128] sm:$0xff]
        %v3305 = vld [vmem:[#allocation4 + $0x130] sm:$0xff]
        %v3306 = vld [vmem:[#allocation4 + $0x138] sm:$0xff]
        %v3307 = vld [vmem:[#allocation4 + $0x140] sm:$0xff]
        %v3308 = vld [vmem:[#allocation4 + $0x148] sm:$0xff]
        %v3309 = vld [vmem:[#allocation4 + $0x150] sm:$0xff]
        %v3310 = vld [vmem:[#allocation4 + $0x158] sm:$0xff]
        %v3311 = vld [vmem:[#allocation4 + $0x160] sm:$0xff]
        %v3312 = vld [vmem:[#allocation4 + $0x168] sm:$0xff]
        %v3313 = vld [vmem:[#allocation4 + $0x170] sm:$0xff]
        %v3314 = vld [vmem:[#allocation4 + $0x178] sm:$0xff]
        %v3315 = vld [vmem:[%s703 + $0x18] sm:$0xe]
        %v3316 = vld [vmem:[%s703 + $0x1c] sm:$0xf]
        %v3317 = vld [vmem:[%s703 + $0x20] sm:$0xf]
        %v3318 = vld [vmem:[%s703 + $0x24] sm:$0xf]
        %v3319 = vld [vmem:[%s703 + $0x28] sm:$0xf]
        %v3320 = vld [vmem:[%s703 + $0x2c] sm:$0xf]
        %v3321 = vld [vmem:[%s703 + $0x30] sm:$0xf]
        %v3322 = vld [vmem:[%s703 + $0x34] sm:$0xf]
        %v3323 = vld [vmem:[%s703 + $0x38] sm:$0xf]
        %v3324 = vld [vmem:[%s703 + $0x3c] sm:$0xf]
        %v3325 = vld [vmem:[%s703 + $0x40] sm:$0xf]
        %v3326 = vld [vmem:[%s703 + $0x44] sm:$0xf]
        %v3327 = vld [vmem:[%s703 + $0x48] sm:$0xf]
        %v3328 = vld [vmem:[%s703 + $0x4c] sm:$0xf]
        %v3329 = vld [vmem:[%s703 + $0x50] sm:$0xf]
        %v3330 = vld [vmem:[%s703 + $0x54] sm:$0xf]
        %v3331 = vld [vmem:[%s703 + $0x58] sm:$0xf]
        %v3332 = vld [vmem:[%s703 + $0x5c] sm:$0xf]
        %v3333 = vld [vmem:[%s703 + $0x60] sm:$0xf]
        %v3334 = vld [vmem:[%s703 + $0x64] sm:$0xf]
        %v3335 = vld [vmem:[%s703 + $0x68] sm:$0xf]
        %v3336 = vld [vmem:[%s703 + $0x6c] sm:$0xf]
        %v3337 = vld [vmem:[%s703 + $0x70] sm:$0xf]
        %v3338 = vld [vmem:[%s703 + $0x74] sm:$0xf]
        %v3339 = vld [vmem:[%s703 + $0x78] sm:$0xf]
        %v3340 = vld [vmem:[%s703 + $0x7c] sm:$0xf]
        %v3341 = vld [vmem:[%s703 + $0x80] sm:$0xf]
        %v3342 = vld [vmem:[%s703 + $0x84] sm:$0xf]
        %v3343 = vld [vmem:[%s703 + $0x88] sm:$0xf]
        %v3344 = vld [vmem:[%s703 + $0x8c] sm:$0xf]
        %v3345 = vld [vmem:[%s703 + $0x90] sm:$0xf]
        %v3346 = vld [vmem:[%s703 + $0x94] sm:$0xf]
        %v3347 = vld [vmem:[%s703 + $0x98] sm:$0xf]
        %v3348 = vld [vmem:[%s703 + $0x9c] sm:$0xf]
        %v3349 = vld [vmem:[%s703 + $0xa0] sm:$0xf]
        %v3350 = vld [vmem:[%s703 + $0xa4] sm:$0xf]
        %v3351 = vld [vmem:[%s703 + $0xa8] sm:$0xf]
        %v3352 = vld [vmem:[%s703 + $0xac] sm:$0xf]
        %v3353 = vld [vmem:[%s703 + $0xb0] sm:$0xf]
        %v3354 = vld [vmem:[%s703 + $0xb4] sm:$0xf]
        %v3355 = vld [vmem:[%s703 + $0xb8] sm:$0xf]
        %v3356 = vld [vmem:[%s703 + $0xbc] sm:$0xf]
        %v3357 = vld [vmem:[%s703 + $0xc0] sm:$0xf]
        %v3358 = vld [vmem:[%s703 + $0xc4] sm:$0xf]
        %v3359 = vld [vmem:[%s703 + $0xc8] sm:$0xf]
        %v3360 = vld [vmem:[%s703 + $0xcc] sm:$0xf]
        %v3361 = vld [vmem:[%s703 + $0xd0] sm:$0xf]
        %v3362 = vld [vmem:[%s703 + $0xd4] sm:$0xf]
        %v3363 = vld [vmem:[%s703 + $0xd8] sm:$0x1]
        %s3364 = scalar_lea.vmem [#allocation5], 256
        %v3365 = vld [vmem:[%s3364] sm:$0xf]
        %v3366 = vld [vmem:[%s3364 + $0x4] sm:$0xf]
        %v3367 = vld [vmem:[%s3364 + $0x8] sm:$0xf]
        %v3368 = vld [vmem:[%s3364 + $0xc] sm:$0xf]
        %v3369 = vld [vmem:[%s3364 + $0x10] sm:$0xf]
        %v3370 = vld [vmem:[%s3364 + $0x14] sm:$0xf]
        %v3371 = vld [vmem:[%s3364 + $0x18] sm:$0xf]
        %v3372 = vld [vmem:[%s3364 + $0x1c] sm:$0xf]
        %v3373 = vld [vmem:[%s3364 + $0x20] sm:$0xf]
        %v3374 = vld [vmem:[%s3364 + $0x24] sm:$0xf]
        %v3375 = vld [vmem:[%s3364 + $0x28] sm:$0xf]
        %v3376 = vld [vmem:[%s3364 + $0x2c] sm:$0xf]
        %v3377 = vld [vmem:[%s3364 + $0x30] sm:$0xf]
        %v3378 = vld [vmem:[%s3364 + $0x34] sm:$0xf]
        %v3379 = vld [vmem:[%s3364 + $0x38] sm:$0xf]
        %v3380 = vld [vmem:[%s3364 + $0x3c] sm:$0xf]
        %v3430 = vunpack.c.l.b16 %v3315
        %v3431 = vunpack.c.l.b16 %v3316
        %v3432 = vunpack.c.l.b16 %v3317
        %v3433 = vunpack.c.l.b16 %v3318
        %v3434 = vunpack.c.l.b16 %v3319
        %v3435 = vunpack.c.l.b16 %v3320
        %v3436 = vunpack.c.l.b16 %v3321
        %v3437 = vunpack.c.l.b16 %v3322
        %v3438 = vunpack.c.l.b16 %v3323
        %v3439 = vunpack.c.l.b16 %v3324
        %v3440 = vunpack.c.l.b16 %v3325
        %v3441 = vunpack.c.l.b16 %v3326
        %v3442 = vunpack.c.l.b16 %v3327
        %v3443 = vunpack.c.l.b16 %v3328
        %v3444 = vunpack.c.l.b16 %v3329
        %v3445 = vunpack.c.l.b16 %v3330
        %v3446 = vunpack.c.l.b16 %v3331
        %v3447 = vunpack.c.l.b16 %v3332
        %v3448 = vunpack.c.l.b16 %v3333
        %v3449 = vunpack.c.l.b16 %v3334
        %v3450 = vunpack.c.l.b16 %v3335
        %v3451 = vunpack.c.l.b16 %v3336
        %v3452 = vunpack.c.l.b16 %v3337
        %v3453 = vunpack.c.l.b16 %v3338
        %v3454 = vunpack.c.l.b16 %v3339
        %v3455 = vunpack.c.l.b16 %v3340
        %v3456 = vunpack.c.l.b16 %v3341
        %v3457 = vunpack.c.l.b16 %v3342
        %v3458 = vunpack.c.l.b16 %v3343
        %v3459 = vunpack.c.l.b16 %v3344
        %v3460 = vunpack.c.l.b16 %v3345
        %v3461 = vunpack.c.l.b16 %v3346
        %v3462 = vunpack.c.l.b16 %v3347
        %v3463 = vunpack.c.l.b16 %v3348
        %v3464 = vunpack.c.l.b16 %v3349
        %v3465 = vunpack.c.l.b16 %v3350
        %v3466 = vunpack.c.l.b16 %v3351
        %v3467 = vunpack.c.l.b16 %v3352
        %v3468 = vunpack.c.l.b16 %v3353
        %v3469 = vunpack.c.l.b16 %v3354
        %v3470 = vunpack.c.l.b16 %v3355
        %v3471 = vunpack.c.l.b16 %v3356
        %v3472 = vunpack.c.l.b16 %v3357
        %v3473 = vunpack.c.l.b16 %v3358
        %v3474 = vunpack.c.l.b16 %v3359
        %v3475 = vunpack.c.l.b16 %v3360
        %v3476 = vunpack.c.l.b16 %v3361
        %v3477 = vunpack.c.l.b16 %v3362
        %v3478 = vunpack.c.l.b16 %v3363
        %v3479 = vpack.c.b16 %v3431, %v3430
        %v3480 = vpack.c.b16 %v3433, %v3432
        %v3481 = vpack.c.b16 %v3435, %v3434
        %v3482 = vpack.c.b16 %v3437, %v3436
        %v3483 = vpack.c.b16 %v3439, %v3438
        %v3484 = vpack.c.b16 %v3441, %v3440
        %v3485 = vpack.c.b16 %v3443, %v3442
        %v3486 = vpack.c.b16 %v3445, %v3444
        %v3487 = vpack.c.b16 %v3447, %v3446
        %v3488 = vpack.c.b16 %v3449, %v3448
        %v3489 = vpack.c.b16 %v3451, %v3450
        %v3490 = vpack.c.b16 %v3453, %v3452
        %v3491 = vpack.c.b16 %v3455, %v3454
        %v3492 = vpack.c.b16 %v3457, %v3456
        %v3493 = vpack.c.b16 %v3459, %v3458
        %v3494 = vpack.c.b16 %v3461, %v3460
        %v3495 = vpack.c.b16 %v3463, %v3462
        %v3496 = vpack.c.b16 %v3465, %v3464
        %v3497 = vpack.c.b16 %v3467, %v3466
        %v3498 = vpack.c.b16 %v3469, %v3468
        %v3499 = vpack.c.b16 %v3471, %v3470
        %v3500 = vpack.c.b16 %v3473, %v3472
        %v3501 = vpack.c.b16 %v3475, %v3474
        %v3502 = vpack.c.b16 %v3477, %v3476
        %v3503 = vpack.c.b16 %v3478, %v3478
        %v3504 = vrot.slane %v3479, 1
        %v3505 = vrot.slane %v3480, 1
        %v3506 = vsel %vm1518, %v3504, %v3505
        %v3507 = vrot.slane %v3481, 1
        %v3508 = vsel %vm1518, %v3505, %v3507
        %v3509 = vrot.slane %v3482, 1
        %v3510 = vsel %vm1518, %v3507, %v3509
        %v3511 = vrot.slane %v3483, 1
        %v3512 = vsel %vm1518, %v3509, %v3511
        %v3513 = vrot.slane %v3484, 1
        %v3514 = vsel %vm1518, %v3511, %v3513
        %v3515 = vrot.slane %v3485, 1
        %v3516 = vsel %vm1518, %v3513, %v3515
        %v3517 = vrot.slane %v3486, 1
        %v3518 = vsel %vm1518, %v3515, %v3517
        %v3519 = vrot.slane %v3487, 1
        %v3520 = vsel %vm1518, %v3517, %v3519
        %v3521 = vrot.slane %v3488, 1
        %v3522 = vsel %vm1518, %v3519, %v3521
        %v3523 = vrot.slane %v3489, 1
        %v3524 = vsel %vm1518, %v3521, %v3523
        %v3525 = vrot.slane %v3490, 1
        %v3526 = vsel %vm1518, %v3523, %v3525
        %v3527 = vrot.slane %v3491, 1
        %v3528 = vsel %vm1518, %v3525, %v3527
        %v3529 = vrot.slane %v3492, 1
        %v3530 = vsel %vm1518, %v3527, %v3529
        %v3531 = vrot.slane %v3493, 1
        %v3532 = vsel %vm1518, %v3529, %v3531
        %v3533 = vrot.slane %v3494, 1
        %v3534 = vsel %vm1518, %v3531, %v3533
        %v3535 = vrot.slane %v3495, 1
        %v3536 = vsel %vm1518, %v3533, %v3535
        %v3537 = vrot.slane %v3496, 1
        %v3538 = vsel %vm1518, %v3535, %v3537
        %v3539 = vrot.slane %v3497, 1
        %v3540 = vsel %vm1518, %v3537, %v3539
        %v3541 = vrot.slane %v3498, 1
        %v3542 = vsel %vm1518, %v3539, %v3541
        %v3543 = vrot.slane %v3499, 1
        %v3544 = vsel %vm1518, %v3541, %v3543
        %v3545 = vrot.slane %v3500, 1
        %v3546 = vsel %vm1518, %v3543, %v3545
        %v3547 = vrot.slane %v3501, 1
        %v3548 = vsel %vm1518, %v3545, %v3547
        %v3549 = vrot.slane %v3502, 1
        %v3550 = vsel %vm1518, %v3547, %v3549
        %v3551 = vrot.slane %v3503, 1
        %v3552 = vsel %vm1518, %v3549, %v3551
        %v3593 = vunpack.c.l.b16 %v3365
        %v3594 = vunpack.c.l.b16 %v3366
        %v3595 = vunpack.c.l.b16 %v3367
        %v3596 = vunpack.c.l.b16 %v3368
        %v3597 = vunpack.c.l.b16 %v3369
        %v3598 = vunpack.c.l.b16 %v3370
        %v3599 = vunpack.c.l.b16 %v3371
        %v3600 = vunpack.c.l.b16 %v3372
        %v3601 = vunpack.c.l.b16 %v3373
        %v3602 = vunpack.c.l.b16 %v3374
        %v3603 = vunpack.c.l.b16 %v3375
        %v3604 = vunpack.c.l.b16 %v3376
        %v3605 = vunpack.c.l.b16 %v3377
        %v3606 = vunpack.c.l.b16 %v3378
        %v3607 = vunpack.c.l.b16 %v3379
        %v3608 = vunpack.c.l.b16 %v3380
        %v3609 = vpack.c.b16 %v3594, %v3593
        %v3610 = vpack.c.b16 %v3596, %v3595
        %v3611 = vpack.c.b16 %v3598, %v3597
        %v3612 = vpack.c.b16 %v3600, %v3599
        %v3613 = vpack.c.b16 %v3602, %v3601
        %v3614 = vpack.c.b16 %v3604, %v3603
        %v3615 = vpack.c.b16 %v3606, %v3605
        %v3616 = vpack.c.b16 %v3608, %v3607
        %3625 = vmatprep.subr.bf16.mxu0 0
        %3626 = vmatpush1.bf16.msra.mxu0 %v3609
        %3627 = vmatprep.subr.bf16.mxu0 0
        %3628 = vmatpush1.bf16.msra.mxu0 %v3610
        %3629 = vmatprep.subr.bf16.mxu0 0
        %3630 = vmatpush1.bf16.msra.mxu0 %v3611
        %3631 = vmatprep.subr.bf16.mxu0 0
        %3632 = vmatpush1.bf16.msra.mxu0 %v3612
        %3633 = vmatprep.subr.bf16.mxu0 0
        %3634 = vmatpush1.bf16.msra.mxu0 %v3613
        %3635 = vmatprep.subr.bf16.mxu0 0
        %3636 = vmatpush1.bf16.msra.mxu0 %v3614
        %3637 = vmatprep.subr.bf16.mxu0 0
        %3638 = vmatpush1.bf16.msra.mxu0 %v3615
        %3639 = vmatprep.subr.bf16.mxu0 0
        %3640 = vmatpush1.bf16.msra.mxu0 %v3616
        %3641 = vmatprep.subr.bf16.mxu0 0
        %3642 = vmatpush1.bf16.msra.mxu0 0
        %3643 = vmatprep.subr.bf16.mxu0 0
        %3644 = vmatpush1.bf16.msra.mxu0 0
        %3645 = vmatprep.subr.bf16.mxu0 0
        %3646 = vmatpush1.bf16.msra.mxu0 0
        %3647 = vmatprep.subr.bf16.mxu0 0
        %3648 = vmatpush1.bf16.msra.mxu0 0
        %3649 = vmatprep.subr.bf16.mxu0 0
        %3650 = vmatpush1.bf16.msra.mxu0 0
        %3651 = vmatprep.subr.bf16.mxu0 0
        %3652 = vmatpush1.bf16.msra.mxu0 0
        %3653 = vmatprep.subr.bf16.mxu0 0
        %3654 = vmatpush1.bf16.msra.mxu0 0
        %3655 = vmatprep.subr.bf16.mxu0 0
        %3656 = vmatpush1.bf16.msra.mxu0 0
        %3657 = vmatprep.mubr.bf16.mxu0 0
        %3658 = vmatmul.mubr.bf16.gmra.mrb[0].mxu0 %v3506
        %v3659 = vpop.f32.mrb[0].mxu0
        %v3660 = vadd.f32 0.0, %v3659
        %v3661 = vpop.f32.mrb[0].mxu0
        %v3662 = vpop.f32.mrb[0].mxu0
        %v3663 = vadd.f32 0.0, %v3662
        %v3664 = vpop.f32.mrb[0].mxu0
        %3665 = vmatprep.mubr.bf16.mxu0 0
        %3666 = vmatmul.mubr.bf16.gmra.mrb[0].mxu0 %v3508
        %v3667 = vpop.f32.mrb[0].mxu0
        %v3668 = vadd.f32 0.0, %v3667
        %v3669 = vpop.f32.mrb[0].mxu0
        %v3670 = vpop.f32.mrb[0].mxu0
        %v3671 = vadd.f32 0.0, %v3670
        %v3672 = vpop.f32.mrb[0].mxu0
        %3673 = vmatprep.mubr.bf16.mxu0 0
        %3674 = vmatmul.mubr.bf16.gmra.mrb[0].mxu0 %v3510
        %v3675 = vpop.f32.mrb[0].mxu0
        %v3676 = vadd.f32 0.0, %v3675
        %v3677 = vpop.f32.mrb[0].mxu0
        %v3678 = vpop.f32.mrb[0].mxu0
        %v3679 = vadd.f32 0.0, %v3678
        %v3680 = vpop.f32.mrb[0].mxu0
        %3681 = vmatprep.mubr.bf16.mxu0 0
        %3682 = vmatmul.mubr.bf16.gmra.mrb[0].mxu0 %v3512
        %v3683 = vpop.f32.mrb[0].mxu0
        %v3684 = vadd.f32 0.0, %v3683
        %v3685 = vpop.f32.mrb[0].mxu0
        %v3686 = vpop.f32.mrb[0].mxu0
        %v3687 = vadd.f32 0.0, %v3686
        %v3688 = vpop.f32.mrb[0].mxu0
        %3689 = vmatprep.mubr.bf16.mxu0 0
        %3690 = vmatmul.mubr.bf16.gmra.mrb[0].mxu0 %v3514
        %v3691 = vpop.f32.mrb[0].mxu0
        %v3692 = vadd.f32 0.0, %v3691
        %v3693 = vpop.f32.mrb[0].mxu0
        %v3694 = vpop.f32.mrb[0].mxu0
        %v3695 = vadd.f32 0.0, %v3694
        %v3696 = vpop.f32.mrb[0].mxu0
        %3697 = vmatprep.mubr.bf16.mxu0 0
        %3698 = vmatmul.mubr.bf16.gmra.mrb[0].mxu0 %v3516
        %v3699 = vpop.f32.mrb[0].mxu0
        %v3700 = vadd.f32 0.0, %v3699
        %v3701 = vpop.f32.mrb[0].mxu0
        %v3702 = vpop.f32.mrb[0].mxu0
        %v3703 = vadd.f32 0.0, %v3702
        %v3704 = vpop.f32.mrb[0].mxu0
        %3705 = vmatprep.mubr.bf16.mxu0 0
        %3706 = vmatmul.mubr.bf16.gmra.mrb[0].mxu0 %v3518
        %v3707 = vpop.f32.mrb[0].mxu0
        %v3708 = vadd.f32 0.0, %v3707
        %v3709 = vpop.f32.mrb[0].mxu0
        %v3710 = vpop.f32.mrb[0].mxu0
        %v3711 = vadd.f32 0.0, %v3710
        %v3712 = vpop.f32.mrb[0].mxu0
        %3713 = vmatprep.mubr.bf16.mxu0 0
        %3714 = vmatmul.mubr.bf16.gmra.mrb[0].mxu0 %v3520
        %v3715 = vpop.f32.mrb[0].mxu0
        %v3716 = vadd.f32 0.0, %v3715
        %v3717 = vpop.f32.mrb[0].mxu0
        %v3718 = vpop.f32.mrb[0].mxu0
        %v3719 = vadd.f32 0.0, %v3718
        %v3720 = vpop.f32.mrb[0].mxu0
        %3721 = vmatprep.mubr.bf16.mxu0 0
        %3722 = vmatmul.mubr.bf16.gmra.mrb[0].mxu0 %v3522
        %v3723 = vpop.f32.mrb[0].mxu0
        %v3724 = vadd.f32 0.0, %v3723
        %v3725 = vpop.f32.mrb[0].mxu0
        %v3726 = vpop.f32.mrb[0].mxu0
        %v3727 = vadd.f32 0.0, %v3726
        %v3728 = vpop.f32.mrb[0].mxu0
        %3729 = vmatprep.mubr.bf16.mxu0 0
        %3730 = vmatmul.mubr.bf16.gmra.mrb[0].mxu0 %v3524
        %v3731 = vpop.f32.mrb[0].mxu0
        %v3732 = vadd.f32 0.0, %v3731
        %v3733 = vpop.f32.mrb[0].mxu0
        %v3734 = vpop.f32.mrb[0].mxu0
        %v3735 = vadd.f32 0.0, %v3734
        %v3736 = vpop.f32.mrb[0].mxu0
        %3737 = vmatprep.mubr.bf16.mxu0 0
        %3738 = vmatmul.mubr.bf16.gmra.mrb[0].mxu0 %v3526
        %v3739 = vpop.f32.mrb[0].mxu0
        %v3740 = vadd.f32 0.0, %v3739
        %v3741 = vpop.f32.mrb[0].mxu0
        %v3742 = vpop.f32.mrb[0].mxu0
        %v3743 = vadd.f32 0.0, %v3742
        %v3744 = vpop.f32.mrb[0].mxu0
        %3745 = vmatprep.mubr.bf16.mxu0 0
        %3746 = vmatmul.mubr.bf16.gmra.mrb[0].mxu0 %v3528
        %v3747 = vpop.f32.mrb[0].mxu0
        %v3748 = vadd.f32 0.0, %v3747
        %v3749 = vpop.f32.mrb[0].mxu0
        %v3750 = vpop.f32.mrb[0].mxu0
        %v3751 = vadd.f32 0.0, %v3750
        %v3752 = vpop.f32.mrb[0].mxu0
        %3753 = vmatprep.mubr.bf16.mxu0 0
        %3754 = vmatmul.mubr.bf16.gmra.mrb[0].mxu0 %v3530
        %v3755 = vpop.f32.mrb[0].mxu0
        %v3756 = vadd.f32 0.0, %v3755
        %v3757 = vpop.f32.mrb[0].mxu0
        %v3758 = vpop.f32.mrb[0].mxu0
        %v3759 = vadd.f32 0.0, %v3758
        %v3760 = vpop.f32.mrb[0].mxu0
        %3761 = vmatprep.mubr.bf16.mxu0 0
        %3762 = vmatmul.mubr.bf16.gmra.mrb[0].mxu0 %v3532
        %v3763 = vpop.f32.mrb[0].mxu0
        %v3764 = vadd.f32 0.0, %v3763
        %v3765 = vpop.f32.mrb[0].mxu0
        %v3766 = vpop.f32.mrb[0].mxu0
        %v3767 = vadd.f32 0.0, %v3766
        %v3768 = vpop.f32.mrb[0].mxu0
        %3769 = vmatprep.mubr.bf16.mxu0 0
        %3770 = vmatmul.mubr.bf16.gmra.mrb[0].mxu0 %v3534
        %v3771 = vpop.f32.mrb[0].mxu0
        %v3772 = vadd.f32 0.0, %v3771
        %v3773 = vpop.f32.mrb[0].mxu0
        %v3774 = vpop.f32.mrb[0].mxu0
        %v3775 = vadd.f32 0.0, %v3774
        %v3776 = vpop.f32.mrb[0].mxu0
        %3777 = vmatprep.mubr.bf16.mxu0 0
        %3778 = vmatmul.mubr.bf16.gmra.mrb[0].mxu0 %v3536
        %v3779 = vpop.f32.mrb[0].mxu0
        %v3780 = vadd.f32 0.0, %v3779
        %v3781 = vpop.f32.mrb[0].mxu0
        %v3782 = vpop.f32.mrb[0].mxu0
        %v3783 = vadd.f32 0.0, %v3782
        %v3784 = vpop.f32.mrb[0].mxu0
        %3785 = vmatprep.mubr.bf16.mxu0 0
        %3786 = vmatmul.mubr.bf16.gmra.mrb[0].mxu0 %v3538
        %v3787 = vpop.f32.mrb[0].mxu0
        %v3788 = vadd.f32 0.0, %v3787
        %v3789 = vpop.f32.mrb[0].mxu0
        %v3790 = vpop.f32.mrb[0].mxu0
        %v3791 = vadd.f32 0.0, %v3790
        %v3792 = vpop.f32.mrb[0].mxu0
        %3793 = vmatprep.mubr.bf16.mxu0 0
        %3794 = vmatmul.mubr.bf16.gmra.mrb[0].mxu0 %v3540
        %v3795 = vpop.f32.mrb[0].mxu0
        %v3796 = vadd.f32 0.0, %v3795
        %v3797 = vpop.f32.mrb[0].mxu0
        %v3798 = vpop.f32.mrb[0].mxu0
        %v3799 = vadd.f32 0.0, %v3798
        %v3800 = vpop.f32.mrb[0].mxu0
        %3801 = vmatprep.mubr.bf16.mxu0 0
        %3802 = vmatmul.mubr.bf16.gmra.mrb[0].mxu0 %v3542
        %v3803 = vpop.f32.mrb[0].mxu0
        %v3804 = vadd.f32 0.0, %v3803
        %v3805 = vpop.f32.mrb[0].mxu0
        %v3806 = vpop.f32.mrb[0].mxu0
        %v3807 = vadd.f32 0.0, %v3806
        %v3808 = vpop.f32.mrb[0].mxu0
        %3809 = vmatprep.mubr.bf16.mxu0 0
        %3810 = vmatmul.mubr.bf16.gmra.mrb[0].mxu0 %v3544
        %v3811 = vpop.f32.mrb[0].mxu0
        %v3812 = vadd.f32 0.0, %v3811
        %v3813 = vpop.f32.mrb[0].mxu0
        %v3814 = vpop.f32.mrb[0].mxu0
        %v3815 = vadd.f32 0.0, %v3814
        %v3816 = vpop.f32.mrb[0].mxu0
        %3817 = vmatprep.mubr.bf16.mxu0 0
        %3818 = vmatmul.mubr.bf16.gmra.mrb[0].mxu0 %v3546
        %v3819 = vpop.f32.mrb[0].mxu0
        %v3820 = vadd.f32 0.0, %v3819
        %v3821 = vpop.f32.mrb[0].mxu0
        %v3822 = vpop.f32.mrb[0].mxu0
        %v3823 = vadd.f32 0.0, %v3822
        %v3824 = vpop.f32.mrb[0].mxu0
        %3825 = vmatprep.mubr.bf16.mxu0 0
        %3826 = vmatmul.mubr.bf16.gmra.mrb[0].mxu0 %v3548
        %v3827 = vpop.f32.mrb[0].mxu0
        %v3828 = vadd.f32 0.0, %v3827
        %v3829 = vpop.f32.mrb[0].mxu0
        %v3830 = vpop.f32.mrb[0].mxu0
        %v3831 = vadd.f32 0.0, %v3830
        %v3832 = vpop.f32.mrb[0].mxu0
        %3833 = vmatprep.mubr.bf16.mxu0 0
        %3834 = vmatmul.mubr.bf16.gmra.mrb[0].mxu0 %v3550
        %v3835 = vpop.f32.mrb[0].mxu0
        %v3836 = vadd.f32 0.0, %v3835
        %v3837 = vpop.f32.mrb[0].mxu0
        %v3838 = vpop.f32.mrb[0].mxu0
        %v3839 = vadd.f32 0.0, %v3838
        %v3840 = vpop.f32.mrb[0].mxu0
        %3841 = vmatprep.mubr.bf16.mxu0 0
        %3842 = vmatmul.mubr.bf16.gmra.mrb[0].mxu0 %v3552
        %v3843 = vpop.f32.mrb[0].mxu0
        %v3844 = vadd.f32 0.0, %v3843
        %v3845 = vpop.f32.mrb[0].mxu0
        %v3846 = vpop.f32.mrb[0].mxu0
        %v3847 = vadd.f32 0.0, %v3846
        %v3848 = vpop.f32.mrb[0].mxu0
        %3849 = vdwg.mxu0
        %v3850 = vadd.f32 %v3267, %v3660
        %v3851 = vadd.f32 %v3268, %v3663
        %v3852 = vadd.f32 %v3269, %v3668
        %v3853 = vadd.f32 %v3270, %v3671
        %v3854 = vadd.f32 %v3271, %v3676
        %v3855 = vadd.f32 %v3272, %v3679
        %v3856 = vadd.f32 %v3273, %v3684
        %v3857 = vadd.f32 %v3274, %v3687
        %v3858 = vadd.f32 %v3275, %v3692
        %v3859 = vadd.f32 %v3276, %v3695
        %v3860 = vadd.f32 %v3277, %v3700
        %v3861 = vadd.f32 %v3278, %v3703
        %v3862 = vadd.f32 %v3279, %v3708
        %v3863 = vadd.f32 %v3280, %v3711
        %v3864 = vadd.f32 %v3281, %v3716
        %v3865 = vadd.f32 %v3282, %v3719
        %v3866 = vadd.f32 %v3283, %v3724
        %v3867 = vadd.f32 %v3284, %v3727
        %v3868 = vadd.f32 %v3285, %v3732
        %v3869 = vadd.f32 %v3286, %v3735
        %v3870 = vadd.f32 %v3287, %v3740
        %v3871 = vadd.f32 %v3288, %v3743
        %v3872 = vadd.f32 %v3289, %v3748
        %v3873 = vadd.f32 %v3290, %v3751
        %v3874 = vadd.f32 %v3291, %v3756
        %v3875 = vadd.f32 %v3292, %v3759
        %v3876 = vadd.f32 %v3293, %v3764
        %v3877 = vadd.f32 %v3294, %v3767
        %v3878 = vadd.f32 %v3295, %v3772
        %v3879 = vadd.f32 %v3296, %v3775
        %v3880 = vadd.f32 %v3297, %v3780
        %v3881 = vadd.f32 %v3298, %v3783
        %v3882 = vadd.f32 %v3299, %v3788
        %v3883 = vadd.f32 %v3300, %v3791
        %v3884 = vadd.f32 %v3301, %v3796
        %v3885 = vadd.f32 %v3302, %v3799
        %v3886 = vadd.f32 %v3303, %v3804
        %v3887 = vadd.f32 %v3304, %v3807
        %v3888 = vadd.f32 %v3305, %v3812
        %v3889 = vadd.f32 %v3306, %v3815
        %v3890 = vadd.f32 %v3307, %v3820
        %v3891 = vadd.f32 %v3308, %v3823
        %v3892 = vadd.f32 %v3309, %v3828
        %v3893 = vadd.f32 %v3310, %v3831
        %v3894 = vadd.f32 %v3311, %v3836
        %v3895 = vadd.f32 %v3312, %v3839
        %v3896 = vadd.f32 %v3313, %v3844
        %v3897 = vadd.f32 %v3314, %v3847
        %3898 = vst [vmem:[#allocation4] sm:$0xff] %v3850
        %3899 = vst [vmem:[#allocation4 + $0x8] sm:$0xff] %v3851
        %3900 = vst [vmem:[#allocation4 + $0x10] sm:$0xff] %v3852
        %3901 = vst [vmem:[#allocation4 + $0x18] sm:$0xff] %v3853
        %3902 = vst [vmem:[#allocation4 + $0x20] sm:$0xff] %v3854
        %3903 = vst [vmem:[#allocation4 + $0x28] sm:$0xff] %v3855
        %3904 = vst [vmem:[#allocation4 + $0x30] sm:$0xff] %v3856
        %3905 = vst [vmem:[#allocation4 + $0x38] sm:$0xff] %v3857
        %3906 = vst [vmem:[#allocation4 + $0x40] sm:$0xff] %v3858
        %3907 = vst [vmem:[#allocation4 + $0x48] sm:$0xff] %v3859
        %3908 = vst [vmem:[#allocation4 + $0x50] sm:$0xff] %v3860
        %3909 = vst [vmem:[#allocation4 + $0x58] sm:$0xff] %v3861
        %3910 = vst [vmem:[#allocation4 + $0x60] sm:$0xff] %v3862
        %3911 = vst [vmem:[#allocation4 + $0x68] sm:$0xff] %v3863
        %3912 = vst [vmem:[#allocation4 + $0x70] sm:$0xff] %v3864
        %3913 = vst [vmem:[#allocation4 + $0x78] sm:$0xff] %v3865
        %3914 = vst [vmem:[#allocation4 + $0x80] sm:$0xff] %v3866
        %3915 = vst [vmem:[#allocation4 + $0x88] sm:$0xff] %v3867
        %3916 = vst [vmem:[#allocation4 + $0x90] sm:$0xff] %v3868
        %3917 = vst [vmem:[#allocation4 + $0x98] sm:$0xff] %v3869
        %3918 = vst [vmem:[#allocation4 + $0xa0] sm:$0xff] %v3870
        %3919 = vst [vmem:[#allocation4 + $0xa8] sm:$0xff] %v3871
        %3920 = vst [vmem:[#allocation4 + $0xb0] sm:$0xff] %v3872
        %3921 = vst [vmem:[#allocation4 + $0xb8] sm:$0xff] %v3873
        %3922 = vst [vmem:[#allocation4 + $0xc0] sm:$0xff] %v3874
        %3923 = vst [vmem:[#allocation4 + $0xc8] sm:$0xff] %v3875
        %3924 = vst [vmem:[#allocation4 + $0xd0] sm:$0xff] %v3876
        %3925 = vst [vmem:[#allocation4 + $0xd8] sm:$0xff] %v3877
        %3926 = vst [vmem:[#allocation4 + $0xe0] sm:$0xff] %v3878
        %3927 = vst [vmem:[#allocation4 + $0xe8] sm:$0xff] %v3879
        %3928 = vst [vmem:[#allocation4 + $0xf0] sm:$0xff] %v3880
        %3929 = vst [vmem:[#allocation4 + $0xf8] sm:$0xff] %v3881
        %3930 = vst [vmem:[#allocation4 + $0x100] sm:$0xff] %v3882
        %3931 = vst [vmem:[#allocation4 + $0x108] sm:$0xff] %v3883
        %3932 = vst [vmem:[#allocation4 + $0x110] sm:$0xff] %v3884
        %3933 = vst [vmem:[#allocation4 + $0x118] sm:$0xff] %v3885
        %3934 = vst [vmem:[#allocation4 + $0x120] sm:$0xff] %v3886
        %3935 = vst [vmem:[#allocation4 + $0x128] sm:$0xff] %v3887
        %3936 = vst [vmem:[#allocation4 + $0x130] sm:$0xff] %v3888
        %3937 = vst [vmem:[#allocation4 + $0x138] sm:$0xff] %v3889
        %3938 = vst [vmem:[#allocation4 + $0x140] sm:$0xff] %v3890
        %3939 = vst [vmem:[#allocation4 + $0x148] sm:$0xff] %v3891
        %3940 = vst [vmem:[#allocation4 + $0x150] sm:$0xff] %v3892
        %3941 = vst [vmem:[#allocation4 + $0x158] sm:$0xff] %v3893
        %3942 = vst [vmem:[#allocation4 + $0x160] sm:$0xff] %v3894
        %3943 = vst [vmem:[#allocation4 + $0x168] sm:$0xff] %v3895
        %3944 = vst [vmem:[#allocation4 + $0x170] sm:$0xff] %v3896
        %3945 = vst [vmem:[#allocation4 + $0x178] sm:$0xff] %v3897
        %v3946 = vld [vmem:[#allocation4] sm:$0xff]
        %v3947 = vld [vmem:[#allocation4 + $0x8] sm:$0xff]
        %v3948 = vld [vmem:[#allocation4 + $0x10] sm:$0xff]
        %v3949 = vld [vmem:[#allocation4 + $0x18] sm:$0xff]
        %v3950 = vld [vmem:[#allocation4 + $0x20] sm:$0xff]
        %v3951 = vld [vmem:[#allocation4 + $0x28] sm:$0xff]
        %v3952 = vld [vmem:[#allocation4 + $0x30] sm:$0xff]
        %v3953 = vld [vmem:[#allocation4 + $0x38] sm:$0xff]
        %v3954 = vld [vmem:[#allocation4 + $0x40] sm:$0xff]
        %v3955 = vld [vmem:[#allocation4 + $0x48] sm:$0xff]
        %v3956 = vld [vmem:[#allocation4 + $0x50] sm:$0xff]
        %v3957 = vld [vmem:[#allocation4 + $0x58] sm:$0xff]
        %v3958 = vld [vmem:[#allocation4 + $0x60] sm:$0xff]
        %v3959 = vld [vmem:[#allocation4 + $0x68] sm:$0xff]
        %v3960 = vld [vmem:[#allocation4 + $0x70] sm:$0xff]
        %v3961 = vld [vmem:[#allocation4 + $0x78] sm:$0xff]
        %v3962 = vld [vmem:[#allocation4 + $0x80] sm:$0xff]
        %v3963 = vld [vmem:[#allocation4 + $0x88] sm:$0xff]
        %v3964 = vld [vmem:[#allocation4 + $0x90] sm:$0xff]
        %v3965 = vld [vmem:[#allocation4 + $0x98] sm:$0xff]
        %v3966 = vld [vmem:[#allocation4 + $0xa0] sm:$0xff]
        %v3967 = vld [vmem:[#allocation4 + $0xa8] sm:$0xff]
        %v3968 = vld [vmem:[#allocation4 + $0xb0] sm:$0xff]
        %v3969 = vld [vmem:[#allocation4 + $0xb8] sm:$0xff]
        %v3970 = vld [vmem:[#allocation4 + $0xc0] sm:$0xff]
        %v3971 = vld [vmem:[#allocation4 + $0xc8] sm:$0xff]
        %v3972 = vld [vmem:[#allocation4 + $0xd0] sm:$0xff]
        %v3973 = vld [vmem:[#allocation4 + $0xd8] sm:$0xff]
        %v3974 = vld [vmem:[#allocation4 + $0xe0] sm:$0xff]
        %v3975 = vld [vmem:[#allocation4 + $0xe8] sm:$0xff]
        %v3976 = vld [vmem:[#allocation4 + $0xf0] sm:$0xff]
        %v3977 = vld [vmem:[#allocation4 + $0xf8] sm:$0xff]
        %v3978 = vld [vmem:[#allocation4 + $0x100] sm:$0xff]
        %v3979 = vld [vmem:[#allocation4 + $0x108] sm:$0xff]
        %v3980 = vld [vmem:[#allocation4 + $0x110] sm:$0xff]
        %v3981 = vld [vmem:[#allocation4 + $0x118] sm:$0xff]
        %v3982 = vld [vmem:[#allocation4 + $0x120] sm:$0xff]
        %v3983 = vld [vmem:[#allocation4 + $0x128] sm:$0xff]
        %v3984 = vld [vmem:[#allocation4 + $0x130] sm:$0xff]
        %v3985 = vld [vmem:[#allocation4 + $0x138] sm:$0xff]
        %v3986 = vld [vmem:[#allocation4 + $0x140] sm:$0xff]
        %v3987 = vld [vmem:[#allocation4 + $0x148] sm:$0xff]
        %v3988 = vld [vmem:[#allocation4 + $0x150] sm:$0xff]
        %v3989 = vld [vmem:[#allocation4 + $0x158] sm:$0xff]
        %v3990 = vld [vmem:[#allocation4 + $0x160] sm:$0xff]
        %v3991 = vld [vmem:[#allocation4 + $0x168] sm:$0xff]
        %v3992 = vld [vmem:[#allocation4 + $0x170] sm:$0xff]
        %v3993 = vld [vmem:[#allocation4 + $0x178] sm:$0xff]
        %v3994 = vld [vmem:[%s703 + $0x18] sm:$0xc]
        %v3995 = vld [vmem:[%s703 + $0x1c] sm:$0xf]
        %v3996 = vld [vmem:[%s703 + $0x20] sm:$0xf]
        %v3997 = vld [vmem:[%s703 + $0x24] sm:$0xf]
        %v3998 = vld [vmem:[%s703 + $0x28] sm:$0xf]
        %v3999 = vld [vmem:[%s703 + $0x2c] sm:$0xf]
        %v4000 = vld [vmem:[%s703 + $0x30] sm:$0xf]
        %v4001 = vld [vmem:[%s703 + $0x34] sm:$0xf]
        %v4002 = vld [vmem:[%s703 + $0x38] sm:$0xf]
        %v4003 = vld [vmem:[%s703 + $0x3c] sm:$0xf]
        %v4004 = vld [vmem:[%s703 + $0x40] sm:$0xf]
        %v4005 = vld [vmem:[%s703 + $0x44] sm:$0xf]
        %v4006 = vld [vmem:[%s703 + $0x48] sm:$0xf]
        %v4007 = vld [vmem:[%s703 + $0x4c] sm:$0xf]
        %v4008 = vld [vmem:[%s703 + $0x50] sm:$0xf]
        %v4009 = vld [vmem:[%s703 + $0x54] sm:$0xf]
        %v4010 = vld [vmem:[%s703 + $0x58] sm:$0xf]
        %v4011 = vld [vmem:[%s703 + $0x5c] sm:$0xf]
        %v4012 = vld [vmem:[%s703 + $0x60] sm:$0xf]
        %v4013 = vld [vmem:[%s703 + $0x64] sm:$0xf]
        %v4014 = vld [vmem:[%s703 + $0x68] sm:$0xf]
        %v4015 = vld [vmem:[%s703 + $0x6c] sm:$0xf]
        %v4016 = vld [vmem:[%s703 + $0x70] sm:$0xf]
        %v4017 = vld [vmem:[%s703 + $0x74] sm:$0xf]
        %v4018 = vld [vmem:[%s703 + $0x78] sm:$0xf]
        %v4019 = vld [vmem:[%s703 + $0x7c] sm:$0xf]
        %v4020 = vld [vmem:[%s703 + $0x80] sm:$0xf]
        %v4021 = vld [vmem:[%s703 + $0x84] sm:$0xf]
        %v4022 = vld [vmem:[%s703 + $0x88] sm:$0xf]
        %v4023 = vld [vmem:[%s703 + $0x8c] sm:$0xf]
        %v4024 = vld [vmem:[%s703 + $0x90] sm:$0xf]
        %v4025 = vld [vmem:[%s703 + $0x94] sm:$0xf]
        %v4026 = vld [vmem:[%s703 + $0x98] sm:$0xf]
        %v4027 = vld [vmem:[%s703 + $0x9c] sm:$0xf]
        %v4028 = vld [vmem:[%s703 + $0xa0] sm:$0xf]
        %v4029 = vld [vmem:[%s703 + $0xa4] sm:$0xf]
        %v4030 = vld [vmem:[%s703 + $0xa8] sm:$0xf]
        %v4031 = vld [vmem:[%s703 + $0xac] sm:$0xf]
        %v4032 = vld [vmem:[%s703 + $0xb0] sm:$0xf]
        %v4033 = vld [vmem:[%s703 + $0xb4] sm:$0xf]
        %v4034 = vld [vmem:[%s703 + $0xb8] sm:$0xf]
        %v4035 = vld [vmem:[%s703 + $0xbc] sm:$0xf]
        %v4036 = vld [vmem:[%s703 + $0xc0] sm:$0xf]
        %v4037 = vld [vmem:[%s703 + $0xc4] sm:$0xf]
        %v4038 = vld [vmem:[%s703 + $0xc8] sm:$0xf]
        %v4039 = vld [vmem:[%s703 + $0xcc] sm:$0xf]
        %v4040 = vld [vmem:[%s703 + $0xd0] sm:$0xf]
        %v4041 = vld [vmem:[%s703 + $0xd4] sm:$0xf]
        %v4042 = vld [vmem:[%s703 + $0xd8] sm:$0x3]
        %s4043 = scalar_lea.vmem [#allocation5], 320
        %v4044 = vld [vmem:[%s4043] sm:$0xf]
        %v4045 = vld [vmem:[%s4043 + $0x4] sm:$0xf]
        %v4046 = vld [vmem:[%s4043 + $0x8] sm:$0xf]
        %v4047 = vld [vmem:[%s4043 + $0xc] sm:$0xf]
        %v4048 = vld [vmem:[%s4043 + $0x10] sm:$0xf]
        %v4049 = vld [vmem:[%s4043 + $0x14] sm:$0xf]
        %v4050 = vld [vmem:[%s4043 + $0x18] sm:$0xf]
        %v4051 = vld [vmem:[%s4043 + $0x1c] sm:$0xf]
        %v4052 = vld [vmem:[%s4043 + $0x20] sm:$0xf]
        %v4053 = vld [vmem:[%s4043 + $0x24] sm:$0xf]
        %v4054 = vld [vmem:[%s4043 + $0x28] sm:$0xf]
        %v4055 = vld [vmem:[%s4043 + $0x2c] sm:$0xf]
        %v4056 = vld [vmem:[%s4043 + $0x30] sm:$0xf]
        %v4057 = vld [vmem:[%s4043 + $0x34] sm:$0xf]
        %v4058 = vld [vmem:[%s4043 + $0x38] sm:$0xf]
        %v4059 = vld [vmem:[%s4043 + $0x3c] sm:$0xf]
        %v4109 = vunpack.c.l.b16 %v3994
        %v4110 = vunpack.c.l.b16 %v3995
        %v4111 = vunpack.c.l.b16 %v3996
        %v4112 = vunpack.c.l.b16 %v3997
        %v4113 = vunpack.c.l.b16 %v3998
        %v4114 = vunpack.c.l.b16 %v3999
        %v4115 = vunpack.c.l.b16 %v4000
        %v4116 = vunpack.c.l.b16 %v4001
        %v4117 = vunpack.c.l.b16 %v4002
        %v4118 = vunpack.c.l.b16 %v4003
        %v4119 = vunpack.c.l.b16 %v4004
        %v4120 = vunpack.c.l.b16 %v4005
        %v4121 = vunpack.c.l.b16 %v4006
        %v4122 = vunpack.c.l.b16 %v4007
        %v4123 = vunpack.c.l.b16 %v4008
        %v4124 = vunpack.c.l.b16 %v4009
        %v4125 = vunpack.c.l.b16 %v4010
        %v4126 = vunpack.c.l.b16 %v4011
        %v4127 = vunpack.c.l.b16 %v4012
        %v4128 = vunpack.c.l.b16 %v4013
        %v4129 = vunpack.c.l.b16 %v4014
        %v4130 = vunpack.c.l.b16 %v4015
        %v4131 = vunpack.c.l.b16 %v4016
        %v4132 = vunpack.c.l.b16 %v4017
        %v4133 = vunpack.c.l.b16 %v4018
        %v4134 = vunpack.c.l.b16 %v4019
        %v4135 = vunpack.c.l.b16 %v4020
        %v4136 = vunpack.c.l.b16 %v4021
        %v4137 = vunpack.c.l.b16 %v4022
        %v4138 = vunpack.c.l.b16 %v4023
        %v4139 = vunpack.c.l.b16 %v4024
        %v4140 = vunpack.c.l.b16 %v4025
        %v4141 = vunpack.c.l.b16 %v4026
        %v4142 = vunpack.c.l.b16 %v4027
        %v4143 = vunpack.c.l.b16 %v4028
        %v4144 = vunpack.c.l.b16 %v4029
        %v4145 = vunpack.c.l.b16 %v4030
        %v4146 = vunpack.c.l.b16 %v4031
        %v4147 = vunpack.c.l.b16 %v4032
        %v4148 = vunpack.c.l.b16 %v4033
        %v4149 = vunpack.c.l.b16 %v4034
        %v4150 = vunpack.c.l.b16 %v4035
        %v4151 = vunpack.c.l.b16 %v4036
        %v4152 = vunpack.c.l.b16 %v4037
        %v4153 = vunpack.c.l.b16 %v4038
        %v4154 = vunpack.c.l.b16 %v4039
        %v4155 = vunpack.c.l.b16 %v4040
        %v4156 = vunpack.c.l.b16 %v4041
        %v4157 = vunpack.c.l.b16 %v4042
        %v4158 = vpack.c.b16 %v4110, %v4109
        %v4159 = vpack.c.b16 %v4112, %v4111
        %v4160 = vpack.c.b16 %v4114, %v4113
        %v4161 = vpack.c.b16 %v4116, %v4115
        %v4162 = vpack.c.b16 %v4118, %v4117
        %v4163 = vpack.c.b16 %v4120, %v4119
        %v4164 = vpack.c.b16 %v4122, %v4121
        %v4165 = vpack.c.b16 %v4124, %v4123
        %v4166 = vpack.c.b16 %v4126, %v4125
        %v4167 = vpack.c.b16 %v4128, %v4127
        %v4168 = vpack.c.b16 %v4130, %v4129
        %v4169 = vpack.c.b16 %v4132, %v4131
        %v4170 = vpack.c.b16 %v4134, %v4133
        %v4171 = vpack.c.b16 %v4136, %v4135
        %v4172 = vpack.c.b16 %v4138, %v4137
        %v4173 = vpack.c.b16 %v4140, %v4139
        %v4174 = vpack.c.b16 %v4142, %v4141
        %v4175 = vpack.c.b16 %v4144, %v4143
        %v4176 = vpack.c.b16 %v4146, %v4145
        %v4177 = vpack.c.b16 %v4148, %v4147
        %v4178 = vpack.c.b16 %v4150, %v4149
        %v4179 = vpack.c.b16 %v4152, %v4151
        %v4180 = vpack.c.b16 %v4154, %v4153
        %v4181 = vpack.c.b16 %v4156, %v4155
        %v4182 = vpack.c.b16 %v4157, %v4157
        %v4183 = vrot.slane %v4158, 2
        %v4184 = vrot.slane %v4159, 2
        %v4185 = vsel %vm2198, %v4183, %v4184
        %v4186 = vrot.slane %v4160, 2
        %v4187 = vsel %vm2198, %v4184, %v4186
        %v4188 = vrot.slane %v4161, 2
        %v4189 = vsel %vm2198, %v4186, %v4188
        %v4190 = vrot.slane %v4162, 2
        %v4191 = vsel %vm2198, %v4188, %v4190
        %v4192 = vrot.slane %v4163, 2
        %v4193 = vsel %vm2198, %v4190, %v4192
        %v4194 = vrot.slane %v4164, 2
        %v4195 = vsel %vm2198, %v4192, %v4194
        %v4196 = vrot.slane %v4165, 2
        %v4197 = vsel %vm2198, %v4194, %v4196
        %v4198 = vrot.slane %v4166, 2
        %v4199 = vsel %vm2198, %v4196, %v4198
        %v4200 = vrot.slane %v4167, 2
        %v4201 = vsel %vm2198, %v4198, %v4200
        %v4202 = vrot.slane %v4168, 2
        %v4203 = vsel %vm2198, %v4200, %v4202
        %v4204 = vrot.slane %v4169, 2
        %v4205 = vsel %vm2198, %v4202, %v4204
        %v4206 = vrot.slane %v4170, 2
        %v4207 = vsel %vm2198, %v4204, %v4206
        %v4208 = vrot.slane %v4171, 2
        %v4209 = vsel %vm2198, %v4206, %v4208
        %v4210 = vrot.slane %v4172, 2
        %v4211 = vsel %vm2198, %v4208, %v4210
        %v4212 = vrot.slane %v4173, 2
        %v4213 = vsel %vm2198, %v4210, %v4212
        %v4214 = vrot.slane %v4174, 2
        %v4215 = vsel %vm2198, %v4212, %v4214
        %v4216 = vrot.slane %v4175, 2
        %v4217 = vsel %vm2198, %v4214, %v4216
        %v4218 = vrot.slane %v4176, 2
        %v4219 = vsel %vm2198, %v4216, %v4218
        %v4220 = vrot.slane %v4177, 2
        %v4221 = vsel %vm2198, %v4218, %v4220
        %v4222 = vrot.slane %v4178, 2
        %v4223 = vsel %vm2198, %v4220, %v4222
        %v4224 = vrot.slane %v4179, 2
        %v4225 = vsel %vm2198, %v4222, %v4224
        %v4226 = vrot.slane %v4180, 2
        %v4227 = vsel %vm2198, %v4224, %v4226
        %v4228 = vrot.slane %v4181, 2
        %v4229 = vsel %vm2198, %v4226, %v4228
        %v4230 = vrot.slane %v4182, 2
        %v4231 = vsel %vm2198, %v4228, %v4230
        %v4272 = vunpack.c.l.b16 %v4044
        %v4273 = vunpack.c.l.b16 %v4045
        %v4274 = vunpack.c.l.b16 %v4046
        %v4275 = vunpack.c.l.b16 %v4047
        %v4276 = vunpack.c.l.b16 %v4048
        %v4277 = vunpack.c.l.b16 %v4049
        %v4278 = vunpack.c.l.b16 %v4050
        %v4279 = vunpack.c.l.b16 %v4051
        %v4280 = vunpack.c.l.b16 %v4052
        %v4281 = vunpack.c.l.b16 %v4053
        %v4282 = vunpack.c.l.b16 %v4054
        %v4283 = vunpack.c.l.b16 %v4055
        %v4284 = vunpack.c.l.b16 %v4056
        %v4285 = vunpack.c.l.b16 %v4057
        %v4286 = vunpack.c.l.b16 %v4058
        %v4287 = vunpack.c.l.b16 %v4059
        %v4288 = vpack.c.b16 %v4273, %v4272
        %v4289 = vpack.c.b16 %v4275, %v4274
        %v4290 = vpack.c.b16 %v4277, %v4276
        %v4291 = vpack.c.b16 %v4279, %v4278
        %v4292 = vpack.c.b16 %v4281, %v4280
        %v4293 = vpack.c.b16 %v4283, %v4282
        %v4294 = vpack.c.b16 %v4285, %v4284
        %v4295 = vpack.c.b16 %v4287, %v4286
        %4304 = vmatprep.subr.bf16.mxu0 0
        %4305 = vmatpush1.bf16.msra.mxu0 %v4288
        %4306 = vmatprep.subr.bf16.mxu0 0
        %4307 = vmatpush1.bf16.msra.mxu0 %v4289
        %4308 = vmatprep.subr.bf16.mxu0 0
        %4309 = vmatpush1.bf16.msra.mxu0 %v4290
        %4310 = vmatprep.subr.bf16.mxu0 0
        %4311 = vmatpush1.bf16.msra.mxu0 %v4291
        %4312 = vmatprep.subr.bf16.mxu0 0
        %4313 = vmatpush1.bf16.msra.mxu0 %v4292
        %4314 = vmatprep.subr.bf16.mxu0 0
        %4315 = vmatpush1.bf16.msra.mxu0 %v4293
        %4316 = vmatprep.subr.bf16.mxu0 0
        %4317 = vmatpush1.bf16.msra.mxu0 %v4294
        %4318 = vmatprep.subr.bf16.mxu0 0
        %4319 = vmatpush1.bf16.msra.mxu0 %v4295
        %4320 = vmatprep.subr.bf16.mxu0 0
        %4321 = vmatpush1.bf16.msra.mxu0 0
        %4322 = vmatprep.subr.bf16.mxu0 0
        %4323 = vmatpush1.bf16.msra.mxu0 0
        %4324 = vmatprep.subr.bf16.mxu0 0
        %4325 = vmatpush1.bf16.msra.mxu0 0
        %4326 = vmatprep.subr.bf16.mxu0 0
        %4327 = vmatpush1.bf16.msra.mxu0 0
        %4328 = vmatprep.subr.bf16.mxu0 0
        %4329 = vmatpush1.bf16.msra.mxu0 0
        %4330 = vmatprep.subr.bf16.mxu0 0
        %4331 = vmatpush1.bf16.msra.mxu0 0
        %4332 = vmatprep.subr.bf16.mxu0 0
        %4333 = vmatpush1.bf16.msra.mxu0 0
        %4334 = vmatprep.subr.bf16.mxu0 0
        %4335 = vmatpush1.bf16.msra.mxu0 0
        %4336 = vmatprep.mubr.bf16.mxu0 0
        %4337 = vmatmul.mubr.bf16.gmra.mrb[0].mxu0 %v4185
        %v4338 = vpop.f32.mrb[0].mxu0
        %v4339 = vadd.f32 0.0, %v4338
        %v4340 = vpop.f32.mrb[0].mxu0
        %v4341 = vpop.f32.mrb[0].mxu0
        %v4342 = vadd.f32 0.0, %v4341
        %v4343 = vpop.f32.mrb[0].mxu0
        %4344 = vmatprep.mubr.bf16.mxu0 0
        %4345 = vmatmul.mubr.bf16.gmra.mrb[0].mxu0 %v4187
        %v4346 = vpop.f32.mrb[0].mxu0
        %v4347 = vadd.f32 0.0, %v4346
        %v4348 = vpop.f32.mrb[0].mxu0
        %v4349 = vpop.f32.mrb[0].mxu0
        %v4350 = vadd.f32 0.0, %v4349
        %v4351 = vpop.f32.mrb[0].mxu0
        %4352 = vmatprep.mubr.bf16.mxu0 0
        %4353 = vmatmul.mubr.bf16.gmra.mrb[0].mxu0 %v4189
        %v4354 = vpop.f32.mrb[0].mxu0
        %v4355 = vadd.f32 0.0, %v4354
        %v4356 = vpop.f32.mrb[0].mxu0
        %v4357 = vpop.f32.mrb[0].mxu0
        %v4358 = vadd.f32 0.0, %v4357
        %v4359 = vpop.f32.mrb[0].mxu0
        %4360 = vmatprep.mubr.bf16.mxu0 0
        %4361 = vmatmul.mubr.bf16.gmra.mrb[0].mxu0 %v4191
        %v4362 = vpop.f32.mrb[0].mxu0
        %v4363 = vadd.f32 0.0, %v4362
        %v4364 = vpop.f32.mrb[0].mxu0
        %v4365 = vpop.f32.mrb[0].mxu0
        %v4366 = vadd.f32 0.0, %v4365
        %v4367 = vpop.f32.mrb[0].mxu0
        %4368 = vmatprep.mubr.bf16.mxu0 0
        %4369 = vmatmul.mubr.bf16.gmra.mrb[0].mxu0 %v4193
        %v4370 = vpop.f32.mrb[0].mxu0
        %v4371 = vadd.f32 0.0, %v4370
        %v4372 = vpop.f32.mrb[0].mxu0
        %v4373 = vpop.f32.mrb[0].mxu0
        %v4374 = vadd.f32 0.0, %v4373
        %v4375 = vpop.f32.mrb[0].mxu0
        %4376 = vmatprep.mubr.bf16.mxu0 0
        %4377 = vmatmul.mubr.bf16.gmra.mrb[0].mxu0 %v4195
        %v4378 = vpop.f32.mrb[0].mxu0
        %v4379 = vadd.f32 0.0, %v4378
        %v4380 = vpop.f32.mrb[0].mxu0
        %v4381 = vpop.f32.mrb[0].mxu0
        %v4382 = vadd.f32 0.0, %v4381
        %v4383 = vpop.f32.mrb[0].mxu0
        %4384 = vmatprep.mubr.bf16.mxu0 0
        %4385 = vmatmul.mubr.bf16.gmra.mrb[0].mxu0 %v4197
        %v4386 = vpop.f32.mrb[0].mxu0
        %v4387 = vadd.f32 0.0, %v4386
        %v4388 = vpop.f32.mrb[0].mxu0
        %v4389 = vpop.f32.mrb[0].mxu0
        %v4390 = vadd.f32 0.0, %v4389
        %v4391 = vpop.f32.mrb[0].mxu0
        %4392 = vmatprep.mubr.bf16.mxu0 0
        %4393 = vmatmul.mubr.bf16.gmra.mrb[0].mxu0 %v4199
        %v4394 = vpop.f32.mrb[0].mxu0
        %v4395 = vadd.f32 0.0, %v4394
        %v4396 = vpop.f32.mrb[0].mxu0
        %v4397 = vpop.f32.mrb[0].mxu0
        %v4398 = vadd.f32 0.0, %v4397
        %v4399 = vpop.f32.mrb[0].mxu0
        %4400 = vmatprep.mubr.bf16.mxu0 0
        %4401 = vmatmul.mubr.bf16.gmra.mrb[0].mxu0 %v4201
        %v4402 = vpop.f32.mrb[0].mxu0
        %v4403 = vadd.f32 0.0, %v4402
        %v4404 = vpop.f32.mrb[0].mxu0
        %v4405 = vpop.f32.mrb[0].mxu0
        %v4406 = vadd.f32 0.0, %v4405
        %v4407 = vpop.f32.mrb[0].mxu0
        %4408 = vmatprep.mubr.bf16.mxu0 0
        %4409 = vmatmul.mubr.bf16.gmra.mrb[0].mxu0 %v4203
        %v4410 = vpop.f32.mrb[0].mxu0
        %v4411 = vadd.f32 0.0, %v4410
        %v4412 = vpop.f32.mrb[0].mxu0
        %v4413 = vpop.f32.mrb[0].mxu0
        %v4414 = vadd.f32 0.0, %v4413
        %v4415 = vpop.f32.mrb[0].mxu0
        %4416 = vmatprep.mubr.bf16.mxu0 0
        %4417 = vmatmul.mubr.bf16.gmra.mrb[0].mxu0 %v4205
        %v4418 = vpop.f32.mrb[0].mxu0
        %v4419 = vadd.f32 0.0, %v4418
        %v4420 = vpop.f32.mrb[0].mxu0
        %v4421 = vpop.f32.mrb[0].mxu0
        %v4422 = vadd.f32 0.0, %v4421
        %v4423 = vpop.f32.mrb[0].mxu0
        %4424 = vmatprep.mubr.bf16.mxu0 0
        %4425 = vmatmul.mubr.bf16.gmra.mrb[0].mxu0 %v4207
        %v4426 = vpop.f32.mrb[0].mxu0
        %v4427 = vadd.f32 0.0, %v4426
        %v4428 = vpop.f32.mrb[0].mxu0
        %v4429 = vpop.f32.mrb[0].mxu0
        %v4430 = vadd.f32 0.0, %v4429
        %v4431 = vpop.f32.mrb[0].mxu0
        %4432 = vmatprep.mubr.bf16.mxu0 0
        %4433 = vmatmul.mubr.bf16.gmra.mrb[0].mxu0 %v4209
        %v4434 = vpop.f32.mrb[0].mxu0
        %v4435 = vadd.f32 0.0, %v4434
        %v4436 = vpop.f32.mrb[0].mxu0
        %v4437 = vpop.f32.mrb[0].mxu0
        %v4438 = vadd.f32 0.0, %v4437
        %v4439 = vpop.f32.mrb[0].mxu0
        %4440 = vmatprep.mubr.bf16.mxu0 0
        %4441 = vmatmul.mubr.bf16.gmra.mrb[0].mxu0 %v4211
        %v4442 = vpop.f32.mrb[0].mxu0
        %v4443 = vadd.f32 0.0, %v4442
        %v4444 = vpop.f32.mrb[0].mxu0
        %v4445 = vpop.f32.mrb[0].mxu0
        %v4446 = vadd.f32 0.0, %v4445
        %v4447 = vpop.f32.mrb[0].mxu0
        %4448 = vmatprep.mubr.bf16.mxu0 0
        %4449 = vmatmul.mubr.bf16.gmra.mrb[0].mxu0 %v4213
        %v4450 = vpop.f32.mrb[0].mxu0
        %v4451 = vadd.f32 0.0, %v4450
        %v4452 = vpop.f32.mrb[0].mxu0
        %v4453 = vpop.f32.mrb[0].mxu0
        %v4454 = vadd.f32 0.0, %v4453
        %v4455 = vpop.f32.mrb[0].mxu0
        %4456 = vmatprep.mubr.bf16.mxu0 0
        %4457 = vmatmul.mubr.bf16.gmra.mrb[0].mxu0 %v4215
        %v4458 = vpop.f32.mrb[0].mxu0
        %v4459 = vadd.f32 0.0, %v4458
        %v4460 = vpop.f32.mrb[0].mxu0
        %v4461 = vpop.f32.mrb[0].mxu0
        %v4462 = vadd.f32 0.0, %v4461
        %v4463 = vpop.f32.mrb[0].mxu0
        %4464 = vmatprep.mubr.bf16.mxu0 0
        %4465 = vmatmul.mubr.bf16.gmra.mrb[0].mxu0 %v4217
        %v4466 = vpop.f32.mrb[0].mxu0
        %v4467 = vadd.f32 0.0, %v4466
        %v4468 = vpop.f32.mrb[0].mxu0
        %v4469 = vpop.f32.mrb[0].mxu0
        %v4470 = vadd.f32 0.0, %v4469
        %v4471 = vpop.f32.mrb[0].mxu0
        %4472 = vmatprep.mubr.bf16.mxu0 0
        %4473 = vmatmul.mubr.bf16.gmra.mrb[0].mxu0 %v4219
        %v4474 = vpop.f32.mrb[0].mxu0
        %v4475 = vadd.f32 0.0, %v4474
        %v4476 = vpop.f32.mrb[0].mxu0
        %v4477 = vpop.f32.mrb[0].mxu0
        %v4478 = vadd.f32 0.0, %v4477
        %v4479 = vpop.f32.mrb[0].mxu0
        %4480 = vmatprep.mubr.bf16.mxu0 0
        %4481 = vmatmul.mubr.bf16.gmra.mrb[0].mxu0 %v4221
        %v4482 = vpop.f32.mrb[0].mxu0
        %v4483 = vadd.f32 0.0, %v4482
        %v4484 = vpop.f32.mrb[0].mxu0
        %v4485 = vpop.f32.mrb[0].mxu0
        %v4486 = vadd.f32 0.0, %v4485
        %v4487 = vpop.f32.mrb[0].mxu0
        %4488 = vmatprep.mubr.bf16.mxu0 0
        %4489 = vmatmul.mubr.bf16.gmra.mrb[0].mxu0 %v4223
        %v4490 = vpop.f32.mrb[0].mxu0
        %v4491 = vadd.f32 0.0, %v4490
        %v4492 = vpop.f32.mrb[0].mxu0
        %v4493 = vpop.f32.mrb[0].mxu0
        %v4494 = vadd.f32 0.0, %v4493
        %v4495 = vpop.f32.mrb[0].mxu0
        %4496 = vmatprep.mubr.bf16.mxu0 0
        %4497 = vmatmul.mubr.bf16.gmra.mrb[0].mxu0 %v4225
        %v4498 = vpop.f32.mrb[0].mxu0
        %v4499 = vadd.f32 0.0, %v4498
        %v4500 = vpop.f32.mrb[0].mxu0
        %v4501 = vpop.f32.mrb[0].mxu0
        %v4502 = vadd.f32 0.0, %v4501
        %v4503 = vpop.f32.mrb[0].mxu0
        %4504 = vmatprep.mubr.bf16.mxu0 0
        %4505 = vmatmul.mubr.bf16.gmra.mrb[0].mxu0 %v4227
        %v4506 = vpop.f32.mrb[0].mxu0
        %v4507 = vadd.f32 0.0, %v4506
        %v4508 = vpop.f32.mrb[0].mxu0
        %v4509 = vpop.f32.mrb[0].mxu0
        %v4510 = vadd.f32 0.0, %v4509
        %v4511 = vpop.f32.mrb[0].mxu0
        %4512 = vmatprep.mubr.bf16.mxu0 0
        %4513 = vmatmul.mubr.bf16.gmra.mrb[0].mxu0 %v4229
        %v4514 = vpop.f32.mrb[0].mxu0
        %v4515 = vadd.f32 0.0, %v4514
        %v4516 = vpop.f32.mrb[0].mxu0
        %v4517 = vpop.f32.mrb[0].mxu0
        %v4518 = vadd.f32 0.0, %v4517
        %v4519 = vpop.f32.mrb[0].mxu0
        %4520 = vmatprep.mubr.bf16.mxu0 0
        %4521 = vmatmul.mubr.bf16.gmra.mrb[0].mxu0 %v4231
        %v4522 = vpop.f32.mrb[0].mxu0
        %v4523 = vadd.f32 0.0, %v4522
        %v4524 = vpop.f32.mrb[0].mxu0
        %v4525 = vpop.f32.mrb[0].mxu0
        %v4526 = vadd.f32 0.0, %v4525
        %v4527 = vpop.f32.mrb[0].mxu0
        %4528 = vdwg.mxu0
        %v4529 = vadd.f32 %v3946, %v4339
        %v4530 = vadd.f32 %v3947, %v4342
        %v4531 = vadd.f32 %v3948, %v4347
        %v4532 = vadd.f32 %v3949, %v4350
        %v4533 = vadd.f32 %v3950, %v4355
        %v4534 = vadd.f32 %v3951, %v4358
        %v4535 = vadd.f32 %v3952, %v4363
        %v4536 = vadd.f32 %v3953, %v4366
        %v4537 = vadd.f32 %v3954, %v4371
        %v4538 = vadd.f32 %v3955, %v4374
        %v4539 = vadd.f32 %v3956, %v4379
        %v4540 = vadd.f32 %v3957, %v4382
        %v4541 = vadd.f32 %v3958, %v4387
        %v4542 = vadd.f32 %v3959, %v4390
        %v4543 = vadd.f32 %v3960, %v4395
        %v4544 = vadd.f32 %v3961, %v4398
        %v4545 = vadd.f32 %v3962, %v4403
        %v4546 = vadd.f32 %v3963, %v4406
        %v4547 = vadd.f32 %v3964, %v4411
        %v4548 = vadd.f32 %v3965, %v4414
        %v4549 = vadd.f32 %v3966, %v4419
        %v4550 = vadd.f32 %v3967, %v4422
        %v4551 = vadd.f32 %v3968, %v4427
        %v4552 = vadd.f32 %v3969, %v4430
        %v4553 = vadd.f32 %v3970, %v4435
        %v4554 = vadd.f32 %v3971, %v4438
        %v4555 = vadd.f32 %v3972, %v4443
        %v4556 = vadd.f32 %v3973, %v4446
        %v4557 = vadd.f32 %v3974, %v4451
        %v4558 = vadd.f32 %v3975, %v4454
        %v4559 = vadd.f32 %v3976, %v4459
        %v4560 = vadd.f32 %v3977, %v4462
        %v4561 = vadd.f32 %v3978, %v4467
        %v4562 = vadd.f32 %v3979, %v4470
        %v4563 = vadd.f32 %v3980, %v4475
        %v4564 = vadd.f32 %v3981, %v4478
        %v4565 = vadd.f32 %v3982, %v4483
        %v4566 = vadd.f32 %v3983, %v4486
        %v4567 = vadd.f32 %v3984, %v4491
        %v4568 = vadd.f32 %v3985, %v4494
        %v4569 = vadd.f32 %v3986, %v4499
        %v4570 = vadd.f32 %v3987, %v4502
        %v4571 = vadd.f32 %v3988, %v4507
        %v4572 = vadd.f32 %v3989, %v4510
        %v4573 = vadd.f32 %v3990, %v4515
        %v4574 = vadd.f32 %v3991, %v4518
        %v4575 = vadd.f32 %v3992, %v4523
        %v4576 = vadd.f32 %v3993, %v4526
        %4577 = vst [vmem:[#allocation4] sm:$0xff] %v4529
        %4578 = vst [vmem:[#allocation4 + $0x8] sm:$0xff] %v4530
        %4579 = vst [vmem:[#allocation4 + $0x10] sm:$0xff] %v4531
        %4580 = vst [vmem:[#allocation4 + $0x18] sm:$0xff] %v4532
        %4581 = vst [vmem:[#allocation4 + $0x20] sm:$0xff] %v4533
        %4582 = vst [vmem:[#allocation4 + $0x28] sm:$0xff] %v4534
        %4583 = vst [vmem:[#allocation4 + $0x30] sm:$0xff] %v4535
        %4584 = vst [vmem:[#allocation4 + $0x38] sm:$0xff] %v4536
        %4585 = vst [vmem:[#allocation4 + $0x40] sm:$0xff] %v4537
        %4586 = vst [vmem:[#allocation4 + $0x48] sm:$0xff] %v4538
        %4587 = vst [vmem:[#allocation4 + $0x50] sm:$0xff] %v4539
        %4588 = vst [vmem:[#allocation4 + $0x58] sm:$0xff] %v4540
        %4589 = vst [vmem:[#allocation4 + $0x60] sm:$0xff] %v4541
        %4590 = vst [vmem:[#allocation4 + $0x68] sm:$0xff] %v4542
        %4591 = vst [vmem:[#allocation4 + $0x70] sm:$0xff] %v4543
        %4592 = vst [vmem:[#allocation4 + $0x78] sm:$0xff] %v4544
        %4593 = vst [vmem:[#allocation4 + $0x80] sm:$0xff] %v4545
        %4594 = vst [vmem:[#allocation4 + $0x88] sm:$0xff] %v4546
        %4595 = vst [vmem:[#allocation4 + $0x90] sm:$0xff] %v4547
        %4596 = vst [vmem:[#allocation4 + $0x98] sm:$0xff] %v4548
        %4597 = vst [vmem:[#allocation4 + $0xa0] sm:$0xff] %v4549
        %4598 = vst [vmem:[#allocation4 + $0xa8] sm:$0xff] %v4550
        %4599 = vst [vmem:[#allocation4 + $0xb0] sm:$0xff] %v4551
        %4600 = vst [vmem:[#allocation4 + $0xb8] sm:$0xff] %v4552
        %4601 = vst [vmem:[#allocation4 + $0xc0] sm:$0xff] %v4553
        %4602 = vst [vmem:[#allocation4 + $0xc8] sm:$0xff] %v4554
        %4603 = vst [vmem:[#allocation4 + $0xd0] sm:$0xff] %v4555
        %4604 = vst [vmem:[#allocation4 + $0xd8] sm:$0xff] %v4556
        %4605 = vst [vmem:[#allocation4 + $0xe0] sm:$0xff] %v4557
        %4606 = vst [vmem:[#allocation4 + $0xe8] sm:$0xff] %v4558
        %4607 = vst [vmem:[#allocation4 + $0xf0] sm:$0xff] %v4559
        %4608 = vst [vmem:[#allocation4 + $0xf8] sm:$0xff] %v4560
        %4609 = vst [vmem:[#allocation4 + $0x100] sm:$0xff] %v4561
        %4610 = vst [vmem:[#allocation4 + $0x108] sm:$0xff] %v4562
        %4611 = vst [vmem:[#allocation4 + $0x110] sm:$0xff] %v4563
        %4612 = vst [vmem:[#allocation4 + $0x118] sm:$0xff] %v4564
        %4613 = vst [vmem:[#allocation4 + $0x120] sm:$0xff] %v4565
        %4614 = vst [vmem:[#allocation4 + $0x128] sm:$0xff] %v4566
        %4615 = vst [vmem:[#allocation4 + $0x130] sm:$0xff] %v4567
        %4616 = vst [vmem:[#allocation4 + $0x138] sm:$0xff] %v4568
        %4617 = vst [vmem:[#allocation4 + $0x140] sm:$0xff] %v4569
        %4618 = vst [vmem:[#allocation4 + $0x148] sm:$0xff] %v4570
        %4619 = vst [vmem:[#allocation4 + $0x150] sm:$0xff] %v4571
        %4620 = vst [vmem:[#allocation4 + $0x158] sm:$0xff] %v4572
        %4621 = vst [vmem:[#allocation4 + $0x160] sm:$0xff] %v4573
        %4622 = vst [vmem:[#allocation4 + $0x168] sm:$0xff] %v4574
        %4623 = vst [vmem:[#allocation4 + $0x170] sm:$0xff] %v4575
        %4624 = vst [vmem:[#allocation4 + $0x178] sm:$0xff] %v4576
        %v4625 = vld [vmem:[#allocation4] sm:$0xff]
        %v4626 = vld [vmem:[#allocation4 + $0x8] sm:$0xff]
        %v4627 = vld [vmem:[#allocation4 + $0x10] sm:$0xff]
        %v4628 = vld [vmem:[#allocation4 + $0x18] sm:$0xff]
        %v4629 = vld [vmem:[#allocation4 + $0x20] sm:$0xff]
        %v4630 = vld [vmem:[#allocation4 + $0x28] sm:$0xff]
        %v4631 = vld [vmem:[#allocation4 + $0x30] sm:$0xff]
        %v4632 = vld [vmem:[#allocation4 + $0x38] sm:$0xff]
        %v4633 = vld [vmem:[#allocation4 + $0x40] sm:$0xff]
        %v4634 = vld [vmem:[#allocation4 + $0x48] sm:$0xff]
        %v4635 = vld [vmem:[#allocation4 + $0x50] sm:$0xff]
        %v4636 = vld [vmem:[#allocation4 + $0x58] sm:$0xff]
        %v4637 = vld [vmem:[#allocation4 + $0x60] sm:$0xff]
        %v4638 = vld [vmem:[#allocation4 + $0x68] sm:$0xff]
        %v4639 = vld [vmem:[#allocation4 + $0x70] sm:$0xff]
        %v4640 = vld [vmem:[#allocation4 + $0x78] sm:$0xff]
        %v4641 = vld [vmem:[#allocation4 + $0x80] sm:$0xff]
        %v4642 = vld [vmem:[#allocation4 + $0x88] sm:$0xff]
        %v4643 = vld [vmem:[#allocation4 + $0x90] sm:$0xff]
        %v4644 = vld [vmem:[#allocation4 + $0x98] sm:$0xff]
        %v4645 = vld [vmem:[#allocation4 + $0xa0] sm:$0xff]
        %v4646 = vld [vmem:[#allocation4 + $0xa8] sm:$0xff]
        %v4647 = vld [vmem:[#allocation4 + $0xb0] sm:$0xff]
        %v4648 = vld [vmem:[#allocation4 + $0xb8] sm:$0xff]
        %v4649 = vld [vmem:[#allocation4 + $0xc0] sm:$0xff]
        %v4650 = vld [vmem:[#allocation4 + $0xc8] sm:$0xff]
        %v4651 = vld [vmem:[#allocation4 + $0xd0] sm:$0xff]
        %v4652 = vld [vmem:[#allocation4 + $0xd8] sm:$0xff]
        %v4653 = vld [vmem:[#allocation4 + $0xe0] sm:$0xff]
        %v4654 = vld [vmem:[#allocation4 + $0xe8] sm:$0xff]
        %v4655 = vld [vmem:[#allocation4 + $0xf0] sm:$0xff]
        %v4656 = vld [vmem:[#allocation4 + $0xf8] sm:$0xff]
        %v4657 = vld [vmem:[#allocation4 + $0x100] sm:$0xff]
        %v4658 = vld [vmem:[#allocation4 + $0x108] sm:$0xff]
        %v4659 = vld [vmem:[#allocation4 + $0x110] sm:$0xff]
        %v4660 = vld [vmem:[#allocation4 + $0x118] sm:$0xff]
        %v4661 = vld [vmem:[#allocation4 + $0x120] sm:$0xff]
        %v4662 = vld [vmem:[#allocation4 + $0x128] sm:$0xff]
        %v4663 = vld [vmem:[#allocation4 + $0x130] sm:$0xff]
        %v4664 = vld [vmem:[#allocation4 + $0x138] sm:$0xff]
        %v4665 = vld [vmem:[#allocation4 + $0x140] sm:$0xff]
        %v4666 = vld [vmem:[#allocation4 + $0x148] sm:$0xff]
        %v4667 = vld [vmem:[#allocation4 + $0x150] sm:$0xff]
        %v4668 = vld [vmem:[#allocation4 + $0x158] sm:$0xff]
        %v4669 = vld [vmem:[#allocation4 + $0x160] sm:$0xff]
        %v4670 = vld [vmem:[#allocation4 + $0x168] sm:$0xff]
        %v4671 = vld [vmem:[#allocation4 + $0x170] sm:$0xff]
        %v4672 = vld [vmem:[#allocation4 + $0x178] sm:$0xff]
        %v4673 = vld [vmem:[%s703 + $0x30] sm:$0xf]
        %v4674 = vld [vmem:[%s703 + $0x34] sm:$0xf]
        %v4675 = vld [vmem:[%s703 + $0x38] sm:$0xf]
        %v4676 = vld [vmem:[%s703 + $0x3c] sm:$0xf]
        %v4677 = vld [vmem:[%s703 + $0x40] sm:$0xf]
        %v4678 = vld [vmem:[%s703 + $0x44] sm:$0xf]
        %v4679 = vld [vmem:[%s703 + $0x48] sm:$0xf]
        %v4680 = vld [vmem:[%s703 + $0x4c] sm:$0xf]
        %v4681 = vld [vmem:[%s703 + $0x50] sm:$0xf]
        %v4682 = vld [vmem:[%s703 + $0x54] sm:$0xf]
        %v4683 = vld [vmem:[%s703 + $0x58] sm:$0xf]
        %v4684 = vld [vmem:[%s703 + $0x5c] sm:$0xf]
        %v4685 = vld [vmem:[%s703 + $0x60] sm:$0xf]
        %v4686 = vld [vmem:[%s703 + $0x64] sm:$0xf]
        %v4687 = vld [vmem:[%s703 + $0x68] sm:$0xf]
        %v4688 = vld [vmem:[%s703 + $0x6c] sm:$0xf]
        %v4689 = vld [vmem:[%s703 + $0x70] sm:$0xf]
        %v4690 = vld [vmem:[%s703 + $0x74] sm:$0xf]
        %v4691 = vld [vmem:[%s703 + $0x78] sm:$0xf]
        %v4692 = vld [vmem:[%s703 + $0x7c] sm:$0xf]
        %v4693 = vld [vmem:[%s703 + $0x80] sm:$0xf]
        %v4694 = vld [vmem:[%s703 + $0x84] sm:$0xf]
        %v4695 = vld [vmem:[%s703 + $0x88] sm:$0xf]
        %v4696 = vld [vmem:[%s703 + $0x8c] sm:$0xf]
        %v4697 = vld [vmem:[%s703 + $0x90] sm:$0xf]
        %v4698 = vld [vmem:[%s703 + $0x94] sm:$0xf]
        %v4699 = vld [vmem:[%s703 + $0x98] sm:$0xf]
        %v4700 = vld [vmem:[%s703 + $0x9c] sm:$0xf]
        %v4701 = vld [vmem:[%s703 + $0xa0] sm:$0xf]
        %v4702 = vld [vmem:[%s703 + $0xa4] sm:$0xf]
        %v4703 = vld [vmem:[%s703 + $0xa8] sm:$0xf]
        %v4704 = vld [vmem:[%s703 + $0xac] sm:$0xf]
        %v4705 = vld [vmem:[%s703 + $0xb0] sm:$0xf]
        %v4706 = vld [vmem:[%s703 + $0xb4] sm:$0xf]
        %v4707 = vld [vmem:[%s703 + $0xb8] sm:$0xf]
        %v4708 = vld [vmem:[%s703 + $0xbc] sm:$0xf]
        %v4709 = vld [vmem:[%s703 + $0xc0] sm:$0xf]
        %v4710 = vld [vmem:[%s703 + $0xc4] sm:$0xf]
        %v4711 = vld [vmem:[%s703 + $0xc8] sm:$0xf]
        %v4712 = vld [vmem:[%s703 + $0xcc] sm:$0xf]
        %v4713 = vld [vmem:[%s703 + $0xd0] sm:$0xf]
        %v4714 = vld [vmem:[%s703 + $0xd4] sm:$0xf]
        %v4715 = vld [vmem:[%s703 + $0xd8] sm:$0xf]
        %v4716 = vld [vmem:[%s703 + $0xdc] sm:$0xf]
        %v4717 = vld [vmem:[%s703 + $0xe0] sm:$0xf]
        %v4718 = vld [vmem:[%s703 + $0xe4] sm:$0xf]
        %v4719 = vld [vmem:[%s703 + $0xe8] sm:$0xf]
        %v4720 = vld [vmem:[%s703 + $0xec] sm:$0xf]
        %s4721 = scalar_lea.vmem [#allocation5], 384
        %v4722 = vld [vmem:[%s4721] sm:$0xf]
        %v4723 = vld [vmem:[%s4721 + $0x4] sm:$0xf]
        %v4724 = vld [vmem:[%s4721 + $0x8] sm:$0xf]
        %v4725 = vld [vmem:[%s4721 + $0xc] sm:$0xf]
        %v4726 = vld [vmem:[%s4721 + $0x10] sm:$0xf]
        %v4727 = vld [vmem:[%s4721 + $0x14] sm:$0xf]
        %v4728 = vld [vmem:[%s4721 + $0x18] sm:$0xf]
        %v4729 = vld [vmem:[%s4721 + $0x1c] sm:$0xf]
        %v4730 = vld [vmem:[%s4721 + $0x20] sm:$0xf]
        %v4731 = vld [vmem:[%s4721 + $0x24] sm:$0xf]
        %v4732 = vld [vmem:[%s4721 + $0x28] sm:$0xf]
        %v4733 = vld [vmem:[%s4721 + $0x2c] sm:$0xf]
        %v4734 = vld [vmem:[%s4721 + $0x30] sm:$0xf]
        %v4735 = vld [vmem:[%s4721 + $0x34] sm:$0xf]
        %v4736 = vld [vmem:[%s4721 + $0x38] sm:$0xf]
        %v4737 = vld [vmem:[%s4721 + $0x3c] sm:$0xf]
        %v4786 = vunpack.c.l.b16 %v4673
        %v4787 = vunpack.c.l.b16 %v4674
        %v4788 = vunpack.c.l.b16 %v4675
        %v4789 = vunpack.c.l.b16 %v4676
        %v4790 = vunpack.c.l.b16 %v4677
        %v4791 = vunpack.c.l.b16 %v4678
        %v4792 = vunpack.c.l.b16 %v4679
        %v4793 = vunpack.c.l.b16 %v4680
        %v4794 = vunpack.c.l.b16 %v4681
        %v4795 = vunpack.c.l.b16 %v4682
        %v4796 = vunpack.c.l.b16 %v4683
        %v4797 = vunpack.c.l.b16 %v4684
        %v4798 = vunpack.c.l.b16 %v4685
        %v4799 = vunpack.c.l.b16 %v4686
        %v4800 = vunpack.c.l.b16 %v4687
        %v4801 = vunpack.c.l.b16 %v4688
        %v4802 = vunpack.c.l.b16 %v4689
        %v4803 = vunpack.c.l.b16 %v4690
        %v4804 = vunpack.c.l.b16 %v4691
        %v4805 = vunpack.c.l.b16 %v4692
        %v4806 = vunpack.c.l.b16 %v4693
        %v4807 = vunpack.c.l.b16 %v4694
        %v4808 = vunpack.c.l.b16 %v4695
        %v4809 = vunpack.c.l.b16 %v4696
        %v4810 = vunpack.c.l.b16 %v4697
        %v4811 = vunpack.c.l.b16 %v4698
        %v4812 = vunpack.c.l.b16 %v4699
        %v4813 = vunpack.c.l.b16 %v4700
        %v4814 = vunpack.c.l.b16 %v4701
        %v4815 = vunpack.c.l.b16 %v4702
        %v4816 = vunpack.c.l.b16 %v4703
        %v4817 = vunpack.c.l.b16 %v4704
        %v4818 = vunpack.c.l.b16 %v4705
        %v4819 = vunpack.c.l.b16 %v4706
        %v4820 = vunpack.c.l.b16 %v4707
        %v4821 = vunpack.c.l.b16 %v4708
        %v4822 = vunpack.c.l.b16 %v4709
        %v4823 = vunpack.c.l.b16 %v4710
        %v4824 = vunpack.c.l.b16 %v4711
        %v4825 = vunpack.c.l.b16 %v4712
        %v4826 = vunpack.c.l.b16 %v4713
        %v4827 = vunpack.c.l.b16 %v4714
        %v4828 = vunpack.c.l.b16 %v4715
        %v4829 = vunpack.c.l.b16 %v4716
        %v4830 = vunpack.c.l.b16 %v4717
        %v4831 = vunpack.c.l.b16 %v4718
        %v4832 = vunpack.c.l.b16 %v4719
        %v4833 = vunpack.c.l.b16 %v4720
        %v4834 = vpack.c.b16 %v4787, %v4786
        %v4835 = vpack.c.b16 %v4789, %v4788
        %v4836 = vpack.c.b16 %v4791, %v4790
        %v4837 = vpack.c.b16 %v4793, %v4792
        %v4838 = vpack.c.b16 %v4795, %v4794
        %v4839 = vpack.c.b16 %v4797, %v4796
        %v4840 = vpack.c.b16 %v4799, %v4798
        %v4841 = vpack.c.b16 %v4801, %v4800
        %v4842 = vpack.c.b16 %v4803, %v4802
        %v4843 = vpack.c.b16 %v4805, %v4804
        %v4844 = vpack.c.b16 %v4807, %v4806
        %v4845 = vpack.c.b16 %v4809, %v4808
        %v4846 = vpack.c.b16 %v4811, %v4810
        %v4847 = vpack.c.b16 %v4813, %v4812
        %v4848 = vpack.c.b16 %v4815, %v4814
        %v4849 = vpack.c.b16 %v4817, %v4816
        %v4850 = vpack.c.b16 %v4819, %v4818
        %v4851 = vpack.c.b16 %v4821, %v4820
        %v4852 = vpack.c.b16 %v4823, %v4822
        %v4853 = vpack.c.b16 %v4825, %v4824
        %v4854 = vpack.c.b16 %v4827, %v4826
        %v4855 = vpack.c.b16 %v4829, %v4828
        %v4856 = vpack.c.b16 %v4831, %v4830
        %v4857 = vpack.c.b16 %v4833, %v4832
        %v4898 = vunpack.c.l.b16 %v4722
        %v4899 = vunpack.c.l.b16 %v4723
        %v4900 = vunpack.c.l.b16 %v4724
        %v4901 = vunpack.c.l.b16 %v4725
        %v4902 = vunpack.c.l.b16 %v4726
        %v4903 = vunpack.c.l.b16 %v4727
        %v4904 = vunpack.c.l.b16 %v4728
        %v4905 = vunpack.c.l.b16 %v4729
        %v4906 = vunpack.c.l.b16 %v4730
        %v4907 = vunpack.c.l.b16 %v4731
        %v4908 = vunpack.c.l.b16 %v4732
        %v4909 = vunpack.c.l.b16 %v4733
        %v4910 = vunpack.c.l.b16 %v4734
        %v4911 = vunpack.c.l.b16 %v4735
        %v4912 = vunpack.c.l.b16 %v4736
        %v4913 = vunpack.c.l.b16 %v4737
        %v4914 = vpack.c.b16 %v4899, %v4898
        %v4915 = vpack.c.b16 %v4901, %v4900
        %v4916 = vpack.c.b16 %v4903, %v4902
        %v4917 = vpack.c.b16 %v4905, %v4904
        %v4918 = vpack.c.b16 %v4907, %v4906
        %v4919 = vpack.c.b16 %v4909, %v4908
        %v4920 = vpack.c.b16 %v4911, %v4910
        %v4921 = vpack.c.b16 %v4913, %v4912
        %4930 = vmatprep.subr.bf16.mxu0 0
        %4931 = vmatpush1.bf16.msra.mxu0 %v4914
        %4932 = vmatprep.subr.bf16.mxu0 0
        %4933 = vmatpush1.bf16.msra.mxu0 %v4915
        %4934 = vmatprep.subr.bf16.mxu0 0
        %4935 = vmatpush1.bf16.msra.mxu0 %v4916
        %4936 = vmatprep.subr.bf16.mxu0 0
        %4937 = vmatpush1.bf16.msra.mxu0 %v4917
        %4938 = vmatprep.subr.bf16.mxu0 0
        %4939 = vmatpush1.bf16.msra.mxu0 %v4918
        %4940 = vmatprep.subr.bf16.mxu0 0
        %4941 = vmatpush1.bf16.msra.mxu0 %v4919
        %4942 = vmatprep.subr.bf16.mxu0 0
        %4943 = vmatpush1.bf16.msra.mxu0 %v4920
        %4944 = vmatprep.subr.bf16.mxu0 0
        %4945 = vmatpush1.bf16.msra.mxu0 %v4921
        %4946 = vmatprep.subr.bf16.mxu0 0
        %4947 = vmatpush1.bf16.msra.mxu0 0
        %4948 = vmatprep.subr.bf16.mxu0 0
        %4949 = vmatpush1.bf16.msra.mxu0 0
        %4950 = vmatprep.subr.bf16.mxu0 0
        %4951 = vmatpush1.bf16.msra.mxu0 0
        %4952 = vmatprep.subr.bf16.mxu0 0
        %4953 = vmatpush1.bf16.msra.mxu0 0
        %4954 = vmatprep.subr.bf16.mxu0 0
        %4955 = vmatpush1.bf16.msra.mxu0 0
        %4956 = vmatprep.subr.bf16.mxu0 0
        %4957 = vmatpush1.bf16.msra.mxu0 0
        %4958 = vmatprep.subr.bf16.mxu0 0
        %4959 = vmatpush1.bf16.msra.mxu0 0
        %4960 = vmatprep.subr.bf16.mxu0 0
        %4961 = vmatpush1.bf16.msra.mxu0 0
        %4962 = vmatprep.mubr.bf16.mxu0 0
        %4963 = vmatmul.mubr.bf16.gmra.mrb[0].mxu0 %v4834
        %v4964 = vpop.f32.mrb[0].mxu0
        %v4965 = vadd.f32 0.0, %v4964
        %v4966 = vpop.f32.mrb[0].mxu0
        %v4967 = vpop.f32.mrb[0].mxu0
        %v4968 = vadd.f32 0.0, %v4967
        %v4969 = vpop.f32.mrb[0].mxu0
        %4970 = vmatprep.mubr.bf16.mxu0 0
        %4971 = vmatmul.mubr.bf16.gmra.mrb[0].mxu0 %v4835
        %v4972 = vpop.f32.mrb[0].mxu0
        %v4973 = vadd.f32 0.0, %v4972
        %v4974 = vpop.f32.mrb[0].mxu0
        %v4975 = vpop.f32.mrb[0].mxu0
        %v4976 = vadd.f32 0.0, %v4975
        %v4977 = vpop.f32.mrb[0].mxu0
        %4978 = vmatprep.mubr.bf16.mxu0 0
        %4979 = vmatmul.mubr.bf16.gmra.mrb[0].mxu0 %v4836
        %v4980 = vpop.f32.mrb[0].mxu0
        %v4981 = vadd.f32 0.0, %v4980
        %v4982 = vpop.f32.mrb[0].mxu0
        %v4983 = vpop.f32.mrb[0].mxu0
        %v4984 = vadd.f32 0.0, %v4983
        %v4985 = vpop.f32.mrb[0].mxu0
        %4986 = vmatprep.mubr.bf16.mxu0 0
        %4987 = vmatmul.mubr.bf16.gmra.mrb[0].mxu0 %v4837
        %v4988 = vpop.f32.mrb[0].mxu0
        %v4989 = vadd.f32 0.0, %v4988
        %v4990 = vpop.f32.mrb[0].mxu0
        %v4991 = vpop.f32.mrb[0].mxu0
        %v4992 = vadd.f32 0.0, %v4991
        %v4993 = vpop.f32.mrb[0].mxu0
        %4994 = vmatprep.mubr.bf16.mxu0 0
        %4995 = vmatmul.mubr.bf16.gmra.mrb[0].mxu0 %v4838
        %v4996 = vpop.f32.mrb[0].mxu0
        %v4997 = vadd.f32 0.0, %v4996
        %v4998 = vpop.f32.mrb[0].mxu0
        %v4999 = vpop.f32.mrb[0].mxu0
        %v5000 = vadd.f32 0.0, %v4999
        %v5001 = vpop.f32.mrb[0].mxu0
        %5002 = vmatprep.mubr.bf16.mxu0 0
        %5003 = vmatmul.mubr.bf16.gmra.mrb[0].mxu0 %v4839
        %v5004 = vpop.f32.mrb[0].mxu0
        %v5005 = vadd.f32 0.0, %v5004
        %v5006 = vpop.f32.mrb[0].mxu0
        %v5007 = vpop.f32.mrb[0].mxu0
        %v5008 = vadd.f32 0.0, %v5007
        %v5009 = vpop.f32.mrb[0].mxu0
        %5010 = vmatprep.mubr.bf16.mxu0 0
        %5011 = vmatmul.mubr.bf16.gmra.mrb[0].mxu0 %v4840
        %v5012 = vpop.f32.mrb[0].mxu0
        %v5013 = vadd.f32 0.0, %v5012
        %v5014 = vpop.f32.mrb[0].mxu0
        %v5015 = vpop.f32.mrb[0].mxu0
        %v5016 = vadd.f32 0.0, %v5015
        %v5017 = vpop.f32.mrb[0].mxu0
        %5018 = vmatprep.mubr.bf16.mxu0 0
        %5019 = vmatmul.mubr.bf16.gmra.mrb[0].mxu0 %v4841
        %v5020 = vpop.f32.mrb[0].mxu0
        %v5021 = vadd.f32 0.0, %v5020
        %v5022 = vpop.f32.mrb[0].mxu0
        %v5023 = vpop.f32.mrb[0].mxu0
        %v5024 = vadd.f32 0.0, %v5023
        %v5025 = vpop.f32.mrb[0].mxu0
        %5026 = vmatprep.mubr.bf16.mxu0 0
        %5027 = vmatmul.mubr.bf16.gmra.mrb[0].mxu0 %v4842
        %v5028 = vpop.f32.mrb[0].mxu0
        %v5029 = vadd.f32 0.0, %v5028
        %v5030 = vpop.f32.mrb[0].mxu0
        %v5031 = vpop.f32.mrb[0].mxu0
        %v5032 = vadd.f32 0.0, %v5031
        %v5033 = vpop.f32.mrb[0].mxu0
        %5034 = vmatprep.mubr.bf16.mxu0 0
        %5035 = vmatmul.mubr.bf16.gmra.mrb[0].mxu0 %v4843
        %v5036 = vpop.f32.mrb[0].mxu0
        %v5037 = vadd.f32 0.0, %v5036
        %v5038 = vpop.f32.mrb[0].mxu0
        %v5039 = vpop.f32.mrb[0].mxu0
        %v5040 = vadd.f32 0.0, %v5039
        %v5041 = vpop.f32.mrb[0].mxu0
        %5042 = vmatprep.mubr.bf16.mxu0 0
        %5043 = vmatmul.mubr.bf16.gmra.mrb[0].mxu0 %v4844
        %v5044 = vpop.f32.mrb[0].mxu0
        %v5045 = vadd.f32 0.0, %v5044
        %v5046 = vpop.f32.mrb[0].mxu0
        %v5047 = vpop.f32.mrb[0].mxu0
        %v5048 = vadd.f32 0.0, %v5047
        %v5049 = vpop.f32.mrb[0].mxu0
        %5050 = vmatprep.mubr.bf16.mxu0 0
        %5051 = vmatmul.mubr.bf16.gmra.mrb[0].mxu0 %v4845
        %v5052 = vpop.f32.mrb[0].mxu0
        %v5053 = vadd.f32 0.0, %v5052
        %v5054 = vpop.f32.mrb[0].mxu0
        %v5055 = vpop.f32.mrb[0].mxu0
        %v5056 = vadd.f32 0.0, %v5055
        %v5057 = vpop.f32.mrb[0].mxu0
        %5058 = vmatprep.mubr.bf16.mxu0 0
        %5059 = vmatmul.mubr.bf16.gmra.mrb[0].mxu0 %v4846
        %v5060 = vpop.f32.mrb[0].mxu0
        %v5061 = vadd.f32 0.0, %v5060
        %v5062 = vpop.f32.mrb[0].mxu0
        %v5063 = vpop.f32.mrb[0].mxu0
        %v5064 = vadd.f32 0.0, %v5063
        %v5065 = vpop.f32.mrb[0].mxu0
        %5066 = vmatprep.mubr.bf16.mxu0 0
        %5067 = vmatmul.mubr.bf16.gmra.mrb[0].mxu0 %v4847
        %v5068 = vpop.f32.mrb[0].mxu0
        %v5069 = vadd.f32 0.0, %v5068
        %v5070 = vpop.f32.mrb[0].mxu0
        %v5071 = vpop.f32.mrb[0].mxu0
        %v5072 = vadd.f32 0.0, %v5071
        %v5073 = vpop.f32.mrb[0].mxu0
        %5074 = vmatprep.mubr.bf16.mxu0 0
        %5075 = vmatmul.mubr.bf16.gmra.mrb[0].mxu0 %v4848
        %v5076 = vpop.f32.mrb[0].mxu0
        %v5077 = vadd.f32 0.0, %v5076
        %v5078 = vpop.f32.mrb[0].mxu0
        %v5079 = vpop.f32.mrb[0].mxu0
        %v5080 = vadd.f32 0.0, %v5079
        %v5081 = vpop.f32.mrb[0].mxu0
        %5082 = vmatprep.mubr.bf16.mxu0 0
        %5083 = vmatmul.mubr.bf16.gmra.mrb[0].mxu0 %v4849
        %v5084 = vpop.f32.mrb[0].mxu0
        %v5085 = vadd.f32 0.0, %v5084
        %v5086 = vpop.f32.mrb[0].mxu0
        %v5087 = vpop.f32.mrb[0].mxu0
        %v5088 = vadd.f32 0.0, %v5087
        %v5089 = vpop.f32.mrb[0].mxu0
        %5090 = vmatprep.mubr.bf16.mxu0 0
        %5091 = vmatmul.mubr.bf16.gmra.mrb[0].mxu0 %v4850
        %v5092 = vpop.f32.mrb[0].mxu0
        %v5093 = vadd.f32 0.0, %v5092
        %v5094 = vpop.f32.mrb[0].mxu0
        %v5095 = vpop.f32.mrb[0].mxu0
        %v5096 = vadd.f32 0.0, %v5095
        %v5097 = vpop.f32.mrb[0].mxu0
        %5098 = vmatprep.mubr.bf16.mxu0 0
        %5099 = vmatmul.mubr.bf16.gmra.mrb[0].mxu0 %v4851
        %v5100 = vpop.f32.mrb[0].mxu0
        %v5101 = vadd.f32 0.0, %v5100
        %v5102 = vpop.f32.mrb[0].mxu0
        %v5103 = vpop.f32.mrb[0].mxu0
        %v5104 = vadd.f32 0.0, %v5103
        %v5105 = vpop.f32.mrb[0].mxu0
        %5106 = vmatprep.mubr.bf16.mxu0 0
        %5107 = vmatmul.mubr.bf16.gmra.mrb[0].mxu0 %v4852
        %v5108 = vpop.f32.mrb[0].mxu0
        %v5109 = vadd.f32 0.0, %v5108
        %v5110 = vpop.f32.mrb[0].mxu0
        %v5111 = vpop.f32.mrb[0].mxu0
        %v5112 = vadd.f32 0.0, %v5111
        %v5113 = vpop.f32.mrb[0].mxu0
        %5114 = vmatprep.mubr.bf16.mxu0 0
        %5115 = vmatmul.mubr.bf16.gmra.mrb[0].mxu0 %v4853
        %v5116 = vpop.f32.mrb[0].mxu0
        %v5117 = vadd.f32 0.0, %v5116
        %v5118 = vpop.f32.mrb[0].mxu0
        %v5119 = vpop.f32.mrb[0].mxu0
        %v5120 = vadd.f32 0.0, %v5119
        %v5121 = vpop.f32.mrb[0].mxu0
        %5122 = vmatprep.mubr.bf16.mxu0 0
        %5123 = vmatmul.mubr.bf16.gmra.mrb[0].mxu0 %v4854
        %v5124 = vpop.f32.mrb[0].mxu0
        %v5125 = vadd.f32 0.0, %v5124
        %v5126 = vpop.f32.mrb[0].mxu0
        %v5127 = vpop.f32.mrb[0].mxu0
        %v5128 = vadd.f32 0.0, %v5127
        %v5129 = vpop.f32.mrb[0].mxu0
        %5130 = vmatprep.mubr.bf16.mxu0 0
        %5131 = vmatmul.mubr.bf16.gmra.mrb[0].mxu0 %v4855
        %v5132 = vpop.f32.mrb[0].mxu0
        %v5133 = vadd.f32 0.0, %v5132
        %v5134 = vpop.f32.mrb[0].mxu0
        %v5135 = vpop.f32.mrb[0].mxu0
        %v5136 = vadd.f32 0.0, %v5135
        %v5137 = vpop.f32.mrb[0].mxu0
        %5138 = vmatprep.mubr.bf16.mxu0 0
        %5139 = vmatmul.mubr.bf16.gmra.mrb[0].mxu0 %v4856
        %v5140 = vpop.f32.mrb[0].mxu0
        %v5141 = vadd.f32 0.0, %v5140
        %v5142 = vpop.f32.mrb[0].mxu0
        %v5143 = vpop.f32.mrb[0].mxu0
        %v5144 = vadd.f32 0.0, %v5143
        %v5145 = vpop.f32.mrb[0].mxu0
        %5146 = vmatprep.mubr.bf16.mxu0 0
        %5147 = vmatmul.mubr.bf16.gmra.mrb[0].mxu0 %v4857
        %v5148 = vpop.f32.mrb[0].mxu0
        %v5149 = vadd.f32 0.0, %v5148
        %v5150 = vpop.f32.mrb[0].mxu0
        %v5151 = vpop.f32.mrb[0].mxu0
        %v5152 = vadd.f32 0.0, %v5151
        %v5153 = vpop.f32.mrb[0].mxu0
        %5154 = vdwg.mxu0
        %v5155 = vadd.f32 %v4625, %v4965
        %v5156 = vadd.f32 %v4626, %v4968
        %v5157 = vadd.f32 %v4627, %v4973
        %v5158 = vadd.f32 %v4628, %v4976
        %v5159 = vadd.f32 %v4629, %v4981
        %v5160 = vadd.f32 %v4630, %v4984
        %v5161 = vadd.f32 %v4631, %v4989
        %v5162 = vadd.f32 %v4632, %v4992
        %v5163 = vadd.f32 %v4633, %v4997
        %v5164 = vadd.f32 %v4634, %v5000
        %v5165 = vadd.f32 %v4635, %v5005
        %v5166 = vadd.f32 %v4636, %v5008
        %v5167 = vadd.f32 %v4637, %v5013
        %v5168 = vadd.f32 %v4638, %v5016
        %v5169 = vadd.f32 %v4639, %v5021
        %v5170 = vadd.f32 %v4640, %v5024
        %v5171 = vadd.f32 %v4641, %v5029
        %v5172 = vadd.f32 %v4642, %v5032
        %v5173 = vadd.f32 %v4643, %v5037
        %v5174 = vadd.f32 %v4644, %v5040
        %v5175 = vadd.f32 %v4645, %v5045
        %v5176 = vadd.f32 %v4646, %v5048
        %v5177 = vadd.f32 %v4647, %v5053
        %v5178 = vadd.f32 %v4648, %v5056
        %v5179 = vadd.f32 %v4649, %v5061
        %v5180 = vadd.f32 %v4650, %v5064
        %v5181 = vadd.f32 %v4651, %v5069
        %v5182 = vadd.f32 %v4652, %v5072
        %v5183 = vadd.f32 %v4653, %v5077
        %v5184 = vadd.f32 %v4654, %v5080
        %v5185 = vadd.f32 %v4655, %v5085
        %v5186 = vadd.f32 %v4656, %v5088
        %v5187 = vadd.f32 %v4657, %v5093
        %v5188 = vadd.f32 %v4658, %v5096
        %v5189 = vadd.f32 %v4659, %v5101
        %v5190 = vadd.f32 %v4660, %v5104
        %v5191 = vadd.f32 %v4661, %v5109
        %v5192 = vadd.f32 %v4662, %v5112
        %v5193 = vadd.f32 %v4663, %v5117
        %v5194 = vadd.f32 %v4664, %v5120
        %v5195 = vadd.f32 %v4665, %v5125
        %v5196 = vadd.f32 %v4666, %v5128
        %v5197 = vadd.f32 %v4667, %v5133
        %v5198 = vadd.f32 %v4668, %v5136
        %v5199 = vadd.f32 %v4669, %v5141
        %v5200 = vadd.f32 %v4670, %v5144
        %v5201 = vadd.f32 %v4671, %v5149
        %v5202 = vadd.f32 %v4672, %v5152
        %5203 = vst [vmem:[#allocation4] sm:$0xff] %v5155
        %5204 = vst [vmem:[#allocation4 + $0x8] sm:$0xff] %v5156
        %5205 = vst [vmem:[#allocation4 + $0x10] sm:$0xff] %v5157
        %5206 = vst [vmem:[#allocation4 + $0x18] sm:$0xff] %v5158
        %5207 = vst [vmem:[#allocation4 + $0x20] sm:$0xff] %v5159
        %5208 = vst [vmem:[#allocation4 + $0x28] sm:$0xff] %v5160
        %5209 = vst [vmem:[#allocation4 + $0x30] sm:$0xff] %v5161
        %5210 = vst [vmem:[#allocation4 + $0x38] sm:$0xff] %v5162
        %5211 = vst [vmem:[#allocation4 + $0x40] sm:$0xff] %v5163
        %5212 = vst [vmem:[#allocation4 + $0x48] sm:$0xff] %v5164
        %5213 = vst [vmem:[#allocation4 + $0x50] sm:$0xff] %v5165
        %5214 = vst [vmem:[#allocation4 + $0x58] sm:$0xff] %v5166
        %5215 = vst [vmem:[#allocation4 + $0x60] sm:$0xff] %v5167
        %5216 = vst [vmem:[#allocation4 + $0x68] sm:$0xff] %v5168
        %5217 = vst [vmem:[#allocation4 + $0x70] sm:$0xff] %v5169
        %5218 = vst [vmem:[#allocation4 + $0x78] sm:$0xff] %v5170
        %5219 = vst [vmem:[#allocation4 + $0x80] sm:$0xff] %v5171
        %5220 = vst [vmem:[#allocation4 + $0x88] sm:$0xff] %v5172
        %5221 = vst [vmem:[#allocation4 + $0x90] sm:$0xff] %v5173
        %5222 = vst [vmem:[#allocation4 + $0x98] sm:$0xff] %v5174
        %5223 = vst [vmem:[#allocation4 + $0xa0] sm:$0xff] %v5175
        %5224 = vst [vmem:[#allocation4 + $0xa8] sm:$0xff] %v5176
        %5225 = vst [vmem:[#allocation4 + $0xb0] sm:$0xff] %v5177
        %5226 = vst [vmem:[#allocation4 + $0xb8] sm:$0xff] %v5178
        %5227 = vst [vmem:[#allocation4 + $0xc0] sm:$0xff] %v5179
        %5228 = vst [vmem:[#allocation4 + $0xc8] sm:$0xff] %v5180
        %5229 = vst [vmem:[#allocation4 + $0xd0] sm:$0xff] %v5181
        %5230 = vst [vmem:[#allocation4 + $0xd8] sm:$0xff] %v5182
        %5231 = vst [vmem:[#allocation4 + $0xe0] sm:$0xff] %v5183
        %5232 = vst [vmem:[#allocation4 + $0xe8] sm:$0xff] %v5184
        %5233 = vst [vmem:[#allocation4 + $0xf0] sm:$0xff] %v5185
        %5234 = vst [vmem:[#allocation4 + $0xf8] sm:$0xff] %v5186
        %5235 = vst [vmem:[#allocation4 + $0x100] sm:$0xff] %v5187
        %5236 = vst [vmem:[#allocation4 + $0x108] sm:$0xff] %v5188
        %5237 = vst [vmem:[#allocation4 + $0x110] sm:$0xff] %v5189
        %5238 = vst [vmem:[#allocation4 + $0x118] sm:$0xff] %v5190
        %5239 = vst [vmem:[#allocation4 + $0x120] sm:$0xff] %v5191
        %5240 = vst [vmem:[#allocation4 + $0x128] sm:$0xff] %v5192
        %5241 = vst [vmem:[#allocation4 + $0x130] sm:$0xff] %v5193
        %5242 = vst [vmem:[#allocation4 + $0x138] sm:$0xff] %v5194
        %5243 = vst [vmem:[#allocation4 + $0x140] sm:$0xff] %v5195
        %5244 = vst [vmem:[#allocation4 + $0x148] sm:$0xff] %v5196
        %5245 = vst [vmem:[#allocation4 + $0x150] sm:$0xff] %v5197
        %5246 = vst [vmem:[#allocation4 + $0x158] sm:$0xff] %v5198
        %5247 = vst [vmem:[#allocation4 + $0x160] sm:$0xff] %v5199
        %5248 = vst [vmem:[#allocation4 + $0x168] sm:$0xff] %v5200
        %5249 = vst [vmem:[#allocation4 + $0x170] sm:$0xff] %v5201
        %5250 = vst [vmem:[#allocation4 + $0x178] sm:$0xff] %v5202
        %v5251 = vld [vmem:[#allocation4] sm:$0xff]
        %v5252 = vld [vmem:[#allocation4 + $0x8] sm:$0xff]
        %v5253 = vld [vmem:[#allocation4 + $0x10] sm:$0xff]
        %v5254 = vld [vmem:[#allocation4 + $0x18] sm:$0xff]
        %v5255 = vld [vmem:[#allocation4 + $0x20] sm:$0xff]
        %v5256 = vld [vmem:[#allocation4 + $0x28] sm:$0xff]
        %v5257 = vld [vmem:[#allocation4 + $0x30] sm:$0xff]
        %v5258 = vld [vmem:[#allocation4 + $0x38] sm:$0xff]
        %v5259 = vld [vmem:[#allocation4 + $0x40] sm:$0xff]
        %v5260 = vld [vmem:[#allocation4 + $0x48] sm:$0xff]
        %v5261 = vld [vmem:[#allocation4 + $0x50] sm:$0xff]
        %v5262 = vld [vmem:[#allocation4 + $0x58] sm:$0xff]
        %v5263 = vld [vmem:[#allocation4 + $0x60] sm:$0xff]
        %v5264 = vld [vmem:[#allocation4 + $0x68] sm:$0xff]
        %v5265 = vld [vmem:[#allocation4 + $0x70] sm:$0xff]
        %v5266 = vld [vmem:[#allocation4 + $0x78] sm:$0xff]
        %v5267 = vld [vmem:[#allocation4 + $0x80] sm:$0xff]
        %v5268 = vld [vmem:[#allocation4 + $0x88] sm:$0xff]
        %v5269 = vld [vmem:[#allocation4 + $0x90] sm:$0xff]
        %v5270 = vld [vmem:[#allocation4 + $0x98] sm:$0xff]
        %v5271 = vld [vmem:[#allocation4 + $0xa0] sm:$0xff]
        %v5272 = vld [vmem:[#allocation4 + $0xa8] sm:$0xff]
        %v5273 = vld [vmem:[#allocation4 + $0xb0] sm:$0xff]
        %v5274 = vld [vmem:[#allocation4 + $0xb8] sm:$0xff]
        %v5275 = vld [vmem:[#allocation4 + $0xc0] sm:$0xff]
        %v5276 = vld [vmem:[#allocation4 + $0xc8] sm:$0xff]
        %v5277 = vld [vmem:[#allocation4 + $0xd0] sm:$0xff]
        %v5278 = vld [vmem:[#allocation4 + $0xd8] sm:$0xff]
        %v5279 = vld [vmem:[#allocation4 + $0xe0] sm:$0xff]
        %v5280 = vld [vmem:[#allocation4 + $0xe8] sm:$0xff]
        %v5281 = vld [vmem:[#allocation4 + $0xf0] sm:$0xff]
        %v5282 = vld [vmem:[#allocation4 + $0xf8] sm:$0xff]
        %v5283 = vld [vmem:[#allocation4 + $0x100] sm:$0xff]
        %v5284 = vld [vmem:[#allocation4 + $0x108] sm:$0xff]
        %v5285 = vld [vmem:[#allocation4 + $0x110] sm:$0xff]
        %v5286 = vld [vmem:[#allocation4 + $0x118] sm:$0xff]
        %v5287 = vld [vmem:[#allocation4 + $0x120] sm:$0xff]
        %v5288 = vld [vmem:[#allocation4 + $0x128] sm:$0xff]
        %v5289 = vld [vmem:[#allocation4 + $0x130] sm:$0xff]
        %v5290 = vld [vmem:[#allocation4 + $0x138] sm:$0xff]
        %v5291 = vld [vmem:[#allocation4 + $0x140] sm:$0xff]
        %v5292 = vld [vmem:[#allocation4 + $0x148] sm:$0xff]
        %v5293 = vld [vmem:[#allocation4 + $0x150] sm:$0xff]
        %v5294 = vld [vmem:[#allocation4 + $0x158] sm:$0xff]
        %v5295 = vld [vmem:[#allocation4 + $0x160] sm:$0xff]
        %v5296 = vld [vmem:[#allocation4 + $0x168] sm:$0xff]
        %v5297 = vld [vmem:[#allocation4 + $0x170] sm:$0xff]
        %v5298 = vld [vmem:[#allocation4 + $0x178] sm:$0xff]
        %v5299 = vld [vmem:[%s703 + $0x30] sm:$0xe]
        %v5300 = vld [vmem:[%s703 + $0x34] sm:$0xf]
        %v5301 = vld [vmem:[%s703 + $0x38] sm:$0xf]
        %v5302 = vld [vmem:[%s703 + $0x3c] sm:$0xf]
        %v5303 = vld [vmem:[%s703 + $0x40] sm:$0xf]
        %v5304 = vld [vmem:[%s703 + $0x44] sm:$0xf]
        %v5305 = vld [vmem:[%s703 + $0x48] sm:$0xf]
        %v5306 = vld [vmem:[%s703 + $0x4c] sm:$0xf]
        %v5307 = vld [vmem:[%s703 + $0x50] sm:$0xf]
        %v5308 = vld [vmem:[%s703 + $0x54] sm:$0xf]
        %v5309 = vld [vmem:[%s703 + $0x58] sm:$0xf]
        %v5310 = vld [vmem:[%s703 + $0x5c] sm:$0xf]
        %v5311 = vld [vmem:[%s703 + $0x60] sm:$0xf]
        %v5312 = vld [vmem:[%s703 + $0x64] sm:$0xf]
        %v5313 = vld [vmem:[%s703 + $0x68] sm:$0xf]
        %v5314 = vld [vmem:[%s703 + $0x6c] sm:$0xf]
        %v5315 = vld [vmem:[%s703 + $0x70] sm:$0xf]
        %v5316 = vld [vmem:[%s703 + $0x74] sm:$0xf]
        %v5317 = vld [vmem:[%s703 + $0x78] sm:$0xf]
        %v5318 = vld [vmem:[%s703 + $0x7c] sm:$0xf]
        %v5319 = vld [vmem:[%s703 + $0x80] sm:$0xf]
        %v5320 = vld [vmem:[%s703 + $0x84] sm:$0xf]
        %v5321 = vld [vmem:[%s703 + $0x88] sm:$0xf]
        %v5322 = vld [vmem:[%s703 + $0x8c] sm:$0xf]
        %v5323 = vld [vmem:[%s703 + $0x90] sm:$0xf]
        %v5324 = vld [vmem:[%s703 + $0x94] sm:$0xf]
        %v5325 = vld [vmem:[%s703 + $0x98] sm:$0xf]
        %v5326 = vld [vmem:[%s703 + $0x9c] sm:$0xf]
        %v5327 = vld [vmem:[%s703 + $0xa0] sm:$0xf]
        %v5328 = vld [vmem:[%s703 + $0xa4] sm:$0xf]
        %v5329 = vld [vmem:[%s703 + $0xa8] sm:$0xf]
        %v5330 = vld [vmem:[%s703 + $0xac] sm:$0xf]
        %v5331 = vld [vmem:[%s703 + $0xb0] sm:$0xf]
        %v5332 = vld [vmem:[%s703 + $0xb4] sm:$0xf]
        %v5333 = vld [vmem:[%s703 + $0xb8] sm:$0xf]
        %v5334 = vld [vmem:[%s703 + $0xbc] sm:$0xf]
        %v5335 = vld [vmem:[%s703 + $0xc0] sm:$0xf]
        %v5336 = vld [vmem:[%s703 + $0xc4] sm:$0xf]
        %v5337 = vld [vmem:[%s703 + $0xc8] sm:$0xf]
        %v5338 = vld [vmem:[%s703 + $0xcc] sm:$0xf]
        %v5339 = vld [vmem:[%s703 + $0xd0] sm:$0xf]
        %v5340 = vld [vmem:[%s703 + $0xd4] sm:$0xf]
        %v5341 = vld [vmem:[%s703 + $0xd8] sm:$0xf]
        %v5342 = vld [vmem:[%s703 + $0xdc] sm:$0xf]
        %v5343 = vld [vmem:[%s703 + $0xe0] sm:$0xf]
        %v5344 = vld [vmem:[%s703 + $0xe4] sm:$0xf]
        %v5345 = vld [vmem:[%s703 + $0xe8] sm:$0xf]
        %v5346 = vld [vmem:[%s703 + $0xec] sm:$0xf]
        %v5347 = vld [vmem:[%s703 + $0xf0] sm:$0x1]
        %s5348 = scalar_lea.vmem [#allocation5], 448
        %v5349 = vld [vmem:[%s5348] sm:$0xf]
        %v5350 = vld [vmem:[%s5348 + $0x4] sm:$0xf]
        %v5351 = vld [vmem:[%s5348 + $0x8] sm:$0xf]
        %v5352 = vld [vmem:[%s5348 + $0xc] sm:$0xf]
        %v5353 = vld [vmem:[%s5348 + $0x10] sm:$0xf]
        %v5354 = vld [vmem:[%s5348 + $0x14] sm:$0xf]
        %v5355 = vld [vmem:[%s5348 + $0x18] sm:$0xf]
        %v5356 = vld [vmem:[%s5348 + $0x1c] sm:$0xf]
        %v5357 = vld [vmem:[%s5348 + $0x20] sm:$0xf]
        %v5358 = vld [vmem:[%s5348 + $0x24] sm:$0xf]
        %v5359 = vld [vmem:[%s5348 + $0x28] sm:$0xf]
        %v5360 = vld [vmem:[%s5348 + $0x2c] sm:$0xf]
        %v5361 = vld [vmem:[%s5348 + $0x30] sm:$0xf]
        %v5362 = vld [vmem:[%s5348 + $0x34] sm:$0xf]
        %v5363 = vld [vmem:[%s5348 + $0x38] sm:$0xf]
        %v5364 = vld [vmem:[%s5348 + $0x3c] sm:$0xf]
        %v5414 = vunpack.c.l.b16 %v5299
        %v5415 = vunpack.c.l.b16 %v5300
        %v5416 = vunpack.c.l.b16 %v5301
        %v5417 = vunpack.c.l.b16 %v5302
        %v5418 = vunpack.c.l.b16 %v5303
        %v5419 = vunpack.c.l.b16 %v5304
        %v5420 = vunpack.c.l.b16 %v5305
        %v5421 = vunpack.c.l.b16 %v5306
        %v5422 = vunpack.c.l.b16 %v5307
        %v5423 = vunpack.c.l.b16 %v5308
        %v5424 = vunpack.c.l.b16 %v5309
        %v5425 = vunpack.c.l.b16 %v5310
        %v5426 = vunpack.c.l.b16 %v5311
        %v5427 = vunpack.c.l.b16 %v5312
        %v5428 = vunpack.c.l.b16 %v5313
        %v5429 = vunpack.c.l.b16 %v5314
        %v5430 = vunpack.c.l.b16 %v5315
        %v5431 = vunpack.c.l.b16 %v5316
        %v5432 = vunpack.c.l.b16 %v5317
        %v5433 = vunpack.c.l.b16 %v5318
        %v5434 = vunpack.c.l.b16 %v5319
        %v5435 = vunpack.c.l.b16 %v5320
        %v5436 = vunpack.c.l.b16 %v5321
        %v5437 = vunpack.c.l.b16 %v5322
        %v5438 = vunpack.c.l.b16 %v5323
        %v5439 = vunpack.c.l.b16 %v5324
        %v5440 = vunpack.c.l.b16 %v5325
        %v5441 = vunpack.c.l.b16 %v5326
        %v5442 = vunpack.c.l.b16 %v5327
        %v5443 = vunpack.c.l.b16 %v5328
        %v5444 = vunpack.c.l.b16 %v5329
        %v5445 = vunpack.c.l.b16 %v5330
        %v5446 = vunpack.c.l.b16 %v5331
        %v5447 = vunpack.c.l.b16 %v5332
        %v5448 = vunpack.c.l.b16 %v5333
        %v5449 = vunpack.c.l.b16 %v5334
        %v5450 = vunpack.c.l.b16 %v5335
        %v5451 = vunpack.c.l.b16 %v5336
        %v5452 = vunpack.c.l.b16 %v5337
        %v5453 = vunpack.c.l.b16 %v5338
        %v5454 = vunpack.c.l.b16 %v5339
        %v5455 = vunpack.c.l.b16 %v5340
        %v5456 = vunpack.c.l.b16 %v5341
        %v5457 = vunpack.c.l.b16 %v5342
        %v5458 = vunpack.c.l.b16 %v5343
        %v5459 = vunpack.c.l.b16 %v5344
        %v5460 = vunpack.c.l.b16 %v5345
        %v5461 = vunpack.c.l.b16 %v5346
        %v5462 = vunpack.c.l.b16 %v5347
        %v5463 = vpack.c.b16 %v5415, %v5414
        %v5464 = vpack.c.b16 %v5417, %v5416
        %v5465 = vpack.c.b16 %v5419, %v5418
        %v5466 = vpack.c.b16 %v5421, %v5420
        %v5467 = vpack.c.b16 %v5423, %v5422
        %v5468 = vpack.c.b16 %v5425, %v5424
        %v5469 = vpack.c.b16 %v5427, %v5426
        %v5470 = vpack.c.b16 %v5429, %v5428
        %v5471 = vpack.c.b16 %v5431, %v5430
        %v5472 = vpack.c.b16 %v5433, %v5432
        %v5473 = vpack.c.b16 %v5435, %v5434
        %v5474 = vpack.c.b16 %v5437, %v5436
        %v5475 = vpack.c.b16 %v5439, %v5438
        %v5476 = vpack.c.b16 %v5441, %v5440
        %v5477 = vpack.c.b16 %v5443, %v5442
        %v5478 = vpack.c.b16 %v5445, %v5444
        %v5479 = vpack.c.b16 %v5447, %v5446
        %v5480 = vpack.c.b16 %v5449, %v5448
        %v5481 = vpack.c.b16 %v5451, %v5450
        %v5482 = vpack.c.b16 %v5453, %v5452
        %v5483 = vpack.c.b16 %v5455, %v5454
        %v5484 = vpack.c.b16 %v5457, %v5456
        %v5485 = vpack.c.b16 %v5459, %v5458
        %v5486 = vpack.c.b16 %v5461, %v5460
        %v5487 = vpack.c.b16 %v5462, %v5462
        %v5488 = vrot.slane %v5463, 1
        %v5489 = vrot.slane %v5464, 1
        %v5490 = vsel %vm1518, %v5488, %v5489
        %v5491 = vrot.slane %v5465, 1
        %v5492 = vsel %vm1518, %v5489, %v5491
        %v5493 = vrot.slane %v5466, 1
        %v5494 = vsel %vm1518, %v5491, %v5493
        %v5495 = vrot.slane %v5467, 1
        %v5496 = vsel %vm1518, %v5493, %v5495
        %v5497 = vrot.slane %v5468, 1
        %v5498 = vsel %vm1518, %v5495, %v5497
        %v5499 = vrot.slane %v5469, 1
        %v5500 = vsel %vm1518, %v5497, %v5499
        %v5501 = vrot.slane %v5470, 1
        %v5502 = vsel %vm1518, %v5499, %v5501
        %v5503 = vrot.slane %v5471, 1
        %v5504 = vsel %vm1518, %v5501, %v5503
        %v5505 = vrot.slane %v5472, 1
        %v5506 = vsel %vm1518, %v5503, %v5505
        %v5507 = vrot.slane %v5473, 1
        %v5508 = vsel %vm1518, %v5505, %v5507
        %v5509 = vrot.slane %v5474, 1
        %v5510 = vsel %vm1518, %v5507, %v5509
        %v5511 = vrot.slane %v5475, 1
        %v5512 = vsel %vm1518, %v5509, %v5511
        %v5513 = vrot.slane %v5476, 1
        %v5514 = vsel %vm1518, %v5511, %v5513
        %v5515 = vrot.slane %v5477, 1
        %v5516 = vsel %vm1518, %v5513, %v5515
        %v5517 = vrot.slane %v5478, 1
        %v5518 = vsel %vm1518, %v5515, %v5517
        %v5519 = vrot.slane %v5479, 1
        %v5520 = vsel %vm1518, %v5517, %v5519
        %v5521 = vrot.slane %v5480, 1
        %v5522 = vsel %vm1518, %v5519, %v5521
        %v5523 = vrot.slane %v5481, 1
        %v5524 = vsel %vm1518, %v5521, %v5523
        %v5525 = vrot.slane %v5482, 1
        %v5526 = vsel %vm1518, %v5523, %v5525
        %v5527 = vrot.slane %v5483, 1
        %v5528 = vsel %vm1518, %v5525, %v5527
        %v5529 = vrot.slane %v5484, 1
        %v5530 = vsel %vm1518, %v5527, %v5529
        %v5531 = vrot.slane %v5485, 1
        %v5532 = vsel %vm1518, %v5529, %v5531
        %v5533 = vrot.slane %v5486, 1
        %v5534 = vsel %vm1518, %v5531, %v5533
        %v5535 = vrot.slane %v5487, 1
        %v5536 = vsel %vm1518, %v5533, %v5535
        %v5577 = vunpack.c.l.b16 %v5349
        %v5578 = vunpack.c.l.b16 %v5350
        %v5579 = vunpack.c.l.b16 %v5351
        %v5580 = vunpack.c.l.b16 %v5352
        %v5581 = vunpack.c.l.b16 %v5353
        %v5582 = vunpack.c.l.b16 %v5354
        %v5583 = vunpack.c.l.b16 %v5355
        %v5584 = vunpack.c.l.b16 %v5356
        %v5585 = vunpack.c.l.b16 %v5357
        %v5586 = vunpack.c.l.b16 %v5358
        %v5587 = vunpack.c.l.b16 %v5359
        %v5588 = vunpack.c.l.b16 %v5360
        %v5589 = vunpack.c.l.b16 %v5361
        %v5590 = vunpack.c.l.b16 %v5362
        %v5591 = vunpack.c.l.b16 %v5363
        %v5592 = vunpack.c.l.b16 %v5364
        %v5593 = vpack.c.b16 %v5578, %v5577
        %v5594 = vpack.c.b16 %v5580, %v5579
        %v5595 = vpack.c.b16 %v5582, %v5581
        %v5596 = vpack.c.b16 %v5584, %v5583
        %v5597 = vpack.c.b16 %v5586, %v5585
        %v5598 = vpack.c.b16 %v5588, %v5587
        %v5599 = vpack.c.b16 %v5590, %v5589
        %v5600 = vpack.c.b16 %v5592, %v5591
        %5609 = vmatprep.subr.bf16.mxu0 0
        %5610 = vmatpush1.bf16.msra.mxu0 %v5593
        %5611 = vmatprep.subr.bf16.mxu0 0
        %5612 = vmatpush1.bf16.msra.mxu0 %v5594
        %5613 = vmatprep.subr.bf16.mxu0 0
        %5614 = vmatpush1.bf16.msra.mxu0 %v5595
        %5615 = vmatprep.subr.bf16.mxu0 0
        %5616 = vmatpush1.bf16.msra.mxu0 %v5596
        %5617 = vmatprep.subr.bf16.mxu0 0
        %5618 = vmatpush1.bf16.msra.mxu0 %v5597
        %5619 = vmatprep.subr.bf16.mxu0 0
        %5620 = vmatpush1.bf16.msra.mxu0 %v5598
        %5621 = vmatprep.subr.bf16.mxu0 0
        %5622 = vmatpush1.bf16.msra.mxu0 %v5599
        %5623 = vmatprep.subr.bf16.mxu0 0
        %5624 = vmatpush1.bf16.msra.mxu0 %v5600
        %5625 = vmatprep.subr.bf16.mxu0 0
        %5626 = vmatpush1.bf16.msra.mxu0 0
        %5627 = vmatprep.subr.bf16.mxu0 0
        %5628 = vmatpush1.bf16.msra.mxu0 0
        %5629 = vmatprep.subr.bf16.mxu0 0
        %5630 = vmatpush1.bf16.msra.mxu0 0
        %5631 = vmatprep.subr.bf16.mxu0 0
        %5632 = vmatpush1.bf16.msra.mxu0 0
        %5633 = vmatprep.subr.bf16.mxu0 0
        %5634 = vmatpush1.bf16.msra.mxu0 0
        %5635 = vmatprep.subr.bf16.mxu0 0
        %5636 = vmatpush1.bf16.msra.mxu0 0
        %5637 = vmatprep.subr.bf16.mxu0 0
        %5638 = vmatpush1.bf16.msra.mxu0 0
        %5639 = vmatprep.subr.bf16.mxu0 0
        %5640 = vmatpush1.bf16.msra.mxu0 0
        %5641 = vmatprep.mubr.bf16.mxu0 0
        %5642 = vmatmul.mubr.bf16.gmra.mrb[0].mxu0 %v5490
        %v5643 = vpop.f32.mrb[0].mxu0
        %v5644 = vadd.f32 0.0, %v5643
        %v5645 = vpop.f32.mrb[0].mxu0
        %v5646 = vpop.f32.mrb[0].mxu0
        %v5647 = vadd.f32 0.0, %v5646
        %v5648 = vpop.f32.mrb[0].mxu0
        %5649 = vmatprep.mubr.bf16.mxu0 0
        %5650 = vmatmul.mubr.bf16.gmra.mrb[0].mxu0 %v5492
        %v5651 = vpop.f32.mrb[0].mxu0
        %v5652 = vadd.f32 0.0, %v5651
        %v5653 = vpop.f32.mrb[0].mxu0
        %v5654 = vpop.f32.mrb[0].mxu0
        %v5655 = vadd.f32 0.0, %v5654
        %v5656 = vpop.f32.mrb[0].mxu0
        %5657 = vmatprep.mubr.bf16.mxu0 0
        %5658 = vmatmul.mubr.bf16.gmra.mrb[0].mxu0 %v5494
        %v5659 = vpop.f32.mrb[0].mxu0
        %v5660 = vadd.f32 0.0, %v5659
        %v5661 = vpop.f32.mrb[0].mxu0
        %v5662 = vpop.f32.mrb[0].mxu0
        %v5663 = vadd.f32 0.0, %v5662
        %v5664 = vpop.f32.mrb[0].mxu0
        %5665 = vmatprep.mubr.bf16.mxu0 0
        %5666 = vmatmul.mubr.bf16.gmra.mrb[0].mxu0 %v5496
        %v5667 = vpop.f32.mrb[0].mxu0
        %v5668 = vadd.f32 0.0, %v5667
        %v5669 = vpop.f32.mrb[0].mxu0
        %v5670 = vpop.f32.mrb[0].mxu0
        %v5671 = vadd.f32 0.0, %v5670
        %v5672 = vpop.f32.mrb[0].mxu0
        %5673 = vmatprep.mubr.bf16.mxu0 0
        %5674 = vmatmul.mubr.bf16.gmra.mrb[0].mxu0 %v5498
        %v5675 = vpop.f32.mrb[0].mxu0
        %v5676 = vadd.f32 0.0, %v5675
        %v5677 = vpop.f32.mrb[0].mxu0
        %v5678 = vpop.f32.mrb[0].mxu0
        %v5679 = vadd.f32 0.0, %v5678
        %v5680 = vpop.f32.mrb[0].mxu0
        %5681 = vmatprep.mubr.bf16.mxu0 0
        %5682 = vmatmul.mubr.bf16.gmra.mrb[0].mxu0 %v5500
        %v5683 = vpop.f32.mrb[0].mxu0
        %v5684 = vadd.f32 0.0, %v5683
        %v5685 = vpop.f32.mrb[0].mxu0
        %v5686 = vpop.f32.mrb[0].mxu0
        %v5687 = vadd.f32 0.0, %v5686
        %v5688 = vpop.f32.mrb[0].mxu0
        %5689 = vmatprep.mubr.bf16.mxu0 0
        %5690 = vmatmul.mubr.bf16.gmra.mrb[0].mxu0 %v5502
        %v5691 = vpop.f32.mrb[0].mxu0
        %v5692 = vadd.f32 0.0, %v5691
        %v5693 = vpop.f32.mrb[0].mxu0
        %v5694 = vpop.f32.mrb[0].mxu0
        %v5695 = vadd.f32 0.0, %v5694
        %v5696 = vpop.f32.mrb[0].mxu0
        %5697 = vmatprep.mubr.bf16.mxu0 0
        %5698 = vmatmul.mubr.bf16.gmra.mrb[0].mxu0 %v5504
        %v5699 = vpop.f32.mrb[0].mxu0
        %v5700 = vadd.f32 0.0, %v5699
        %v5701 = vpop.f32.mrb[0].mxu0
        %v5702 = vpop.f32.mrb[0].mxu0
        %v5703 = vadd.f32 0.0, %v5702
        %v5704 = vpop.f32.mrb[0].mxu0
        %5705 = vmatprep.mubr.bf16.mxu0 0
        %5706 = vmatmul.mubr.bf16.gmra.mrb[0].mxu0 %v5506
        %v5707 = vpop.f32.mrb[0].mxu0
        %v5708 = vadd.f32 0.0, %v5707
        %v5709 = vpop.f32.mrb[0].mxu0
        %v5710 = vpop.f32.mrb[0].mxu0
        %v5711 = vadd.f32 0.0, %v5710
        %v5712 = vpop.f32.mrb[0].mxu0
        %5713 = vmatprep.mubr.bf16.mxu0 0
        %5714 = vmatmul.mubr.bf16.gmra.mrb[0].mxu0 %v5508
        %v5715 = vpop.f32.mrb[0].mxu0
        %v5716 = vadd.f32 0.0, %v5715
        %v5717 = vpop.f32.mrb[0].mxu0
        %v5718 = vpop.f32.mrb[0].mxu0
        %v5719 = vadd.f32 0.0, %v5718
        %v5720 = vpop.f32.mrb[0].mxu0
        %5721 = vmatprep.mubr.bf16.mxu0 0
        %5722 = vmatmul.mubr.bf16.gmra.mrb[0].mxu0 %v5510
        %v5723 = vpop.f32.mrb[0].mxu0
        %v5724 = vadd.f32 0.0, %v5723
        %v5725 = vpop.f32.mrb[0].mxu0
        %v5726 = vpop.f32.mrb[0].mxu0
        %v5727 = vadd.f32 0.0, %v5726
        %v5728 = vpop.f32.mrb[0].mxu0
        %5729 = vmatprep.mubr.bf16.mxu0 0
        %5730 = vmatmul.mubr.bf16.gmra.mrb[0].mxu0 %v5512
        %v5731 = vpop.f32.mrb[0].mxu0
        %v5732 = vadd.f32 0.0, %v5731
        %v5733 = vpop.f32.mrb[0].mxu0
        %v5734 = vpop.f32.mrb[0].mxu0
        %v5735 = vadd.f32 0.0, %v5734
        %v5736 = vpop.f32.mrb[0].mxu0
        %5737 = vmatprep.mubr.bf16.mxu0 0
        %5738 = vmatmul.mubr.bf16.gmra.mrb[0].mxu0 %v5514
        %v5739 = vpop.f32.mrb[0].mxu0
        %v5740 = vadd.f32 0.0, %v5739
        %v5741 = vpop.f32.mrb[0].mxu0
        %v5742 = vpop.f32.mrb[0].mxu0
        %v5743 = vadd.f32 0.0, %v5742
        %v5744 = vpop.f32.mrb[0].mxu0
        %5745 = vmatprep.mubr.bf16.mxu0 0
        %5746 = vmatmul.mubr.bf16.gmra.mrb[0].mxu0 %v5516
        %v5747 = vpop.f32.mrb[0].mxu0
        %v5748 = vadd.f32 0.0, %v5747
        %v5749 = vpop.f32.mrb[0].mxu0
        %v5750 = vpop.f32.mrb[0].mxu0
        %v5751 = vadd.f32 0.0, %v5750
        %v5752 = vpop.f32.mrb[0].mxu0
        %5753 = vmatprep.mubr.bf16.mxu0 0
        %5754 = vmatmul.mubr.bf16.gmra.mrb[0].mxu0 %v5518
        %v5755 = vpop.f32.mrb[0].mxu0
        %v5756 = vadd.f32 0.0, %v5755
        %v5757 = vpop.f32.mrb[0].mxu0
        %v5758 = vpop.f32.mrb[0].mxu0
        %v5759 = vadd.f32 0.0, %v5758
        %v5760 = vpop.f32.mrb[0].mxu0
        %5761 = vmatprep.mubr.bf16.mxu0 0
        %5762 = vmatmul.mubr.bf16.gmra.mrb[0].mxu0 %v5520
        %v5763 = vpop.f32.mrb[0].mxu0
        %v5764 = vadd.f32 0.0, %v5763
        %v5765 = vpop.f32.mrb[0].mxu0
        %v5766 = vpop.f32.mrb[0].mxu0
        %v5767 = vadd.f32 0.0, %v5766
        %v5768 = vpop.f32.mrb[0].mxu0
        %5769 = vmatprep.mubr.bf16.mxu0 0
        %5770 = vmatmul.mubr.bf16.gmra.mrb[0].mxu0 %v5522
        %v5771 = vpop.f32.mrb[0].mxu0
        %v5772 = vadd.f32 0.0, %v5771
        %v5773 = vpop.f32.mrb[0].mxu0
        %v5774 = vpop.f32.mrb[0].mxu0
        %v5775 = vadd.f32 0.0, %v5774
        %v5776 = vpop.f32.mrb[0].mxu0
        %5777 = vmatprep.mubr.bf16.mxu0 0
        %5778 = vmatmul.mubr.bf16.gmra.mrb[0].mxu0 %v5524
        %v5779 = vpop.f32.mrb[0].mxu0
        %v5780 = vadd.f32 0.0, %v5779
        %v5781 = vpop.f32.mrb[0].mxu0
        %v5782 = vpop.f32.mrb[0].mxu0
        %v5783 = vadd.f32 0.0, %v5782
        %v5784 = vpop.f32.mrb[0].mxu0
        %5785 = vmatprep.mubr.bf16.mxu0 0
        %5786 = vmatmul.mubr.bf16.gmra.mrb[0].mxu0 %v5526
        %v5787 = vpop.f32.mrb[0].mxu0
        %v5788 = vadd.f32 0.0, %v5787
        %v5789 = vpop.f32.mrb[0].mxu0
        %v5790 = vpop.f32.mrb[0].mxu0
        %v5791 = vadd.f32 0.0, %v5790
        %v5792 = vpop.f32.mrb[0].mxu0
        %5793 = vmatprep.mubr.bf16.mxu0 0
        %5794 = vmatmul.mubr.bf16.gmra.mrb[0].mxu0 %v5528
        %v5795 = vpop.f32.mrb[0].mxu0
        %v5796 = vadd.f32 0.0, %v5795
        %v5797 = vpop.f32.mrb[0].mxu0
        %v5798 = vpop.f32.mrb[0].mxu0
        %v5799 = vadd.f32 0.0, %v5798
        %v5800 = vpop.f32.mrb[0].mxu0
        %5801 = vmatprep.mubr.bf16.mxu0 0
        %5802 = vmatmul.mubr.bf16.gmra.mrb[0].mxu0 %v5530
        %v5803 = vpop.f32.mrb[0].mxu0
        %v5804 = vadd.f32 0.0, %v5803
        %v5805 = vpop.f32.mrb[0].mxu0
        %v5806 = vpop.f32.mrb[0].mxu0
        %v5807 = vadd.f32 0.0, %v5806
        %v5808 = vpop.f32.mrb[0].mxu0
        %5809 = vmatprep.mubr.bf16.mxu0 0
        %5810 = vmatmul.mubr.bf16.gmra.mrb[0].mxu0 %v5532
        %v5811 = vpop.f32.mrb[0].mxu0
        %v5812 = vadd.f32 0.0, %v5811
        %v5813 = vpop.f32.mrb[0].mxu0
        %v5814 = vpop.f32.mrb[0].mxu0
        %v5815 = vadd.f32 0.0, %v5814
        %v5816 = vpop.f32.mrb[0].mxu0
        %5817 = vmatprep.mubr.bf16.mxu0 0
        %5818 = vmatmul.mubr.bf16.gmra.mrb[0].mxu0 %v5534
        %v5819 = vpop.f32.mrb[0].mxu0
        %v5820 = vadd.f32 0.0, %v5819
        %v5821 = vpop.f32.mrb[0].mxu0
        %v5822 = vpop.f32.mrb[0].mxu0
        %v5823 = vadd.f32 0.0, %v5822
        %v5824 = vpop.f32.mrb[0].mxu0
        %5825 = vmatprep.mubr.bf16.mxu0 0
        %5826 = vmatmul.mubr.bf16.gmra.mrb[0].mxu0 %v5536
        %v5827 = vpop.f32.mrb[0].mxu0
        %v5828 = vadd.f32 0.0, %v5827
        %v5829 = vpop.f32.mrb[0].mxu0
        %v5830 = vpop.f32.mrb[0].mxu0
        %v5831 = vadd.f32 0.0, %v5830
        %v5832 = vpop.f32.mrb[0].mxu0
        %5833 = vdwg.mxu0
        %v5834 = vadd.f32 %v5251, %v5644
        %v5835 = vadd.f32 %v5252, %v5647
        %v5836 = vadd.f32 %v5253, %v5652
        %v5837 = vadd.f32 %v5254, %v5655
        %v5838 = vadd.f32 %v5255, %v5660
        %v5839 = vadd.f32 %v5256, %v5663
        %v5840 = vadd.f32 %v5257, %v5668
        %v5841 = vadd.f32 %v5258, %v5671
        %v5842 = vadd.f32 %v5259, %v5676
        %v5843 = vadd.f32 %v5260, %v5679
        %v5844 = vadd.f32 %v5261, %v5684
        %v5845 = vadd.f32 %v5262, %v5687
        %v5846 = vadd.f32 %v5263, %v5692
        %v5847 = vadd.f32 %v5264, %v5695
        %v5848 = vadd.f32 %v5265, %v5700
        %v5849 = vadd.f32 %v5266, %v5703
        %v5850 = vadd.f32 %v5267, %v5708
        %v5851 = vadd.f32 %v5268, %v5711
        %v5852 = vadd.f32 %v5269, %v5716
        %v5853 = vadd.f32 %v5270, %v5719
        %v5854 = vadd.f32 %v5271, %v5724
        %v5855 = vadd.f32 %v5272, %v5727
        %v5856 = vadd.f32 %v5273, %v5732
        %v5857 = vadd.f32 %v5274, %v5735
        %v5858 = vadd.f32 %v5275, %v5740
        %v5859 = vadd.f32 %v5276, %v5743
        %v5860 = vadd.f32 %v5277, %v5748
        %v5861 = vadd.f32 %v5278, %v5751
        %v5862 = vadd.f32 %v5279, %v5756
        %v5863 = vadd.f32 %v5280, %v5759
        %v5864 = vadd.f32 %v5281, %v5764
        %v5865 = vadd.f32 %v5282, %v5767
        %v5866 = vadd.f32 %v5283, %v5772
        %v5867 = vadd.f32 %v5284, %v5775
        %v5868 = vadd.f32 %v5285, %v5780
        %v5869 = vadd.f32 %v5286, %v5783
        %v5870 = vadd.f32 %v5287, %v5788
        %v5871 = vadd.f32 %v5288, %v5791
        %v5872 = vadd.f32 %v5289, %v5796
        %v5873 = vadd.f32 %v5290, %v5799
        %v5874 = vadd.f32 %v5291, %v5804
        %v5875 = vadd.f32 %v5292, %v5807
        %v5876 = vadd.f32 %v5293, %v5812
        %v5877 = vadd.f32 %v5294, %v5815
        %v5878 = vadd.f32 %v5295, %v5820
        %v5879 = vadd.f32 %v5296, %v5823
        %v5880 = vadd.f32 %v5297, %v5828
        %v5881 = vadd.f32 %v5298, %v5831
        %5882 = vst [vmem:[#allocation4] sm:$0xff] %v5834
        %5883 = vst [vmem:[#allocation4 + $0x8] sm:$0xff] %v5835
        %5884 = vst [vmem:[#allocation4 + $0x10] sm:$0xff] %v5836
        %5885 = vst [vmem:[#allocation4 + $0x18] sm:$0xff] %v5837
        %5886 = vst [vmem:[#allocation4 + $0x20] sm:$0xff] %v5838
        %5887 = vst [vmem:[#allocation4 + $0x28] sm:$0xff] %v5839
        %5888 = vst [vmem:[#allocation4 + $0x30] sm:$0xff] %v5840
        %5889 = vst [vmem:[#allocation4 + $0x38] sm:$0xff] %v5841
        %5890 = vst [vmem:[#allocation4 + $0x40] sm:$0xff] %v5842
        %5891 = vst [vmem:[#allocation4 + $0x48] sm:$0xff] %v5843
        %5892 = vst [vmem:[#allocation4 + $0x50] sm:$0xff] %v5844
        %5893 = vst [vmem:[#allocation4 + $0x58] sm:$0xff] %v5845
        %5894 = vst [vmem:[#allocation4 + $0x60] sm:$0xff] %v5846
        %5895 = vst [vmem:[#allocation4 + $0x68] sm:$0xff] %v5847
        %5896 = vst [vmem:[#allocation4 + $0x70] sm:$0xff] %v5848
        %5897 = vst [vmem:[#allocation4 + $0x78] sm:$0xff] %v5849
        %5898 = vst [vmem:[#allocation4 + $0x80] sm:$0xff] %v5850
        %5899 = vst [vmem:[#allocation4 + $0x88] sm:$0xff] %v5851
        %5900 = vst [vmem:[#allocation4 + $0x90] sm:$0xff] %v5852
        %5901 = vst [vmem:[#allocation4 + $0x98] sm:$0xff] %v5853
        %5902 = vst [vmem:[#allocation4 + $0xa0] sm:$0xff] %v5854
        %5903 = vst [vmem:[#allocation4 + $0xa8] sm:$0xff] %v5855
        %5904 = vst [vmem:[#allocation4 + $0xb0] sm:$0xff] %v5856
        %5905 = vst [vmem:[#allocation4 + $0xb8] sm:$0xff] %v5857
        %5906 = vst [vmem:[#allocation4 + $0xc0] sm:$0xff] %v5858
        %5907 = vst [vmem:[#allocation4 + $0xc8] sm:$0xff] %v5859
        %5908 = vst [vmem:[#allocation4 + $0xd0] sm:$0xff] %v5860
        %5909 = vst [vmem:[#allocation4 + $0xd8] sm:$0xff] %v5861
        %5910 = vst [vmem:[#allocation4 + $0xe0] sm:$0xff] %v5862
        %5911 = vst [vmem:[#allocation4 + $0xe8] sm:$0xff] %v5863
        %5912 = vst [vmem:[#allocation4 + $0xf0] sm:$0xff] %v5864
        %5913 = vst [vmem:[#allocation4 + $0xf8] sm:$0xff] %v5865
        %5914 = vst [vmem:[#allocation4 + $0x100] sm:$0xff] %v5866
        %5915 = vst [vmem:[#allocation4 + $0x108] sm:$0xff] %v5867
        %5916 = vst [vmem:[#allocation4 + $0x110] sm:$0xff] %v5868
        %5917 = vst [vmem:[#allocation4 + $0x118] sm:$0xff] %v5869
        %5918 = vst [vmem:[#allocation4 + $0x120] sm:$0xff] %v5870
        %5919 = vst [vmem:[#allocation4 + $0x128] sm:$0xff] %v5871
        %5920 = vst [vmem:[#allocation4 + $0x130] sm:$0xff] %v5872
        %5921 = vst [vmem:[#allocation4 + $0x138] sm:$0xff] %v5873
        %5922 = vst [vmem:[#allocation4 + $0x140] sm:$0xff] %v5874
        %5923 = vst [vmem:[#allocation4 + $0x148] sm:$0xff] %v5875
        %5924 = vst [vmem:[#allocation4 + $0x150] sm:$0xff] %v5876
        %5925 = vst [vmem:[#allocation4 + $0x158] sm:$0xff] %v5877
        %5926 = vst [vmem:[#allocation4 + $0x160] sm:$0xff] %v5878
        %5927 = vst [vmem:[#allocation4 + $0x168] sm:$0xff] %v5879
        %5928 = vst [vmem:[#allocation4 + $0x170] sm:$0xff] %v5880
        %5929 = vst [vmem:[#allocation4 + $0x178] sm:$0xff] %v5881
        %v5930 = vld [vmem:[#allocation4] sm:$0xff]
        %v5931 = vld [vmem:[#allocation4 + $0x8] sm:$0xff]
        %v5932 = vld [vmem:[#allocation4 + $0x10] sm:$0xff]
        %v5933 = vld [vmem:[#allocation4 + $0x18] sm:$0xff]
        %v5934 = vld [vmem:[#allocation4 + $0x20] sm:$0xff]
        %v5935 = vld [vmem:[#allocation4 + $0x28] sm:$0xff]
        %v5936 = vld [vmem:[#allocation4 + $0x30] sm:$0xff]
        %v5937 = vld [vmem:[#allocation4 + $0x38] sm:$0xff]
        %v5938 = vld [vmem:[#allocation4 + $0x40] sm:$0xff]
        %v5939 = vld [vmem:[#allocation4 + $0x48] sm:$0xff]
        %v5940 = vld [vmem:[#allocation4 + $0x50] sm:$0xff]
        %v5941 = vld [vmem:[#allocation4 + $0x58] sm:$0xff]
        %v5942 = vld [vmem:[#allocation4 + $0x60] sm:$0xff]
        %v5943 = vld [vmem:[#allocation4 + $0x68] sm:$0xff]
        %v5944 = vld [vmem:[#allocation4 + $0x70] sm:$0xff]
        %v5945 = vld [vmem:[#allocation4 + $0x78] sm:$0xff]
        %v5946 = vld [vmem:[#allocation4 + $0x80] sm:$0xff]
        %v5947 = vld [vmem:[#allocation4 + $0x88] sm:$0xff]
        %v5948 = vld [vmem:[#allocation4 + $0x90] sm:$0xff]
        %v5949 = vld [vmem:[#allocation4 + $0x98] sm:$0xff]
        %v5950 = vld [vmem:[#allocation4 + $0xa0] sm:$0xff]
        %v5951 = vld [vmem:[#allocation4 + $0xa8] sm:$0xff]
        %v5952 = vld [vmem:[#allocation4 + $0xb0] sm:$0xff]
        %v5953 = vld [vmem:[#allocation4 + $0xb8] sm:$0xff]
        %v5954 = vld [vmem:[#allocation4 + $0xc0] sm:$0xff]
        %v5955 = vld [vmem:[#allocation4 + $0xc8] sm:$0xff]
        %v5956 = vld [vmem:[#allocation4 + $0xd0] sm:$0xff]
        %v5957 = vld [vmem:[#allocation4 + $0xd8] sm:$0xff]
        %v5958 = vld [vmem:[#allocation4 + $0xe0] sm:$0xff]
        %v5959 = vld [vmem:[#allocation4 + $0xe8] sm:$0xff]
        %v5960 = vld [vmem:[#allocation4 + $0xf0] sm:$0xff]
        %v5961 = vld [vmem:[#allocation4 + $0xf8] sm:$0xff]
        %v5962 = vld [vmem:[#allocation4 + $0x100] sm:$0xff]
        %v5963 = vld [vmem:[#allocation4 + $0x108] sm:$0xff]
        %v5964 = vld [vmem:[#allocation4 + $0x110] sm:$0xff]
        %v5965 = vld [vmem:[#allocation4 + $0x118] sm:$0xff]
        %v5966 = vld [vmem:[#allocation4 + $0x120] sm:$0xff]
        %v5967 = vld [vmem:[#allocation4 + $0x128] sm:$0xff]
        %v5968 = vld [vmem:[#allocation4 + $0x130] sm:$0xff]
        %v5969 = vld [vmem:[#allocation4 + $0x138] sm:$0xff]
        %v5970 = vld [vmem:[#allocation4 + $0x140] sm:$0xff]
        %v5971 = vld [vmem:[#allocation4 + $0x148] sm:$0xff]
        %v5972 = vld [vmem:[#allocation4 + $0x150] sm:$0xff]
        %v5973 = vld [vmem:[#allocation4 + $0x158] sm:$0xff]
        %v5974 = vld [vmem:[#allocation4 + $0x160] sm:$0xff]
        %v5975 = vld [vmem:[#allocation4 + $0x168] sm:$0xff]
        %v5976 = vld [vmem:[#allocation4 + $0x170] sm:$0xff]
        %v5977 = vld [vmem:[#allocation4 + $0x178] sm:$0xff]
        %v5978 = vld [vmem:[%s703 + $0x30] sm:$0xc]
        %v5979 = vld [vmem:[%s703 + $0x34] sm:$0xf]
        %v5980 = vld [vmem:[%s703 + $0x38] sm:$0xf]
        %v5981 = vld [vmem:[%s703 + $0x3c] sm:$0xf]
        %v5982 = vld [vmem:[%s703 + $0x40] sm:$0xf]
        %v5983 = vld [vmem:[%s703 + $0x44] sm:$0xf]
        %v5984 = vld [vmem:[%s703 + $0x48] sm:$0xf]
        %v5985 = vld [vmem:[%s703 + $0x4c] sm:$0xf]
        %v5986 = vld [vmem:[%s703 + $0x50] sm:$0xf]
        %v5987 = vld [vmem:[%s703 + $0x54] sm:$0xf]
        %v5988 = vld [vmem:[%s703 + $0x58] sm:$0xf]
        %v5989 = vld [vmem:[%s703 + $0x5c] sm:$0xf]
        %v5990 = vld [vmem:[%s703 + $0x60] sm:$0xf]
        %v5991 = vld [vmem:[%s703 + $0x64] sm:$0xf]
        %v5992 = vld [vmem:[%s703 + $0x68] sm:$0xf]
        %v5993 = vld [vmem:[%s703 + $0x6c] sm:$0xf]
        %v5994 = vld [vmem:[%s703 + $0x70] sm:$0xf]
        %v5995 = vld [vmem:[%s703 + $0x74] sm:$0xf]
        %v5996 = vld [vmem:[%s703 + $0x78] sm:$0xf]
        %v5997 = vld [vmem:[%s703 + $0x7c] sm:$0xf]
        %v5998 = vld [vmem:[%s703 + $0x80] sm:$0xf]
        %v5999 = vld [vmem:[%s703 + $0x84] sm:$0xf]
        %v6000 = vld [vmem:[%s703 + $0x88] sm:$0xf]
        %v6001 = vld [vmem:[%s703 + $0x8c] sm:$0xf]
        %v6002 = vld [vmem:[%s703 + $0x90] sm:$0xf]
        %v6003 = vld [vmem:[%s703 + $0x94] sm:$0xf]
        %v6004 = vld [vmem:[%s703 + $0x98] sm:$0xf]
        %v6005 = vld [vmem:[%s703 + $0x9c] sm:$0xf]
        %v6006 = vld [vmem:[%s703 + $0xa0] sm:$0xf]
        %v6007 = vld [vmem:[%s703 + $0xa4] sm:$0xf]
        %v6008 = vld [vmem:[%s703 + $0xa8] sm:$0xf]
        %v6009 = vld [vmem:[%s703 + $0xac] sm:$0xf]
        %v6010 = vld [vmem:[%s703 + $0xb0] sm:$0xf]
        %v6011 = vld [vmem:[%s703 + $0xb4] sm:$0xf]
        %v6012 = vld [vmem:[%s703 + $0xb8] sm:$0xf]
        %v6013 = vld [vmem:[%s703 + $0xbc] sm:$0xf]
        %v6014 = vld [vmem:[%s703 + $0xc0] sm:$0xf]
        %v6015 = vld [vmem:[%s703 + $0xc4] sm:$0xf]
        %v6016 = vld [vmem:[%s703 + $0xc8] sm:$0xf]
        %v6017 = vld [vmem:[%s703 + $0xcc] sm:$0xf]
        %v6018 = vld [vmem:[%s703 + $0xd0] sm:$0xf]
        %v6019 = vld [vmem:[%s703 + $0xd4] sm:$0xf]
        %v6020 = vld [vmem:[%s703 + $0xd8] sm:$0xf]
        %v6021 = vld [vmem:[%s703 + $0xdc] sm:$0xf]
        %v6022 = vld [vmem:[%s703 + $0xe0] sm:$0xf]
        %v6023 = vld [vmem:[%s703 + $0xe4] sm:$0xf]
        %v6024 = vld [vmem:[%s703 + $0xe8] sm:$0xf]
        %v6025 = vld [vmem:[%s703 + $0xec] sm:$0xf]
        %v6026 = vld [vmem:[%s703 + $0xf0] sm:$0x3]
        %s6027 = scalar_lea.vmem [#allocation5], 512
        %v6028 = vld [vmem:[%s6027] sm:$0xf]
        %v6029 = vld [vmem:[%s6027 + $0x4] sm:$0xf]
        %v6030 = vld [vmem:[%s6027 + $0x8] sm:$0xf]
        %v6031 = vld [vmem:[%s6027 + $0xc] sm:$0xf]
        %v6032 = vld [vmem:[%s6027 + $0x10] sm:$0xf]
        %v6033 = vld [vmem:[%s6027 + $0x14] sm:$0xf]
        %v6034 = vld [vmem:[%s6027 + $0x18] sm:$0xf]
        %v6035 = vld [vmem:[%s6027 + $0x1c] sm:$0xf]
        %v6036 = vld [vmem:[%s6027 + $0x20] sm:$0xf]
        %v6037 = vld [vmem:[%s6027 + $0x24] sm:$0xf]
        %v6038 = vld [vmem:[%s6027 + $0x28] sm:$0xf]
        %v6039 = vld [vmem:[%s6027 + $0x2c] sm:$0xf]
        %v6040 = vld [vmem:[%s6027 + $0x30] sm:$0xf]
        %v6041 = vld [vmem:[%s6027 + $0x34] sm:$0xf]
        %v6042 = vld [vmem:[%s6027 + $0x38] sm:$0xf]
        %v6043 = vld [vmem:[%s6027 + $0x3c] sm:$0xf]
        %v6093 = vunpack.c.l.b16 %v5978
        %v6094 = vunpack.c.l.b16 %v5979
        %v6095 = vunpack.c.l.b16 %v5980
        %v6096 = vunpack.c.l.b16 %v5981
        %v6097 = vunpack.c.l.b16 %v5982
        %v6098 = vunpack.c.l.b16 %v5983
        %v6099 = vunpack.c.l.b16 %v5984
        %v6100 = vunpack.c.l.b16 %v5985
        %v6101 = vunpack.c.l.b16 %v5986
        %v6102 = vunpack.c.l.b16 %v5987
        %v6103 = vunpack.c.l.b16 %v5988
        %v6104 = vunpack.c.l.b16 %v5989
        %v6105 = vunpack.c.l.b16 %v5990
        %v6106 = vunpack.c.l.b16 %v5991
        %v6107 = vunpack.c.l.b16 %v5992
        %v6108 = vunpack.c.l.b16 %v5993
        %v6109 = vunpack.c.l.b16 %v5994
        %v6110 = vunpack.c.l.b16 %v5995
        %v6111 = vunpack.c.l.b16 %v5996
        %v6112 = vunpack.c.l.b16 %v5997
        %v6113 = vunpack.c.l.b16 %v5998
        %v6114 = vunpack.c.l.b16 %v5999
        %v6115 = vunpack.c.l.b16 %v6000
        %v6116 = vunpack.c.l.b16 %v6001
        %v6117 = vunpack.c.l.b16 %v6002
        %v6118 = vunpack.c.l.b16 %v6003
        %v6119 = vunpack.c.l.b16 %v6004
        %v6120 = vunpack.c.l.b16 %v6005
        %v6121 = vunpack.c.l.b16 %v6006
        %v6122 = vunpack.c.l.b16 %v6007
        %v6123 = vunpack.c.l.b16 %v6008
        %v6124 = vunpack.c.l.b16 %v6009
        %v6125 = vunpack.c.l.b16 %v6010
        %v6126 = vunpack.c.l.b16 %v6011
        %v6127 = vunpack.c.l.b16 %v6012
        %v6128 = vunpack.c.l.b16 %v6013
        %v6129 = vunpack.c.l.b16 %v6014
        %v6130 = vunpack.c.l.b16 %v6015
        %v6131 = vunpack.c.l.b16 %v6016
        %v6132 = vunpack.c.l.b16 %v6017
        %v6133 = vunpack.c.l.b16 %v6018
        %v6134 = vunpack.c.l.b16 %v6019
        %v6135 = vunpack.c.l.b16 %v6020
        %v6136 = vunpack.c.l.b16 %v6021
        %v6137 = vunpack.c.l.b16 %v6022
        %v6138 = vunpack.c.l.b16 %v6023
        %v6139 = vunpack.c.l.b16 %v6024
        %v6140 = vunpack.c.l.b16 %v6025
        %v6141 = vunpack.c.l.b16 %v6026
        %v6142 = vpack.c.b16 %v6094, %v6093
        %v6143 = vpack.c.b16 %v6096, %v6095
        %v6144 = vpack.c.b16 %v6098, %v6097
        %v6145 = vpack.c.b16 %v6100, %v6099
        %v6146 = vpack.c.b16 %v6102, %v6101
        %v6147 = vpack.c.b16 %v6104, %v6103
        %v6148 = vpack.c.b16 %v6106, %v6105
        %v6149 = vpack.c.b16 %v6108, %v6107
        %v6150 = vpack.c.b16 %v6110, %v6109
        %v6151 = vpack.c.b16 %v6112, %v6111
        %v6152 = vpack.c.b16 %v6114, %v6113
        %v6153 = vpack.c.b16 %v6116, %v6115
        %v6154 = vpack.c.b16 %v6118, %v6117
        %v6155 = vpack.c.b16 %v6120, %v6119
        %v6156 = vpack.c.b16 %v6122, %v6121
        %v6157 = vpack.c.b16 %v6124, %v6123
        %v6158 = vpack.c.b16 %v6126, %v6125
        %v6159 = vpack.c.b16 %v6128, %v6127
        %v6160 = vpack.c.b16 %v6130, %v6129
        %v6161 = vpack.c.b16 %v6132, %v6131
        %v6162 = vpack.c.b16 %v6134, %v6133
        %v6163 = vpack.c.b16 %v6136, %v6135
        %v6164 = vpack.c.b16 %v6138, %v6137
        %v6165 = vpack.c.b16 %v6140, %v6139
        %v6166 = vpack.c.b16 %v6141, %v6141
        %v6167 = vrot.slane %v6142, 2
        %v6168 = vrot.slane %v6143, 2
        %v6169 = vsel %vm2198, %v6167, %v6168
        %v6170 = vrot.slane %v6144, 2
        %v6171 = vsel %vm2198, %v6168, %v6170
        %v6172 = vrot.slane %v6145, 2
        %v6173 = vsel %vm2198, %v6170, %v6172
        %v6174 = vrot.slane %v6146, 2
        %v6175 = vsel %vm2198, %v6172, %v6174
        %v6176 = vrot.slane %v6147, 2
        %v6177 = vsel %vm2198, %v6174, %v6176
        %v6178 = vrot.slane %v6148, 2
        %v6179 = vsel %vm2198, %v6176, %v6178
        %v6180 = vrot.slane %v6149, 2
        %v6181 = vsel %vm2198, %v6178, %v6180
        %v6182 = vrot.slane %v6150, 2
        %v6183 = vsel %vm2198, %v6180, %v6182
        %v6184 = vrot.slane %v6151, 2
        %v6185 = vsel %vm2198, %v6182, %v6184
        %v6186 = vrot.slane %v6152, 2
        %v6187 = vsel %vm2198, %v6184, %v6186
        %v6188 = vrot.slane %v6153, 2
        %v6189 = vsel %vm2198, %v6186, %v6188
        %v6190 = vrot.slane %v6154, 2
        %v6191 = vsel %vm2198, %v6188, %v6190
        %v6192 = vrot.slane %v6155, 2
        %v6193 = vsel %vm2198, %v6190, %v6192
        %v6194 = vrot.slane %v6156, 2
        %v6195 = vsel %vm2198, %v6192, %v6194
        %v6196 = vrot.slane %v6157, 2
        %v6197 = vsel %vm2198, %v6194, %v6196
        %v6198 = vrot.slane %v6158, 2
        %v6199 = vsel %vm2198, %v6196, %v6198
        %v6200 = vrot.slane %v6159, 2
        %v6201 = vsel %vm2198, %v6198, %v6200
        %v6202 = vrot.slane %v6160, 2
        %v6203 = vsel %vm2198, %v6200, %v6202
        %v6204 = vrot.slane %v6161, 2
        %v6205 = vsel %vm2198, %v6202, %v6204
        %v6206 = vrot.slane %v6162, 2
        %v6207 = vsel %vm2198, %v6204, %v6206
        %v6208 = vrot.slane %v6163, 2
        %v6209 = vsel %vm2198, %v6206, %v6208
        %v6210 = vrot.slane %v6164, 2
        %v6211 = vsel %vm2198, %v6208, %v6210
        %v6212 = vrot.slane %v6165, 2
        %v6213 = vsel %vm2198, %v6210, %v6212
        %v6214 = vrot.slane %v6166, 2
        %v6215 = vsel %vm2198, %v6212, %v6214
        %v6256 = vunpack.c.l.b16 %v6028
        %v6257 = vunpack.c.l.b16 %v6029
        %v6258 = vunpack.c.l.b16 %v6030
        %v6259 = vunpack.c.l.b16 %v6031
        %v6260 = vunpack.c.l.b16 %v6032
        %v6261 = vunpack.c.l.b16 %v6033
        %v6262 = vunpack.c.l.b16 %v6034
        %v6263 = vunpack.c.l.b16 %v6035
        %v6264 = vunpack.c.l.b16 %v6036
        %v6265 = vunpack.c.l.b16 %v6037
        %v6266 = vunpack.c.l.b16 %v6038
        %v6267 = vunpack.c.l.b16 %v6039
        %v6268 = vunpack.c.l.b16 %v6040
        %v6269 = vunpack.c.l.b16 %v6041
        %v6270 = vunpack.c.l.b16 %v6042
        %v6271 = vunpack.c.l.b16 %v6043
        %v6272 = vpack.c.b16 %v6257, %v6256
        %v6273 = vpack.c.b16 %v6259, %v6258
        %v6274 = vpack.c.b16 %v6261, %v6260
        %v6275 = vpack.c.b16 %v6263, %v6262
        %v6276 = vpack.c.b16 %v6265, %v6264
        %v6277 = vpack.c.b16 %v6267, %v6266
        %v6278 = vpack.c.b16 %v6269, %v6268
        %v6279 = vpack.c.b16 %v6271, %v6270
        %6288 = vmatprep.subr.bf16.mxu0 0
        %6289 = vmatpush1.bf16.msra.mxu0 %v6272
        %6290 = vmatprep.subr.bf16.mxu0 0
        %6291 = vmatpush1.bf16.msra.mxu0 %v6273
        %6292 = vmatprep.subr.bf16.mxu0 0
        %6293 = vmatpush1.bf16.msra.mxu0 %v6274
        %6294 = vmatprep.subr.bf16.mxu0 0
        %6295 = vmatpush1.bf16.msra.mxu0 %v6275
        %6296 = vmatprep.subr.bf16.mxu0 0
        %6297 = vmatpush1.bf16.msra.mxu0 %v6276
        %6298 = vmatprep.subr.bf16.mxu0 0
        %6299 = vmatpush1.bf16.msra.mxu0 %v6277
        %6300 = vmatprep.subr.bf16.mxu0 0
        %6301 = vmatpush1.bf16.msra.mxu0 %v6278
        %6302 = vmatprep.subr.bf16.mxu0 0
        %6303 = vmatpush1.bf16.msra.mxu0 %v6279
        %6304 = vmatprep.subr.bf16.mxu0 0
        %6305 = vmatpush1.bf16.msra.mxu0 0
        %6306 = vmatprep.subr.bf16.mxu0 0
        %6307 = vmatpush1.bf16.msra.mxu0 0
        %6308 = vmatprep.subr.bf16.mxu0 0
        %6309 = vmatpush1.bf16.msra.mxu0 0
        %6310 = vmatprep.subr.bf16.mxu0 0
        %6311 = vmatpush1.bf16.msra.mxu0 0
        %6312 = vmatprep.subr.bf16.mxu0 0
        %6313 = vmatpush1.bf16.msra.mxu0 0
        %6314 = vmatprep.subr.bf16.mxu0 0
        %6315 = vmatpush1.bf16.msra.mxu0 0
        %6316 = vmatprep.subr.bf16.mxu0 0
        %6317 = vmatpush1.bf16.msra.mxu0 0
        %6318 = vmatprep.subr.bf16.mxu0 0
        %6319 = vmatpush1.bf16.msra.mxu0 0
        %6320 = vmatprep.mubr.bf16.mxu0 0
        %6321 = vmatmul.mubr.bf16.gmra.mrb[0].mxu0 %v6169
        %v6322 = vpop.f32.mrb[0].mxu0
        %v6323 = vadd.f32 0.0, %v6322
        %v6324 = vpop.f32.mrb[0].mxu0
        %v6325 = vpop.f32.mrb[0].mxu0
        %v6326 = vadd.f32 0.0, %v6325
        %v6327 = vpop.f32.mrb[0].mxu0
        %6328 = vmatprep.mubr.bf16.mxu0 0
        %6329 = vmatmul.mubr.bf16.gmra.mrb[0].mxu0 %v6171
        %v6330 = vpop.f32.mrb[0].mxu0
        %v6331 = vadd.f32 0.0, %v6330
        %v6332 = vpop.f32.mrb[0].mxu0
        %v6333 = vpop.f32.mrb[0].mxu0
        %v6334 = vadd.f32 0.0, %v6333
        %v6335 = vpop.f32.mrb[0].mxu0
        %6336 = vmatprep.mubr.bf16.mxu0 0
        %6337 = vmatmul.mubr.bf16.gmra.mrb[0].mxu0 %v6173
        %v6338 = vpop.f32.mrb[0].mxu0
        %v6339 = vadd.f32 0.0, %v6338
        %v6340 = vpop.f32.mrb[0].mxu0
        %v6341 = vpop.f32.mrb[0].mxu0
        %v6342 = vadd.f32 0.0, %v6341
        %v6343 = vpop.f32.mrb[0].mxu0
        %6344 = vmatprep.mubr.bf16.mxu0 0
        %6345 = vmatmul.mubr.bf16.gmra.mrb[0].mxu0 %v6175
        %v6346 = vpop.f32.mrb[0].mxu0
        %v6347 = vadd.f32 0.0, %v6346
        %v6348 = vpop.f32.mrb[0].mxu0
        %v6349 = vpop.f32.mrb[0].mxu0
        %v6350 = vadd.f32 0.0, %v6349
        %v6351 = vpop.f32.mrb[0].mxu0
        %6352 = vmatprep.mubr.bf16.mxu0 0
        %6353 = vmatmul.mubr.bf16.gmra.mrb[0].mxu0 %v6177
        %v6354 = vpop.f32.mrb[0].mxu0
        %v6355 = vadd.f32 0.0, %v6354
        %v6356 = vpop.f32.mrb[0].mxu0
        %v6357 = vpop.f32.mrb[0].mxu0
        %v6358 = vadd.f32 0.0, %v6357
        %v6359 = vpop.f32.mrb[0].mxu0
        %6360 = vmatprep.mubr.bf16.mxu0 0
        %6361 = vmatmul.mubr.bf16.gmra.mrb[0].mxu0 %v6179
        %v6362 = vpop.f32.mrb[0].mxu0
        %v6363 = vadd.f32 0.0, %v6362
        %v6364 = vpop.f32.mrb[0].mxu0
        %v6365 = vpop.f32.mrb[0].mxu0
        %v6366 = vadd.f32 0.0, %v6365
        %v6367 = vpop.f32.mrb[0].mxu0
        %6368 = vmatprep.mubr.bf16.mxu0 0
        %6369 = vmatmul.mubr.bf16.gmra.mrb[0].mxu0 %v6181
        %v6370 = vpop.f32.mrb[0].mxu0
        %v6371 = vadd.f32 0.0, %v6370
        %v6372 = vpop.f32.mrb[0].mxu0
        %v6373 = vpop.f32.mrb[0].mxu0
        %v6374 = vadd.f32 0.0, %v6373
        %v6375 = vpop.f32.mrb[0].mxu0
        %6376 = vmatprep.mubr.bf16.mxu0 0
        %6377 = vmatmul.mubr.bf16.gmra.mrb[0].mxu0 %v6183
        %v6378 = vpop.f32.mrb[0].mxu0
        %v6379 = vadd.f32 0.0, %v6378
        %v6380 = vpop.f32.mrb[0].mxu0
        %v6381 = vpop.f32.mrb[0].mxu0
        %v6382 = vadd.f32 0.0, %v6381
        %v6383 = vpop.f32.mrb[0].mxu0
        %6384 = vmatprep.mubr.bf16.mxu0 0
        %6385 = vmatmul.mubr.bf16.gmra.mrb[0].mxu0 %v6185
        %v6386 = vpop.f32.mrb[0].mxu0
        %v6387 = vadd.f32 0.0, %v6386
        %v6388 = vpop.f32.mrb[0].mxu0
        %v6389 = vpop.f32.mrb[0].mxu0
        %v6390 = vadd.f32 0.0, %v6389
        %v6391 = vpop.f32.mrb[0].mxu0
        %6392 = vmatprep.mubr.bf16.mxu0 0
        %6393 = vmatmul.mubr.bf16.gmra.mrb[0].mxu0 %v6187
        %v6394 = vpop.f32.mrb[0].mxu0
        %v6395 = vadd.f32 0.0, %v6394
        %v6396 = vpop.f32.mrb[0].mxu0
        %v6397 = vpop.f32.mrb[0].mxu0
        %v6398 = vadd.f32 0.0, %v6397
        %v6399 = vpop.f32.mrb[0].mxu0
        %6400 = vmatprep.mubr.bf16.mxu0 0
        %6401 = vmatmul.mubr.bf16.gmra.mrb[0].mxu0 %v6189
        %v6402 = vpop.f32.mrb[0].mxu0
        %v6403 = vadd.f32 0.0, %v6402
        %v6404 = vpop.f32.mrb[0].mxu0
        %v6405 = vpop.f32.mrb[0].mxu0
        %v6406 = vadd.f32 0.0, %v6405
        %v6407 = vpop.f32.mrb[0].mxu0
        %6408 = vmatprep.mubr.bf16.mxu0 0
        %6409 = vmatmul.mubr.bf16.gmra.mrb[0].mxu0 %v6191
        %v6410 = vpop.f32.mrb[0].mxu0
        %v6411 = vadd.f32 0.0, %v6410
        %v6412 = vpop.f32.mrb[0].mxu0
        %v6413 = vpop.f32.mrb[0].mxu0
        %v6414 = vadd.f32 0.0, %v6413
        %v6415 = vpop.f32.mrb[0].mxu0
        %6416 = vmatprep.mubr.bf16.mxu0 0
        %6417 = vmatmul.mubr.bf16.gmra.mrb[0].mxu0 %v6193
        %v6418 = vpop.f32.mrb[0].mxu0
        %v6419 = vadd.f32 0.0, %v6418
        %v6420 = vpop.f32.mrb[0].mxu0
        %v6421 = vpop.f32.mrb[0].mxu0
        %v6422 = vadd.f32 0.0, %v6421
        %v6423 = vpop.f32.mrb[0].mxu0
        %6424 = vmatprep.mubr.bf16.mxu0 0
        %6425 = vmatmul.mubr.bf16.gmra.mrb[0].mxu0 %v6195
        %v6426 = vpop.f32.mrb[0].mxu0
        %v6427 = vadd.f32 0.0, %v6426
        %v6428 = vpop.f32.mrb[0].mxu0
        %v6429 = vpop.f32.mrb[0].mxu0
        %v6430 = vadd.f32 0.0, %v6429
        %v6431 = vpop.f32.mrb[0].mxu0
        %6432 = vmatprep.mubr.bf16.mxu0 0
        %6433 = vmatmul.mubr.bf16.gmra.mrb[0].mxu0 %v6197
        %v6434 = vpop.f32.mrb[0].mxu0
        %v6435 = vadd.f32 0.0, %v6434
        %v6436 = vpop.f32.mrb[0].mxu0
        %v6437 = vpop.f32.mrb[0].mxu0
        %v6438 = vadd.f32 0.0, %v6437
        %v6439 = vpop.f32.mrb[0].mxu0
        %6440 = vmatprep.mubr.bf16.mxu0 0
        %6441 = vmatmul.mubr.bf16.gmra.mrb[0].mxu0 %v6199
        %v6442 = vpop.f32.mrb[0].mxu0
        %v6443 = vadd.f32 0.0, %v6442
        %v6444 = vpop.f32.mrb[0].mxu0
        %v6445 = vpop.f32.mrb[0].mxu0
        %v6446 = vadd.f32 0.0, %v6445
        %v6447 = vpop.f32.mrb[0].mxu0
        %6448 = vmatprep.mubr.bf16.mxu0 0
        %6449 = vmatmul.mubr.bf16.gmra.mrb[0].mxu0 %v6201
        %v6450 = vpop.f32.mrb[0].mxu0
        %v6451 = vadd.f32 0.0, %v6450
        %v6452 = vpop.f32.mrb[0].mxu0
        %v6453 = vpop.f32.mrb[0].mxu0
        %v6454 = vadd.f32 0.0, %v6453
        %v6455 = vpop.f32.mrb[0].mxu0
        %6456 = vmatprep.mubr.bf16.mxu0 0
        %6457 = vmatmul.mubr.bf16.gmra.mrb[0].mxu0 %v6203
        %v6458 = vpop.f32.mrb[0].mxu0
        %v6459 = vadd.f32 0.0, %v6458
        %v6460 = vpop.f32.mrb[0].mxu0
        %v6461 = vpop.f32.mrb[0].mxu0
        %v6462 = vadd.f32 0.0, %v6461
        %v6463 = vpop.f32.mrb[0].mxu0
        %6464 = vmatprep.mubr.bf16.mxu0 0
        %6465 = vmatmul.mubr.bf16.gmra.mrb[0].mxu0 %v6205
        %v6466 = vpop.f32.mrb[0].mxu0
        %v6467 = vadd.f32 0.0, %v6466
        %v6468 = vpop.f32.mrb[0].mxu0
        %v6469 = vpop.f32.mrb[0].mxu0
        %v6470 = vadd.f32 0.0, %v6469
        %v6471 = vpop.f32.mrb[0].mxu0
        %6472 = vmatprep.mubr.bf16.mxu0 0
        %6473 = vmatmul.mubr.bf16.gmra.mrb[0].mxu0 %v6207
        %v6474 = vpop.f32.mrb[0].mxu0
        %v6475 = vadd.f32 0.0, %v6474
        %v6476 = vpop.f32.mrb[0].mxu0
        %v6477 = vpop.f32.mrb[0].mxu0
        %v6478 = vadd.f32 0.0, %v6477
        %v6479 = vpop.f32.mrb[0].mxu0
        %6480 = vmatprep.mubr.bf16.mxu0 0
        %6481 = vmatmul.mubr.bf16.gmra.mrb[0].mxu0 %v6209
        %v6482 = vpop.f32.mrb[0].mxu0
        %v6483 = vadd.f32 0.0, %v6482
        %v6484 = vpop.f32.mrb[0].mxu0
        %v6485 = vpop.f32.mrb[0].mxu0
        %v6486 = vadd.f32 0.0, %v6485
        %v6487 = vpop.f32.mrb[0].mxu0
        %6488 = vmatprep.mubr.bf16.mxu0 0
        %6489 = vmatmul.mubr.bf16.gmra.mrb[0].mxu0 %v6211
        %v6490 = vpop.f32.mrb[0].mxu0
        %v6491 = vadd.f32 0.0, %v6490
        %v6492 = vpop.f32.mrb[0].mxu0
        %v6493 = vpop.f32.mrb[0].mxu0
        %v6494 = vadd.f32 0.0, %v6493
        %v6495 = vpop.f32.mrb[0].mxu0
        %6496 = vmatprep.mubr.bf16.mxu0 0
        %6497 = vmatmul.mubr.bf16.gmra.mrb[0].mxu0 %v6213
        %v6498 = vpop.f32.mrb[0].mxu0
        %v6499 = vadd.f32 0.0, %v6498
        %v6500 = vpop.f32.mrb[0].mxu0
        %v6501 = vpop.f32.mrb[0].mxu0
        %v6502 = vadd.f32 0.0, %v6501
        %v6503 = vpop.f32.mrb[0].mxu0
        %6504 = vmatprep.mubr.bf16.mxu0 0
        %6505 = vmatmul.mubr.bf16.gmra.mrb[0].mxu0 %v6215
        %v6506 = vpop.f32.mrb[0].mxu0
        %v6507 = vadd.f32 0.0, %v6506
        %v6508 = vpop.f32.mrb[0].mxu0
        %v6509 = vpop.f32.mrb[0].mxu0
        %v6510 = vadd.f32 0.0, %v6509
        %v6511 = vpop.f32.mrb[0].mxu0
        %6512 = vdwg.mxu0
        %v6513 = vadd.f32 %v5930, %v6323
        %v6514 = vadd.f32 %v5931, %v6326
        %v6515 = vadd.f32 %v5932, %v6331
        %v6516 = vadd.f32 %v5933, %v6334
        %v6517 = vadd.f32 %v5934, %v6339
        %v6518 = vadd.f32 %v5935, %v6342
        %v6519 = vadd.f32 %v5936, %v6347
        %v6520 = vadd.f32 %v5937, %v6350
        %v6521 = vadd.f32 %v5938, %v6355
        %v6522 = vadd.f32 %v5939, %v6358
        %v6523 = vadd.f32 %v5940, %v6363
        %v6524 = vadd.f32 %v5941, %v6366
        %v6525 = vadd.f32 %v5942, %v6371
        %v6526 = vadd.f32 %v5943, %v6374
        %v6527 = vadd.f32 %v5944, %v6379
        %v6528 = vadd.f32 %v5945, %v6382
        %v6529 = vadd.f32 %v5946, %v6387
        %v6530 = vadd.f32 %v5947, %v6390
        %v6531 = vadd.f32 %v5948, %v6395
        %v6532 = vadd.f32 %v5949, %v6398
        %v6533 = vadd.f32 %v5950, %v6403
        %v6534 = vadd.f32 %v5951, %v6406
        %v6535 = vadd.f32 %v5952, %v6411
        %v6536 = vadd.f32 %v5953, %v6414
        %v6537 = vadd.f32 %v5954, %v6419
        %v6538 = vadd.f32 %v5955, %v6422
        %v6539 = vadd.f32 %v5956, %v6427
        %v6540 = vadd.f32 %v5957, %v6430
        %v6541 = vadd.f32 %v5958, %v6435
        %v6542 = vadd.f32 %v5959, %v6438
        %v6543 = vadd.f32 %v5960, %v6443
        %v6544 = vadd.f32 %v5961, %v6446
        %v6545 = vadd.f32 %v5962, %v6451
        %v6546 = vadd.f32 %v5963, %v6454
        %v6547 = vadd.f32 %v5964, %v6459
        %v6548 = vadd.f32 %v5965, %v6462
        %v6549 = vadd.f32 %v5966, %v6467
        %v6550 = vadd.f32 %v5967, %v6470
        %v6551 = vadd.f32 %v5968, %v6475
        %v6552 = vadd.f32 %v5969, %v6478
        %v6553 = vadd.f32 %v5970, %v6483
        %v6554 = vadd.f32 %v5971, %v6486
        %v6555 = vadd.f32 %v5972, %v6491
        %v6556 = vadd.f32 %v5973, %v6494
        %v6557 = vadd.f32 %v5974, %v6499
        %v6558 = vadd.f32 %v5975, %v6502
        %v6559 = vadd.f32 %v5976, %v6507
        %v6560 = vadd.f32 %v5977, %v6510
        %6561 = vst [vmem:[#allocation4] sm:$0xff] %v6513
        %6562 = vst [vmem:[#allocation4 + $0x8] sm:$0xff] %v6514
        %6563 = vst [vmem:[#allocation4 + $0x10] sm:$0xff] %v6515
        %6564 = vst [vmem:[#allocation4 + $0x18] sm:$0xff] %v6516
        %6565 = vst [vmem:[#allocation4 + $0x20] sm:$0xff] %v6517
        %6566 = vst [vmem:[#allocation4 + $0x28] sm:$0xff] %v6518
        %6567 = vst [vmem:[#allocation4 + $0x30] sm:$0xff] %v6519
        %6568 = vst [vmem:[#allocation4 + $0x38] sm:$0xff] %v6520
        %6569 = vst [vmem:[#allocation4 + $0x40] sm:$0xff] %v6521
        %6570 = vst [vmem:[#allocation4 + $0x48] sm:$0xff] %v6522
        %6571 = vst [vmem:[#allocation4 + $0x50] sm:$0xff] %v6523
        %6572 = vst [vmem:[#allocation4 + $0x58] sm:$0xff] %v6524
        %6573 = vst [vmem:[#allocation4 + $0x60] sm:$0xff] %v6525
        %6574 = vst [vmem:[#allocation4 + $0x68] sm:$0xff] %v6526
        %6575 = vst [vmem:[#allocation4 + $0x70] sm:$0xff] %v6527
        %6576 = vst [vmem:[#allocation4 + $0x78] sm:$0xff] %v6528
        %6577 = vst [vmem:[#allocation4 + $0x80] sm:$0xff] %v6529
        %6578 = vst [vmem:[#allocation4 + $0x88] sm:$0xff] %v6530
        %6579 = vst [vmem:[#allocation4 + $0x90] sm:$0xff] %v6531
        %6580 = vst [vmem:[#allocation4 + $0x98] sm:$0xff] %v6532
        %6581 = vst [vmem:[#allocation4 + $0xa0] sm:$0xff] %v6533
        %6582 = vst [vmem:[#allocation4 + $0xa8] sm:$0xff] %v6534
        %6583 = vst [vmem:[#allocation4 + $0xb0] sm:$0xff] %v6535
        %6584 = vst [vmem:[#allocation4 + $0xb8] sm:$0xff] %v6536
        %6585 = vst [vmem:[#allocation4 + $0xc0] sm:$0xff] %v6537
        %6586 = vst [vmem:[#allocation4 + $0xc8] sm:$0xff] %v6538
        %6587 = vst [vmem:[#allocation4 + $0xd0] sm:$0xff] %v6539
        %6588 = vst [vmem:[#allocation4 + $0xd8] sm:$0xff] %v6540
        %6589 = vst [vmem:[#allocation4 + $0xe0] sm:$0xff] %v6541
        %6590 = vst [vmem:[#allocation4 + $0xe8] sm:$0xff] %v6542
        %6591 = vst [vmem:[#allocation4 + $0xf0] sm:$0xff] %v6543
        %6592 = vst [vmem:[#allocation4 + $0xf8] sm:$0xff] %v6544
        %6593 = vst [vmem:[#allocation4 + $0x100] sm:$0xff] %v6545
        %6594 = vst [vmem:[#allocation4 + $0x108] sm:$0xff] %v6546
        %6595 = vst [vmem:[#allocation4 + $0x110] sm:$0xff] %v6547
        %6596 = vst [vmem:[#allocation4 + $0x118] sm:$0xff] %v6548
        %6597 = vst [vmem:[#allocation4 + $0x120] sm:$0xff] %v6549
        %6598 = vst [vmem:[#allocation4 + $0x128] sm:$0xff] %v6550
        %6599 = vst [vmem:[#allocation4 + $0x130] sm:$0xff] %v6551
        %6600 = vst [vmem:[#allocation4 + $0x138] sm:$0xff] %v6552
        %6601 = vst [vmem:[#allocation4 + $0x140] sm:$0xff] %v6553
        %6602 = vst [vmem:[#allocation4 + $0x148] sm:$0xff] %v6554
        %6603 = vst [vmem:[#allocation4 + $0x150] sm:$0xff] %v6555
        %6604 = vst [vmem:[#allocation4 + $0x158] sm:$0xff] %v6556
        %6605 = vst [vmem:[#allocation4 + $0x160] sm:$0xff] %v6557
        %6606 = vst [vmem:[#allocation4 + $0x168] sm:$0xff] %v6558
        %6607 = vst [vmem:[#allocation4 + $0x170] sm:$0xff] %v6559
        %6608 = vst [vmem:[#allocation4 + $0x178] sm:$0xff] %v6560
        %v6609 = vld [vmem:[#allocation4] sm:$0xff]
        %v6610 = vld [vmem:[#allocation4 + $0x8] sm:$0xff]
        %v6611 = vld [vmem:[#allocation4 + $0x18] sm:$0xff]
        %v6612 = vld [vmem:[#allocation4 + $0x20] sm:$0xff]
        %v6613 = vld [vmem:[#allocation4 + $0x30] sm:$0xff]
        %v6614 = vld [vmem:[#allocation4 + $0x38] sm:$0xff]
        %v6615 = vld [vmem:[#allocation4 + $0x48] sm:$0xff]
        %v6616 = vld [vmem:[#allocation4 + $0x50] sm:$0xff]
        %v6617 = vld [vmem:[#allocation4 + $0x60] sm:$0xff]
        %v6618 = vld [vmem:[#allocation4 + $0x68] sm:$0xff]
        %v6619 = vld [vmem:[#allocation4 + $0x78] sm:$0xff]
        %v6620 = vld [vmem:[#allocation4 + $0x80] sm:$0xff]
        %v6621 = vld [vmem:[#allocation4 + $0x90] sm:$0xff]
        %v6622 = vld [vmem:[#allocation4 + $0x98] sm:$0xff]
        %v6623 = vld [vmem:[#allocation4 + $0xa8] sm:$0xff]
        %v6624 = vld [vmem:[#allocation4 + $0xb0] sm:$0xff]
        %v6625 = vld [vmem:[#allocation4 + $0xc0] sm:$0xff]
        %v6626 = vld [vmem:[#allocation4 + $0xc8] sm:$0xff]
        %v6627 = vld [vmem:[#allocation4 + $0xd8] sm:$0xff]
        %v6628 = vld [vmem:[#allocation4 + $0xe0] sm:$0xff]
        %v6629 = vld [vmem:[#allocation4 + $0xf0] sm:$0xff]
        %v6630 = vld [vmem:[#allocation4 + $0xf8] sm:$0xff]
        %v6631 = vld [vmem:[#allocation4 + $0x108] sm:$0xff]
        %v6632 = vld [vmem:[#allocation4 + $0x110] sm:$0xff]
        %v6633 = vld [vmem:[#allocation4 + $0x120] sm:$0xff]
        %v6634 = vld [vmem:[#allocation4 + $0x128] sm:$0xff]
        %v6635 = vld [vmem:[#allocation4 + $0x138] sm:$0xff]
        %v6636 = vld [vmem:[#allocation4 + $0x140] sm:$0xff]
        %v6637 = vld [vmem:[#allocation4 + $0x150] sm:$0xff]
        %v6638 = vld [vmem:[#allocation4 + $0x158] sm:$0xff]
        %v6639 = vld [vmem:[#allocation4 + $0x168] sm:$0xff]
        %v6640 = vld [vmem:[#allocation4 + $0x170] sm:$0xff]
        %v6641 = vmax.f32 %v6609, 0.0
        %v6642 = vmax.f32 %v6610, 0.0
        %v6643 = vmax.f32 %v6611, 0.0
        %v6644 = vmax.f32 %v6612, 0.0
        %v6645 = vmax.f32 %v6613, 0.0
        %v6646 = vmax.f32 %v6614, 0.0
        %v6647 = vmax.f32 %v6615, 0.0
        %v6648 = vmax.f32 %v6616, 0.0
        %v6649 = vmax.f32 %v6617, 0.0
        %v6650 = vmax.f32 %v6618, 0.0
        %v6651 = vmax.f32 %v6619, 0.0
        %v6652 = vmax.f32 %v6620, 0.0
        %v6653 = vmax.f32 %v6621, 0.0
        %v6654 = vmax.f32 %v6622, 0.0
        %v6655 = vmax.f32 %v6623, 0.0
        %v6656 = vmax.f32 %v6624, 0.0
        %v6657 = vmax.f32 %v6625, 0.0
        %v6658 = vmax.f32 %v6626, 0.0
        %v6659 = vmax.f32 %v6627, 0.0
        %v6660 = vmax.f32 %v6628, 0.0
        %v6661 = vmax.f32 %v6629, 0.0
        %v6662 = vmax.f32 %v6630, 0.0
        %v6663 = vmax.f32 %v6631, 0.0
        %v6664 = vmax.f32 %v6632, 0.0
        %v6665 = vmax.f32 %v6633, 0.0
        %v6666 = vmax.f32 %v6634, 0.0
        %v6667 = vmax.f32 %v6635, 0.0
        %v6668 = vmax.f32 %v6636, 0.0
        %v6669 = vmax.f32 %v6637, 0.0
        %v6670 = vmax.f32 %v6638, 0.0
        %v6671 = vmax.f32 %v6639, 0.0
        %v6672 = vmax.f32 %v6640, 0.0
        %6673 = vst [vmem:[%s151] sm:$0xff] %v6641
        %6674 = vst [vmem:[%s151 + $0x8] sm:$0xff] %v6642
        %6675 = vst [vmem:[%s151 + $0x10] sm:$0xff] %v6643
        %6676 = vst [vmem:[%s151 + $0x18] sm:$0xff] %v6644
        %6677 = vst [vmem:[%s151 + $0x20] sm:$0xff] %v6645
        %6678 = vst [vmem:[%s151 + $0x28] sm:$0xff] %v6646
        %6679 = vst [vmem:[%s151 + $0x30] sm:$0xff] %v6647
        %6680 = vst [vmem:[%s151 + $0x38] sm:$0xff] %v6648
        %6681 = vst [vmem:[%s151 + $0x40] sm:$0xff] %v6649
        %6682 = vst [vmem:[%s151 + $0x48] sm:$0xff] %v6650
        %6683 = vst [vmem:[%s151 + $0x50] sm:$0xff] %v6651
        %6684 = vst [vmem:[%s151 + $0x58] sm:$0xff] %v6652
        %6685 = vst [vmem:[%s151 + $0x60] sm:$0xff] %v6653
        %6686 = vst [vmem:[%s151 + $0x68] sm:$0xff] %v6654
        %6687 = vst [vmem:[%s151 + $0x70] sm:$0xff] %v6655
        %6688 = vst [vmem:[%s151 + $0x78] sm:$0xff] %v6656
        %6689 = vst [vmem:[%s151 + $0x80] sm:$0xff] %v6657
        %6690 = vst [vmem:[%s151 + $0x88] sm:$0xff] %v6658
        %6691 = vst [vmem:[%s151 + $0x90] sm:$0xff] %v6659
        %6692 = vst [vmem:[%s151 + $0x98] sm:$0xff] %v6660
        %6693 = vst [vmem:[%s151 + $0xa0] sm:$0xff] %v6661
        %6694 = vst [vmem:[%s151 + $0xa8] sm:$0xff] %v6662
        %6695 = vst [vmem:[%s151 + $0xb0] sm:$0xff] %v6663
        %6696 = vst [vmem:[%s151 + $0xb8] sm:$0xff] %v6664
        %6697 = vst [vmem:[%s151 + $0xc0] sm:$0xff] %v6665
        %6698 = vst [vmem:[%s151 + $0xc8] sm:$0xff] %v6666
        %6699 = vst [vmem:[%s151 + $0xd0] sm:$0xff] %v6667
        %6700 = vst [vmem:[%s151 + $0xd8] sm:$0xff] %v6668
        %6701 = vst [vmem:[%s151 + $0xe0] sm:$0xff] %v6669
        %6702 = vst [vmem:[%s151 + $0xe8] sm:$0xff] %v6670
        %6703 = vst [vmem:[%s151 + $0xf0] sm:$0xff] %v6671
        %6704 = vst [vmem:[%s151 + $0xf8] sm:$0xff] %v6672
        %s6705 = sand.u32 %s82, 1
        %s6706 = scalar_lea.sflag [#allocation7], %s6705
        %s6707 = sand.u32 %s82, 1
        %s6708 = smul.addr %s6707, 256
        %s6709 = scalar_lea.vmem [#allocation8], %s6708
        // Predicated region
        $region57: #{tpu_custom_call.1} parent=27 // pred_check
          %p6710 = pneg %p92
        $region58: #{tpu_custom_call.1} parent=27 // pred_check_branch
          %6712 = sbr.rel (%p6710) target = $region60
        $region59: #{tpu_custom_call.1} parent=27 // pred_region
          %s6713 = smul.u32 16, %s23
          %s6715 = ssub.s32 4096, 4096
          %6716 = vsyncadd %s6706, %s6715
          %s6717 = smul.addr %s6713, 2
          %s6718 = smul.addr %s22, 32
          %s6719 = sadd.s32 %s6717, %s6718
          %s6720 = smul.addr %s6719, 128
          %s6721 = scalar_lea.hbm %s3, %s6720
          %s6722 = sshll.u32 %s6709, 4
          %s6723 = int_to_ptr.vmem [resolvable:$true] %s6722
          %6728 = dma.vmem_to_hbm [thread:$0]  %s6723, 4096, %s6721, %s6706, 128, 128, 8
        $region60: #{tpu_custom_call.1} parent=27 // pred_fallthru
          _
      $region28: #{tpu_custom_call.1} parent=5 // pred_fallthru
        _
      %p6729 = scmp.le.s32.totalorder 2, %s13
      // Predicated region
      $region61: #{tpu_custom_call.1} parent=5 // pred_check
        %p6730 = pneg %p6729
      $region62: #{tpu_custom_call.1} parent=5 // pred_check_branch
        %6732 = sbr.rel (%p6730) target = $region64
      $region63: #{tpu_custom_call.1} parent=5 // pred_region
        %s6733 = ssub.s32 %s13, 2
        // Predicated region
        $region65: #{tpu_custom_call.1} parent=63 // pred_check
          %p6734 = pneg %p98
        $region66: #{tpu_custom_call.1} parent=63 // pred_check_branch
          %6736 = sbr.rel (%p6734) target = $region68
        $region67: #{tpu_custom_call.1} parent=63 // pred_region
          %s6737 = sand.u32 %s83, 1
          %s6738 = scalar_lea.sflag [#allocation7], %s6737
          %s6739 = sand.u32 %s83, 1
          %s6740 = smul.addr %s6739, 256
          %s6741 = scalar_lea.vmem [#allocation8], %s6740
          %6742 = dma.done %s6738, 4096
        $region68: #{tpu_custom_call.1} parent=63 // pred_fallthru
          _
      $region64: #{tpu_custom_call.1} parent=5 // pred_fallthru
        _
    $region6: #{tpu_custom_call.1} parent=1 // loop_footer
      %s17 = sadd.s32 1, %s13
    $region7: #{tpu_custom_call.1} parent=1 // loop_footer_branch
      %12 = sbr.rel target = $region3
    $region8: #{tpu_custom_call.1} parent=1 // loop_exit
      _
    %6743 = vsyncpa [#allocation6], 1
    %s6744 = scalar_lea.sflag [#allocation6], 1
    %6745 = vsyncpa %s6744, 1
    %6746 = vsyncpa [#allocation7], 1
    %s6747 = scalar_lea.sflag [#allocation7], 1
    %6748 = vsyncpa %s6747, 1
  %6749 = vsyncmov [#allocation3]
  %s6750 = vpop.sfrf %6749
  %p6751 = scmp.eq.s32.totalorder %s6750, 0
  %p6752 = pneg %p6751
  %6754 = shalt.err (%p6752)
  %s6755 = scalar_lea.sflag [#allocation3], 1
  %6756 = vsyncmov %s6755
  %s6757 = vpop.sfrf %6756
  %p6758 = scmp.eq.s32.totalorder %s6757, 0
  %p6759 = pneg %p6758
  %6761 = shalt.err (%p6759)

</llo_original>
